<compile_context>
chip_gen: v6e
topology: v6e:2x2x1
jax: 0.10.0
libtpu: 0.0.40
codegen_flags: <defaults>
</compile_context>

<pallas_src>
import numpy as np
import jax
import jax.numpy as jnp
from jax.experimental import pallas as pl
from jax.experimental.pallas import tpu as pltpu


def _round_up(x, m):
    return ((x + m - 1) // m) * m


def _conv_geometry(H, W):
    oh1, ow1 = (H - 8) // 4 + 1, (W - 8) // 4 + 1
    oh2, ow2 = (oh1 - 4) // 2 + 1, (ow1 - 4) // 2 + 1
    return oh1, ow1, oh2, ow2


# -----------------------------------------------------------------------------
# Fused kernel: conv1 -> relu -> conv2 -> relu -> flatten -> fc1 -> relu -> fc2
# One grid step per batch block of B_TILE images.  Only 2-D bf16 matmuls with
# f32 accumulation, static aligned row slices, bias adds and ReLUs.
# -----------------------------------------------------------------------------
def _dqn_kernel(p_ref, w1_ref, b1_ref, w2_ref, b2_ref,
                wf1_ref, bf1_ref, wf2_ref, bf2_ref, o_ref):
    f32, bf16 = jnp.float32, jnp.bfloat16
    n_tap = w2_ref.shape[0]              # 16 conv2 taps (4x4 kernel)
    n_pos = wf1_ref.shape[0]             # oh2*ow2 conv2 output positions
    bt = o_ref.shape[0]                  # batch tile
    nq = p_ref.shape[0]                  # n_tap * n_pos duplicated patch rows

    # conv1: ONE fat matmul over every (tap, out-pos, image) duplicated patch.
    x = p_ref[...].reshape(nq * bt, p_ref.shape[2])            # (nq*bt, C*64) bf16
    g = jnp.dot(x, w1_ref[...], preferred_element_type=f32)    # (nq*bt, 32) f32
    g = jnp.maximum(g + b1_ref[...], 0.0).astype(bf16)

    # conv2: 16 batch-folded tap matmuls on static, sublane-aligned row slices.
    rpt = n_pos * bt
    h2 = jnp.zeros((rpt, w2_ref.shape[2]), f32)                # (n_pos*bt, 64)
    for t in range(n_tap):
        h2 = h2 + jnp.dot(g[t * rpt:(t + 1) * rpt, :], w2_ref[t],
                          preferred_element_type=f32)
    h2 = jnp.maximum(h2 + b2_ref[...], 0.0).astype(bf16)

    # fc1: n_pos batch-folded matmuls (M = bt, N = 512); torch NCHW flatten
    # order is folded into wf1m's layout.
    h3 = jnp.zeros((bt, wf1_ref.shape[2]), f32)                # (bt, 512)
    for p in range(n_pos):
        h3 = h3 + jnp.dot(h2[p * bt:(p + 1) * bt, :], wf1_ref[p],
                          preferred_element_type=f32)
    h3 = jnp.maximum(h3 + bf1_ref[...], 0.0).astype(bf16)

    # fc2: N padded to a 128-lane multiple -> one dense (bt, 128) store.
    o_ref[...] = (jnp.dot(h3, wf2_ref[...], preferred_element_type=f32)
                  + bf2_ref[...])


# -----------------------------------------------------------------------------
# Wrapper-side im2col with duplicated rows, ordered (conv2-tap, conv2-pos, b),
# so the kernel never needs gathers: patches[(t*n_pos+p)*?, b, :] is the conv1
# input patch feeding h1 at position (2i+di, 2j+dj).
# -----------------------------------------------------------------------------
def _prep_patches(x_nchw, b_pad):
    B, C, H, W = x_nchw.shape
    _, _, oh2, ow2 = _conv_geometry(H, W)
    n_pos = oh2 * ow2

    di = np.repeat(np.arange(4), 4)          # conv2 tap rows
    dj = np.tile(np.arange(4), 4)            # conv2 tap cols
    pi = np.repeat(np.arange(oh2), ow2)      # conv2 output rows
    pj = np.tile(np.arange(ow2), oh2)        # conv2 output cols
    r = (2 * pi[None, :] + di[:, None]).reshape(-1)            # conv1 out row
    c = (2 * pj[None, :] + dj[:, None]).reshape(-1)            # conv1 out col
    rows = 4 * r[:, None] + np.arange(8)[None, :]              # (nq, 8) pixels
    cols = 4 * c[:, None] + np.arange(8)[None, :]

    xb = x_nchw.astype(jnp.bfloat16)
    p = xb[:, :, rows[:, :, None], cols[:, None, :]]           # (B, C, nq, 8, 8)
    p = jnp.transpose(p, (2, 0, 1, 3, 4)).reshape(16 * n_pos, B, C * 64)
    if b_pad > B:
        p = jnp.pad(p, ((0, 0), (0, b_pad - B), (0, 0)))
    return p                                                   # (nq, b_pad, C*64)


# -----------------------------------------------------------------------------
# One-time parameter prep: fold every permutation into the stored layouts.
# -----------------------------------------------------------------------------
def prepare_dqn_params(params):
    bf16, f32 = jnp.bfloat16, jnp.float32

    w1 = params["w1"]                                  # (32, C, 8, 8)
    cout1 = w1.shape[0]
    w1m = jnp.transpose(w1.reshape(cout1, -1), (1, 0)).astype(bf16)   # (C*64, 32)

    w2 = params["w2"]                                  # (64, 32, 4, 4)
    cout2 = w2.shape[0]
    w2m = jnp.transpose(w2, (2, 3, 1, 0)).reshape(16, w2.shape[1], cout2)
    w2m = w2m.astype(bf16)                             # (16, 32, 64), t = di*4+dj

    wfc1 = params["wfc1"]                              # (512, 64*n_pos), torch layout
    nf1 = wfc1.shape[0]
    n_pos = wfc1.shape[1] // cout2
    wf1m = jnp.transpose(wfc1.reshape(nf1, cout2, n_pos), (2, 1, 0)).astype(bf16)

    wf2m = jnp.transpose(params["wfc2"], (1, 0)).astype(bf16)         # (512, n_act)

    return {
        "w1m": w1m, "b1": params["b1"].reshape(1, -1).astype(f32),
        "w2m": w2m, "b2": params["b2"].reshape(1, -1).astype(f32),
        "wf1m": wf1m, "bf1": params["bfc1"].reshape(1, -1).astype(f32),
        "wf2m": wf2m, "bf2": params["bfc2"].reshape(1, -1).astype(f32),
    }


# -----------------------------------------------------------------------------
# Parameter init (deterministic, PyTorch-default-style uniform bounds)
# -----------------------------------------------------------------------------
def init_dqn_params(key, input_shape, n_actions):
    c_in, H, W = input_shape
    _, _, oh2, ow2 = _conv_geometry(H, W)
    conv_out = 64 * oh2 * ow2
    ks = jax.random.split(key, 8)

    def unif(k, shape, fan_in):
        bound = 1.0 / jnp.sqrt(jnp.float32(fan_in))
        return jax.random.uniform(k, shape, jnp.float32, -bound, bound)

    params = {
        "w1": unif(ks[0], (32, c_in, 8, 8), c_in * 64),
        "b1": unif(ks[1], (32,), c_in * 64),
        "w2": unif(ks[2], (64, 32, 4, 4), 32 * 16),
        "b2": unif(ks[3], (64,), 32 * 16),
        "wfc1": unif(ks[4], (512, conv_out), conv_out),
        "bfc1": unif(ks[5], (512,), conv_out),
        "wfc2": unif(ks[6], (n_actions, 512), 512),
        "bfc2": unif(ks[7], (n_actions,), 512),
    }
    return params, conv_out


# -----------------------------------------------------------------------------
# Forward pass (matches DQN.forward) — single fused pallas_call.
# -----------------------------------------------------------------------------
def dqn_forward(kparams, x_nchw, *, b_tile_cap=32):
    B, C, H, W = x_nchw.shape
    oh1, ow1, oh2, ow2 = _conv_geometry(H, W)
    assert oh1 >= 4 and ow1 >= 4 and oh2 >= 1 and ow2 >= 1, "input too small"
    n_pos = oh2 * ow2
    nq = 16 * n_pos
    feat = C * 64

    # Batch tile: multiple of 16 (keeps bf16 row slices tile-aligned), capped so
    # the per-step working set fits the default scoped VMEM on every generation.
    bt = min(_round_up(b_tile_cap, 16), _round_up(B, 16))
    bp = _round_up(B, bt)

    patches = _prep_patches(x_nchw, bp)                          # (nq, bp, feat)

    # Pad fc2's N to a 128-lane multiple for a dense output store.
    wf2m = kparams["wf2m"]
    n_act = wf2m.shape[1]
    n_pad = _round_up(max(n_act, 128), 128)
    wf2p = jnp.zeros((wf2m.shape[0], n_pad), jnp.bfloat16).at[:, :n_act].set(wf2m)
    bf2p = jnp.zeros((1, n_pad), jnp.float32).at[:, :n_act].set(kparams["bf2"])

    operands = (patches, kparams["w1m"], kparams["b1"],
                kparams["w2m"], kparams["b2"],
                kparams["wf1m"], kparams["bf1"], wf2p, bf2p)

    def const_spec(a):  # whole-array block, constant index -> stays VMEM-resident
        nd = a.ndim
        return pl.BlockSpec(a.shape, lambda g, _nd=nd: (0,) * _nd)

    in_specs = [pl.BlockSpec((nq, bt, feat), lambda g: (0, g, 0))] + \
               [const_spec(a) for a in operands[1:]]

    flops = 2 * bp * (nq * feat * 32 + 16 * n_pos * 32 * 64
                      + n_pos * 64 * 512 + 512 * n_pad)
    bytes_accessed = int(sum(int(np.prod(a.shape)) * a.dtype.itemsize
                             for a in operands) + bp * n_pad * 4)

    out = pl.pallas_call(
        _dqn_kernel,
        out_shape=jax.ShapeDtypeStruct((bp, n_pad), jnp.float32),
        grid=(bp // bt,),
        in_specs=in_specs,
        out_specs=pl.BlockSpec((bt, n_pad), lambda g: (g, 0)),
        compiler_params=pltpu.CompilerParams(dimension_semantics=("parallel",)),
        cost_estimate=pl.CostEstimate(flops=flops, transcendentals=0,
                                      bytes_accessed=bytes_accessed),
    )(*operands)
    return out[:B, :n_act]


# -----------------------------------------------------------------------------
# Pure-JAX reference (lax.conv) for a correctness sanity check
# -----------------------------------------------------------------------------
def dqn_forward_ref(params, x_nchw):
    x = x_nchw.astype(jnp.float32)
    dn = jax.lax.conv_dimension_numbers(x.shape, params["w1"].shape,
                                        ("NCHW", "OIHW", "NCHW"))
    x = jax.lax.conv_general_dilated(x, params["w1"], (4, 4), "VALID",
                                     dimension_numbers=dn)
    x = jax.nn.relu(x + params["b1"][None, :, None, None])
    dn2 = jax.lax.conv_dimension_numbers(x.shape, params["w2"].shape,
                                         ("NCHW", "OIHW", "NCHW"))
    x = jax.lax.conv_general_dilated(x, params["w2"], (2, 2), "VALID",
                                     dimension_numbers=dn2)
    x = jax.nn.relu(x + params["b2"][None, :, None, None])
    x = x.reshape(x.shape[0], -1)
    x = jax.nn.relu(x @ params["wfc1"].T + params["bfc1"])
    return x @ params["wfc2"].T + params["bfc2"]


if __name__ == "__main__":
    # Small shapes consistent with the module: frame stack of 4, 36x36 frames
    # (conv1 -> 8x8, conv2 -> 3x3, conv_out = 576), 6 actions.
    BATCH = 8
    INPUT_SHAPE = (4, 36, 36)
    N_ACTIONS = 6

    key = jax.random.PRNGKey(0)
    pkey, xkey = jax.random.split(key)
    params, conv_out = init_dqn_params(pkey, INPUT_SHAPE, N_ACTIONS)
    kparams = prepare_dqn_params(params)      # one-time kernel-layout weights (bf16)
    x = jax.random.uniform(xkey, (BATCH,) + INPUT_SHAPE, jnp.float32)

    q = jax.block_until_ready(jax.jit(dqn_forward)(kparams, x))
    assert q.shape == (BATCH, N_ACTIONS), q.shape

    q_ref = jax.block_until_ready(dqn_forward_ref(params, x))
    assert jnp.allclose(q, q_ref, rtol=3e-2, atol=3e-2), (
        float(jnp.max(jnp.abs(q - q_ref))))

    print("KERNEL_OK")
</pallas_src>

<mosaic_0001>
module attributes {stable_mosaic.version = 11 : i64} {
  func.func @_dqn_kernel(%arg0: i32, %arg1: memref<144x16x256xbf16, #tpu.memory_space<vmem>>, %arg2: memref<256x32xbf16, #tpu.memory_space<vmem>>, %arg3: memref<1x32xf32, #tpu.memory_space<vmem>>, %arg4: memref<16x32x64xbf16, #tpu.memory_space<vmem>>, %arg5: memref<1x64xf32, #tpu.memory_space<vmem>>, %arg6: memref<9x64x512xbf16, #tpu.memory_space<vmem>>, %arg7: memref<1x512xf32, #tpu.memory_space<vmem>>, %arg8: memref<512x128xbf16, #tpu.memory_space<vmem>>, %arg9: memref<1x128xf32, #tpu.memory_space<vmem>>, %arg10: memref<16x128xf32, #tpu.memory_space<vmem>>) attributes {dimension_semantics = [#tpu.dimension_semantics<parallel>], iteration_bounds = array<i64: 1>, scalar_prefetch = 0 : i64, scratch_operands = 0 : i64, tpu.core_type = #tpu.core_type<tc>, window_params = [{transform_indices = @transform_0, window_bounds = array<i64: 144, 16, 256>}, {pipeline_mode = #tpu.pipeline_mode<synchronous>, transform_indices = @transform_1, window_bounds = array<i64: 256, 32>}, {pipeline_mode = #tpu.pipeline_mode<synchronous>, transform_indices = @transform_2, window_bounds = array<i64: 1, 32>}, {pipeline_mode = #tpu.pipeline_mode<synchronous>, transform_indices = @transform_3, window_bounds = array<i64: 16, 32, 64>}, {pipeline_mode = #tpu.pipeline_mode<synchronous>, transform_indices = @transform_4, window_bounds = array<i64: 1, 64>}, {pipeline_mode = #tpu.pipeline_mode<synchronous>, transform_indices = @transform_5, window_bounds = array<i64: 9, 64, 512>}, {pipeline_mode = #tpu.pipeline_mode<synchronous>, transform_indices = @transform_6, window_bounds = array<i64: 1, 512>}, {pipeline_mode = #tpu.pipeline_mode<synchronous>, transform_indices = @transform_7, window_bounds = array<i64: 512, 128>}, {pipeline_mode = #tpu.pipeline_mode<synchronous>, transform_indices = @transform_8, window_bounds = array<i64: 1, 128>}, {transform_indices = @transform_9, window_bounds = array<i64: 16, 128>}]} {
    %c0 = arith.constant 0 : index
    %c0_0 = arith.constant 0 : index
    %c0_1 = arith.constant 0 : index
    %0 = vector.load %arg1[%c0, %c0_0, %c0_1] : memref<144x16x256xbf16, #tpu.memory_space<vmem>>, vector<144x16x256xbf16>
    %1 = vector.shape_cast %0 : vector<144x16x256xbf16> to vector<2304x256xbf16>
    %c0_2 = arith.constant 0 : index
    %c0_3 = arith.constant 0 : index
    %2 = vector.load %arg2[%c0_2, %c0_3] : memref<256x32xbf16, #tpu.memory_space<vmem>>, vector<256x32xbf16>
    %cst = arith.constant dense<0.000000e+00> : vector<2304x32xf32>
    %3 = tpu.matmul %1, %2, %cst {dimension_numbers = #tpu.dot_dimension_numbers<[1], [0], [0], [1], [0, 0, 1, 1], [], []>} : vector<2304x256xbf16>, vector<256x32xbf16>, vector<2304x32xf32> -> vector<2304x32xf32>
    %c0_4 = arith.constant 0 : index
    %c0_5 = arith.constant 0 : index
    %4 = vector.load %arg3[%c0_4, %c0_5] : memref<1x32xf32, #tpu.memory_space<vmem>>, vector<1x32xf32>
    %5 = vector.broadcast %4 : vector<1x32xf32> to vector<2304x32xf32>
    %6 = arith.addf %3, %5 : vector<2304x32xf32>
    %cst_6 = arith.constant 0.000000e+00 : f32
    %7 = vector.broadcast %cst_6 : f32 to vector<2304x32xf32>
    %8 = arith.maximumf %6, %7 : vector<2304x32xf32>
    %9 = arith.truncf %8 : vector<2304x32xf32> to vector<2304x32xbf16>
    %cst_7 = arith.constant 0.000000e+00 : f32
    %10 = vector.broadcast %cst_7 : f32 to vector<144x64xf32>
    %11 = vector.extract_strided_slice %9 {offsets = [0, 0], sizes = [144, 32], strides = [1, 1]} : vector<2304x32xbf16> to vector<144x32xbf16>
    %c0_8 = arith.constant 0 : index
    %c0_9 = arith.constant 0 : index
    %c0_10 = arith.constant 0 : index
    %12 = vector.load %arg4[%c0_8, %c0_9, %c0_10] : memref<16x32x64xbf16, #tpu.memory_space<vmem>>, vector<1x32x64xbf16>
    %13 = vector.shape_cast %12 : vector<1x32x64xbf16> to vector<32x64xbf16>
    %cst_11 = arith.constant dense<0.000000e+00> : vector<144x64xf32>
    %14 = tpu.matmul %11, %13, %cst_11 {dimension_numbers = #tpu.dot_dimension_numbers<[1], [0], [0], [1], [0, 0, 1, 1], [], []>} : vector<144x32xbf16>, vector<32x64xbf16>, vector<144x64xf32> -> vector<144x64xf32>
    %15 = arith.addf %10, %14 : vector<144x64xf32>
    %16 = vector.extract_strided_slice %9 {offsets = [144, 0], sizes = [144, 32], strides = [1, 1]} : vector<2304x32xbf16> to vector<144x32xbf16>
    %c1 = arith.constant 1 : index
    %c0_12 = arith.constant 0 : index
    %c0_13 = arith.constant 0 : index
    %17 = vector.load %arg4[%c1, %c0_12, %c0_13] : memref<16x32x64xbf16, #tpu.memory_space<vmem>>, vector<1x32x64xbf16>
    %18 = vector.shape_cast %17 : vector<1x32x64xbf16> to vector<32x64xbf16>
    %cst_14 = arith.constant dense<0.000000e+00> : vector<144x64xf32>
    %19 = tpu.matmul %16, %18, %cst_14 {dimension_numbers = #tpu.dot_dimension_numbers<[1], [0], [0], [1], [0, 0, 1, 1], [], []>} : vector<144x32xbf16>, vector<32x64xbf16>, vector<144x64xf32> -> vector<144x64xf32>
    %20 = arith.addf %15, %19 : vector<144x64xf32>
    %21 = vector.extract_strided_slice %9 {offsets = [288, 0], sizes = [144, 32], strides = [1, 1]} : vector<2304x32xbf16> to vector<144x32xbf16>
    %c2 = arith.constant 2 : index
    %c0_15 = arith.constant 0 : index
    %c0_16 = arith.constant 0 : index
    %22 = vector.load %arg4[%c2, %c0_15, %c0_16] : memref<16x32x64xbf16, #tpu.memory_space<vmem>>, vector<1x32x64xbf16>
    %23 = vector.shape_cast %22 : vector<1x32x64xbf16> to vector<32x64xbf16>
    %cst_17 = arith.constant dense<0.000000e+00> : vector<144x64xf32>
    %24 = tpu.matmul %21, %23, %cst_17 {dimension_numbers = #tpu.dot_dimension_numbers<[1], [0], [0], [1], [0, 0, 1, 1], [], []>} : vector<144x32xbf16>, vector<32x64xbf16>, vector<144x64xf32> -> vector<144x64xf32>
    %25 = arith.addf %20, %24 : vector<144x64xf32>
    %26 = vector.extract_strided_slice %9 {offsets = [432, 0], sizes = [144, 32], strides = [1, 1]} : vector<2304x32xbf16> to vector<144x32xbf16>
    %c3 = arith.constant 3 : index
    %c0_18 = arith.constant 0 : index
    %c0_19 = arith.constant 0 : index
    %27 = vector.load %arg4[%c3, %c0_18, %c0_19] : memref<16x32x64xbf16, #tpu.memory_space<vmem>>, vector<1x32x64xbf16>
    %28 = vector.shape_cast %27 : vector<1x32x64xbf16> to vector<32x64xbf16>
    %cst_20 = arith.constant dense<0.000000e+00> : vector<144x64xf32>
    %29 = tpu.matmul %26, %28, %cst_20 {dimension_numbers = #tpu.dot_dimension_numbers<[1], [0], [0], [1], [0, 0, 1, 1], [], []>} : vector<144x32xbf16>, vector<32x64xbf16>, vector<144x64xf32> -> vector<144x64xf32>
    %30 = arith.addf %25, %29 : vector<144x64xf32>
    %31 = vector.extract_strided_slice %9 {offsets = [576, 0], sizes = [144, 32], strides = [1, 1]} : vector<2304x32xbf16> to vector<144x32xbf16>
    %c4 = arith.constant 4 : index
    %c0_21 = arith.constant 0 : index
    %c0_22 = arith.constant 0 : index
    %32 = vector.load %arg4[%c4, %c0_21, %c0_22] : memref<16x32x64xbf16, #tpu.memory_space<vmem>>, vector<1x32x64xbf16>
    %33 = vector.shape_cast %32 : vector<1x32x64xbf16> to vector<32x64xbf16>
    %cst_23 = arith.constant dense<0.000000e+00> : vector<144x64xf32>
    %34 = tpu.matmul %31, %33, %cst_23 {dimension_numbers = #tpu.dot_dimension_numbers<[1], [0], [0], [1], [0, 0, 1, 1], [], []>} : vector<144x32xbf16>, vector<32x64xbf16>, vector<144x64xf32> -> vector<144x64xf32>
    %35 = arith.addf %30, %34 : vector<144x64xf32>
    %36 = vector.extract_strided_slice %9 {offsets = [720, 0], sizes = [144, 32], strides = [1, 1]} : vector<2304x32xbf16> to vector<144x32xbf16>
    %c5 = arith.constant 5 : index
    %c0_24 = arith.constant 0 : index
    %c0_25 = arith.constant 0 : index
    %37 = vector.load %arg4[%c5, %c0_24, %c0_25] : memref<16x32x64xbf16, #tpu.memory_space<vmem>>, vector<1x32x64xbf16>
    %38 = vector.shape_cast %37 : vector<1x32x64xbf16> to vector<32x64xbf16>
    %cst_26 = arith.constant dense<0.000000e+00> : vector<144x64xf32>
    %39 = tpu.matmul %36, %38, %cst_26 {dimension_numbers = #tpu.dot_dimension_numbers<[1], [0], [0], [1], [0, 0, 1, 1], [], []>} : vector<144x32xbf16>, vector<32x64xbf16>, vector<144x64xf32> -> vector<144x64xf32>
    %40 = arith.addf %35, %39 : vector<144x64xf32>
    %41 = vector.extract_strided_slice %9 {offsets = [864, 0], sizes = [144, 32], strides = [1, 1]} : vector<2304x32xbf16> to vector<144x32xbf16>
    %c6 = arith.constant 6 : index
    %c0_27 = arith.constant 0 : index
    %c0_28 = arith.constant 0 : index
    %42 = vector.load %arg4[%c6, %c0_27, %c0_28] : memref<16x32x64xbf16, #tpu.memory_space<vmem>>, vector<1x32x64xbf16>
    %43 = vector.shape_cast %42 : vector<1x32x64xbf16> to vector<32x64xbf16>
    %cst_29 = arith.constant dense<0.000000e+00> : vector<144x64xf32>
    %44 = tpu.matmul %41, %43, %cst_29 {dimension_numbers = #tpu.dot_dimension_numbers<[1], [0], [0], [1], [0, 0, 1, 1], [], []>} : vector<144x32xbf16>, vector<32x64xbf16>, vector<144x64xf32> -> vector<144x64xf32>
    %45 = arith.addf %40, %44 : vector<144x64xf32>
    %46 = vector.extract_strided_slice %9 {offsets = [1008, 0], sizes = [144, 32], strides = [1, 1]} : vector<2304x32xbf16> to vector<144x32xbf16>
    %c7 = arith.constant 7 : index
    %c0_30 = arith.constant 0 : index
    %c0_31 = arith.constant 0 : index
    %47 = vector.load %arg4[%c7, %c0_30, %c0_31] : memref<16x32x64xbf16, #tpu.memory_space<vmem>>, vector<1x32x64xbf16>
    %48 = vector.shape_cast %47 : vector<1x32x64xbf16> to vector<32x64xbf16>
    %cst_32 = arith.constant dense<0.000000e+00> : vector<144x64xf32>
    %49 = tpu.matmul %46, %48, %cst_32 {dimension_numbers = #tpu.dot_dimension_numbers<[1], [0], [0], [1], [0, 0, 1, 1], [], []>} : vector<144x32xbf16>, vector<32x64xbf16>, vector<144x64xf32> -> vector<144x64xf32>
    %50 = arith.addf %45, %49 : vector<144x64xf32>
    %51 = vector.extract_strided_slice %9 {offsets = [1152, 0], sizes = [144, 32], strides = [1, 1]} : vector<2304x32xbf16> to vector<144x32xbf16>
    %c8 = arith.constant 8 : index
    %c0_33 = arith.constant 0 : index
    %c0_34 = arith.constant 0 : index
    %52 = vector.load %arg4[%c8, %c0_33, %c0_34] : memref<16x32x64xbf16, #tpu.memory_space<vmem>>, vector<1x32x64xbf16>
    %53 = vector.shape_cast %52 : vector<1x32x64xbf16> to vector<32x64xbf16>
    %cst_35 = arith.constant dense<0.000000e+00> : vector<144x64xf32>
    %54 = tpu.matmul %51, %53, %cst_35 {dimension_numbers = #tpu.dot_dimension_numbers<[1], [0], [0], [1], [0, 0, 1, 1], [], []>} : vector<144x32xbf16>, vector<32x64xbf16>, vector<144x64xf32> -> vector<144x64xf32>
    %55 = arith.addf %50, %54 : vector<144x64xf32>
    %56 = vector.extract_strided_slice %9 {offsets = [1296, 0], sizes = [144, 32], strides = [1, 1]} : vector<2304x32xbf16> to vector<144x32xbf16>
    %c9 = arith.constant 9 : index
    %c0_36 = arith.constant 0 : index
    %c0_37 = arith.constant 0 : index
    %57 = vector.load %arg4[%c9, %c0_36, %c0_37] : memref<16x32x64xbf16, #tpu.memory_space<vmem>>, vector<1x32x64xbf16>
    %58 = vector.shape_cast %57 : vector<1x32x64xbf16> to vector<32x64xbf16>
    %cst_38 = arith.constant dense<0.000000e+00> : vector<144x64xf32>
    %59 = tpu.matmul %56, %58, %cst_38 {dimension_numbers = #tpu.dot_dimension_numbers<[1], [0], [0], [1], [0, 0, 1, 1], [], []>} : vector<144x32xbf16>, vector<32x64xbf16>, vector<144x64xf32> -> vector<144x64xf32>
    %60 = arith.addf %55, %59 : vector<144x64xf32>
    %61 = vector.extract_strided_slice %9 {offsets = [1440, 0], sizes = [144, 32], strides = [1, 1]} : vector<2304x32xbf16> to vector<144x32xbf16>
    %c10 = arith.constant 10 : index
    %c0_39 = arith.constant 0 : index
    %c0_40 = arith.constant 0 : index
    %62 = vector.load %arg4[%c10, %c0_39, %c0_40] : memref<16x32x64xbf16, #tpu.memory_space<vmem>>, vector<1x32x64xbf16>
    %63 = vector.shape_cast %62 : vector<1x32x64xbf16> to vector<32x64xbf16>
    %cst_41 = arith.constant dense<0.000000e+00> : vector<144x64xf32>
    %64 = tpu.matmul %61, %63, %cst_41 {dimension_numbers = #tpu.dot_dimension_numbers<[1], [0], [0], [1], [0, 0, 1, 1], [], []>} : vector<144x32xbf16>, vector<32x64xbf16>, vector<144x64xf32> -> vector<144x64xf32>
    %65 = arith.addf %60, %64 : vector<144x64xf32>
    %66 = vector.extract_strided_slice %9 {offsets = [1584, 0], sizes = [144, 32], strides = [1, 1]} : vector<2304x32xbf16> to vector<144x32xbf16>
    %c11 = arith.constant 11 : index
    %c0_42 = arith.constant 0 : index
    %c0_43 = arith.constant 0 : index
    %67 = vector.load %arg4[%c11, %c0_42, %c0_43] : memref<16x32x64xbf16, #tpu.memory_space<vmem>>, vector<1x32x64xbf16>
    %68 = vector.shape_cast %67 : vector<1x32x64xbf16> to vector<32x64xbf16>
    %cst_44 = arith.constant dense<0.000000e+00> : vector<144x64xf32>
    %69 = tpu.matmul %66, %68, %cst_44 {dimension_numbers = #tpu.dot_dimension_numbers<[1], [0], [0], [1], [0, 0, 1, 1], [], []>} : vector<144x32xbf16>, vector<32x64xbf16>, vector<144x64xf32> -> vector<144x64xf32>
    %70 = arith.addf %65, %69 : vector<144x64xf32>
    %71 = vector.extract_strided_slice %9 {offsets = [1728, 0], sizes = [144, 32], strides = [1, 1]} : vector<2304x32xbf16> to vector<144x32xbf16>
    %c12 = arith.constant 12 : index
    %c0_45 = arith.constant 0 : index
    %c0_46 = arith.constant 0 : index
    %72 = vector.load %arg4[%c12, %c0_45, %c0_46] : memref<16x32x64xbf16, #tpu.memory_space<vmem>>, vector<1x32x64xbf16>
    %73 = vector.shape_cast %72 : vector<1x32x64xbf16> to vector<32x64xbf16>
    %cst_47 = arith.constant dense<0.000000e+00> : vector<144x64xf32>
    %74 = tpu.matmul %71, %73, %cst_47 {dimension_numbers = #tpu.dot_dimension_numbers<[1], [0], [0], [1], [0, 0, 1, 1], [], []>} : vector<144x32xbf16>, vector<32x64xbf16>, vector<144x64xf32> -> vector<144x64xf32>
    %75 = arith.addf %70, %74 : vector<144x64xf32>
    %76 = vector.extract_strided_slice %9 {offsets = [1872, 0], sizes = [144, 32], strides = [1, 1]} : vector<2304x32xbf16> to vector<144x32xbf16>
    %c13 = arith.constant 13 : index
    %c0_48 = arith.constant 0 : index
    %c0_49 = arith.constant 0 : index
    %77 = vector.load %arg4[%c13, %c0_48, %c0_49] : memref<16x32x64xbf16, #tpu.memory_space<vmem>>, vector<1x32x64xbf16>
    %78 = vector.shape_cast %77 : vector<1x32x64xbf16> to vector<32x64xbf16>
    %cst_50 = arith.constant dense<0.000000e+00> : vector<144x64xf32>
    %79 = tpu.matmul %76, %78, %cst_50 {dimension_numbers = #tpu.dot_dimension_numbers<[1], [0], [0], [1], [0, 0, 1, 1], [], []>} : vector<144x32xbf16>, vector<32x64xbf16>, vector<144x64xf32> -> vector<144x64xf32>
    %80 = arith.addf %75, %79 : vector<144x64xf32>
    %81 = vector.extract_strided_slice %9 {offsets = [2016, 0], sizes = [144, 32], strides = [1, 1]} : vector<2304x32xbf16> to vector<144x32xbf16>
    %c14 = arith.constant 14 : index
    %c0_51 = arith.constant 0 : index
    %c0_52 = arith.constant 0 : index
    %82 = vector.load %arg4[%c14, %c0_51, %c0_52] : memref<16x32x64xbf16, #tpu.memory_space<vmem>>, vector<1x32x64xbf16>
    %83 = vector.shape_cast %82 : vector<1x32x64xbf16> to vector<32x64xbf16>
    %cst_53 = arith.constant dense<0.000000e+00> : vector<144x64xf32>
    %84 = tpu.matmul %81, %83, %cst_53 {dimension_numbers = #tpu.dot_dimension_numbers<[1], [0], [0], [1], [0, 0, 1, 1], [], []>} : vector<144x32xbf16>, vector<32x64xbf16>, vector<144x64xf32> -> vector<144x64xf32>
    %85 = arith.addf %80, %84 : vector<144x64xf32>
    %86 = vector.extract_strided_slice %9 {offsets = [2160, 0], sizes = [144, 32], strides = [1, 1]} : vector<2304x32xbf16> to vector<144x32xbf16>
    %c15 = arith.constant 15 : index
    %c0_54 = arith.constant 0 : index
    %c0_55 = arith.constant 0 : index
    %87 = vector.load %arg4[%c15, %c0_54, %c0_55] : memref<16x32x64xbf16, #tpu.memory_space<vmem>>, vector<1x32x64xbf16>
    %88 = vector.shape_cast %87 : vector<1x32x64xbf16> to vector<32x64xbf16>
    %cst_56 = arith.constant dense<0.000000e+00> : vector<144x64xf32>
    %89 = tpu.matmul %86, %88, %cst_56 {dimension_numbers = #tpu.dot_dimension_numbers<[1], [0], [0], [1], [0, 0, 1, 1], [], []>} : vector<144x32xbf16>, vector<32x64xbf16>, vector<144x64xf32> -> vector<144x64xf32>
    %90 = arith.addf %85, %89 : vector<144x64xf32>
    %c0_57 = arith.constant 0 : index
    %c0_58 = arith.constant 0 : index
    %91 = vector.load %arg5[%c0_57, %c0_58] : memref<1x64xf32, #tpu.memory_space<vmem>>, vector<1x64xf32>
    %92 = vector.broadcast %91 : vector<1x64xf32> to vector<144x64xf32>
    %93 = arith.addf %90, %92 : vector<144x64xf32>
    %cst_59 = arith.constant 0.000000e+00 : f32
    %94 = vector.broadcast %cst_59 : f32 to vector<144x64xf32>
    %95 = arith.maximumf %93, %94 : vector<144x64xf32>
    %96 = arith.truncf %95 : vector<144x64xf32> to vector<144x64xbf16>
    %cst_60 = arith.constant 0.000000e+00 : f32
    %97 = vector.broadcast %cst_60 : f32 to vector<16x512xf32>
    %98 = vector.extract_strided_slice %96 {offsets = [0, 0], sizes = [16, 64], strides = [1, 1]} : vector<144x64xbf16> to vector<16x64xbf16>
    %c0_61 = arith.constant 0 : index
    %c0_62 = arith.constant 0 : index
    %c0_63 = arith.constant 0 : index
    %99 = vector.load %arg6[%c0_61, %c0_62, %c0_63] : memref<9x64x512xbf16, #tpu.memory_space<vmem>>, vector<1x64x512xbf16>
    %100 = vector.shape_cast %99 : vector<1x64x512xbf16> to vector<64x512xbf16>
    %cst_64 = arith.constant dense<0.000000e+00> : vector<16x512xf32>
    %101 = tpu.matmul %98, %100, %cst_64 {dimension_numbers = #tpu.dot_dimension_numbers<[1], [0], [0], [1], [0, 0, 1, 1], [], []>} : vector<16x64xbf16>, vector<64x512xbf16>, vector<16x512xf32> -> vector<16x512xf32>
    %102 = arith.addf %97, %101 : vector<16x512xf32>
    %103 = vector.extract_strided_slice %96 {offsets = [16, 0], sizes = [16, 64], strides = [1, 1]} : vector<144x64xbf16> to vector<16x64xbf16>
    %c1_65 = arith.constant 1 : index
    %c0_66 = arith.constant 0 : index
    %c0_67 = arith.constant 0 : index
    %104 = vector.load %arg6[%c1_65, %c0_66, %c0_67] : memref<9x64x512xbf16, #tpu.memory_space<vmem>>, vector<1x64x512xbf16>
    %105 = vector.shape_cast %104 : vector<1x64x512xbf16> to vector<64x512xbf16>
    %cst_68 = arith.constant dense<0.000000e+00> : vector<16x512xf32>
    %106 = tpu.matmul %103, %105, %cst_68 {dimension_numbers = #tpu.dot_dimension_numbers<[1], [0], [0], [1], [0, 0, 1, 1], [], []>} : vector<16x64xbf16>, vector<64x512xbf16>, vector<16x512xf32> -> vector<16x512xf32>
    %107 = arith.addf %102, %106 : vector<16x512xf32>
    %108 = vector.extract_strided_slice %96 {offsets = [32, 0], sizes = [16, 64], strides = [1, 1]} : vector<144x64xbf16> to vector<16x64xbf16>
    %c2_69 = arith.constant 2 : index
    %c0_70 = arith.constant 0 : index
    %c0_71 = arith.constant 0 : index
    %109 = vector.load %arg6[%c2_69, %c0_70, %c0_71] : memref<9x64x512xbf16, #tpu.memory_space<vmem>>, vector<1x64x512xbf16>
    %110 = vector.shape_cast %109 : vector<1x64x512xbf16> to vector<64x512xbf16>
    %cst_72 = arith.constant dense<0.000000e+00> : vector<16x512xf32>
    %111 = tpu.matmul %108, %110, %cst_72 {dimension_numbers = #tpu.dot_dimension_numbers<[1], [0], [0], [1], [0, 0, 1, 1], [], []>} : vector<16x64xbf16>, vector<64x512xbf16>, vector<16x512xf32> -> vector<16x512xf32>
    %112 = arith.addf %107, %111 : vector<16x512xf32>
    %113 = vector.extract_strided_slice %96 {offsets = [48, 0], sizes = [16, 64], strides = [1, 1]} : vector<144x64xbf16> to vector<16x64xbf16>
    %c3_73 = arith.constant 3 : index
    %c0_74 = arith.constant 0 : index
    %c0_75 = arith.constant 0 : index
    %114 = vector.load %arg6[%c3_73, %c0_74, %c0_75] : memref<9x64x512xbf16, #tpu.memory_space<vmem>>, vector<1x64x512xbf16>
    %115 = vector.shape_cast %114 : vector<1x64x512xbf16> to vector<64x512xbf16>
    %cst_76 = arith.constant dense<0.000000e+00> : vector<16x512xf32>
    %116 = tpu.matmul %113, %115, %cst_76 {dimension_numbers = #tpu.dot_dimension_numbers<[1], [0], [0], [1], [0, 0, 1, 1], [], []>} : vector<16x64xbf16>, vector<64x512xbf16>, vector<16x512xf32> -> vector<16x512xf32>
    %117 = arith.addf %112, %116 : vector<16x512xf32>
    %118 = vector.extract_strided_slice %96 {offsets = [64, 0], sizes = [16, 64], strides = [1, 1]} : vector<144x64xbf16> to vector<16x64xbf16>
    %c4_77 = arith.constant 4 : index
    %c0_78 = arith.constant 0 : index
    %c0_79 = arith.constant 0 : index
    %119 = vector.load %arg6[%c4_77, %c0_78, %c0_79] : memref<9x64x512xbf16, #tpu.memory_space<vmem>>, vector<1x64x512xbf16>
    %120 = vector.shape_cast %119 : vector<1x64x512xbf16> to vector<64x512xbf16>
    %cst_80 = arith.constant dense<0.000000e+00> : vector<16x512xf32>
    %121 = tpu.matmul %118, %120, %cst_80 {dimension_numbers = #tpu.dot_dimension_numbers<[1], [0], [0], [1], [0, 0, 1, 1], [], []>} : vector<16x64xbf16>, vector<64x512xbf16>, vector<16x512xf32> -> vector<16x512xf32>
    %122 = arith.addf %117, %121 : vector<16x512xf32>
    %123 = vector.extract_strided_slice %96 {offsets = [80, 0], sizes = [16, 64], strides = [1, 1]} : vector<144x64xbf16> to vector<16x64xbf16>
    %c5_81 = arith.constant 5 : index
    %c0_82 = arith.constant 0 : index
    %c0_83 = arith.constant 0 : index
    %124 = vector.load %arg6[%c5_81, %c0_82, %c0_83] : memref<9x64x512xbf16, #tpu.memory_space<vmem>>, vector<1x64x512xbf16>
    %125 = vector.shape_cast %124 : vector<1x64x512xbf16> to vector<64x512xbf16>
    %cst_84 = arith.constant dense<0.000000e+00> : vector<16x512xf32>
    %126 = tpu.matmul %123, %125, %cst_84 {dimension_numbers = #tpu.dot_dimension_numbers<[1], [0], [0], [1], [0, 0, 1, 1], [], []>} : vector<16x64xbf16>, vector<64x512xbf16>, vector<16x512xf32> -> vector<16x512xf32>
    %127 = arith.addf %122, %126 : vector<16x512xf32>
    %128 = vector.extract_strided_slice %96 {offsets = [96, 0], sizes = [16, 64], strides = [1, 1]} : vector<144x64xbf16> to vector<16x64xbf16>
    %c6_85 = arith.constant 6 : index
    %c0_86 = arith.constant 0 : index
    %c0_87 = arith.constant 0 : index
    %129 = vector.load %arg6[%c6_85, %c0_86, %c0_87] : memref<9x64x512xbf16, #tpu.memory_space<vmem>>, vector<1x64x512xbf16>
    %130 = vector.shape_cast %129 : vector<1x64x512xbf16> to vector<64x512xbf16>
    %cst_88 = arith.constant dense<0.000000e+00> : vector<16x512xf32>
    %131 = tpu.matmul %128, %130, %cst_88 {dimension_numbers = #tpu.dot_dimension_numbers<[1], [0], [0], [1], [0, 0, 1, 1], [], []>} : vector<16x64xbf16>, vector<64x512xbf16>, vector<16x512xf32> -> vector<16x512xf32>
    %132 = arith.addf %127, %131 : vector<16x512xf32>
    %133 = vector.extract_strided_slice %96 {offsets = [112, 0], sizes = [16, 64], strides = [1, 1]} : vector<144x64xbf16> to vector<16x64xbf16>
    %c7_89 = arith.constant 7 : index
    %c0_90 = arith.constant 0 : index
    %c0_91 = arith.constant 0 : index
    %134 = vector.load %arg6[%c7_89, %c0_90, %c0_91] : memref<9x64x512xbf16, #tpu.memory_space<vmem>>, vector<1x64x512xbf16>
    %135 = vector.shape_cast %134 : vector<1x64x512xbf16> to vector<64x512xbf16>
    %cst_92 = arith.constant dense<0.000000e+00> : vector<16x512xf32>
    %136 = tpu.matmul %133, %135, %cst_92 {dimension_numbers = #tpu.dot_dimension_numbers<[1], [0], [0], [1], [0, 0, 1, 1], [], []>} : vector<16x64xbf16>, vector<64x512xbf16>, vector<16x512xf32> -> vector<16x512xf32>
    %137 = arith.addf %132, %136 : vector<16x512xf32>
    %138 = vector.extract_strided_slice %96 {offsets = [128, 0], sizes = [16, 64], strides = [1, 1]} : vector<144x64xbf16> to vector<16x64xbf16>
    %c8_93 = arith.constant 8 : index
    %c0_94 = arith.constant 0 : index
    %c0_95 = arith.constant 0 : index
    %139 = vector.load %arg6[%c8_93, %c0_94, %c0_95] : memref<9x64x512xbf16, #tpu.memory_space<vmem>>, vector<1x64x512xbf16>
    %140 = vector.shape_cast %139 : vector<1x64x512xbf16> to vector<64x512xbf16>
    %cst_96 = arith.constant dense<0.000000e+00> : vector<16x512xf32>
    %141 = tpu.matmul %138, %140, %cst_96 {dimension_numbers = #tpu.dot_dimension_numbers<[1], [0], [0], [1], [0, 0, 1, 1], [], []>} : vector<16x64xbf16>, vector<64x512xbf16>, vector<16x512xf32> -> vector<16x512xf32>
    %142 = arith.addf %137, %141 : vector<16x512xf32>
    %c0_97 = arith.constant 0 : index
    %c0_98 = arith.constant 0 : index
    %143 = vector.load %arg7[%c0_97, %c0_98] : memref<1x512xf32, #tpu.memory_space<vmem>>, vector<1x512xf32>
    %144 = vector.broadcast %143 : vector<1x512xf32> to vector<16x512xf32>
    %145 = arith.addf %142, %144 : vector<16x512xf32>
    %cst_99 = arith.constant 0.000000e+00 : f32
    %146 = vector.broadcast %cst_99 : f32 to vector<16x512xf32>
    %147 = arith.maximumf %145, %146 : vector<16x512xf32>
    %148 = arith.truncf %147 : vector<16x512xf32> to vector<16x512xbf16>
    %c0_100 = arith.constant 0 : index
    %c0_101 = arith.constant 0 : index
    %149 = vector.load %arg8[%c0_100, %c0_101] : memref<512x128xbf16, #tpu.memory_space<vmem>>, vector<512x128xbf16>
    %cst_102 = arith.constant dense<0.000000e+00> : vector<16x128xf32>
    %150 = tpu.matmul %148, %149, %cst_102 {dimension_numbers = #tpu.dot_dimension_numbers<[1], [0], [0], [1], [0, 0, 1, 1], [], []>} : vector<16x512xbf16>, vector<512x128xbf16>, vector<16x128xf32> -> vector<16x128xf32>
    %c0_103 = arith.constant 0 : index
    %c0_104 = arith.constant 0 : index
    %151 = vector.load %arg9[%c0_103, %c0_104] : memref<1x128xf32, #tpu.memory_space<vmem>>, vector<1x128xf32>
    %152 = vector.broadcast %151 : vector<1x128xf32> to vector<16x128xf32>
    %153 = arith.addf %150, %152 : vector<16x128xf32>
    %c0_105 = arith.constant 0 : index
    %c0_106 = arith.constant 0 : index
    %154 = vector.load %arg10[%c0_105, %c0_106] : memref<16x128xf32, #tpu.memory_space<vmem>>, vector<16x128xf32>
    tpu.vector_store %arg10[%c0_105, %c0_106], %153 {strides = array<i32>} : memref<16x128xf32, #tpu.memory_space<vmem>>, vector<16x128xf32>,
    return
  }
  func.func @transform_0(%arg0: i32) -> (i32, i32, i32) {
    %c0_i32 = arith.constant 0 : i32
    %c0_i32_0 = arith.constant 0 : i32
    %c0_i32_1 = arith.constant 0 : i32
    return %c0_i32, %arg0, %c0_i32_0 : i32, i32, i32
  }
  func.func @transform_1(%arg0: i32) -> (i32, i32) {
    %c0_i32 = arith.constant 0 : i32
    %c0_i32_0 = arith.constant 0 : i32
    %c0_i32_1 = arith.constant 0 : i32
    return %c0_i32, %c0_i32_0 : i32, i32
  }
  func.func @transform_2(%arg0: i32) -> (i32, i32) {
    %c0_i32 = arith.constant 0 : i32
    %c0_i32_0 = arith.constant 0 : i32
    %c0_i32_1 = arith.constant 0 : i32
    return %c0_i32, %c0_i32_0 : i32, i32
  }
  func.func @transform_3(%arg0: i32) -> (i32, i32, i32) {
    %c0_i32 = arith.constant 0 : i32
    %c0_i32_0 = arith.constant 0 : i32
    %c0_i32_1 = arith.constant 0 : i32
    %c0_i32_2 = arith.constant 0 : i32
    return %c0_i32, %c0_i32_0, %c0_i32_1 : i32, i32, i32
  }
  func.func @transform_4(%arg0: i32) -> (i32, i32) {
    %c0_i32 = arith.constant 0 : i32
    %c0_i32_0 = arith.constant 0 : i32
    %c0_i32_1 = arith.constant 0 : i32
    return %c0_i32, %c0_i32_0 : i32, i32
  }
  func.func @transform_5(%arg0: i32) -> (i32, i32, i32) {
    %c0_i32 = arith.constant 0 : i32
    %c0_i32_0 = arith.constant 0 : i32
    %c0_i32_1 = arith.constant 0 : i32
    %c0_i32_2 = arith.constant 0 : i32
    return %c0_i32, %c0_i32_0, %c0_i32_1 : i32, i32, i32
  }
  func.func @transform_6(%arg0: i32) -> (i32, i32) {
    %c0_i32 = arith.constant 0 : i32
    %c0_i32_0 = arith.constant 0 : i32
    %c0_i32_1 = arith.constant 0 : i32
    return %c0_i32, %c0_i32_0 : i32, i32
  }
  func.func @transform_7(%arg0: i32) -> (i32, i32) {
    %c0_i32 = arith.constant 0 : i32
    %c0_i32_0 = arith.constant 0 : i32
    %c0_i32_1 = arith.constant 0 : i32
    return %c0_i32, %c0_i32_0 : i32, i32
  }
  func.func @transform_8(%arg0: i32) -> (i32, i32) {
    %c0_i32 = arith.constant 0 : i32
    %c0_i32_0 = arith.constant 0 : i32
    %c0_i32_1 = arith.constant 0 : i32
    return %c0_i32, %c0_i32_0 : i32, i32
  }
  func.func @transform_9(%arg0: i32) -> (i32, i32) {
    %c0_i32 = arith.constant 0 : i32
    %c0_i32_0 = arith.constant 0 : i32
    return %arg0, %c0_i32 : i32, i32
  }
}

</mosaic_0001>

<llo_original>
// kernel: dqn_forward.1
$region0: #{dqn_forward.1}
  #allocation0 [shape = 'u32[]', space=smem, size = 0x4, offset = 0x4, fixed_abs, tag = 'smem constant byte address 0x4 - core index']
  #allocation1 [shape = 'u32[144,128]{1,0:T(1,128)}', space=vmem, size = 0x12000, scoped, tag = 'internal scratch']
  %s0 = inlined_call_operand.vmem [shape: bf16[144,16,256], index: 0, kind: input, shape index: {}]
  %s1 = inlined_call_operand.vmem [shape: bf16[256,32], index: 1, kind: input, shape index: {}]
  %s2 = inlined_call_operand.vmem [shape: f32[1,32], index: 2, kind: input, shape index: {}]
  %s3 = inlined_call_operand.vmem [shape: bf16[16,32,64], index: 3, kind: input, shape index: {}]
  %s4 = inlined_call_operand.vmem [shape: f32[1,64], index: 4, kind: input, shape index: {}]
  %s5 = inlined_call_operand.vmem [shape: bf16[9,64,512], index: 5, kind: input, shape index: {}]
  %s6 = inlined_call_operand.vmem [shape: f32[1,512], index: 6, kind: input, shape index: {}]
  %s7 = inlined_call_operand.vmem [shape: bf16[512,128], index: 7, kind: input, shape index: {}]
  %s8 = inlined_call_operand.vmem [shape: f32[1,128], index: 8, kind: input, shape index: {}]
  %s9 = inlined_call_operand.vmem [shape: f32[16,128], index: 9, kind: output, shape index: {}]
  %s10 = sld [smem:[#allocation0]]
  $region46: #{dqn_forward.1} parent=0
    _
  %s12 = ssub.s32 1, %s10
  %s13 = scalar_select 0, %s12, %s10
  // Predicated region
  $region2: #{dqn_forward.1} parent=0 // pred_check
    _
  $region3: #{dqn_forward.1} parent=0 // pred_check_branch
    %15 = sbr.rel (0) target = $region5
  $region4: #{dqn_forward.1} parent=0 // pred_region
    _
  $region5: #{dqn_forward.1} parent=0 // pred_fallthru
    _
  // Predicated region
  $region6: #{dqn_forward.1} parent=0 // pred_check
    _
  $region7: #{dqn_forward.1} parent=0 // pred_check_branch
    %17 = sbr.rel (0) target = $region9
  $region8: #{dqn_forward.1} parent=0 // pred_region
    _
  $region9: #{dqn_forward.1} parent=0 // pred_fallthru
    _
  // Predicated region
  $region10: #{dqn_forward.1} parent=0 // pred_check
    _
  $region11: #{dqn_forward.1} parent=0 // pred_check_branch
    %19 = sbr.rel (0) target = $region13
  $region12: #{dqn_forward.1} parent=0 // pred_region
    _
  $region13: #{dqn_forward.1} parent=0 // pred_fallthru
    _
  // Predicated region
  $region14: #{dqn_forward.1} parent=0 // pred_check
    _
  $region15: #{dqn_forward.1} parent=0 // pred_check_branch
    %21 = sbr.rel (0) target = $region17
  $region16: #{dqn_forward.1} parent=0 // pred_region
    _
  $region17: #{dqn_forward.1} parent=0 // pred_fallthru
    _
  // Predicated region
  $region18: #{dqn_forward.1} parent=0 // pred_check
    _
  $region19: #{dqn_forward.1} parent=0 // pred_check_branch
    %23 = sbr.rel (0) target = $region21
  $region20: #{dqn_forward.1} parent=0 // pred_region
    _
  $region21: #{dqn_forward.1} parent=0 // pred_fallthru
    _
  // Predicated region
  $region22: #{dqn_forward.1} parent=0 // pred_check
    _
  $region23: #{dqn_forward.1} parent=0 // pred_check_branch
    %25 = sbr.rel (0) target = $region25
  $region24: #{dqn_forward.1} parent=0 // pred_region
    _
  $region25: #{dqn_forward.1} parent=0 // pred_fallthru
    _
  // Predicated region
  $region26: #{dqn_forward.1} parent=0 // pred_check
    _
  $region27: #{dqn_forward.1} parent=0 // pred_check_branch
    %27 = sbr.rel (0) target = $region29
  $region28: #{dqn_forward.1} parent=0 // pred_region
    _
  $region29: #{dqn_forward.1} parent=0 // pred_fallthru
    _
  // Predicated region
  $region30: #{dqn_forward.1} parent=0 // pred_check
    _
  $region31: #{dqn_forward.1} parent=0 // pred_check_branch
    %29 = sbr.rel (0) target = $region33
  $region32: #{dqn_forward.1} parent=0 // pred_region
    _
  $region33: #{dqn_forward.1} parent=0 // pred_fallthru
    _
  // Predicated region
  $region34: #{dqn_forward.1} parent=0 // pred_check
    _
  $region35: #{dqn_forward.1} parent=0 // pred_check_branch
    %31 = sbr.rel (0) target = $region37
  $region36: #{dqn_forward.1} parent=0 // pred_region
    _
  $region37: #{dqn_forward.1} parent=0 // pred_fallthru
    _
  %v33 = vld [vmem:[%s0] sm:$0xff]
  %v34 = vld [vmem:[%s0 + $0x8] sm:$0xff]
  %v35 = vld [vmem:[%s0 + $0x10] sm:$0xff]
  %v36 = vld [vmem:[%s0 + $0x18] sm:$0xff]
  %v37 = vld [vmem:[%s0 + $0x20] sm:$0xff]
  %v38 = vld [vmem:[%s0 + $0x28] sm:$0xff]
  %v39 = vld [vmem:[%s0 + $0x30] sm:$0xff]
  %v40 = vld [vmem:[%s0 + $0x38] sm:$0xff]
  %v41 = vld [vmem:[%s0 + $0x40] sm:$0xff]
  %v42 = vld [vmem:[%s0 + $0x48] sm:$0xff]
  %v43 = vld [vmem:[%s0 + $0x50] sm:$0xff]
  %v44 = vld [vmem:[%s0 + $0x58] sm:$0xff]
  %v45 = vld [vmem:[%s0 + $0x60] sm:$0xff]
  %v46 = vld [vmem:[%s0 + $0x68] sm:$0xff]
  %v47 = vld [vmem:[%s0 + $0x70] sm:$0xff]
  %v48 = vld [vmem:[%s0 + $0x78] sm:$0xff]
  %v49 = vld [vmem:[%s0 + $0x80] sm:$0xff]
  %v50 = vld [vmem:[%s0 + $0x88] sm:$0xff]
  %v51 = vld [vmem:[%s0 + $0x90] sm:$0xff]
  %v52 = vld [vmem:[%s0 + $0x98] sm:$0xff]
  %v53 = vld [vmem:[%s0 + $0xa0] sm:$0xff]
  %v54 = vld [vmem:[%s0 + $0xa8] sm:$0xff]
  %v55 = vld [vmem:[%s0 + $0xb0] sm:$0xff]
  %v56 = vld [vmem:[%s0 + $0xb8] sm:$0xff]
  %v57 = vld [vmem:[%s0 + $0xc0] sm:$0xff]
  %v58 = vld [vmem:[%s0 + $0xc8] sm:$0xff]
  %v59 = vld [vmem:[%s0 + $0xd0] sm:$0xff]
  %v60 = vld [vmem:[%s0 + $0xd8] sm:$0xff]
  %v61 = vld [vmem:[%s0 + $0xe0] sm:$0xff]
  %v62 = vld [vmem:[%s0 + $0xe8] sm:$0xff]
  %v63 = vld [vmem:[%s0 + $0xf0] sm:$0xff]
  %v64 = vld [vmem:[%s0 + $0xf8] sm:$0xff]
  %v65 = vld [vmem:[%s0 + $0x100] sm:$0xff]
  %v66 = vld [vmem:[%s0 + $0x108] sm:$0xff]
  %v67 = vld [vmem:[%s0 + $0x110] sm:$0xff]
  %v68 = vld [vmem:[%s0 + $0x118] sm:$0xff]
  %v69 = vld [vmem:[%s0 + $0x120] sm:$0xff]
  %v70 = vld [vmem:[%s0 + $0x128] sm:$0xff]
  %v71 = vld [vmem:[%s0 + $0x130] sm:$0xff]
  %v72 = vld [vmem:[%s0 + $0x138] sm:$0xff]
  %v73 = vld [vmem:[%s0 + $0x140] sm:$0xff]
  %v74 = vld [vmem:[%s0 + $0x148] sm:$0xff]
  %v75 = vld [vmem:[%s0 + $0x150] sm:$0xff]
  %v76 = vld [vmem:[%s0 + $0x158] sm:$0xff]
  %v77 = vld [vmem:[%s0 + $0x160] sm:$0xff]
  %v78 = vld [vmem:[%s0 + $0x168] sm:$0xff]
  %v79 = vld [vmem:[%s0 + $0x170] sm:$0xff]
  %v80 = vld [vmem:[%s0 + $0x178] sm:$0xff]
  %v81 = vld [vmem:[%s0 + $0x180] sm:$0xff]
  %v82 = vld [vmem:[%s0 + $0x188] sm:$0xff]
  %v83 = vld [vmem:[%s0 + $0x190] sm:$0xff]
  %v84 = vld [vmem:[%s0 + $0x198] sm:$0xff]
  %v85 = vld [vmem:[%s0 + $0x1a0] sm:$0xff]
  %v86 = vld [vmem:[%s0 + $0x1a8] sm:$0xff]
  %v87 = vld [vmem:[%s0 + $0x1b0] sm:$0xff]
  %v88 = vld [vmem:[%s0 + $0x1b8] sm:$0xff]
  %v89 = vld [vmem:[%s0 + $0x1c0] sm:$0xff]
  %v90 = vld [vmem:[%s0 + $0x1c8] sm:$0xff]
  %v91 = vld [vmem:[%s0 + $0x1d0] sm:$0xff]
  %v92 = vld [vmem:[%s0 + $0x1d8] sm:$0xff]
  %v93 = vld [vmem:[%s0 + $0x1e0] sm:$0xff]
  %v94 = vld [vmem:[%s0 + $0x1e8] sm:$0xff]
  %v95 = vld [vmem:[%s0 + $0x1f0] sm:$0xff]
  %v96 = vld [vmem:[%s0 + $0x1f8] sm:$0xff]
  %v97 = vld [vmem:[%s0 + $0x200] sm:$0xff]
  %v98 = vld [vmem:[%s0 + $0x208] sm:$0xff]
  %v99 = vld [vmem:[%s0 + $0x210] sm:$0xff]
  %v100 = vld [vmem:[%s0 + $0x218] sm:$0xff]
  %v101 = vld [vmem:[%s0 + $0x220] sm:$0xff]
  %v102 = vld [vmem:[%s0 + $0x228] sm:$0xff]
  %v103 = vld [vmem:[%s0 + $0x230] sm:$0xff]
  %v104 = vld [vmem:[%s0 + $0x238] sm:$0xff]
  %v105 = vld [vmem:[%s0 + $0x240] sm:$0xff]
  %v106 = vld [vmem:[%s0 + $0x248] sm:$0xff]
  %v107 = vld [vmem:[%s0 + $0x250] sm:$0xff]
  %v108 = vld [vmem:[%s0 + $0x258] sm:$0xff]
  %v109 = vld [vmem:[%s0 + $0x260] sm:$0xff]
  %v110 = vld [vmem:[%s0 + $0x268] sm:$0xff]
  %v111 = vld [vmem:[%s0 + $0x270] sm:$0xff]
  %v112 = vld [vmem:[%s0 + $0x278] sm:$0xff]
  %v113 = vld [vmem:[%s0 + $0x280] sm:$0xff]
  %v114 = vld [vmem:[%s0 + $0x288] sm:$0xff]
  %v115 = vld [vmem:[%s0 + $0x290] sm:$0xff]
  %v116 = vld [vmem:[%s0 + $0x298] sm:$0xff]
  %v117 = vld [vmem:[%s0 + $0x2a0] sm:$0xff]
  %v118 = vld [vmem:[%s0 + $0x2a8] sm:$0xff]
  %v119 = vld [vmem:[%s0 + $0x2b0] sm:$0xff]
  %v120 = vld [vmem:[%s0 + $0x2b8] sm:$0xff]
  %v121 = vld [vmem:[%s0 + $0x2c0] sm:$0xff]
  %v122 = vld [vmem:[%s0 + $0x2c8] sm:$0xff]
  %v123 = vld [vmem:[%s0 + $0x2d0] sm:$0xff]
  %v124 = vld [vmem:[%s0 + $0x2d8] sm:$0xff]
  %v125 = vld [vmem:[%s0 + $0x2e0] sm:$0xff]
  %v126 = vld [vmem:[%s0 + $0x2e8] sm:$0xff]
  %v127 = vld [vmem:[%s0 + $0x2f0] sm:$0xff]
  %v128 = vld [vmem:[%s0 + $0x2f8] sm:$0xff]
  %v129 = vld [vmem:[%s0 + $0x300] sm:$0xff]
  %v130 = vld [vmem:[%s0 + $0x308] sm:$0xff]
  %v131 = vld [vmem:[%s0 + $0x310] sm:$0xff]
  %v132 = vld [vmem:[%s0 + $0x318] sm:$0xff]
  %v133 = vld [vmem:[%s0 + $0x320] sm:$0xff]
  %v134 = vld [vmem:[%s0 + $0x328] sm:$0xff]
  %v135 = vld [vmem:[%s0 + $0x330] sm:$0xff]
  %v136 = vld [vmem:[%s0 + $0x338] sm:$0xff]
  %v137 = vld [vmem:[%s0 + $0x340] sm:$0xff]
  %v138 = vld [vmem:[%s0 + $0x348] sm:$0xff]
  %v139 = vld [vmem:[%s0 + $0x350] sm:$0xff]
  %v140 = vld [vmem:[%s0 + $0x358] sm:$0xff]
  %v141 = vld [vmem:[%s0 + $0x360] sm:$0xff]
  %v142 = vld [vmem:[%s0 + $0x368] sm:$0xff]
  %v143 = vld [vmem:[%s0 + $0x370] sm:$0xff]
  %v144 = vld [vmem:[%s0 + $0x378] sm:$0xff]
  %v145 = vld [vmem:[%s0 + $0x380] sm:$0xff]
  %v146 = vld [vmem:[%s0 + $0x388] sm:$0xff]
  %v147 = vld [vmem:[%s0 + $0x390] sm:$0xff]
  %v148 = vld [vmem:[%s0 + $0x398] sm:$0xff]
  %v149 = vld [vmem:[%s0 + $0x3a0] sm:$0xff]
  %v150 = vld [vmem:[%s0 + $0x3a8] sm:$0xff]
  %v151 = vld [vmem:[%s0 + $0x3b0] sm:$0xff]
  %v152 = vld [vmem:[%s0 + $0x3b8] sm:$0xff]
  %v153 = vld [vmem:[%s0 + $0x3c0] sm:$0xff]
  %v154 = vld [vmem:[%s0 + $0x3c8] sm:$0xff]
  %v155 = vld [vmem:[%s0 + $0x3d0] sm:$0xff]
  %v156 = vld [vmem:[%s0 + $0x3d8] sm:$0xff]
  %v157 = vld [vmem:[%s0 + $0x3e0] sm:$0xff]
  %v158 = vld [vmem:[%s0 + $0x3e8] sm:$0xff]
  %v159 = vld [vmem:[%s0 + $0x3f0] sm:$0xff]
  %v160 = vld [vmem:[%s0 + $0x3f8] sm:$0xff]
  %v161 = vld [vmem:[%s0 + $0x400] sm:$0xff]
  %v162 = vld [vmem:[%s0 + $0x408] sm:$0xff]
  %v163 = vld [vmem:[%s0 + $0x410] sm:$0xff]
  %v164 = vld [vmem:[%s0 + $0x418] sm:$0xff]
  %v165 = vld [vmem:[%s0 + $0x420] sm:$0xff]
  %v166 = vld [vmem:[%s0 + $0x428] sm:$0xff]
  %v167 = vld [vmem:[%s0 + $0x430] sm:$0xff]
  %v168 = vld [vmem:[%s0 + $0x438] sm:$0xff]
  %v169 = vld [vmem:[%s0 + $0x440] sm:$0xff]
  %v170 = vld [vmem:[%s0 + $0x448] sm:$0xff]
  %v171 = vld [vmem:[%s0 + $0x450] sm:$0xff]
  %v172 = vld [vmem:[%s0 + $0x458] sm:$0xff]
  %v173 = vld [vmem:[%s0 + $0x460] sm:$0xff]
  %v174 = vld [vmem:[%s0 + $0x468] sm:$0xff]
  %v175 = vld [vmem:[%s0 + $0x470] sm:$0xff]
  %v176 = vld [vmem:[%s0 + $0x478] sm:$0xff]
  %v177 = vld [vmem:[%s0 + $0x480] sm:$0xff]
  %v178 = vld [vmem:[%s0 + $0x488] sm:$0xff]
  %v179 = vld [vmem:[%s0 + $0x490] sm:$0xff]
  %v180 = vld [vmem:[%s0 + $0x498] sm:$0xff]
  %v181 = vld [vmem:[%s0 + $0x4a0] sm:$0xff]
  %v182 = vld [vmem:[%s0 + $0x4a8] sm:$0xff]
  %v183 = vld [vmem:[%s0 + $0x4b0] sm:$0xff]
  %v184 = vld [vmem:[%s0 + $0x4b8] sm:$0xff]
  %v185 = vld [vmem:[%s0 + $0x4c0] sm:$0xff]
  %v186 = vld [vmem:[%s0 + $0x4c8] sm:$0xff]
  %v187 = vld [vmem:[%s0 + $0x4d0] sm:$0xff]
  %v188 = vld [vmem:[%s0 + $0x4d8] sm:$0xff]
  %v189 = vld [vmem:[%s0 + $0x4e0] sm:$0xff]
  %v190 = vld [vmem:[%s0 + $0x4e8] sm:$0xff]
  %v191 = vld [vmem:[%s0 + $0x4f0] sm:$0xff]
  %v192 = vld [vmem:[%s0 + $0x4f8] sm:$0xff]
  %v193 = vld [vmem:[%s0 + $0x500] sm:$0xff]
  %v194 = vld [vmem:[%s0 + $0x508] sm:$0xff]
  %v195 = vld [vmem:[%s0 + $0x510] sm:$0xff]
  %v196 = vld [vmem:[%s0 + $0x518] sm:$0xff]
  %v197 = vld [vmem:[%s0 + $0x520] sm:$0xff]
  %v198 = vld [vmem:[%s0 + $0x528] sm:$0xff]
  %v199 = vld [vmem:[%s0 + $0x530] sm:$0xff]
  %v200 = vld [vmem:[%s0 + $0x538] sm:$0xff]
  %v201 = vld [vmem:[%s0 + $0x540] sm:$0xff]
  %v202 = vld [vmem:[%s0 + $0x548] sm:$0xff]
  %v203 = vld [vmem:[%s0 + $0x550] sm:$0xff]
  %v204 = vld [vmem:[%s0 + $0x558] sm:$0xff]
  %v205 = vld [vmem:[%s0 + $0x560] sm:$0xff]
  %v206 = vld [vmem:[%s0 + $0x568] sm:$0xff]
  %v207 = vld [vmem:[%s0 + $0x570] sm:$0xff]
  %v208 = vld [vmem:[%s0 + $0x578] sm:$0xff]
  %v209 = vld [vmem:[%s0 + $0x580] sm:$0xff]
  %v210 = vld [vmem:[%s0 + $0x588] sm:$0xff]
  %v211 = vld [vmem:[%s0 + $0x590] sm:$0xff]
  %v212 = vld [vmem:[%s0 + $0x598] sm:$0xff]
  %v213 = vld [vmem:[%s0 + $0x5a0] sm:$0xff]
  %v214 = vld [vmem:[%s0 + $0x5a8] sm:$0xff]
  %v215 = vld [vmem:[%s0 + $0x5b0] sm:$0xff]
  %v216 = vld [vmem:[%s0 + $0x5b8] sm:$0xff]
  %v217 = vld [vmem:[%s0 + $0x5c0] sm:$0xff]
  %v218 = vld [vmem:[%s0 + $0x5c8] sm:$0xff]
  %v219 = vld [vmem:[%s0 + $0x5d0] sm:$0xff]
  %v220 = vld [vmem:[%s0 + $0x5d8] sm:$0xff]
  %v221 = vld [vmem:[%s0 + $0x5e0] sm:$0xff]
  %v222 = vld [vmem:[%s0 + $0x5e8] sm:$0xff]
  %v223 = vld [vmem:[%s0 + $0x5f0] sm:$0xff]
  %v224 = vld [vmem:[%s0 + $0x5f8] sm:$0xff]
  %v225 = vld [vmem:[%s0 + $0x600] sm:$0xff]
  %v226 = vld [vmem:[%s0 + $0x608] sm:$0xff]
  %v227 = vld [vmem:[%s0 + $0x610] sm:$0xff]
  %v228 = vld [vmem:[%s0 + $0x618] sm:$0xff]
  %v229 = vld [vmem:[%s0 + $0x620] sm:$0xff]
  %v230 = vld [vmem:[%s0 + $0x628] sm:$0xff]
  %v231 = vld [vmem:[%s0 + $0x630] sm:$0xff]
  %v232 = vld [vmem:[%s0 + $0x638] sm:$0xff]
  %v233 = vld [vmem:[%s0 + $0x640] sm:$0xff]
  %v234 = vld [vmem:[%s0 + $0x648] sm:$0xff]
  %v235 = vld [vmem:[%s0 + $0x650] sm:$0xff]
  %v236 = vld [vmem:[%s0 + $0x658] sm:$0xff]
  %v237 = vld [vmem:[%s0 + $0x660] sm:$0xff]
  %v238 = vld [vmem:[%s0 + $0x668] sm:$0xff]
  %v239 = vld [vmem:[%s0 + $0x670] sm:$0xff]
  %v240 = vld [vmem:[%s0 + $0x678] sm:$0xff]
  %v241 = vld [vmem:[%s0 + $0x680] sm:$0xff]
  %v242 = vld [vmem:[%s0 + $0x688] sm:$0xff]
  %v243 = vld [vmem:[%s0 + $0x690] sm:$0xff]
  %v244 = vld [vmem:[%s0 + $0x698] sm:$0xff]
  %v245 = vld [vmem:[%s0 + $0x6a0] sm:$0xff]
  %v246 = vld [vmem:[%s0 + $0x6a8] sm:$0xff]
  %v247 = vld [vmem:[%s0 + $0x6b0] sm:$0xff]
  %v248 = vld [vmem:[%s0 + $0x6b8] sm:$0xff]
  %v249 = vld [vmem:[%s0 + $0x6c0] sm:$0xff]
  %v250 = vld [vmem:[%s0 + $0x6c8] sm:$0xff]
  %v251 = vld [vmem:[%s0 + $0x6d0] sm:$0xff]
  %v252 = vld [vmem:[%s0 + $0x6d8] sm:$0xff]
  %v253 = vld [vmem:[%s0 + $0x6e0] sm:$0xff]
  %v254 = vld [vmem:[%s0 + $0x6e8] sm:$0xff]
  %v255 = vld [vmem:[%s0 + $0x6f0] sm:$0xff]
  %v256 = vld [vmem:[%s0 + $0x6f8] sm:$0xff]
  %v257 = vld [vmem:[%s0 + $0x700] sm:$0xff]
  %v258 = vld [vmem:[%s0 + $0x708] sm:$0xff]
  %v259 = vld [vmem:[%s0 + $0x710] sm:$0xff]
  %v260 = vld [vmem:[%s0 + $0x718] sm:$0xff]
  %v261 = vld [vmem:[%s0 + $0x720] sm:$0xff]
  %v262 = vld [vmem:[%s0 + $0x728] sm:$0xff]
  %v263 = vld [vmem:[%s0 + $0x730] sm:$0xff]
  %v264 = vld [vmem:[%s0 + $0x738] sm:$0xff]
  %v265 = vld [vmem:[%s0 + $0x740] sm:$0xff]
  %v266 = vld [vmem:[%s0 + $0x748] sm:$0xff]
  %v267 = vld [vmem:[%s0 + $0x750] sm:$0xff]
  %v268 = vld [vmem:[%s0 + $0x758] sm:$0xff]
  %v269 = vld [vmem:[%s0 + $0x760] sm:$0xff]
  %v270 = vld [vmem:[%s0 + $0x768] sm:$0xff]
  %v271 = vld [vmem:[%s0 + $0x770] sm:$0xff]
  %v272 = vld [vmem:[%s0 + $0x778] sm:$0xff]
  %v273 = vld [vmem:[%s0 + $0x780] sm:$0xff]
  %v274 = vld [vmem:[%s0 + $0x788] sm:$0xff]
  %v275 = vld [vmem:[%s0 + $0x790] sm:$0xff]
  %v276 = vld [vmem:[%s0 + $0x798] sm:$0xff]
  %v277 = vld [vmem:[%s0 + $0x7a0] sm:$0xff]
  %v278 = vld [vmem:[%s0 + $0x7a8] sm:$0xff]
  %v279 = vld [vmem:[%s0 + $0x7b0] sm:$0xff]
  %v280 = vld [vmem:[%s0 + $0x7b8] sm:$0xff]
  %v281 = vld [vmem:[%s0 + $0x7c0] sm:$0xff]
  %v282 = vld [vmem:[%s0 + $0x7c8] sm:$0xff]
  %v283 = vld [vmem:[%s0 + $0x7d0] sm:$0xff]
  %v284 = vld [vmem:[%s0 + $0x7d8] sm:$0xff]
  %v285 = vld [vmem:[%s0 + $0x7e0] sm:$0xff]
  %v286 = vld [vmem:[%s0 + $0x7e8] sm:$0xff]
  %v287 = vld [vmem:[%s0 + $0x7f0] sm:$0xff]
  %v288 = vld [vmem:[%s0 + $0x7f8] sm:$0xff]
  %v289 = vld [vmem:[%s0 + $0x800] sm:$0xff]
  %v290 = vld [vmem:[%s0 + $0x808] sm:$0xff]
  %v291 = vld [vmem:[%s0 + $0x810] sm:$0xff]
  %v292 = vld [vmem:[%s0 + $0x818] sm:$0xff]
  %v293 = vld [vmem:[%s0 + $0x820] sm:$0xff]
  %v294 = vld [vmem:[%s0 + $0x828] sm:$0xff]
  %v295 = vld [vmem:[%s0 + $0x830] sm:$0xff]
  %v296 = vld [vmem:[%s0 + $0x838] sm:$0xff]
  %v297 = vld [vmem:[%s0 + $0x840] sm:$0xff]
  %v298 = vld [vmem:[%s0 + $0x848] sm:$0xff]
  %v299 = vld [vmem:[%s0 + $0x850] sm:$0xff]
  %v300 = vld [vmem:[%s0 + $0x858] sm:$0xff]
  %v301 = vld [vmem:[%s0 + $0x860] sm:$0xff]
  %v302 = vld [vmem:[%s0 + $0x868] sm:$0xff]
  %v303 = vld [vmem:[%s0 + $0x870] sm:$0xff]
  %v304 = vld [vmem:[%s0 + $0x878] sm:$0xff]
  %v305 = vld [vmem:[%s0 + $0x880] sm:$0xff]
  %v306 = vld [vmem:[%s0 + $0x888] sm:$0xff]
  %v307 = vld [vmem:[%s0 + $0x890] sm:$0xff]
  %v308 = vld [vmem:[%s0 + $0x898] sm:$0xff]
  %v309 = vld [vmem:[%s0 + $0x8a0] sm:$0xff]
  %v310 = vld [vmem:[%s0 + $0x8a8] sm:$0xff]
  %v311 = vld [vmem:[%s0 + $0x8b0] sm:$0xff]
  %v312 = vld [vmem:[%s0 + $0x8b8] sm:$0xff]
  %v313 = vld [vmem:[%s0 + $0x8c0] sm:$0xff]
  %v314 = vld [vmem:[%s0 + $0x8c8] sm:$0xff]
  %v315 = vld [vmem:[%s0 + $0x8d0] sm:$0xff]
  %v316 = vld [vmem:[%s0 + $0x8d8] sm:$0xff]
  %v317 = vld [vmem:[%s0 + $0x8e0] sm:$0xff]
  %v318 = vld [vmem:[%s0 + $0x8e8] sm:$0xff]
  %v319 = vld [vmem:[%s0 + $0x8f0] sm:$0xff]
  %v320 = vld [vmem:[%s0 + $0x8f8] sm:$0xff]
  %v321 = vld [vmem:[%s1] sm:$0xf]
  %v322 = vld [vmem:[%s1 + $0x4] sm:$0xf]
  %v323 = vld [vmem:[%s1 + $0x8] sm:$0xf]
  %v324 = vld [vmem:[%s1 + $0xc] sm:$0xf]
  %v325 = vld [vmem:[%s1 + $0x10] sm:$0xf]
  %v326 = vld [vmem:[%s1 + $0x14] sm:$0xf]
  %v327 = vld [vmem:[%s1 + $0x18] sm:$0xf]
  %v328 = vld [vmem:[%s1 + $0x1c] sm:$0xf]
  %v329 = vld [vmem:[%s1 + $0x20] sm:$0xf]
  %v330 = vld [vmem:[%s1 + $0x24] sm:$0xf]
  %v331 = vld [vmem:[%s1 + $0x28] sm:$0xf]
  %v332 = vld [vmem:[%s1 + $0x2c] sm:$0xf]
  %v333 = vld [vmem:[%s1 + $0x30] sm:$0xf]
  %v334 = vld [vmem:[%s1 + $0x34] sm:$0xf]
  %v335 = vld [vmem:[%s1 + $0x38] sm:$0xf]
  %v336 = vld [vmem:[%s1 + $0x3c] sm:$0xf]
  %v337 = vld [vmem:[%s1 + $0x40] sm:$0xf]
  %v338 = vld [vmem:[%s1 + $0x44] sm:$0xf]
  %v339 = vld [vmem:[%s1 + $0x48] sm:$0xf]
  %v340 = vld [vmem:[%s1 + $0x4c] sm:$0xf]
  %v341 = vld [vmem:[%s1 + $0x50] sm:$0xf]
  %v342 = vld [vmem:[%s1 + $0x54] sm:$0xf]
  %v343 = vld [vmem:[%s1 + $0x58] sm:$0xf]
  %v344 = vld [vmem:[%s1 + $0x5c] sm:$0xf]
  %v345 = vld [vmem:[%s1 + $0x60] sm:$0xf]
  %v346 = vld [vmem:[%s1 + $0x64] sm:$0xf]
  %v347 = vld [vmem:[%s1 + $0x68] sm:$0xf]
  %v348 = vld [vmem:[%s1 + $0x6c] sm:$0xf]
  %v349 = vld [vmem:[%s1 + $0x70] sm:$0xf]
  %v350 = vld [vmem:[%s1 + $0x74] sm:$0xf]
  %v351 = vld [vmem:[%s1 + $0x78] sm:$0xf]
  %v352 = vld [vmem:[%s1 + $0x7c] sm:$0xf]
  %v353 = vld [vmem:[%s2] sm:$0x1]
  %v355 = vlaneseq
  %v356 = vshrl.u32 %v355, 7
  %v357 = vsub.s32 0, %v356
  %v358 = vrot.slane %v353, %v357
  %v648 = vunpack.c.l.b16 %v33
  %v649 = vunpack.c.h.b16 %v33
  %v650 = vunpack.c.l.b16 %v34
  %v651 = vunpack.c.h.b16 %v34
  %v652 = vunpack.c.l.b16 %v35
  %v653 = vunpack.c.h.b16 %v35
  %v654 = vunpack.c.l.b16 %v36
  %v655 = vunpack.c.h.b16 %v36
  %v656 = vunpack.c.l.b16 %v37
  %v657 = vunpack.c.h.b16 %v37
  %v658 = vunpack.c.l.b16 %v38
  %v659 = vunpack.c.h.b16 %v38
  %v660 = vunpack.c.l.b16 %v39
  %v661 = vunpack.c.h.b16 %v39
  %v662 = vunpack.c.l.b16 %v40
  %v663 = vunpack.c.h.b16 %v40
  %v664 = vunpack.c.l.b16 %v41
  %v665 = vunpack.c.h.b16 %v41
  %v666 = vunpack.c.l.b16 %v42
  %v667 = vunpack.c.h.b16 %v42
  %v668 = vunpack.c.l.b16 %v43
  %v669 = vunpack.c.h.b16 %v43
  %v670 = vunpack.c.l.b16 %v44
  %v671 = vunpack.c.h.b16 %v44
  %v672 = vunpack.c.l.b16 %v45
  %v673 = vunpack.c.h.b16 %v45
  %v674 = vunpack.c.l.b16 %v46
  %v675 = vunpack.c.h.b16 %v46
  %v676 = vunpack.c.l.b16 %v47
  %v677 = vunpack.c.h.b16 %v47
  %v678 = vunpack.c.l.b16 %v48
  %v679 = vunpack.c.h.b16 %v48
  %v680 = vunpack.c.l.b16 %v49
  %v681 = vunpack.c.h.b16 %v49
  %v682 = vunpack.c.l.b16 %v50
  %v683 = vunpack.c.h.b16 %v50
  %v684 = vunpack.c.l.b16 %v51
  %v685 = vunpack.c.h.b16 %v51
  %v686 = vunpack.c.l.b16 %v52
  %v687 = vunpack.c.h.b16 %v52
  %v688 = vunpack.c.l.b16 %v53
  %v689 = vunpack.c.h.b16 %v53
  %v690 = vunpack.c.l.b16 %v54
  %v691 = vunpack.c.h.b16 %v54
  %v692 = vunpack.c.l.b16 %v55
  %v693 = vunpack.c.h.b16 %v55
  %v694 = vunpack.c.l.b16 %v56
  %v695 = vunpack.c.h.b16 %v56
  %v696 = vunpack.c.l.b16 %v57
  %v697 = vunpack.c.h.b16 %v57
  %v698 = vunpack.c.l.b16 %v58
  %v699 = vunpack.c.h.b16 %v58
  %v700 = vunpack.c.l.b16 %v59
  %v701 = vunpack.c.h.b16 %v59
  %v702 = vunpack.c.l.b16 %v60
  %v703 = vunpack.c.h.b16 %v60
  %v704 = vunpack.c.l.b16 %v61
  %v705 = vunpack.c.h.b16 %v61
  %v706 = vunpack.c.l.b16 %v62
  %v707 = vunpack.c.h.b16 %v62
  %v708 = vunpack.c.l.b16 %v63
  %v709 = vunpack.c.h.b16 %v63
  %v710 = vunpack.c.l.b16 %v64
  %v711 = vunpack.c.h.b16 %v64
  %v712 = vunpack.c.l.b16 %v65
  %v713 = vunpack.c.h.b16 %v65
  %v714 = vunpack.c.l.b16 %v66
  %v715 = vunpack.c.h.b16 %v66
  %v716 = vunpack.c.l.b16 %v67
  %v717 = vunpack.c.h.b16 %v67
  %v718 = vunpack.c.l.b16 %v68
  %v719 = vunpack.c.h.b16 %v68
  %v720 = vunpack.c.l.b16 %v69
  %v721 = vunpack.c.h.b16 %v69
  %v722 = vunpack.c.l.b16 %v70
  %v723 = vunpack.c.h.b16 %v70
  %v724 = vunpack.c.l.b16 %v71
  %v725 = vunpack.c.h.b16 %v71
  %v726 = vunpack.c.l.b16 %v72
  %v727 = vunpack.c.h.b16 %v72
  %v728 = vunpack.c.l.b16 %v73
  %v729 = vunpack.c.h.b16 %v73
  %v730 = vunpack.c.l.b16 %v74
  %v731 = vunpack.c.h.b16 %v74
  %v732 = vunpack.c.l.b16 %v75
  %v733 = vunpack.c.h.b16 %v75
  %v734 = vunpack.c.l.b16 %v76
  %v735 = vunpack.c.h.b16 %v76
  %v736 = vunpack.c.l.b16 %v77
  %v737 = vunpack.c.h.b16 %v77
  %v738 = vunpack.c.l.b16 %v78
  %v739 = vunpack.c.h.b16 %v78
  %v740 = vunpack.c.l.b16 %v79
  %v741 = vunpack.c.h.b16 %v79
  %v742 = vunpack.c.l.b16 %v80
  %v743 = vunpack.c.h.b16 %v80
  %v744 = vunpack.c.l.b16 %v81
  %v745 = vunpack.c.h.b16 %v81
  %v746 = vunpack.c.l.b16 %v82
  %v747 = vunpack.c.h.b16 %v82
  %v748 = vunpack.c.l.b16 %v83
  %v749 = vunpack.c.h.b16 %v83
  %v750 = vunpack.c.l.b16 %v84
  %v751 = vunpack.c.h.b16 %v84
  %v752 = vunpack.c.l.b16 %v85
  %v753 = vunpack.c.h.b16 %v85
  %v754 = vunpack.c.l.b16 %v86
  %v755 = vunpack.c.h.b16 %v86
  %v756 = vunpack.c.l.b16 %v87
  %v757 = vunpack.c.h.b16 %v87
  %v758 = vunpack.c.l.b16 %v88
  %v759 = vunpack.c.h.b16 %v88
  %v760 = vunpack.c.l.b16 %v89
  %v761 = vunpack.c.h.b16 %v89
  %v762 = vunpack.c.l.b16 %v90
  %v763 = vunpack.c.h.b16 %v90
  %v764 = vunpack.c.l.b16 %v91
  %v765 = vunpack.c.h.b16 %v91
  %v766 = vunpack.c.l.b16 %v92
  %v767 = vunpack.c.h.b16 %v92
  %v768 = vunpack.c.l.b16 %v93
  %v769 = vunpack.c.h.b16 %v93
  %v770 = vunpack.c.l.b16 %v94
  %v771 = vunpack.c.h.b16 %v94
  %v772 = vunpack.c.l.b16 %v95
  %v773 = vunpack.c.h.b16 %v95
  %v774 = vunpack.c.l.b16 %v96
  %v775 = vunpack.c.h.b16 %v96
  %v776 = vunpack.c.l.b16 %v97
  %v777 = vunpack.c.h.b16 %v97
  %v778 = vunpack.c.l.b16 %v98
  %v779 = vunpack.c.h.b16 %v98
  %v780 = vunpack.c.l.b16 %v99
  %v781 = vunpack.c.h.b16 %v99
  %v782 = vunpack.c.l.b16 %v100
  %v783 = vunpack.c.h.b16 %v100
  %v784 = vunpack.c.l.b16 %v101
  %v785 = vunpack.c.h.b16 %v101
  %v786 = vunpack.c.l.b16 %v102
  %v787 = vunpack.c.h.b16 %v102
  %v788 = vunpack.c.l.b16 %v103
  %v789 = vunpack.c.h.b16 %v103
  %v790 = vunpack.c.l.b16 %v104
  %v791 = vunpack.c.h.b16 %v104
  %v792 = vunpack.c.l.b16 %v105
  %v793 = vunpack.c.h.b16 %v105
  %v794 = vunpack.c.l.b16 %v106
  %v795 = vunpack.c.h.b16 %v106
  %v796 = vunpack.c.l.b16 %v107
  %v797 = vunpack.c.h.b16 %v107
  %v798 = vunpack.c.l.b16 %v108
  %v799 = vunpack.c.h.b16 %v108
  %v800 = vunpack.c.l.b16 %v109
  %v801 = vunpack.c.h.b16 %v109
  %v802 = vunpack.c.l.b16 %v110
  %v803 = vunpack.c.h.b16 %v110
  %v804 = vunpack.c.l.b16 %v111
  %v805 = vunpack.c.h.b16 %v111
  %v806 = vunpack.c.l.b16 %v112
  %v807 = vunpack.c.h.b16 %v112
  %v808 = vunpack.c.l.b16 %v113
  %v809 = vunpack.c.h.b16 %v113
  %v810 = vunpack.c.l.b16 %v114
  %v811 = vunpack.c.h.b16 %v114
  %v812 = vunpack.c.l.b16 %v115
  %v813 = vunpack.c.h.b16 %v115
  %v814 = vunpack.c.l.b16 %v116
  %v815 = vunpack.c.h.b16 %v116
  %v816 = vunpack.c.l.b16 %v117
  %v817 = vunpack.c.h.b16 %v117
  %v818 = vunpack.c.l.b16 %v118
  %v819 = vunpack.c.h.b16 %v118
  %v820 = vunpack.c.l.b16 %v119
  %v821 = vunpack.c.h.b16 %v119
  %v822 = vunpack.c.l.b16 %v120
  %v823 = vunpack.c.h.b16 %v120
  %v824 = vunpack.c.l.b16 %v121
  %v825 = vunpack.c.h.b16 %v121
  %v826 = vunpack.c.l.b16 %v122
  %v827 = vunpack.c.h.b16 %v122
  %v828 = vunpack.c.l.b16 %v123
  %v829 = vunpack.c.h.b16 %v123
  %v830 = vunpack.c.l.b16 %v124
  %v831 = vunpack.c.h.b16 %v124
  %v832 = vunpack.c.l.b16 %v125
  %v833 = vunpack.c.h.b16 %v125
  %v834 = vunpack.c.l.b16 %v126
  %v835 = vunpack.c.h.b16 %v126
  %v836 = vunpack.c.l.b16 %v127
  %v837 = vunpack.c.h.b16 %v127
  %v838 = vunpack.c.l.b16 %v128
  %v839 = vunpack.c.h.b16 %v128
  %v840 = vunpack.c.l.b16 %v129
  %v841 = vunpack.c.h.b16 %v129
  %v842 = vunpack.c.l.b16 %v130
  %v843 = vunpack.c.h.b16 %v130
  %v844 = vunpack.c.l.b16 %v131
  %v845 = vunpack.c.h.b16 %v131
  %v846 = vunpack.c.l.b16 %v132
  %v847 = vunpack.c.h.b16 %v132
  %v848 = vunpack.c.l.b16 %v133
  %v849 = vunpack.c.h.b16 %v133
  %v850 = vunpack.c.l.b16 %v134
  %v851 = vunpack.c.h.b16 %v134
  %v852 = vunpack.c.l.b16 %v135
  %v853 = vunpack.c.h.b16 %v135
  %v854 = vunpack.c.l.b16 %v136
  %v855 = vunpack.c.h.b16 %v136
  %v856 = vunpack.c.l.b16 %v137
  %v857 = vunpack.c.h.b16 %v137
  %v858 = vunpack.c.l.b16 %v138
  %v859 = vunpack.c.h.b16 %v138
  %v860 = vunpack.c.l.b16 %v139
  %v861 = vunpack.c.h.b16 %v139
  %v862 = vunpack.c.l.b16 %v140
  %v863 = vunpack.c.h.b16 %v140
  %v864 = vunpack.c.l.b16 %v141
  %v865 = vunpack.c.h.b16 %v141
  %v866 = vunpack.c.l.b16 %v142
  %v867 = vunpack.c.h.b16 %v142
  %v868 = vunpack.c.l.b16 %v143
  %v869 = vunpack.c.h.b16 %v143
  %v870 = vunpack.c.l.b16 %v144
  %v871 = vunpack.c.h.b16 %v144
  %v872 = vunpack.c.l.b16 %v145
  %v873 = vunpack.c.h.b16 %v145
  %v874 = vunpack.c.l.b16 %v146
  %v875 = vunpack.c.h.b16 %v146
  %v876 = vunpack.c.l.b16 %v147
  %v877 = vunpack.c.h.b16 %v147
  %v878 = vunpack.c.l.b16 %v148
  %v879 = vunpack.c.h.b16 %v148
  %v880 = vunpack.c.l.b16 %v149
  %v881 = vunpack.c.h.b16 %v149
  %v882 = vunpack.c.l.b16 %v150
  %v883 = vunpack.c.h.b16 %v150
  %v884 = vunpack.c.l.b16 %v151
  %v885 = vunpack.c.h.b16 %v151
  %v886 = vunpack.c.l.b16 %v152
  %v887 = vunpack.c.h.b16 %v152
  %v888 = vunpack.c.l.b16 %v153
  %v889 = vunpack.c.h.b16 %v153
  %v890 = vunpack.c.l.b16 %v154
  %v891 = vunpack.c.h.b16 %v154
  %v892 = vunpack.c.l.b16 %v155
  %v893 = vunpack.c.h.b16 %v155
  %v894 = vunpack.c.l.b16 %v156
  %v895 = vunpack.c.h.b16 %v156
  %v896 = vunpack.c.l.b16 %v157
  %v897 = vunpack.c.h.b16 %v157
  %v898 = vunpack.c.l.b16 %v158
  %v899 = vunpack.c.h.b16 %v158
  %v900 = vunpack.c.l.b16 %v159
  %v901 = vunpack.c.h.b16 %v159
  %v902 = vunpack.c.l.b16 %v160
  %v903 = vunpack.c.h.b16 %v160
  %v904 = vunpack.c.l.b16 %v161
  %v905 = vunpack.c.h.b16 %v161
  %v906 = vunpack.c.l.b16 %v162
  %v907 = vunpack.c.h.b16 %v162
  %v908 = vunpack.c.l.b16 %v163
  %v909 = vunpack.c.h.b16 %v163
  %v910 = vunpack.c.l.b16 %v164
  %v911 = vunpack.c.h.b16 %v164
  %v912 = vunpack.c.l.b16 %v165
  %v913 = vunpack.c.h.b16 %v165
  %v914 = vunpack.c.l.b16 %v166
  %v915 = vunpack.c.h.b16 %v166
  %v916 = vunpack.c.l.b16 %v167
  %v917 = vunpack.c.h.b16 %v167
  %v918 = vunpack.c.l.b16 %v168
  %v919 = vunpack.c.h.b16 %v168
  %v920 = vunpack.c.l.b16 %v169
  %v921 = vunpack.c.h.b16 %v169
  %v922 = vunpack.c.l.b16 %v170
  %v923 = vunpack.c.h.b16 %v170
  %v924 = vunpack.c.l.b16 %v171
  %v925 = vunpack.c.h.b16 %v171
  %v926 = vunpack.c.l.b16 %v172
  %v927 = vunpack.c.h.b16 %v172
  %v928 = vunpack.c.l.b16 %v173
  %v929 = vunpack.c.h.b16 %v173
  %v930 = vunpack.c.l.b16 %v174
  %v931 = vunpack.c.h.b16 %v174
  %v932 = vunpack.c.l.b16 %v175
  %v933 = vunpack.c.h.b16 %v175
  %v934 = vunpack.c.l.b16 %v176
  %v935 = vunpack.c.h.b16 %v176
  %v936 = vunpack.c.l.b16 %v177
  %v937 = vunpack.c.h.b16 %v177
  %v938 = vunpack.c.l.b16 %v178
  %v939 = vunpack.c.h.b16 %v178
  %v940 = vunpack.c.l.b16 %v179
  %v941 = vunpack.c.h.b16 %v179
  %v942 = vunpack.c.l.b16 %v180
  %v943 = vunpack.c.h.b16 %v180
  %v944 = vunpack.c.l.b16 %v181
  %v945 = vunpack.c.h.b16 %v181
  %v946 = vunpack.c.l.b16 %v182
  %v947 = vunpack.c.h.b16 %v182
  %v948 = vunpack.c.l.b16 %v183
  %v949 = vunpack.c.h.b16 %v183
  %v950 = vunpack.c.l.b16 %v184
  %v951 = vunpack.c.h.b16 %v184
  %v952 = vunpack.c.l.b16 %v185
  %v953 = vunpack.c.h.b16 %v185
  %v954 = vunpack.c.l.b16 %v186
  %v955 = vunpack.c.h.b16 %v186
  %v956 = vunpack.c.l.b16 %v187
  %v957 = vunpack.c.h.b16 %v187
  %v958 = vunpack.c.l.b16 %v188
  %v959 = vunpack.c.h.b16 %v188
  %v960 = vunpack.c.l.b16 %v189
  %v961 = vunpack.c.h.b16 %v189
  %v962 = vunpack.c.l.b16 %v190
  %v963 = vunpack.c.h.b16 %v190
  %v964 = vunpack.c.l.b16 %v191
  %v965 = vunpack.c.h.b16 %v191
  %v966 = vunpack.c.l.b16 %v192
  %v967 = vunpack.c.h.b16 %v192
  %v968 = vunpack.c.l.b16 %v193
  %v969 = vunpack.c.h.b16 %v193
  %v970 = vunpack.c.l.b16 %v194
  %v971 = vunpack.c.h.b16 %v194
  %v972 = vunpack.c.l.b16 %v195
  %v973 = vunpack.c.h.b16 %v195
  %v974 = vunpack.c.l.b16 %v196
  %v975 = vunpack.c.h.b16 %v196
  %v976 = vunpack.c.l.b16 %v197
  %v977 = vunpack.c.h.b16 %v197
  %v978 = vunpack.c.l.b16 %v198
  %v979 = vunpack.c.h.b16 %v198
  %v980 = vunpack.c.l.b16 %v199
  %v981 = vunpack.c.h.b16 %v199
  %v982 = vunpack.c.l.b16 %v200
  %v983 = vunpack.c.h.b16 %v200
  %v984 = vunpack.c.l.b16 %v201
  %v985 = vunpack.c.h.b16 %v201
  %v986 = vunpack.c.l.b16 %v202
  %v987 = vunpack.c.h.b16 %v202
  %v988 = vunpack.c.l.b16 %v203
  %v989 = vunpack.c.h.b16 %v203
  %v990 = vunpack.c.l.b16 %v204
  %v991 = vunpack.c.h.b16 %v204
  %v992 = vunpack.c.l.b16 %v205
  %v993 = vunpack.c.h.b16 %v205
  %v994 = vunpack.c.l.b16 %v206
  %v995 = vunpack.c.h.b16 %v206
  %v996 = vunpack.c.l.b16 %v207
  %v997 = vunpack.c.h.b16 %v207
  %v998 = vunpack.c.l.b16 %v208
  %v999 = vunpack.c.h.b16 %v208
  %v1000 = vunpack.c.l.b16 %v209
  %v1001 = vunpack.c.h.b16 %v209
  %v1002 = vunpack.c.l.b16 %v210
  %v1003 = vunpack.c.h.b16 %v210
  %v1004 = vunpack.c.l.b16 %v211
  %v1005 = vunpack.c.h.b16 %v211
  %v1006 = vunpack.c.l.b16 %v212
  %v1007 = vunpack.c.h.b16 %v212
  %v1008 = vunpack.c.l.b16 %v213
  %v1009 = vunpack.c.h.b16 %v213
  %v1010 = vunpack.c.l.b16 %v214
  %v1011 = vunpack.c.h.b16 %v214
  %v1012 = vunpack.c.l.b16 %v215
  %v1013 = vunpack.c.h.b16 %v215
  %v1014 = vunpack.c.l.b16 %v216
  %v1015 = vunpack.c.h.b16 %v216
  %v1016 = vunpack.c.l.b16 %v217
  %v1017 = vunpack.c.h.b16 %v217
  %v1018 = vunpack.c.l.b16 %v218
  %v1019 = vunpack.c.h.b16 %v218
  %v1020 = vunpack.c.l.b16 %v219
  %v1021 = vunpack.c.h.b16 %v219
  %v1022 = vunpack.c.l.b16 %v220
  %v1023 = vunpack.c.h.b16 %v220
  %v1024 = vunpack.c.l.b16 %v221
  %v1025 = vunpack.c.h.b16 %v221
  %v1026 = vunpack.c.l.b16 %v222
  %v1027 = vunpack.c.h.b16 %v222
  %v1028 = vunpack.c.l.b16 %v223
  %v1029 = vunpack.c.h.b16 %v223
  %v1030 = vunpack.c.l.b16 %v224
  %v1031 = vunpack.c.h.b16 %v224
  %v1032 = vunpack.c.l.b16 %v225
  %v1033 = vunpack.c.h.b16 %v225
  %v1034 = vunpack.c.l.b16 %v226
  %v1035 = vunpack.c.h.b16 %v226
  %v1036 = vunpack.c.l.b16 %v227
  %v1037 = vunpack.c.h.b16 %v227
  %v1038 = vunpack.c.l.b16 %v228
  %v1039 = vunpack.c.h.b16 %v228
  %v1040 = vunpack.c.l.b16 %v229
  %v1041 = vunpack.c.h.b16 %v229
  %v1042 = vunpack.c.l.b16 %v230
  %v1043 = vunpack.c.h.b16 %v230
  %v1044 = vunpack.c.l.b16 %v231
  %v1045 = vunpack.c.h.b16 %v231
  %v1046 = vunpack.c.l.b16 %v232
  %v1047 = vunpack.c.h.b16 %v232
  %v1048 = vunpack.c.l.b16 %v233
  %v1049 = vunpack.c.h.b16 %v233
  %v1050 = vunpack.c.l.b16 %v234
  %v1051 = vunpack.c.h.b16 %v234
  %v1052 = vunpack.c.l.b16 %v235
  %v1053 = vunpack.c.h.b16 %v235
  %v1054 = vunpack.c.l.b16 %v236
  %v1055 = vunpack.c.h.b16 %v236
  %v1056 = vunpack.c.l.b16 %v237
  %v1057 = vunpack.c.h.b16 %v237
  %v1058 = vunpack.c.l.b16 %v238
  %v1059 = vunpack.c.h.b16 %v238
  %v1060 = vunpack.c.l.b16 %v239
  %v1061 = vunpack.c.h.b16 %v239
  %v1062 = vunpack.c.l.b16 %v240
  %v1063 = vunpack.c.h.b16 %v240
  %v1064 = vunpack.c.l.b16 %v241
  %v1065 = vunpack.c.h.b16 %v241
  %v1066 = vunpack.c.l.b16 %v242
  %v1067 = vunpack.c.h.b16 %v242
  %v1068 = vunpack.c.l.b16 %v243
  %v1069 = vunpack.c.h.b16 %v243
  %v1070 = vunpack.c.l.b16 %v244
  %v1071 = vunpack.c.h.b16 %v244
  %v1072 = vunpack.c.l.b16 %v245
  %v1073 = vunpack.c.h.b16 %v245
  %v1074 = vunpack.c.l.b16 %v246
  %v1075 = vunpack.c.h.b16 %v246
  %v1076 = vunpack.c.l.b16 %v247
  %v1077 = vunpack.c.h.b16 %v247
  %v1078 = vunpack.c.l.b16 %v248
  %v1079 = vunpack.c.h.b16 %v248
  %v1080 = vunpack.c.l.b16 %v249
  %v1081 = vunpack.c.h.b16 %v249
  %v1082 = vunpack.c.l.b16 %v250
  %v1083 = vunpack.c.h.b16 %v250
  %v1084 = vunpack.c.l.b16 %v251
  %v1085 = vunpack.c.h.b16 %v251
  %v1086 = vunpack.c.l.b16 %v252
  %v1087 = vunpack.c.h.b16 %v252
  %v1088 = vunpack.c.l.b16 %v253
  %v1089 = vunpack.c.h.b16 %v253
  %v1090 = vunpack.c.l.b16 %v254
  %v1091 = vunpack.c.h.b16 %v254
  %v1092 = vunpack.c.l.b16 %v255
  %v1093 = vunpack.c.h.b16 %v255
  %v1094 = vunpack.c.l.b16 %v256
  %v1095 = vunpack.c.h.b16 %v256
  %v1096 = vunpack.c.l.b16 %v257
  %v1097 = vunpack.c.h.b16 %v257
  %v1098 = vunpack.c.l.b16 %v258
  %v1099 = vunpack.c.h.b16 %v258
  %v1100 = vunpack.c.l.b16 %v259
  %v1101 = vunpack.c.h.b16 %v259
  %v1102 = vunpack.c.l.b16 %v260
  %v1103 = vunpack.c.h.b16 %v260
  %v1104 = vunpack.c.l.b16 %v261
  %v1105 = vunpack.c.h.b16 %v261
  %v1106 = vunpack.c.l.b16 %v262
  %v1107 = vunpack.c.h.b16 %v262
  %v1108 = vunpack.c.l.b16 %v263
  %v1109 = vunpack.c.h.b16 %v263
  %v1110 = vunpack.c.l.b16 %v264
  %v1111 = vunpack.c.h.b16 %v264
  %v1112 = vunpack.c.l.b16 %v265
  %v1113 = vunpack.c.h.b16 %v265
  %v1114 = vunpack.c.l.b16 %v266
  %v1115 = vunpack.c.h.b16 %v266
  %v1116 = vunpack.c.l.b16 %v267
  %v1117 = vunpack.c.h.b16 %v267
  %v1118 = vunpack.c.l.b16 %v268
  %v1119 = vunpack.c.h.b16 %v268
  %v1120 = vunpack.c.l.b16 %v269
  %v1121 = vunpack.c.h.b16 %v269
  %v1122 = vunpack.c.l.b16 %v270
  %v1123 = vunpack.c.h.b16 %v270
  %v1124 = vunpack.c.l.b16 %v271
  %v1125 = vunpack.c.h.b16 %v271
  %v1126 = vunpack.c.l.b16 %v272
  %v1127 = vunpack.c.h.b16 %v272
  %v1128 = vunpack.c.l.b16 %v273
  %v1129 = vunpack.c.h.b16 %v273
  %v1130 = vunpack.c.l.b16 %v274
  %v1131 = vunpack.c.h.b16 %v274
  %v1132 = vunpack.c.l.b16 %v275
  %v1133 = vunpack.c.h.b16 %v275
  %v1134 = vunpack.c.l.b16 %v276
  %v1135 = vunpack.c.h.b16 %v276
  %v1136 = vunpack.c.l.b16 %v277
  %v1137 = vunpack.c.h.b16 %v277
  %v1138 = vunpack.c.l.b16 %v278
  %v1139 = vunpack.c.h.b16 %v278
  %v1140 = vunpack.c.l.b16 %v279
  %v1141 = vunpack.c.h.b16 %v279
  %v1142 = vunpack.c.l.b16 %v280
  %v1143 = vunpack.c.h.b16 %v280
  %v1144 = vunpack.c.l.b16 %v281
  %v1145 = vunpack.c.h.b16 %v281
  %v1146 = vunpack.c.l.b16 %v282
  %v1147 = vunpack.c.h.b16 %v282
  %v1148 = vunpack.c.l.b16 %v283
  %v1149 = vunpack.c.h.b16 %v283
  %v1150 = vunpack.c.l.b16 %v284
  %v1151 = vunpack.c.h.b16 %v284
  %v1152 = vunpack.c.l.b16 %v285
  %v1153 = vunpack.c.h.b16 %v285
  %v1154 = vunpack.c.l.b16 %v286
  %v1155 = vunpack.c.h.b16 %v286
  %v1156 = vunpack.c.l.b16 %v287
  %v1157 = vunpack.c.h.b16 %v287
  %v1158 = vunpack.c.l.b16 %v288
  %v1159 = vunpack.c.h.b16 %v288
  %v1160 = vunpack.c.l.b16 %v289
  %v1161 = vunpack.c.h.b16 %v289
  %v1162 = vunpack.c.l.b16 %v290
  %v1163 = vunpack.c.h.b16 %v290
  %v1164 = vunpack.c.l.b16 %v291
  %v1165 = vunpack.c.h.b16 %v291
  %v1166 = vunpack.c.l.b16 %v292
  %v1167 = vunpack.c.h.b16 %v292
  %v1168 = vunpack.c.l.b16 %v293
  %v1169 = vunpack.c.h.b16 %v293
  %v1170 = vunpack.c.l.b16 %v294
  %v1171 = vunpack.c.h.b16 %v294
  %v1172 = vunpack.c.l.b16 %v295
  %v1173 = vunpack.c.h.b16 %v295
  %v1174 = vunpack.c.l.b16 %v296
  %v1175 = vunpack.c.h.b16 %v296
  %v1176 = vunpack.c.l.b16 %v297
  %v1177 = vunpack.c.h.b16 %v297
  %v1178 = vunpack.c.l.b16 %v298
  %v1179 = vunpack.c.h.b16 %v298
  %v1180 = vunpack.c.l.b16 %v299
  %v1181 = vunpack.c.h.b16 %v299
  %v1182 = vunpack.c.l.b16 %v300
  %v1183 = vunpack.c.h.b16 %v300
  %v1184 = vunpack.c.l.b16 %v301
  %v1185 = vunpack.c.h.b16 %v301
  %v1186 = vunpack.c.l.b16 %v302
  %v1187 = vunpack.c.h.b16 %v302
  %v1188 = vunpack.c.l.b16 %v303
  %v1189 = vunpack.c.h.b16 %v303
  %v1190 = vunpack.c.l.b16 %v304
  %v1191 = vunpack.c.h.b16 %v304
  %v1192 = vunpack.c.l.b16 %v305
  %v1193 = vunpack.c.h.b16 %v305
  %v1194 = vunpack.c.l.b16 %v306
  %v1195 = vunpack.c.h.b16 %v306
  %v1196 = vunpack.c.l.b16 %v307
  %v1197 = vunpack.c.h.b16 %v307
  %v1198 = vunpack.c.l.b16 %v308
  %v1199 = vunpack.c.h.b16 %v308
  %v1200 = vunpack.c.l.b16 %v309
  %v1201 = vunpack.c.h.b16 %v309
  %v1202 = vunpack.c.l.b16 %v310
  %v1203 = vunpack.c.h.b16 %v310
  %v1204 = vunpack.c.l.b16 %v311
  %v1205 = vunpack.c.h.b16 %v311
  %v1206 = vunpack.c.l.b16 %v312
  %v1207 = vunpack.c.h.b16 %v312
  %v1208 = vunpack.c.l.b16 %v313
  %v1209 = vunpack.c.h.b16 %v313
  %v1210 = vunpack.c.l.b16 %v314
  %v1211 = vunpack.c.h.b16 %v314
  %v1212 = vunpack.c.l.b16 %v315
  %v1213 = vunpack.c.h.b16 %v315
  %v1214 = vunpack.c.l.b16 %v316
  %v1215 = vunpack.c.h.b16 %v316
  %v1216 = vunpack.c.l.b16 %v317
  %v1217 = vunpack.c.h.b16 %v317
  %v1218 = vunpack.c.l.b16 %v318
  %v1219 = vunpack.c.h.b16 %v318
  %v1220 = vunpack.c.l.b16 %v319
  %v1221 = vunpack.c.h.b16 %v319
  %v1222 = vunpack.c.l.b16 %v320
  %v1223 = vunpack.c.h.b16 %v320
  %v1224 = vpack.c.b16 %v650, %v648
  %v1225 = vpack.c.b16 %v651, %v649
  %v1226 = vpack.c.b16 %v654, %v652
  %v1227 = vpack.c.b16 %v655, %v653
  %v1228 = vpack.c.b16 %v658, %v656
  %v1229 = vpack.c.b16 %v659, %v657
  %v1230 = vpack.c.b16 %v662, %v660
  %v1231 = vpack.c.b16 %v663, %v661
  %v1232 = vpack.c.b16 %v666, %v664
  %v1233 = vpack.c.b16 %v667, %v665
  %v1234 = vpack.c.b16 %v670, %v668
  %v1235 = vpack.c.b16 %v671, %v669
  %v1236 = vpack.c.b16 %v674, %v672
  %v1237 = vpack.c.b16 %v675, %v673
  %v1238 = vpack.c.b16 %v678, %v676
  %v1239 = vpack.c.b16 %v679, %v677
  %v1240 = vpack.c.b16 %v682, %v680
  %v1241 = vpack.c.b16 %v683, %v681
  %v1242 = vpack.c.b16 %v686, %v684
  %v1243 = vpack.c.b16 %v687, %v685
  %v1244 = vpack.c.b16 %v690, %v688
  %v1245 = vpack.c.b16 %v691, %v689
  %v1246 = vpack.c.b16 %v694, %v692
  %v1247 = vpack.c.b16 %v695, %v693
  %v1248 = vpack.c.b16 %v698, %v696
  %v1249 = vpack.c.b16 %v699, %v697
  %v1250 = vpack.c.b16 %v702, %v700
  %v1251 = vpack.c.b16 %v703, %v701
  %v1252 = vpack.c.b16 %v706, %v704
  %v1253 = vpack.c.b16 %v707, %v705
  %v1254 = vpack.c.b16 %v710, %v708
  %v1255 = vpack.c.b16 %v711, %v709
  %v1256 = vpack.c.b16 %v714, %v712
  %v1257 = vpack.c.b16 %v715, %v713
  %v1258 = vpack.c.b16 %v718, %v716
  %v1259 = vpack.c.b16 %v719, %v717
  %v1260 = vpack.c.b16 %v722, %v720
  %v1261 = vpack.c.b16 %v723, %v721
  %v1262 = vpack.c.b16 %v726, %v724
  %v1263 = vpack.c.b16 %v727, %v725
  %v1264 = vpack.c.b16 %v730, %v728
  %v1265 = vpack.c.b16 %v731, %v729
  %v1266 = vpack.c.b16 %v734, %v732
  %v1267 = vpack.c.b16 %v735, %v733
  %v1268 = vpack.c.b16 %v738, %v736
  %v1269 = vpack.c.b16 %v739, %v737
  %v1270 = vpack.c.b16 %v742, %v740
  %v1271 = vpack.c.b16 %v743, %v741
  %v1272 = vpack.c.b16 %v746, %v744
  %v1273 = vpack.c.b16 %v747, %v745
  %v1274 = vpack.c.b16 %v750, %v748
  %v1275 = vpack.c.b16 %v751, %v749
  %v1276 = vpack.c.b16 %v754, %v752
  %v1277 = vpack.c.b16 %v755, %v753
  %v1278 = vpack.c.b16 %v758, %v756
  %v1279 = vpack.c.b16 %v759, %v757
  %v1280 = vpack.c.b16 %v762, %v760
  %v1281 = vpack.c.b16 %v763, %v761
  %v1282 = vpack.c.b16 %v766, %v764
  %v1283 = vpack.c.b16 %v767, %v765
  %v1284 = vpack.c.b16 %v770, %v768
  %v1285 = vpack.c.b16 %v771, %v769
  %v1286 = vpack.c.b16 %v774, %v772
  %v1287 = vpack.c.b16 %v775, %v773
  %v1288 = vpack.c.b16 %v778, %v776
  %v1289 = vpack.c.b16 %v779, %v777
  %v1290 = vpack.c.b16 %v782, %v780
  %v1291 = vpack.c.b16 %v783, %v781
  %v1292 = vpack.c.b16 %v786, %v784
  %v1293 = vpack.c.b16 %v787, %v785
  %v1294 = vpack.c.b16 %v790, %v788
  %v1295 = vpack.c.b16 %v791, %v789
  %v1296 = vpack.c.b16 %v794, %v792
  %v1297 = vpack.c.b16 %v795, %v793
  %v1298 = vpack.c.b16 %v798, %v796
  %v1299 = vpack.c.b16 %v799, %v797
  %v1300 = vpack.c.b16 %v802, %v800
  %v1301 = vpack.c.b16 %v803, %v801
  %v1302 = vpack.c.b16 %v806, %v804
  %v1303 = vpack.c.b16 %v807, %v805
  %v1304 = vpack.c.b16 %v810, %v808
  %v1305 = vpack.c.b16 %v811, %v809
  %v1306 = vpack.c.b16 %v814, %v812
  %v1307 = vpack.c.b16 %v815, %v813
  %v1308 = vpack.c.b16 %v818, %v816
  %v1309 = vpack.c.b16 %v819, %v817
  %v1310 = vpack.c.b16 %v822, %v820
  %v1311 = vpack.c.b16 %v823, %v821
  %v1312 = vpack.c.b16 %v826, %v824
  %v1313 = vpack.c.b16 %v827, %v825
  %v1314 = vpack.c.b16 %v830, %v828
  %v1315 = vpack.c.b16 %v831, %v829
  %v1316 = vpack.c.b16 %v834, %v832
  %v1317 = vpack.c.b16 %v835, %v833
  %v1318 = vpack.c.b16 %v838, %v836
  %v1319 = vpack.c.b16 %v839, %v837
  %v1320 = vpack.c.b16 %v842, %v840
  %v1321 = vpack.c.b16 %v843, %v841
  %v1322 = vpack.c.b16 %v846, %v844
  %v1323 = vpack.c.b16 %v847, %v845
  %v1324 = vpack.c.b16 %v850, %v848
  %v1325 = vpack.c.b16 %v851, %v849
  %v1326 = vpack.c.b16 %v854, %v852
  %v1327 = vpack.c.b16 %v855, %v853
  %v1328 = vpack.c.b16 %v858, %v856
  %v1329 = vpack.c.b16 %v859, %v857
  %v1330 = vpack.c.b16 %v862, %v860
  %v1331 = vpack.c.b16 %v863, %v861
  %v1332 = vpack.c.b16 %v866, %v864
  %v1333 = vpack.c.b16 %v867, %v865
  %v1334 = vpack.c.b16 %v870, %v868
  %v1335 = vpack.c.b16 %v871, %v869
  %v1336 = vpack.c.b16 %v874, %v872
  %v1337 = vpack.c.b16 %v875, %v873
  %v1338 = vpack.c.b16 %v878, %v876
  %v1339 = vpack.c.b16 %v879, %v877
  %v1340 = vpack.c.b16 %v882, %v880
  %v1341 = vpack.c.b16 %v883, %v881
  %v1342 = vpack.c.b16 %v886, %v884
  %v1343 = vpack.c.b16 %v887, %v885
  %v1344 = vpack.c.b16 %v890, %v888
  %v1345 = vpack.c.b16 %v891, %v889
  %v1346 = vpack.c.b16 %v894, %v892
  %v1347 = vpack.c.b16 %v895, %v893
  %v1348 = vpack.c.b16 %v898, %v896
  %v1349 = vpack.c.b16 %v899, %v897
  %v1350 = vpack.c.b16 %v902, %v900
  %v1351 = vpack.c.b16 %v903, %v901
  %v1352 = vpack.c.b16 %v906, %v904
  %v1353 = vpack.c.b16 %v907, %v905
  %v1354 = vpack.c.b16 %v910, %v908
  %v1355 = vpack.c.b16 %v911, %v909
  %v1356 = vpack.c.b16 %v914, %v912
  %v1357 = vpack.c.b16 %v915, %v913
  %v1358 = vpack.c.b16 %v918, %v916
  %v1359 = vpack.c.b16 %v919, %v917
  %v1360 = vpack.c.b16 %v922, %v920
  %v1361 = vpack.c.b16 %v923, %v921
  %v1362 = vpack.c.b16 %v926, %v924
  %v1363 = vpack.c.b16 %v927, %v925
  %v1364 = vpack.c.b16 %v930, %v928
  %v1365 = vpack.c.b16 %v931, %v929
  %v1366 = vpack.c.b16 %v934, %v932
  %v1367 = vpack.c.b16 %v935, %v933
  %v1368 = vpack.c.b16 %v938, %v936
  %v1369 = vpack.c.b16 %v939, %v937
  %v1370 = vpack.c.b16 %v942, %v940
  %v1371 = vpack.c.b16 %v943, %v941
  %v1372 = vpack.c.b16 %v946, %v944
  %v1373 = vpack.c.b16 %v947, %v945
  %v1374 = vpack.c.b16 %v950, %v948
  %v1375 = vpack.c.b16 %v951, %v949
  %v1376 = vpack.c.b16 %v954, %v952
  %v1377 = vpack.c.b16 %v955, %v953
  %v1378 = vpack.c.b16 %v958, %v956
  %v1379 = vpack.c.b16 %v959, %v957
  %v1380 = vpack.c.b16 %v962, %v960
  %v1381 = vpack.c.b16 %v963, %v961
  %v1382 = vpack.c.b16 %v966, %v964
  %v1383 = vpack.c.b16 %v967, %v965
  %v1384 = vpack.c.b16 %v970, %v968
  %v1385 = vpack.c.b16 %v971, %v969
  %v1386 = vpack.c.b16 %v974, %v972
  %v1387 = vpack.c.b16 %v975, %v973
  %v1388 = vpack.c.b16 %v978, %v976
  %v1389 = vpack.c.b16 %v979, %v977
  %v1390 = vpack.c.b16 %v982, %v980
  %v1391 = vpack.c.b16 %v983, %v981
  %v1392 = vpack.c.b16 %v986, %v984
  %v1393 = vpack.c.b16 %v987, %v985
  %v1394 = vpack.c.b16 %v990, %v988
  %v1395 = vpack.c.b16 %v991, %v989
  %v1396 = vpack.c.b16 %v994, %v992
  %v1397 = vpack.c.b16 %v995, %v993
  %v1398 = vpack.c.b16 %v998, %v996
  %v1399 = vpack.c.b16 %v999, %v997
  %v1400 = vpack.c.b16 %v1002, %v1000
  %v1401 = vpack.c.b16 %v1003, %v1001
  %v1402 = vpack.c.b16 %v1006, %v1004
  %v1403 = vpack.c.b16 %v1007, %v1005
  %v1404 = vpack.c.b16 %v1010, %v1008
  %v1405 = vpack.c.b16 %v1011, %v1009
  %v1406 = vpack.c.b16 %v1014, %v1012
  %v1407 = vpack.c.b16 %v1015, %v1013
  %v1408 = vpack.c.b16 %v1018, %v1016
  %v1409 = vpack.c.b16 %v1019, %v1017
  %v1410 = vpack.c.b16 %v1022, %v1020
  %v1411 = vpack.c.b16 %v1023, %v1021
  %v1412 = vpack.c.b16 %v1026, %v1024
  %v1413 = vpack.c.b16 %v1027, %v1025
  %v1414 = vpack.c.b16 %v1030, %v1028
  %v1415 = vpack.c.b16 %v1031, %v1029
  %v1416 = vpack.c.b16 %v1034, %v1032
  %v1417 = vpack.c.b16 %v1035, %v1033
  %v1418 = vpack.c.b16 %v1038, %v1036
  %v1419 = vpack.c.b16 %v1039, %v1037
  %v1420 = vpack.c.b16 %v1042, %v1040
  %v1421 = vpack.c.b16 %v1043, %v1041
  %v1422 = vpack.c.b16 %v1046, %v1044
  %v1423 = vpack.c.b16 %v1047, %v1045
  %v1424 = vpack.c.b16 %v1050, %v1048
  %v1425 = vpack.c.b16 %v1051, %v1049
  %v1426 = vpack.c.b16 %v1054, %v1052
  %v1427 = vpack.c.b16 %v1055, %v1053
  %v1428 = vpack.c.b16 %v1058, %v1056
  %v1429 = vpack.c.b16 %v1059, %v1057
  %v1430 = vpack.c.b16 %v1062, %v1060
  %v1431 = vpack.c.b16 %v1063, %v1061
  %v1432 = vpack.c.b16 %v1066, %v1064
  %v1433 = vpack.c.b16 %v1067, %v1065
  %v1434 = vpack.c.b16 %v1070, %v1068
  %v1435 = vpack.c.b16 %v1071, %v1069
  %v1436 = vpack.c.b16 %v1074, %v1072
  %v1437 = vpack.c.b16 %v1075, %v1073
  %v1438 = vpack.c.b16 %v1078, %v1076
  %v1439 = vpack.c.b16 %v1079, %v1077
  %v1440 = vpack.c.b16 %v1082, %v1080
  %v1441 = vpack.c.b16 %v1083, %v1081
  %v1442 = vpack.c.b16 %v1086, %v1084
  %v1443 = vpack.c.b16 %v1087, %v1085
  %v1444 = vpack.c.b16 %v1090, %v1088
  %v1445 = vpack.c.b16 %v1091, %v1089
  %v1446 = vpack.c.b16 %v1094, %v1092
  %v1447 = vpack.c.b16 %v1095, %v1093
  %v1448 = vpack.c.b16 %v1098, %v1096
  %v1449 = vpack.c.b16 %v1099, %v1097
  %v1450 = vpack.c.b16 %v1102, %v1100
  %v1451 = vpack.c.b16 %v1103, %v1101
  %v1452 = vpack.c.b16 %v1106, %v1104
  %v1453 = vpack.c.b16 %v1107, %v1105
  %v1454 = vpack.c.b16 %v1110, %v1108
  %v1455 = vpack.c.b16 %v1111, %v1109
  %v1456 = vpack.c.b16 %v1114, %v1112
  %v1457 = vpack.c.b16 %v1115, %v1113
  %v1458 = vpack.c.b16 %v1118, %v1116
  %v1459 = vpack.c.b16 %v1119, %v1117
  %v1460 = vpack.c.b16 %v1122, %v1120
  %v1461 = vpack.c.b16 %v1123, %v1121
  %v1462 = vpack.c.b16 %v1126, %v1124
  %v1463 = vpack.c.b16 %v1127, %v1125
  %v1464 = vpack.c.b16 %v1130, %v1128
  %v1465 = vpack.c.b16 %v1131, %v1129
  %v1466 = vpack.c.b16 %v1134, %v1132
  %v1467 = vpack.c.b16 %v1135, %v1133
  %v1468 = vpack.c.b16 %v1138, %v1136
  %v1469 = vpack.c.b16 %v1139, %v1137
  %v1470 = vpack.c.b16 %v1142, %v1140
  %v1471 = vpack.c.b16 %v1143, %v1141
  %v1472 = vpack.c.b16 %v1146, %v1144
  %v1473 = vpack.c.b16 %v1147, %v1145
  %v1474 = vpack.c.b16 %v1150, %v1148
  %v1475 = vpack.c.b16 %v1151, %v1149
  %v1476 = vpack.c.b16 %v1154, %v1152
  %v1477 = vpack.c.b16 %v1155, %v1153
  %v1478 = vpack.c.b16 %v1158, %v1156
  %v1479 = vpack.c.b16 %v1159, %v1157
  %v1480 = vpack.c.b16 %v1162, %v1160
  %v1481 = vpack.c.b16 %v1163, %v1161
  %v1482 = vpack.c.b16 %v1166, %v1164
  %v1483 = vpack.c.b16 %v1167, %v1165
  %v1484 = vpack.c.b16 %v1170, %v1168
  %v1485 = vpack.c.b16 %v1171, %v1169
  %v1486 = vpack.c.b16 %v1174, %v1172
  %v1487 = vpack.c.b16 %v1175, %v1173
  %v1488 = vpack.c.b16 %v1178, %v1176
  %v1489 = vpack.c.b16 %v1179, %v1177
  %v1490 = vpack.c.b16 %v1182, %v1180
  %v1491 = vpack.c.b16 %v1183, %v1181
  %v1492 = vpack.c.b16 %v1186, %v1184
  %v1493 = vpack.c.b16 %v1187, %v1185
  %v1494 = vpack.c.b16 %v1190, %v1188
  %v1495 = vpack.c.b16 %v1191, %v1189
  %v1496 = vpack.c.b16 %v1194, %v1192
  %v1497 = vpack.c.b16 %v1195, %v1193
  %v1498 = vpack.c.b16 %v1198, %v1196
  %v1499 = vpack.c.b16 %v1199, %v1197
  %v1500 = vpack.c.b16 %v1202, %v1200
  %v1501 = vpack.c.b16 %v1203, %v1201
  %v1502 = vpack.c.b16 %v1206, %v1204
  %v1503 = vpack.c.b16 %v1207, %v1205
  %v1504 = vpack.c.b16 %v1210, %v1208
  %v1505 = vpack.c.b16 %v1211, %v1209
  %v1506 = vpack.c.b16 %v1214, %v1212
  %v1507 = vpack.c.b16 %v1215, %v1213
  %v1508 = vpack.c.b16 %v1218, %v1216
  %v1509 = vpack.c.b16 %v1219, %v1217
  %v1510 = vpack.c.b16 %v1222, %v1220
  %v1511 = vpack.c.b16 %v1223, %v1221
  %v1832 = vunpack.c.l.b16 %v321
  %v1833 = vunpack.c.l.b16 %v322
  %v1834 = vunpack.c.l.b16 %v323
  %v1835 = vunpack.c.l.b16 %v324
  %v1836 = vunpack.c.l.b16 %v325
  %v1837 = vunpack.c.l.b16 %v326
  %v1838 = vunpack.c.l.b16 %v327
  %v1839 = vunpack.c.l.b16 %v328
  %v1840 = vunpack.c.l.b16 %v329
  %v1841 = vunpack.c.l.b16 %v330
  %v1842 = vunpack.c.l.b16 %v331
  %v1843 = vunpack.c.l.b16 %v332
  %v1844 = vunpack.c.l.b16 %v333
  %v1845 = vunpack.c.l.b16 %v334
  %v1846 = vunpack.c.l.b16 %v335
  %v1847 = vunpack.c.l.b16 %v336
  %v1848 = vunpack.c.l.b16 %v337
  %v1849 = vunpack.c.l.b16 %v338
  %v1850 = vunpack.c.l.b16 %v339
  %v1851 = vunpack.c.l.b16 %v340
  %v1852 = vunpack.c.l.b16 %v341
  %v1853 = vunpack.c.l.b16 %v342
  %v1854 = vunpack.c.l.b16 %v343
  %v1855 = vunpack.c.l.b16 %v344
  %v1856 = vunpack.c.l.b16 %v345
  %v1857 = vunpack.c.l.b16 %v346
  %v1858 = vunpack.c.l.b16 %v347
  %v1859 = vunpack.c.l.b16 %v348
  %v1860 = vunpack.c.l.b16 %v349
  %v1861 = vunpack.c.l.b16 %v350
  %v1862 = vunpack.c.l.b16 %v351
  %v1863 = vunpack.c.l.b16 %v352
  %v1864 = vpack.c.b16 %v1833, %v1832
  %v1865 = vpack.c.b16 %v1835, %v1834
  %v1866 = vpack.c.b16 %v1837, %v1836
  %v1867 = vpack.c.b16 %v1839, %v1838
  %v1868 = vpack.c.b16 %v1841, %v1840
  %v1869 = vpack.c.b16 %v1843, %v1842
  %v1870 = vpack.c.b16 %v1845, %v1844
  %v1871 = vpack.c.b16 %v1847, %v1846
  %v1872 = vpack.c.b16 %v1849, %v1848
  %v1873 = vpack.c.b16 %v1851, %v1850
  %v1874 = vpack.c.b16 %v1853, %v1852
  %v1875 = vpack.c.b16 %v1855, %v1854
  %v1876 = vpack.c.b16 %v1857, %v1856
  %v1877 = vpack.c.b16 %v1859, %v1858
  %v1878 = vpack.c.b16 %v1861, %v1860
  %v1879 = vpack.c.b16 %v1863, %v1862
  %1896 = vmatprep.subr.bf16.mxu0 0
  %1897 = vmatpush1.bf16.msra.mxu0 %v1871
  %1898 = vmatprep.subr.bf16.mxu0 0
  %1899 = vmatpush1.bf16.msra.mxu0 %v1870
  %1900 = vmatprep.subr.bf16.mxu0 0
  %1901 = vmatpush1.bf16.msra.mxu0 %v1869
  %1902 = vmatprep.subr.bf16.mxu0 0
  %1903 = vmatpush1.bf16.msra.mxu0 %v1868
  %1904 = vmatprep.subr.bf16.mxu0 0
  %1905 = vmatpush1.bf16.msra.mxu0 %v1867
  %1906 = vmatprep.subr.bf16.mxu0 0
  %1907 = vmatpush1.bf16.msra.mxu0 %v1866
  %1908 = vmatprep.subr.bf16.mxu0 0
  %1909 = vmatpush1.bf16.msra.mxu0 %v1865
  %1910 = vmatprep.subr.bf16.mxu0 0
  %1911 = vmatpush1.bf16.msra.mxu0 %v1864
  %1912 = vmatprep.subr.bf16.mxu0 0
  %1913 = vmatpush2.bf16.msra.mxu0 %v1879
  %1914 = vmatprep.subr.bf16.mxu0 0
  %1915 = vmatpush2.bf16.msra.mxu0 %v1878
  %1916 = vmatprep.subr.bf16.mxu0 0
  %1917 = vmatpush2.bf16.msra.mxu0 %v1877
  %1918 = vmatprep.subr.bf16.mxu0 0
  %1919 = vmatpush2.bf16.msra.mxu0 %v1876
  %1920 = vmatprep.subr.bf16.mxu0 0
  %1921 = vmatpush2.bf16.msra.mxu0 %v1875
  %1922 = vmatprep.subr.bf16.mxu0 0
  %1923 = vmatpush2.bf16.msra.mxu0 %v1874
  %1924 = vmatprep.subr.bf16.mxu0 0
  %1925 = vmatpush2.bf16.msra.mxu0 %v1873
  %1926 = vmatprep.subr.bf16.mxu0 0
  %1927 = vmatpush2.bf16.msra.mxu0 %v1872
  %1928 = vmatprep.mubr.bf16.mxu0 %v1225
  %1929 = vmatmul.mubr.bf16.gmra.mxu0 %v1224
  %v1930 = vpop.f32.mrf.mxu0
  %v1931 = vadd.f32 %v358, %v1930
  %v1932 = vpop.f32.mrf.mxu0
  %v1933 = vpop.f32.mrf.mxu0
  %v1934 = vadd.f32 %v358, %v1933
  %v1935 = vpop.f32.mrf.mxu0
  %1936 = vmatprep.mubr.bf16.mxu0 %v1227
  %1937 = vmatmul.mubr.bf16.gmra.mxu0 %v1226
  %v1938 = vpop.f32.mrf.mxu0
  %v1939 = vadd.f32 %v358, %v1938
  %v1940 = vpop.f32.mrf.mxu0
  %v1941 = vpop.f32.mrf.mxu0
  %v1942 = vadd.f32 %v358, %v1941
  %v1943 = vpop.f32.mrf.mxu0
  %1944 = vmatprep.mubr.bf16.mxu0 %v1229
  %1945 = vmatmul.mubr.bf16.gmra.mxu0 %v1228
  %v1946 = vpop.f32.mrf.mxu0
  %v1947 = vadd.f32 %v358, %v1946
  %v1948 = vpop.f32.mrf.mxu0
  %v1949 = vpop.f32.mrf.mxu0
  %v1950 = vadd.f32 %v358, %v1949
  %v1951 = vpop.f32.mrf.mxu0
  %1952 = vmatprep.mubr.bf16.mxu0 %v1231
  %1953 = vmatmul.mubr.bf16.gmra.mxu0 %v1230
  %v1954 = vpop.f32.mrf.mxu0
  %v1955 = vadd.f32 %v358, %v1954
  %v1956 = vpop.f32.mrf.mxu0
  %v1957 = vpop.f32.mrf.mxu0
  %v1958 = vadd.f32 %v358, %v1957
  %v1959 = vpop.f32.mrf.mxu0
  %1960 = vmatprep.mubr.bf16.mxu0 %v1233
  %1961 = vmatmul.mubr.bf16.gmra.mxu0 %v1232
  %v1962 = vpop.f32.mrf.mxu0
  %v1963 = vadd.f32 %v358, %v1962
  %v1964 = vpop.f32.mrf.mxu0
  %v1965 = vpop.f32.mrf.mxu0
  %v1966 = vadd.f32 %v358, %v1965
  %v1967 = vpop.f32.mrf.mxu0
  %1968 = vmatprep.mubr.bf16.mxu0 %v1235
  %1969 = vmatmul.mubr.bf16.gmra.mxu0 %v1234
  %v1970 = vpop.f32.mrf.mxu0
  %v1971 = vadd.f32 %v358, %v1970
  %v1972 = vpop.f32.mrf.mxu0
  %v1973 = vpop.f32.mrf.mxu0
  %v1974 = vadd.f32 %v358, %v1973
  %v1975 = vpop.f32.mrf.mxu0
  %1976 = vmatprep.mubr.bf16.mxu0 %v1237
  %1977 = vmatmul.mubr.bf16.gmra.mxu0 %v1236
  %v1978 = vpop.f32.mrf.mxu0
  %v1979 = vadd.f32 %v358, %v1978
  %v1980 = vpop.f32.mrf.mxu0
  %v1981 = vpop.f32.mrf.mxu0
  %v1982 = vadd.f32 %v358, %v1981
  %v1983 = vpop.f32.mrf.mxu0
  %1984 = vmatprep.mubr.bf16.mxu0 %v1239
  %1985 = vmatmul.mubr.bf16.gmra.mxu0 %v1238
  %v1986 = vpop.f32.mrf.mxu0
  %v1987 = vadd.f32 %v358, %v1986
  %v1988 = vpop.f32.mrf.mxu0
  %v1989 = vpop.f32.mrf.mxu0
  %v1990 = vadd.f32 %v358, %v1989
  %v1991 = vpop.f32.mrf.mxu0
  %1992 = vmatprep.mubr.bf16.mxu0 %v1241
  %1993 = vmatmul.mubr.bf16.gmra.mxu0 %v1240
  %v1994 = vpop.f32.mrf.mxu0
  %v1995 = vadd.f32 %v358, %v1994
  %v1996 = vpop.f32.mrf.mxu0
  %v1997 = vpop.f32.mrf.mxu0
  %v1998 = vadd.f32 %v358, %v1997
  %v1999 = vpop.f32.mrf.mxu0
  %2000 = vmatprep.mubr.bf16.mxu0 %v1243
  %2001 = vmatmul.mubr.bf16.gmra.mxu0 %v1242
  %v2002 = vpop.f32.mrf.mxu0
  %v2003 = vadd.f32 %v358, %v2002
  %v2004 = vpop.f32.mrf.mxu0
  %v2005 = vpop.f32.mrf.mxu0
  %v2006 = vadd.f32 %v358, %v2005
  %v2007 = vpop.f32.mrf.mxu0
  %2008 = vmatprep.mubr.bf16.mxu0 %v1245
  %2009 = vmatmul.mubr.bf16.gmra.mxu0 %v1244
  %v2010 = vpop.f32.mrf.mxu0
  %v2011 = vadd.f32 %v358, %v2010
  %v2012 = vpop.f32.mrf.mxu0
  %v2013 = vpop.f32.mrf.mxu0
  %v2014 = vadd.f32 %v358, %v2013
  %v2015 = vpop.f32.mrf.mxu0
  %2016 = vmatprep.mubr.bf16.mxu0 %v1247
  %2017 = vmatmul.mubr.bf16.gmra.mxu0 %v1246
  %v2018 = vpop.f32.mrf.mxu0
  %v2019 = vadd.f32 %v358, %v2018
  %v2020 = vpop.f32.mrf.mxu0
  %v2021 = vpop.f32.mrf.mxu0
  %v2022 = vadd.f32 %v358, %v2021
  %v2023 = vpop.f32.mrf.mxu0
  %2024 = vmatprep.mubr.bf16.mxu0 %v1249
  %2025 = vmatmul.mubr.bf16.gmra.mxu0 %v1248
  %v2026 = vpop.f32.mrf.mxu0
  %v2027 = vadd.f32 %v358, %v2026
  %v2028 = vpop.f32.mrf.mxu0
  %v2029 = vpop.f32.mrf.mxu0
  %v2030 = vadd.f32 %v358, %v2029
  %v2031 = vpop.f32.mrf.mxu0
  %2032 = vmatprep.mubr.bf16.mxu0 %v1251
  %2033 = vmatmul.mubr.bf16.gmra.mxu0 %v1250
  %v2034 = vpop.f32.mrf.mxu0
  %v2035 = vadd.f32 %v358, %v2034
  %v2036 = vpop.f32.mrf.mxu0
  %v2037 = vpop.f32.mrf.mxu0
  %v2038 = vadd.f32 %v358, %v2037
  %v2039 = vpop.f32.mrf.mxu0
  %2040 = vmatprep.mubr.bf16.mxu0 %v1253
  %2041 = vmatmul.mubr.bf16.gmra.mxu0 %v1252
  %v2042 = vpop.f32.mrf.mxu0
  %v2043 = vadd.f32 %v358, %v2042
  %v2044 = vpop.f32.mrf.mxu0
  %v2045 = vpop.f32.mrf.mxu0
  %v2046 = vadd.f32 %v358, %v2045
  %v2047 = vpop.f32.mrf.mxu0
  %2048 = vmatprep.mubr.bf16.mxu0 %v1255
  %2049 = vmatmul.mubr.bf16.gmra.mxu0 %v1254
  %v2050 = vpop.f32.mrf.mxu0
  %v2051 = vadd.f32 %v358, %v2050
  %v2052 = vpop.f32.mrf.mxu0
  %v2053 = vpop.f32.mrf.mxu0
  %v2054 = vadd.f32 %v358, %v2053
  %v2055 = vpop.f32.mrf.mxu0
  %2056 = vmatprep.mubr.bf16.mxu0 %v1257
  %2057 = vmatmul.mubr.bf16.gmra.mxu0 %v1256
  %v2058 = vpop.f32.mrf.mxu0
  %v2059 = vadd.f32 %v358, %v2058
  %v2060 = vpop.f32.mrf.mxu0
  %v2061 = vpop.f32.mrf.mxu0
  %v2062 = vadd.f32 %v358, %v2061
  %v2063 = vpop.f32.mrf.mxu0
  %2064 = vmatprep.mubr.bf16.mxu0 %v1259
  %2065 = vmatmul.mubr.bf16.gmra.mxu0 %v1258
  %v2066 = vpop.f32.mrf.mxu0
  %v2067 = vadd.f32 %v358, %v2066
  %v2068 = vpop.f32.mrf.mxu0
  %v2069 = vpop.f32.mrf.mxu0
  %v2070 = vadd.f32 %v358, %v2069
  %v2071 = vpop.f32.mrf.mxu0
  %2072 = vmatprep.mubr.bf16.mxu0 %v1261
  %2073 = vmatmul.mubr.bf16.gmra.mxu0 %v1260
  %v2074 = vpop.f32.mrf.mxu0
  %v2075 = vadd.f32 %v358, %v2074
  %v2076 = vpop.f32.mrf.mxu0
  %v2077 = vpop.f32.mrf.mxu0
  %v2078 = vadd.f32 %v358, %v2077
  %v2079 = vpop.f32.mrf.mxu0
  %2080 = vmatprep.mubr.bf16.mxu0 %v1263
  %2081 = vmatmul.mubr.bf16.gmra.mxu0 %v1262
  %v2082 = vpop.f32.mrf.mxu0
  %v2083 = vadd.f32 %v358, %v2082
  %v2084 = vpop.f32.mrf.mxu0
  %v2085 = vpop.f32.mrf.mxu0
  %v2086 = vadd.f32 %v358, %v2085
  %v2087 = vpop.f32.mrf.mxu0
  %2088 = vmatprep.mubr.bf16.mxu0 %v1265
  %2089 = vmatmul.mubr.bf16.gmra.mxu0 %v1264
  %v2090 = vpop.f32.mrf.mxu0
  %v2091 = vadd.f32 %v358, %v2090
  %v2092 = vpop.f32.mrf.mxu0
  %v2093 = vpop.f32.mrf.mxu0
  %v2094 = vadd.f32 %v358, %v2093
  %v2095 = vpop.f32.mrf.mxu0
  %2096 = vmatprep.mubr.bf16.mxu0 %v1267
  %2097 = vmatmul.mubr.bf16.gmra.mxu0 %v1266
  %v2098 = vpop.f32.mrf.mxu0
  %v2099 = vadd.f32 %v358, %v2098
  %v2100 = vpop.f32.mrf.mxu0
  %v2101 = vpop.f32.mrf.mxu0
  %v2102 = vadd.f32 %v358, %v2101
  %v2103 = vpop.f32.mrf.mxu0
  %2104 = vmatprep.mubr.bf16.mxu0 %v1269
  %2105 = vmatmul.mubr.bf16.gmra.mxu0 %v1268
  %v2106 = vpop.f32.mrf.mxu0
  %v2107 = vadd.f32 %v358, %v2106
  %v2108 = vpop.f32.mrf.mxu0
  %v2109 = vpop.f32.mrf.mxu0
  %v2110 = vadd.f32 %v358, %v2109
  %v2111 = vpop.f32.mrf.mxu0
  %2112 = vmatprep.mubr.bf16.mxu0 %v1271
  %2113 = vmatmul.mubr.bf16.gmra.mxu0 %v1270
  %v2114 = vpop.f32.mrf.mxu0
  %v2115 = vadd.f32 %v358, %v2114
  %v2116 = vpop.f32.mrf.mxu0
  %v2117 = vpop.f32.mrf.mxu0
  %v2118 = vadd.f32 %v358, %v2117
  %v2119 = vpop.f32.mrf.mxu0
  %2120 = vmatprep.mubr.bf16.mxu0 %v1273
  %2121 = vmatmul.mubr.bf16.gmra.mxu0 %v1272
  %v2122 = vpop.f32.mrf.mxu0
  %v2123 = vadd.f32 %v358, %v2122
  %v2124 = vpop.f32.mrf.mxu0
  %v2125 = vpop.f32.mrf.mxu0
  %v2126 = vadd.f32 %v358, %v2125
  %v2127 = vpop.f32.mrf.mxu0
  %2128 = vmatprep.mubr.bf16.mxu0 %v1275
  %2129 = vmatmul.mubr.bf16.gmra.mxu0 %v1274
  %v2130 = vpop.f32.mrf.mxu0
  %v2131 = vadd.f32 %v358, %v2130
  %v2132 = vpop.f32.mrf.mxu0
  %v2133 = vpop.f32.mrf.mxu0
  %v2134 = vadd.f32 %v358, %v2133
  %v2135 = vpop.f32.mrf.mxu0
  %2136 = vmatprep.mubr.bf16.mxu0 %v1277
  %2137 = vmatmul.mubr.bf16.gmra.mxu0 %v1276
  %v2138 = vpop.f32.mrf.mxu0
  %v2139 = vadd.f32 %v358, %v2138
  %v2140 = vpop.f32.mrf.mxu0
  %v2141 = vpop.f32.mrf.mxu0
  %v2142 = vadd.f32 %v358, %v2141
  %v2143 = vpop.f32.mrf.mxu0
  %2144 = vmatprep.mubr.bf16.mxu0 %v1279
  %2145 = vmatmul.mubr.bf16.gmra.mxu0 %v1278
  %v2146 = vpop.f32.mrf.mxu0
  %v2147 = vadd.f32 %v358, %v2146
  %v2148 = vpop.f32.mrf.mxu0
  %v2149 = vpop.f32.mrf.mxu0
  %v2150 = vadd.f32 %v358, %v2149
  %v2151 = vpop.f32.mrf.mxu0
  %2152 = vmatprep.mubr.bf16.mxu0 %v1281
  %2153 = vmatmul.mubr.bf16.gmra.mxu0 %v1280
  %v2154 = vpop.f32.mrf.mxu0
  %v2155 = vadd.f32 %v358, %v2154
  %v2156 = vpop.f32.mrf.mxu0
  %v2157 = vpop.f32.mrf.mxu0
  %v2158 = vadd.f32 %v358, %v2157
  %v2159 = vpop.f32.mrf.mxu0
  %2160 = vmatprep.mubr.bf16.mxu0 %v1283
  %2161 = vmatmul.mubr.bf16.gmra.mxu0 %v1282
  %v2162 = vpop.f32.mrf.mxu0
  %v2163 = vadd.f32 %v358, %v2162
  %v2164 = vpop.f32.mrf.mxu0
  %v2165 = vpop.f32.mrf.mxu0
  %v2166 = vadd.f32 %v358, %v2165
  %v2167 = vpop.f32.mrf.mxu0
  %2168 = vmatprep.mubr.bf16.mxu0 %v1285
  %2169 = vmatmul.mubr.bf16.gmra.mxu0 %v1284
  %v2170 = vpop.f32.mrf.mxu0
  %v2171 = vadd.f32 %v358, %v2170
  %v2172 = vpop.f32.mrf.mxu0
  %v2173 = vpop.f32.mrf.mxu0
  %v2174 = vadd.f32 %v358, %v2173
  %v2175 = vpop.f32.mrf.mxu0
  %2176 = vmatprep.mubr.bf16.mxu0 %v1287
  %2177 = vmatmul.mubr.bf16.gmra.mxu0 %v1286
  %v2178 = vpop.f32.mrf.mxu0
  %v2179 = vadd.f32 %v358, %v2178
  %v2180 = vpop.f32.mrf.mxu0
  %v2181 = vpop.f32.mrf.mxu0
  %v2182 = vadd.f32 %v358, %v2181
  %v2183 = vpop.f32.mrf.mxu0
  %2184 = vmatprep.mubr.bf16.mxu0 %v1289
  %2185 = vmatmul.mubr.bf16.gmra.mxu0 %v1288
  %v2186 = vpop.f32.mrf.mxu0
  %v2187 = vadd.f32 %v358, %v2186
  %v2188 = vpop.f32.mrf.mxu0
  %v2189 = vpop.f32.mrf.mxu0
  %v2190 = vadd.f32 %v358, %v2189
  %v2191 = vpop.f32.mrf.mxu0
  %2192 = vmatprep.mubr.bf16.mxu0 %v1291
  %2193 = vmatmul.mubr.bf16.gmra.mxu0 %v1290
  %v2194 = vpop.f32.mrf.mxu0
  %v2195 = vadd.f32 %v358, %v2194
  %v2196 = vpop.f32.mrf.mxu0
  %v2197 = vpop.f32.mrf.mxu0
  %v2198 = vadd.f32 %v358, %v2197
  %v2199 = vpop.f32.mrf.mxu0
  %2200 = vmatprep.mubr.bf16.mxu0 %v1293
  %2201 = vmatmul.mubr.bf16.gmra.mxu0 %v1292
  %v2202 = vpop.f32.mrf.mxu0
  %v2203 = vadd.f32 %v358, %v2202
  %v2204 = vpop.f32.mrf.mxu0
  %v2205 = vpop.f32.mrf.mxu0
  %v2206 = vadd.f32 %v358, %v2205
  %v2207 = vpop.f32.mrf.mxu0
  %2208 = vmatprep.mubr.bf16.mxu0 %v1295
  %2209 = vmatmul.mubr.bf16.gmra.mxu0 %v1294
  %v2210 = vpop.f32.mrf.mxu0
  %v2211 = vadd.f32 %v358, %v2210
  %v2212 = vpop.f32.mrf.mxu0
  %v2213 = vpop.f32.mrf.mxu0
  %v2214 = vadd.f32 %v358, %v2213
  %v2215 = vpop.f32.mrf.mxu0
  %2216 = vmatprep.mubr.bf16.mxu0 %v1297
  %2217 = vmatmul.mubr.bf16.gmra.mxu0 %v1296
  %v2218 = vpop.f32.mrf.mxu0
  %v2219 = vadd.f32 %v358, %v2218
  %v2220 = vpop.f32.mrf.mxu0
  %v2221 = vpop.f32.mrf.mxu0
  %v2222 = vadd.f32 %v358, %v2221
  %v2223 = vpop.f32.mrf.mxu0
  %2224 = vmatprep.mubr.bf16.mxu0 %v1299
  %2225 = vmatmul.mubr.bf16.gmra.mxu0 %v1298
  %v2226 = vpop.f32.mrf.mxu0
  %v2227 = vadd.f32 %v358, %v2226
  %v2228 = vpop.f32.mrf.mxu0
  %v2229 = vpop.f32.mrf.mxu0
  %v2230 = vadd.f32 %v358, %v2229
  %v2231 = vpop.f32.mrf.mxu0
  %2232 = vmatprep.mubr.bf16.mxu0 %v1301
  %2233 = vmatmul.mubr.bf16.gmra.mxu0 %v1300
  %v2234 = vpop.f32.mrf.mxu0
  %v2235 = vadd.f32 %v358, %v2234
  %v2236 = vpop.f32.mrf.mxu0
  %v2237 = vpop.f32.mrf.mxu0
  %v2238 = vadd.f32 %v358, %v2237
  %v2239 = vpop.f32.mrf.mxu0
  %2240 = vmatprep.mubr.bf16.mxu0 %v1303
  %2241 = vmatmul.mubr.bf16.gmra.mxu0 %v1302
  %v2242 = vpop.f32.mrf.mxu0
  %v2243 = vadd.f32 %v358, %v2242
  %v2244 = vpop.f32.mrf.mxu0
  %v2245 = vpop.f32.mrf.mxu0
  %v2246 = vadd.f32 %v358, %v2245
  %v2247 = vpop.f32.mrf.mxu0
  %2248 = vmatprep.mubr.bf16.mxu0 %v1305
  %2249 = vmatmul.mubr.bf16.gmra.mxu0 %v1304
  %v2250 = vpop.f32.mrf.mxu0
  %v2251 = vadd.f32 %v358, %v2250
  %v2252 = vpop.f32.mrf.mxu0
  %v2253 = vpop.f32.mrf.mxu0
  %v2254 = vadd.f32 %v358, %v2253
  %v2255 = vpop.f32.mrf.mxu0
  %2256 = vmatprep.mubr.bf16.mxu0 %v1307
  %2257 = vmatmul.mubr.bf16.gmra.mxu0 %v1306
  %v2258 = vpop.f32.mrf.mxu0
  %v2259 = vadd.f32 %v358, %v2258
  %v2260 = vpop.f32.mrf.mxu0
  %v2261 = vpop.f32.mrf.mxu0
  %v2262 = vadd.f32 %v358, %v2261
  %v2263 = vpop.f32.mrf.mxu0
  %2264 = vmatprep.mubr.bf16.mxu0 %v1309
  %2265 = vmatmul.mubr.bf16.gmra.mxu0 %v1308
  %v2266 = vpop.f32.mrf.mxu0
  %v2267 = vadd.f32 %v358, %v2266
  %v2268 = vpop.f32.mrf.mxu0
  %v2269 = vpop.f32.mrf.mxu0
  %v2270 = vadd.f32 %v358, %v2269
  %v2271 = vpop.f32.mrf.mxu0
  %2272 = vmatprep.mubr.bf16.mxu0 %v1311
  %2273 = vmatmul.mubr.bf16.gmra.mxu0 %v1310
  %v2274 = vpop.f32.mrf.mxu0
  %v2275 = vadd.f32 %v358, %v2274
  %v2276 = vpop.f32.mrf.mxu0
  %v2277 = vpop.f32.mrf.mxu0
  %v2278 = vadd.f32 %v358, %v2277
  %v2279 = vpop.f32.mrf.mxu0
  %2280 = vmatprep.mubr.bf16.mxu0 %v1313
  %2281 = vmatmul.mubr.bf16.gmra.mxu0 %v1312
  %v2282 = vpop.f32.mrf.mxu0
  %v2283 = vadd.f32 %v358, %v2282
  %v2284 = vpop.f32.mrf.mxu0
  %v2285 = vpop.f32.mrf.mxu0
  %v2286 = vadd.f32 %v358, %v2285
  %v2287 = vpop.f32.mrf.mxu0
  %2288 = vmatprep.mubr.bf16.mxu0 %v1315
  %2289 = vmatmul.mubr.bf16.gmra.mxu0 %v1314
  %v2290 = vpop.f32.mrf.mxu0
  %v2291 = vadd.f32 %v358, %v2290
  %v2292 = vpop.f32.mrf.mxu0
  %v2293 = vpop.f32.mrf.mxu0
  %v2294 = vadd.f32 %v358, %v2293
  %v2295 = vpop.f32.mrf.mxu0
  %2296 = vmatprep.mubr.bf16.mxu0 %v1317
  %2297 = vmatmul.mubr.bf16.gmra.mxu0 %v1316
  %v2298 = vpop.f32.mrf.mxu0
  %v2299 = vadd.f32 %v358, %v2298
  %v2300 = vpop.f32.mrf.mxu0
  %v2301 = vpop.f32.mrf.mxu0
  %v2302 = vadd.f32 %v358, %v2301
  %v2303 = vpop.f32.mrf.mxu0
  %2304 = vmatprep.mubr.bf16.mxu0 %v1319
  %2305 = vmatmul.mubr.bf16.gmra.mxu0 %v1318
  %v2306 = vpop.f32.mrf.mxu0
  %v2307 = vadd.f32 %v358, %v2306
  %v2308 = vpop.f32.mrf.mxu0
  %v2309 = vpop.f32.mrf.mxu0
  %v2310 = vadd.f32 %v358, %v2309
  %v2311 = vpop.f32.mrf.mxu0
  %2312 = vmatprep.mubr.bf16.mxu0 %v1321
  %2313 = vmatmul.mubr.bf16.gmra.mxu0 %v1320
  %v2314 = vpop.f32.mrf.mxu0
  %v2315 = vadd.f32 %v358, %v2314
  %v2316 = vpop.f32.mrf.mxu0
  %v2317 = vpop.f32.mrf.mxu0
  %v2318 = vadd.f32 %v358, %v2317
  %v2319 = vpop.f32.mrf.mxu0
  %2320 = vmatprep.mubr.bf16.mxu0 %v1323
  %2321 = vmatmul.mubr.bf16.gmra.mxu0 %v1322
  %v2322 = vpop.f32.mrf.mxu0
  %v2323 = vadd.f32 %v358, %v2322
  %v2324 = vpop.f32.mrf.mxu0
  %v2325 = vpop.f32.mrf.mxu0
  %v2326 = vadd.f32 %v358, %v2325
  %v2327 = vpop.f32.mrf.mxu0
  %2328 = vmatprep.mubr.bf16.mxu0 %v1325
  %2329 = vmatmul.mubr.bf16.gmra.mxu0 %v1324
  %v2330 = vpop.f32.mrf.mxu0
  %v2331 = vadd.f32 %v358, %v2330
  %v2332 = vpop.f32.mrf.mxu0
  %v2333 = vpop.f32.mrf.mxu0
  %v2334 = vadd.f32 %v358, %v2333
  %v2335 = vpop.f32.mrf.mxu0
  %2336 = vmatprep.mubr.bf16.mxu0 %v1327
  %2337 = vmatmul.mubr.bf16.gmra.mxu0 %v1326
  %v2338 = vpop.f32.mrf.mxu0
  %v2339 = vadd.f32 %v358, %v2338
  %v2340 = vpop.f32.mrf.mxu0
  %v2341 = vpop.f32.mrf.mxu0
  %v2342 = vadd.f32 %v358, %v2341
  %v2343 = vpop.f32.mrf.mxu0
  %2344 = vmatprep.mubr.bf16.mxu0 %v1329
  %2345 = vmatmul.mubr.bf16.gmra.mxu0 %v1328
  %v2346 = vpop.f32.mrf.mxu0
  %v2347 = vadd.f32 %v358, %v2346
  %v2348 = vpop.f32.mrf.mxu0
  %v2349 = vpop.f32.mrf.mxu0
  %v2350 = vadd.f32 %v358, %v2349
  %v2351 = vpop.f32.mrf.mxu0
  %2352 = vmatprep.mubr.bf16.mxu0 %v1331
  %2353 = vmatmul.mubr.bf16.gmra.mxu0 %v1330
  %v2354 = vpop.f32.mrf.mxu0
  %v2355 = vadd.f32 %v358, %v2354
  %v2356 = vpop.f32.mrf.mxu0
  %v2357 = vpop.f32.mrf.mxu0
  %v2358 = vadd.f32 %v358, %v2357
  %v2359 = vpop.f32.mrf.mxu0
  %2360 = vmatprep.mubr.bf16.mxu0 %v1333
  %2361 = vmatmul.mubr.bf16.gmra.mxu0 %v1332
  %v2362 = vpop.f32.mrf.mxu0
  %v2363 = vadd.f32 %v358, %v2362
  %v2364 = vpop.f32.mrf.mxu0
  %v2365 = vpop.f32.mrf.mxu0
  %v2366 = vadd.f32 %v358, %v2365
  %v2367 = vpop.f32.mrf.mxu0
  %2368 = vmatprep.mubr.bf16.mxu0 %v1335
  %2369 = vmatmul.mubr.bf16.gmra.mxu0 %v1334
  %v2370 = vpop.f32.mrf.mxu0
  %v2371 = vadd.f32 %v358, %v2370
  %v2372 = vpop.f32.mrf.mxu0
  %v2373 = vpop.f32.mrf.mxu0
  %v2374 = vadd.f32 %v358, %v2373
  %v2375 = vpop.f32.mrf.mxu0
  %2376 = vmatprep.mubr.bf16.mxu0 %v1337
  %2377 = vmatmul.mubr.bf16.gmra.mxu0 %v1336
  %v2378 = vpop.f32.mrf.mxu0
  %v2379 = vadd.f32 %v358, %v2378
  %v2380 = vpop.f32.mrf.mxu0
  %v2381 = vpop.f32.mrf.mxu0
  %v2382 = vadd.f32 %v358, %v2381
  %v2383 = vpop.f32.mrf.mxu0
  %2384 = vmatprep.mubr.bf16.mxu0 %v1339
  %2385 = vmatmul.mubr.bf16.gmra.mxu0 %v1338
  %v2386 = vpop.f32.mrf.mxu0
  %v2387 = vadd.f32 %v358, %v2386
  %v2388 = vpop.f32.mrf.mxu0
  %v2389 = vpop.f32.mrf.mxu0
  %v2390 = vadd.f32 %v358, %v2389
  %v2391 = vpop.f32.mrf.mxu0
  %2392 = vmatprep.mubr.bf16.mxu0 %v1341
  %2393 = vmatmul.mubr.bf16.gmra.mxu0 %v1340
  %v2394 = vpop.f32.mrf.mxu0
  %v2395 = vadd.f32 %v358, %v2394
  %v2396 = vpop.f32.mrf.mxu0
  %v2397 = vpop.f32.mrf.mxu0
  %v2398 = vadd.f32 %v358, %v2397
  %v2399 = vpop.f32.mrf.mxu0
  %2400 = vmatprep.mubr.bf16.mxu0 %v1343
  %2401 = vmatmul.mubr.bf16.gmra.mxu0 %v1342
  %v2402 = vpop.f32.mrf.mxu0
  %v2403 = vadd.f32 %v358, %v2402
  %v2404 = vpop.f32.mrf.mxu0
  %v2405 = vpop.f32.mrf.mxu0
  %v2406 = vadd.f32 %v358, %v2405
  %v2407 = vpop.f32.mrf.mxu0
  %2408 = vmatprep.mubr.bf16.mxu0 %v1345
  %2409 = vmatmul.mubr.bf16.gmra.mxu0 %v1344
  %v2410 = vpop.f32.mrf.mxu0
  %v2411 = vadd.f32 %v358, %v2410
  %v2412 = vpop.f32.mrf.mxu0
  %v2413 = vpop.f32.mrf.mxu0
  %v2414 = vadd.f32 %v358, %v2413
  %v2415 = vpop.f32.mrf.mxu0
  %2416 = vmatprep.mubr.bf16.mxu0 %v1347
  %2417 = vmatmul.mubr.bf16.gmra.mxu0 %v1346
  %v2418 = vpop.f32.mrf.mxu0
  %v2419 = vadd.f32 %v358, %v2418
  %v2420 = vpop.f32.mrf.mxu0
  %v2421 = vpop.f32.mrf.mxu0
  %v2422 = vadd.f32 %v358, %v2421
  %v2423 = vpop.f32.mrf.mxu0
  %2424 = vmatprep.mubr.bf16.mxu0 %v1349
  %2425 = vmatmul.mubr.bf16.gmra.mxu0 %v1348
  %v2426 = vpop.f32.mrf.mxu0
  %v2427 = vadd.f32 %v358, %v2426
  %v2428 = vpop.f32.mrf.mxu0
  %v2429 = vpop.f32.mrf.mxu0
  %v2430 = vadd.f32 %v358, %v2429
  %v2431 = vpop.f32.mrf.mxu0
  %2432 = vmatprep.mubr.bf16.mxu0 %v1351
  %2433 = vmatmul.mubr.bf16.gmra.mxu0 %v1350
  %v2434 = vpop.f32.mrf.mxu0
  %v2435 = vadd.f32 %v358, %v2434
  %v2436 = vpop.f32.mrf.mxu0
  %v2437 = vpop.f32.mrf.mxu0
  %v2438 = vadd.f32 %v358, %v2437
  %v2439 = vpop.f32.mrf.mxu0
  %2440 = vmatprep.mubr.bf16.mxu0 %v1353
  %2441 = vmatmul.mubr.bf16.gmra.mxu0 %v1352
  %v2442 = vpop.f32.mrf.mxu0
  %v2443 = vadd.f32 %v358, %v2442
  %v2444 = vpop.f32.mrf.mxu0
  %v2445 = vpop.f32.mrf.mxu0
  %v2446 = vadd.f32 %v358, %v2445
  %v2447 = vpop.f32.mrf.mxu0
  %2448 = vmatprep.mubr.bf16.mxu0 %v1355
  %2449 = vmatmul.mubr.bf16.gmra.mxu0 %v1354
  %v2450 = vpop.f32.mrf.mxu0
  %v2451 = vadd.f32 %v358, %v2450
  %v2452 = vpop.f32.mrf.mxu0
  %v2453 = vpop.f32.mrf.mxu0
  %v2454 = vadd.f32 %v358, %v2453
  %v2455 = vpop.f32.mrf.mxu0
  %2456 = vmatprep.mubr.bf16.mxu0 %v1357
  %2457 = vmatmul.mubr.bf16.gmra.mxu0 %v1356
  %v2458 = vpop.f32.mrf.mxu0
  %v2459 = vadd.f32 %v358, %v2458
  %v2460 = vpop.f32.mrf.mxu0
  %v2461 = vpop.f32.mrf.mxu0
  %v2462 = vadd.f32 %v358, %v2461
  %v2463 = vpop.f32.mrf.mxu0
  %2464 = vmatprep.mubr.bf16.mxu0 %v1359
  %2465 = vmatmul.mubr.bf16.gmra.mxu0 %v1358
  %v2466 = vpop.f32.mrf.mxu0
  %v2467 = vadd.f32 %v358, %v2466
  %v2468 = vpop.f32.mrf.mxu0
  %v2469 = vpop.f32.mrf.mxu0
  %v2470 = vadd.f32 %v358, %v2469
  %v2471 = vpop.f32.mrf.mxu0
  %2472 = vmatprep.mubr.bf16.mxu0 %v1361
  %2473 = vmatmul.mubr.bf16.gmra.mxu0 %v1360
  %v2474 = vpop.f32.mrf.mxu0
  %v2475 = vadd.f32 %v358, %v2474
  %v2476 = vpop.f32.mrf.mxu0
  %v2477 = vpop.f32.mrf.mxu0
  %v2478 = vadd.f32 %v358, %v2477
  %v2479 = vpop.f32.mrf.mxu0
  %2480 = vmatprep.mubr.bf16.mxu0 %v1363
  %2481 = vmatmul.mubr.bf16.gmra.mxu0 %v1362
  %v2482 = vpop.f32.mrf.mxu0
  %v2483 = vadd.f32 %v358, %v2482
  %v2484 = vpop.f32.mrf.mxu0
  %v2485 = vpop.f32.mrf.mxu0
  %v2486 = vadd.f32 %v358, %v2485
  %v2487 = vpop.f32.mrf.mxu0
  %2488 = vmatprep.mubr.bf16.mxu0 %v1365
  %2489 = vmatmul.mubr.bf16.gmra.mxu0 %v1364
  %v2490 = vpop.f32.mrf.mxu0
  %v2491 = vadd.f32 %v358, %v2490
  %v2492 = vpop.f32.mrf.mxu0
  %v2493 = vpop.f32.mrf.mxu0
  %v2494 = vadd.f32 %v358, %v2493
  %v2495 = vpop.f32.mrf.mxu0
  %2496 = vmatprep.mubr.bf16.mxu0 %v1367
  %2497 = vmatmul.mubr.bf16.gmra.mxu0 %v1366
  %v2498 = vpop.f32.mrf.mxu0
  %v2499 = vadd.f32 %v358, %v2498
  %v2500 = vpop.f32.mrf.mxu0
  %v2501 = vpop.f32.mrf.mxu0
  %v2502 = vadd.f32 %v358, %v2501
  %v2503 = vpop.f32.mrf.mxu0
  %2504 = vmatprep.mubr.bf16.mxu0 %v1369
  %2505 = vmatmul.mubr.bf16.gmra.mxu0 %v1368
  %v2506 = vpop.f32.mrf.mxu0
  %v2507 = vadd.f32 %v358, %v2506
  %v2508 = vpop.f32.mrf.mxu0
  %v2509 = vpop.f32.mrf.mxu0
  %v2510 = vadd.f32 %v358, %v2509
  %v2511 = vpop.f32.mrf.mxu0
  %2512 = vmatprep.mubr.bf16.mxu0 %v1371
  %2513 = vmatmul.mubr.bf16.gmra.mxu0 %v1370
  %v2514 = vpop.f32.mrf.mxu0
  %v2515 = vadd.f32 %v358, %v2514
  %v2516 = vpop.f32.mrf.mxu0
  %v2517 = vpop.f32.mrf.mxu0
  %v2518 = vadd.f32 %v358, %v2517
  %v2519 = vpop.f32.mrf.mxu0
  %2520 = vmatprep.mubr.bf16.mxu0 %v1373
  %2521 = vmatmul.mubr.bf16.gmra.mxu0 %v1372
  %v2522 = vpop.f32.mrf.mxu0
  %v2523 = vadd.f32 %v358, %v2522
  %v2524 = vpop.f32.mrf.mxu0
  %v2525 = vpop.f32.mrf.mxu0
  %v2526 = vadd.f32 %v358, %v2525
  %v2527 = vpop.f32.mrf.mxu0
  %2528 = vmatprep.mubr.bf16.mxu0 %v1375
  %2529 = vmatmul.mubr.bf16.gmra.mxu0 %v1374
  %v2530 = vpop.f32.mrf.mxu0
  %v2531 = vadd.f32 %v358, %v2530
  %v2532 = vpop.f32.mrf.mxu0
  %v2533 = vpop.f32.mrf.mxu0
  %v2534 = vadd.f32 %v358, %v2533
  %v2535 = vpop.f32.mrf.mxu0
  %2536 = vmatprep.mubr.bf16.mxu0 %v1377
  %2537 = vmatmul.mubr.bf16.gmra.mxu0 %v1376
  %v2538 = vpop.f32.mrf.mxu0
  %v2539 = vadd.f32 %v358, %v2538
  %v2540 = vpop.f32.mrf.mxu0
  %v2541 = vpop.f32.mrf.mxu0
  %v2542 = vadd.f32 %v358, %v2541
  %v2543 = vpop.f32.mrf.mxu0
  %2544 = vmatprep.mubr.bf16.mxu0 %v1379
  %2545 = vmatmul.mubr.bf16.gmra.mxu0 %v1378
  %v2546 = vpop.f32.mrf.mxu0
  %v2547 = vadd.f32 %v358, %v2546
  %v2548 = vpop.f32.mrf.mxu0
  %v2549 = vpop.f32.mrf.mxu0
  %v2550 = vadd.f32 %v358, %v2549
  %v2551 = vpop.f32.mrf.mxu0
  %2552 = vmatprep.mubr.bf16.mxu0 %v1381
  %2553 = vmatmul.mubr.bf16.gmra.mxu0 %v1380
  %v2554 = vpop.f32.mrf.mxu0
  %v2555 = vadd.f32 %v358, %v2554
  %v2556 = vpop.f32.mrf.mxu0
  %v2557 = vpop.f32.mrf.mxu0
  %v2558 = vadd.f32 %v358, %v2557
  %v2559 = vpop.f32.mrf.mxu0
  %2560 = vmatprep.mubr.bf16.mxu0 %v1383
  %2561 = vmatmul.mubr.bf16.gmra.mxu0 %v1382
  %v2562 = vpop.f32.mrf.mxu0
  %v2563 = vadd.f32 %v358, %v2562
  %v2564 = vpop.f32.mrf.mxu0
  %v2565 = vpop.f32.mrf.mxu0
  %v2566 = vadd.f32 %v358, %v2565
  %v2567 = vpop.f32.mrf.mxu0
  %2568 = vmatprep.mubr.bf16.mxu0 %v1385
  %2569 = vmatmul.mubr.bf16.gmra.mxu0 %v1384
  %v2570 = vpop.f32.mrf.mxu0
  %v2571 = vadd.f32 %v358, %v2570
  %v2572 = vpop.f32.mrf.mxu0
  %v2573 = vpop.f32.mrf.mxu0
  %v2574 = vadd.f32 %v358, %v2573
  %v2575 = vpop.f32.mrf.mxu0
  %2576 = vmatprep.mubr.bf16.mxu0 %v1387
  %2577 = vmatmul.mubr.bf16.gmra.mxu0 %v1386
  %v2578 = vpop.f32.mrf.mxu0
  %v2579 = vadd.f32 %v358, %v2578
  %v2580 = vpop.f32.mrf.mxu0
  %v2581 = vpop.f32.mrf.mxu0
  %v2582 = vadd.f32 %v358, %v2581
  %v2583 = vpop.f32.mrf.mxu0
  %2584 = vmatprep.mubr.bf16.mxu0 %v1389
  %2585 = vmatmul.mubr.bf16.gmra.mxu0 %v1388
  %v2586 = vpop.f32.mrf.mxu0
  %v2587 = vadd.f32 %v358, %v2586
  %v2588 = vpop.f32.mrf.mxu0
  %v2589 = vpop.f32.mrf.mxu0
  %v2590 = vadd.f32 %v358, %v2589
  %v2591 = vpop.f32.mrf.mxu0
  %2592 = vmatprep.mubr.bf16.mxu0 %v1391
  %2593 = vmatmul.mubr.bf16.gmra.mxu0 %v1390
  %v2594 = vpop.f32.mrf.mxu0
  %v2595 = vadd.f32 %v358, %v2594
  %v2596 = vpop.f32.mrf.mxu0
  %v2597 = vpop.f32.mrf.mxu0
  %v2598 = vadd.f32 %v358, %v2597
  %v2599 = vpop.f32.mrf.mxu0
  %2600 = vmatprep.mubr.bf16.mxu0 %v1393
  %2601 = vmatmul.mubr.bf16.gmra.mxu0 %v1392
  %v2602 = vpop.f32.mrf.mxu0
  %v2603 = vadd.f32 %v358, %v2602
  %v2604 = vpop.f32.mrf.mxu0
  %v2605 = vpop.f32.mrf.mxu0
  %v2606 = vadd.f32 %v358, %v2605
  %v2607 = vpop.f32.mrf.mxu0
  %2608 = vmatprep.mubr.bf16.mxu0 %v1395
  %2609 = vmatmul.mubr.bf16.gmra.mxu0 %v1394
  %v2610 = vpop.f32.mrf.mxu0
  %v2611 = vadd.f32 %v358, %v2610
  %v2612 = vpop.f32.mrf.mxu0
  %v2613 = vpop.f32.mrf.mxu0
  %v2614 = vadd.f32 %v358, %v2613
  %v2615 = vpop.f32.mrf.mxu0
  %2616 = vmatprep.mubr.bf16.mxu0 %v1397
  %2617 = vmatmul.mubr.bf16.gmra.mxu0 %v1396
  %v2618 = vpop.f32.mrf.mxu0
  %v2619 = vadd.f32 %v358, %v2618
  %v2620 = vpop.f32.mrf.mxu0
  %v2621 = vpop.f32.mrf.mxu0
  %v2622 = vadd.f32 %v358, %v2621
  %v2623 = vpop.f32.mrf.mxu0
  %2624 = vmatprep.mubr.bf16.mxu0 %v1399
  %2625 = vmatmul.mubr.bf16.gmra.mxu0 %v1398
  %v2626 = vpop.f32.mrf.mxu0
  %v2627 = vadd.f32 %v358, %v2626
  %v2628 = vpop.f32.mrf.mxu0
  %v2629 = vpop.f32.mrf.mxu0
  %v2630 = vadd.f32 %v358, %v2629
  %v2631 = vpop.f32.mrf.mxu0
  %2632 = vmatprep.mubr.bf16.mxu0 %v1401
  %2633 = vmatmul.mubr.bf16.gmra.mxu0 %v1400
  %v2634 = vpop.f32.mrf.mxu0
  %v2635 = vadd.f32 %v358, %v2634
  %v2636 = vpop.f32.mrf.mxu0
  %v2637 = vpop.f32.mrf.mxu0
  %v2638 = vadd.f32 %v358, %v2637
  %v2639 = vpop.f32.mrf.mxu0
  %2640 = vmatprep.mubr.bf16.mxu0 %v1403
  %2641 = vmatmul.mubr.bf16.gmra.mxu0 %v1402
  %v2642 = vpop.f32.mrf.mxu0
  %v2643 = vadd.f32 %v358, %v2642
  %v2644 = vpop.f32.mrf.mxu0
  %v2645 = vpop.f32.mrf.mxu0
  %v2646 = vadd.f32 %v358, %v2645
  %v2647 = vpop.f32.mrf.mxu0
  %2648 = vmatprep.mubr.bf16.mxu0 %v1405
  %2649 = vmatmul.mubr.bf16.gmra.mxu0 %v1404
  %v2650 = vpop.f32.mrf.mxu0
  %v2651 = vadd.f32 %v358, %v2650
  %v2652 = vpop.f32.mrf.mxu0
  %v2653 = vpop.f32.mrf.mxu0
  %v2654 = vadd.f32 %v358, %v2653
  %v2655 = vpop.f32.mrf.mxu0
  %2656 = vmatprep.mubr.bf16.mxu0 %v1407
  %2657 = vmatmul.mubr.bf16.gmra.mxu0 %v1406
  %v2658 = vpop.f32.mrf.mxu0
  %v2659 = vadd.f32 %v358, %v2658
  %v2660 = vpop.f32.mrf.mxu0
  %v2661 = vpop.f32.mrf.mxu0
  %v2662 = vadd.f32 %v358, %v2661
  %v2663 = vpop.f32.mrf.mxu0
  %2664 = vmatprep.mubr.bf16.mxu0 %v1409
  %2665 = vmatmul.mubr.bf16.gmra.mxu0 %v1408
  %v2666 = vpop.f32.mrf.mxu0
  %v2667 = vadd.f32 %v358, %v2666
  %v2668 = vpop.f32.mrf.mxu0
  %v2669 = vpop.f32.mrf.mxu0
  %v2670 = vadd.f32 %v358, %v2669
  %v2671 = vpop.f32.mrf.mxu0
  %2672 = vmatprep.mubr.bf16.mxu0 %v1411
  %2673 = vmatmul.mubr.bf16.gmra.mxu0 %v1410
  %v2674 = vpop.f32.mrf.mxu0
  %v2675 = vadd.f32 %v358, %v2674
  %v2676 = vpop.f32.mrf.mxu0
  %v2677 = vpop.f32.mrf.mxu0
  %v2678 = vadd.f32 %v358, %v2677
  %v2679 = vpop.f32.mrf.mxu0
  %2680 = vmatprep.mubr.bf16.mxu0 %v1413
  %2681 = vmatmul.mubr.bf16.gmra.mxu0 %v1412
  %v2682 = vpop.f32.mrf.mxu0
  %v2683 = vadd.f32 %v358, %v2682
  %v2684 = vpop.f32.mrf.mxu0
  %v2685 = vpop.f32.mrf.mxu0
  %v2686 = vadd.f32 %v358, %v2685
  %v2687 = vpop.f32.mrf.mxu0
  %2688 = vmatprep.mubr.bf16.mxu0 %v1415
  %2689 = vmatmul.mubr.bf16.gmra.mxu0 %v1414
  %v2690 = vpop.f32.mrf.mxu0
  %v2691 = vadd.f32 %v358, %v2690
  %v2692 = vpop.f32.mrf.mxu0
  %v2693 = vpop.f32.mrf.mxu0
  %v2694 = vadd.f32 %v358, %v2693
  %v2695 = vpop.f32.mrf.mxu0
  %2696 = vmatprep.mubr.bf16.mxu0 %v1417
  %2697 = vmatmul.mubr.bf16.gmra.mxu0 %v1416
  %v2698 = vpop.f32.mrf.mxu0
  %v2699 = vadd.f32 %v358, %v2698
  %v2700 = vpop.f32.mrf.mxu0
  %v2701 = vpop.f32.mrf.mxu0
  %v2702 = vadd.f32 %v358, %v2701
  %v2703 = vpop.f32.mrf.mxu0
  %2704 = vmatprep.mubr.bf16.mxu0 %v1419
  %2705 = vmatmul.mubr.bf16.gmra.mxu0 %v1418
  %v2706 = vpop.f32.mrf.mxu0
  %v2707 = vadd.f32 %v358, %v2706
  %v2708 = vpop.f32.mrf.mxu0
  %v2709 = vpop.f32.mrf.mxu0
  %v2710 = vadd.f32 %v358, %v2709
  %v2711 = vpop.f32.mrf.mxu0
  %2712 = vmatprep.mubr.bf16.mxu0 %v1421
  %2713 = vmatmul.mubr.bf16.gmra.mxu0 %v1420
  %v2714 = vpop.f32.mrf.mxu0
  %v2715 = vadd.f32 %v358, %v2714
  %v2716 = vpop.f32.mrf.mxu0
  %v2717 = vpop.f32.mrf.mxu0
  %v2718 = vadd.f32 %v358, %v2717
  %v2719 = vpop.f32.mrf.mxu0
  %2720 = vmatprep.mubr.bf16.mxu0 %v1423
  %2721 = vmatmul.mubr.bf16.gmra.mxu0 %v1422
  %v2722 = vpop.f32.mrf.mxu0
  %v2723 = vadd.f32 %v358, %v2722
  %v2724 = vpop.f32.mrf.mxu0
  %v2725 = vpop.f32.mrf.mxu0
  %v2726 = vadd.f32 %v358, %v2725
  %v2727 = vpop.f32.mrf.mxu0
  %2728 = vmatprep.mubr.bf16.mxu0 %v1425
  %2729 = vmatmul.mubr.bf16.gmra.mxu0 %v1424
  %v2730 = vpop.f32.mrf.mxu0
  %v2731 = vadd.f32 %v358, %v2730
  %v2732 = vpop.f32.mrf.mxu0
  %v2733 = vpop.f32.mrf.mxu0
  %v2734 = vadd.f32 %v358, %v2733
  %v2735 = vpop.f32.mrf.mxu0
  %2736 = vmatprep.mubr.bf16.mxu0 %v1427
  %2737 = vmatmul.mubr.bf16.gmra.mxu0 %v1426
  %v2738 = vpop.f32.mrf.mxu0
  %v2739 = vadd.f32 %v358, %v2738
  %v2740 = vpop.f32.mrf.mxu0
  %v2741 = vpop.f32.mrf.mxu0
  %v2742 = vadd.f32 %v358, %v2741
  %v2743 = vpop.f32.mrf.mxu0
  %2744 = vmatprep.mubr.bf16.mxu0 %v1429
  %2745 = vmatmul.mubr.bf16.gmra.mxu0 %v1428
  %v2746 = vpop.f32.mrf.mxu0
  %v2747 = vadd.f32 %v358, %v2746
  %v2748 = vpop.f32.mrf.mxu0
  %v2749 = vpop.f32.mrf.mxu0
  %v2750 = vadd.f32 %v358, %v2749
  %v2751 = vpop.f32.mrf.mxu0
  %2752 = vmatprep.mubr.bf16.mxu0 %v1431
  %2753 = vmatmul.mubr.bf16.gmra.mxu0 %v1430
  %v2754 = vpop.f32.mrf.mxu0
  %v2755 = vadd.f32 %v358, %v2754
  %v2756 = vpop.f32.mrf.mxu0
  %v2757 = vpop.f32.mrf.mxu0
  %v2758 = vadd.f32 %v358, %v2757
  %v2759 = vpop.f32.mrf.mxu0
  %2760 = vmatprep.mubr.bf16.mxu0 %v1433
  %2761 = vmatmul.mubr.bf16.gmra.mxu0 %v1432
  %v2762 = vpop.f32.mrf.mxu0
  %v2763 = vadd.f32 %v358, %v2762
  %v2764 = vpop.f32.mrf.mxu0
  %v2765 = vpop.f32.mrf.mxu0
  %v2766 = vadd.f32 %v358, %v2765
  %v2767 = vpop.f32.mrf.mxu0
  %2768 = vmatprep.mubr.bf16.mxu0 %v1435
  %2769 = vmatmul.mubr.bf16.gmra.mxu0 %v1434
  %v2770 = vpop.f32.mrf.mxu0
  %v2771 = vadd.f32 %v358, %v2770
  %v2772 = vpop.f32.mrf.mxu0
  %v2773 = vpop.f32.mrf.mxu0
  %v2774 = vadd.f32 %v358, %v2773
  %v2775 = vpop.f32.mrf.mxu0
  %2776 = vmatprep.mubr.bf16.mxu0 %v1437
  %2777 = vmatmul.mubr.bf16.gmra.mxu0 %v1436
  %v2778 = vpop.f32.mrf.mxu0
  %v2779 = vadd.f32 %v358, %v2778
  %v2780 = vpop.f32.mrf.mxu0
  %v2781 = vpop.f32.mrf.mxu0
  %v2782 = vadd.f32 %v358, %v2781
  %v2783 = vpop.f32.mrf.mxu0
  %2784 = vmatprep.mubr.bf16.mxu0 %v1439
  %2785 = vmatmul.mubr.bf16.gmra.mxu0 %v1438
  %v2786 = vpop.f32.mrf.mxu0
  %v2787 = vadd.f32 %v358, %v2786
  %v2788 = vpop.f32.mrf.mxu0
  %v2789 = vpop.f32.mrf.mxu0
  %v2790 = vadd.f32 %v358, %v2789
  %v2791 = vpop.f32.mrf.mxu0
  %2792 = vmatprep.mubr.bf16.mxu0 %v1441
  %2793 = vmatmul.mubr.bf16.gmra.mxu0 %v1440
  %v2794 = vpop.f32.mrf.mxu0
  %v2795 = vadd.f32 %v358, %v2794
  %v2796 = vpop.f32.mrf.mxu0
  %v2797 = vpop.f32.mrf.mxu0
  %v2798 = vadd.f32 %v358, %v2797
  %v2799 = vpop.f32.mrf.mxu0
  %2800 = vmatprep.mubr.bf16.mxu0 %v1443
  %2801 = vmatmul.mubr.bf16.gmra.mxu0 %v1442
  %v2802 = vpop.f32.mrf.mxu0
  %v2803 = vadd.f32 %v358, %v2802
  %v2804 = vpop.f32.mrf.mxu0
  %v2805 = vpop.f32.mrf.mxu0
  %v2806 = vadd.f32 %v358, %v2805
  %v2807 = vpop.f32.mrf.mxu0
  %2808 = vmatprep.mubr.bf16.mxu0 %v1445
  %2809 = vmatmul.mubr.bf16.gmra.mxu0 %v1444
  %v2810 = vpop.f32.mrf.mxu0
  %v2811 = vadd.f32 %v358, %v2810
  %v2812 = vpop.f32.mrf.mxu0
  %v2813 = vpop.f32.mrf.mxu0
  %v2814 = vadd.f32 %v358, %v2813
  %v2815 = vpop.f32.mrf.mxu0
  %2816 = vmatprep.mubr.bf16.mxu0 %v1447
  %2817 = vmatmul.mubr.bf16.gmra.mxu0 %v1446
  %v2818 = vpop.f32.mrf.mxu0
  %v2819 = vadd.f32 %v358, %v2818
  %v2820 = vpop.f32.mrf.mxu0
  %v2821 = vpop.f32.mrf.mxu0
  %v2822 = vadd.f32 %v358, %v2821
  %v2823 = vpop.f32.mrf.mxu0
  %2824 = vmatprep.mubr.bf16.mxu0 %v1449
  %2825 = vmatmul.mubr.bf16.gmra.mxu0 %v1448
  %v2826 = vpop.f32.mrf.mxu0
  %v2827 = vadd.f32 %v358, %v2826
  %v2828 = vpop.f32.mrf.mxu0
  %v2829 = vpop.f32.mrf.mxu0
  %v2830 = vadd.f32 %v358, %v2829
  %v2831 = vpop.f32.mrf.mxu0
  %2832 = vmatprep.mubr.bf16.mxu0 %v1451
  %2833 = vmatmul.mubr.bf16.gmra.mxu0 %v1450
  %v2834 = vpop.f32.mrf.mxu0
  %v2835 = vadd.f32 %v358, %v2834
  %v2836 = vpop.f32.mrf.mxu0
  %v2837 = vpop.f32.mrf.mxu0
  %v2838 = vadd.f32 %v358, %v2837
  %v2839 = vpop.f32.mrf.mxu0
  %2840 = vmatprep.mubr.bf16.mxu0 %v1453
  %2841 = vmatmul.mubr.bf16.gmra.mxu0 %v1452
  %v2842 = vpop.f32.mrf.mxu0
  %v2843 = vadd.f32 %v358, %v2842
  %v2844 = vpop.f32.mrf.mxu0
  %v2845 = vpop.f32.mrf.mxu0
  %v2846 = vadd.f32 %v358, %v2845
  %v2847 = vpop.f32.mrf.mxu0
  %2848 = vmatprep.mubr.bf16.mxu0 %v1455
  %2849 = vmatmul.mubr.bf16.gmra.mxu0 %v1454
  %v2850 = vpop.f32.mrf.mxu0
  %v2851 = vadd.f32 %v358, %v2850
  %v2852 = vpop.f32.mrf.mxu0
  %v2853 = vpop.f32.mrf.mxu0
  %v2854 = vadd.f32 %v358, %v2853
  %v2855 = vpop.f32.mrf.mxu0
  %2856 = vmatprep.mubr.bf16.mxu0 %v1457
  %2857 = vmatmul.mubr.bf16.gmra.mxu0 %v1456
  %v2858 = vpop.f32.mrf.mxu0
  %v2859 = vadd.f32 %v358, %v2858
  %v2860 = vpop.f32.mrf.mxu0
  %v2861 = vpop.f32.mrf.mxu0
  %v2862 = vadd.f32 %v358, %v2861
  %v2863 = vpop.f32.mrf.mxu0
  %2864 = vmatprep.mubr.bf16.mxu0 %v1459
  %2865 = vmatmul.mubr.bf16.gmra.mxu0 %v1458
  %v2866 = vpop.f32.mrf.mxu0
  %v2867 = vadd.f32 %v358, %v2866
  %v2868 = vpop.f32.mrf.mxu0
  %v2869 = vpop.f32.mrf.mxu0
  %v2870 = vadd.f32 %v358, %v2869
  %v2871 = vpop.f32.mrf.mxu0
  %2872 = vmatprep.mubr.bf16.mxu0 %v1461
  %2873 = vmatmul.mubr.bf16.gmra.mxu0 %v1460
  %v2874 = vpop.f32.mrf.mxu0
  %v2875 = vadd.f32 %v358, %v2874
  %v2876 = vpop.f32.mrf.mxu0
  %v2877 = vpop.f32.mrf.mxu0
  %v2878 = vadd.f32 %v358, %v2877
  %v2879 = vpop.f32.mrf.mxu0
  %2880 = vmatprep.mubr.bf16.mxu0 %v1463
  %2881 = vmatmul.mubr.bf16.gmra.mxu0 %v1462
  %v2882 = vpop.f32.mrf.mxu0
  %v2883 = vadd.f32 %v358, %v2882
  %v2884 = vpop.f32.mrf.mxu0
  %v2885 = vpop.f32.mrf.mxu0
  %v2886 = vadd.f32 %v358, %v2885
  %v2887 = vpop.f32.mrf.mxu0
  %2888 = vmatprep.mubr.bf16.mxu0 %v1465
  %2889 = vmatmul.mubr.bf16.gmra.mxu0 %v1464
  %v2890 = vpop.f32.mrf.mxu0
  %v2891 = vadd.f32 %v358, %v2890
  %v2892 = vpop.f32.mrf.mxu0
  %v2893 = vpop.f32.mrf.mxu0
  %v2894 = vadd.f32 %v358, %v2893
  %v2895 = vpop.f32.mrf.mxu0
  %2896 = vmatprep.mubr.bf16.mxu0 %v1467
  %2897 = vmatmul.mubr.bf16.gmra.mxu0 %v1466
  %v2898 = vpop.f32.mrf.mxu0
  %v2899 = vadd.f32 %v358, %v2898
  %v2900 = vpop.f32.mrf.mxu0
  %v2901 = vpop.f32.mrf.mxu0
  %v2902 = vadd.f32 %v358, %v2901
  %v2903 = vpop.f32.mrf.mxu0
  %2904 = vmatprep.mubr.bf16.mxu0 %v1469
  %2905 = vmatmul.mubr.bf16.gmra.mxu0 %v1468
  %v2906 = vpop.f32.mrf.mxu0
  %v2907 = vadd.f32 %v358, %v2906
  %v2908 = vpop.f32.mrf.mxu0
  %v2909 = vpop.f32.mrf.mxu0
  %v2910 = vadd.f32 %v358, %v2909
  %v2911 = vpop.f32.mrf.mxu0
  %2912 = vmatprep.mubr.bf16.mxu0 %v1471
  %2913 = vmatmul.mubr.bf16.gmra.mxu0 %v1470
  %v2914 = vpop.f32.mrf.mxu0
  %v2915 = vadd.f32 %v358, %v2914
  %v2916 = vpop.f32.mrf.mxu0
  %v2917 = vpop.f32.mrf.mxu0
  %v2918 = vadd.f32 %v358, %v2917
  %v2919 = vpop.f32.mrf.mxu0
  %2920 = vmatprep.mubr.bf16.mxu0 %v1473
  %2921 = vmatmul.mubr.bf16.gmra.mxu0 %v1472
  %v2922 = vpop.f32.mrf.mxu0
  %v2923 = vadd.f32 %v358, %v2922
  %v2924 = vpop.f32.mrf.mxu0
  %v2925 = vpop.f32.mrf.mxu0
  %v2926 = vadd.f32 %v358, %v2925
  %v2927 = vpop.f32.mrf.mxu0
  %2928 = vmatprep.mubr.bf16.mxu0 %v1475
  %2929 = vmatmul.mubr.bf16.gmra.mxu0 %v1474
  %v2930 = vpop.f32.mrf.mxu0
  %v2931 = vadd.f32 %v358, %v2930
  %v2932 = vpop.f32.mrf.mxu0
  %v2933 = vpop.f32.mrf.mxu0
  %v2934 = vadd.f32 %v358, %v2933
  %v2935 = vpop.f32.mrf.mxu0
  %2936 = vmatprep.mubr.bf16.mxu0 %v1477
  %2937 = vmatmul.mubr.bf16.gmra.mxu0 %v1476
  %v2938 = vpop.f32.mrf.mxu0
  %v2939 = vadd.f32 %v358, %v2938
  %v2940 = vpop.f32.mrf.mxu0
  %v2941 = vpop.f32.mrf.mxu0
  %v2942 = vadd.f32 %v358, %v2941
  %v2943 = vpop.f32.mrf.mxu0
  %2944 = vmatprep.mubr.bf16.mxu0 %v1479
  %2945 = vmatmul.mubr.bf16.gmra.mxu0 %v1478
  %v2946 = vpop.f32.mrf.mxu0
  %v2947 = vadd.f32 %v358, %v2946
  %v2948 = vpop.f32.mrf.mxu0
  %v2949 = vpop.f32.mrf.mxu0
  %v2950 = vadd.f32 %v358, %v2949
  %v2951 = vpop.f32.mrf.mxu0
  %2952 = vmatprep.mubr.bf16.mxu0 %v1481
  %2953 = vmatmul.mubr.bf16.gmra.mxu0 %v1480
  %v2954 = vpop.f32.mrf.mxu0
  %v2955 = vadd.f32 %v358, %v2954
  %v2956 = vpop.f32.mrf.mxu0
  %v2957 = vpop.f32.mrf.mxu0
  %v2958 = vadd.f32 %v358, %v2957
  %v2959 = vpop.f32.mrf.mxu0
  %2960 = vmatprep.mubr.bf16.mxu0 %v1483
  %2961 = vmatmul.mubr.bf16.gmra.mxu0 %v1482
  %v2962 = vpop.f32.mrf.mxu0
  %v2963 = vadd.f32 %v358, %v2962
  %v2964 = vpop.f32.mrf.mxu0
  %v2965 = vpop.f32.mrf.mxu0
  %v2966 = vadd.f32 %v358, %v2965
  %v2967 = vpop.f32.mrf.mxu0
  %2968 = vmatprep.mubr.bf16.mxu0 %v1485
  %2969 = vmatmul.mubr.bf16.gmra.mxu0 %v1484
  %v2970 = vpop.f32.mrf.mxu0
  %v2971 = vadd.f32 %v358, %v2970
  %v2972 = vpop.f32.mrf.mxu0
  %v2973 = vpop.f32.mrf.mxu0
  %v2974 = vadd.f32 %v358, %v2973
  %v2975 = vpop.f32.mrf.mxu0
  %2976 = vmatprep.mubr.bf16.mxu0 %v1487
  %2977 = vmatmul.mubr.bf16.gmra.mxu0 %v1486
  %v2978 = vpop.f32.mrf.mxu0
  %v2979 = vadd.f32 %v358, %v2978
  %v2980 = vpop.f32.mrf.mxu0
  %v2981 = vpop.f32.mrf.mxu0
  %v2982 = vadd.f32 %v358, %v2981
  %v2983 = vpop.f32.mrf.mxu0
  %2984 = vmatprep.mubr.bf16.mxu0 %v1489
  %2985 = vmatmul.mubr.bf16.gmra.mxu0 %v1488
  %v2986 = vpop.f32.mrf.mxu0
  %v2987 = vadd.f32 %v358, %v2986
  %v2988 = vpop.f32.mrf.mxu0
  %v2989 = vpop.f32.mrf.mxu0
  %v2990 = vadd.f32 %v358, %v2989
  %v2991 = vpop.f32.mrf.mxu0
  %2992 = vmatprep.mubr.bf16.mxu0 %v1491
  %2993 = vmatmul.mubr.bf16.gmra.mxu0 %v1490
  %v2994 = vpop.f32.mrf.mxu0
  %v2995 = vadd.f32 %v358, %v2994
  %v2996 = vpop.f32.mrf.mxu0
  %v2997 = vpop.f32.mrf.mxu0
  %v2998 = vadd.f32 %v358, %v2997
  %v2999 = vpop.f32.mrf.mxu0
  %3000 = vmatprep.mubr.bf16.mxu0 %v1493
  %3001 = vmatmul.mubr.bf16.gmra.mxu0 %v1492
  %v3002 = vpop.f32.mrf.mxu0
  %v3003 = vadd.f32 %v358, %v3002
  %v3004 = vpop.f32.mrf.mxu0
  %v3005 = vpop.f32.mrf.mxu0
  %v3006 = vadd.f32 %v358, %v3005
  %v3007 = vpop.f32.mrf.mxu0
  %3008 = vmatprep.mubr.bf16.mxu0 %v1495
  %3009 = vmatmul.mubr.bf16.gmra.mxu0 %v1494
  %v3010 = vpop.f32.mrf.mxu0
  %v3011 = vadd.f32 %v358, %v3010
  %v3012 = vpop.f32.mrf.mxu0
  %v3013 = vpop.f32.mrf.mxu0
  %v3014 = vadd.f32 %v358, %v3013
  %v3015 = vpop.f32.mrf.mxu0
  %3016 = vmatprep.mubr.bf16.mxu0 %v1497
  %3017 = vmatmul.mubr.bf16.gmra.mxu0 %v1496
  %v3018 = vpop.f32.mrf.mxu0
  %v3019 = vadd.f32 %v358, %v3018
  %v3020 = vpop.f32.mrf.mxu0
  %v3021 = vpop.f32.mrf.mxu0
  %v3022 = vadd.f32 %v358, %v3021
  %v3023 = vpop.f32.mrf.mxu0
  %3024 = vmatprep.mubr.bf16.mxu0 %v1499
  %3025 = vmatmul.mubr.bf16.gmra.mxu0 %v1498
  %v3026 = vpop.f32.mrf.mxu0
  %v3027 = vadd.f32 %v358, %v3026
  %v3028 = vpop.f32.mrf.mxu0
  %v3029 = vpop.f32.mrf.mxu0
  %v3030 = vadd.f32 %v358, %v3029
  %v3031 = vpop.f32.mrf.mxu0
  %3032 = vmatprep.mubr.bf16.mxu0 %v1501
  %3033 = vmatmul.mubr.bf16.gmra.mxu0 %v1500
  %v3034 = vpop.f32.mrf.mxu0
  %v3035 = vadd.f32 %v358, %v3034
  %v3036 = vpop.f32.mrf.mxu0
  %v3037 = vpop.f32.mrf.mxu0
  %v3038 = vadd.f32 %v358, %v3037
  %v3039 = vpop.f32.mrf.mxu0
  %3040 = vmatprep.mubr.bf16.mxu0 %v1503
  %3041 = vmatmul.mubr.bf16.gmra.mxu0 %v1502
  %v3042 = vpop.f32.mrf.mxu0
  %v3043 = vadd.f32 %v358, %v3042
  %v3044 = vpop.f32.mrf.mxu0
  %v3045 = vpop.f32.mrf.mxu0
  %v3046 = vadd.f32 %v358, %v3045
  %v3047 = vpop.f32.mrf.mxu0
  %3048 = vmatprep.mubr.bf16.mxu0 %v1505
  %3049 = vmatmul.mubr.bf16.gmra.mxu0 %v1504
  %v3050 = vpop.f32.mrf.mxu0
  %v3051 = vadd.f32 %v358, %v3050
  %v3052 = vpop.f32.mrf.mxu0
  %v3053 = vpop.f32.mrf.mxu0
  %v3054 = vadd.f32 %v358, %v3053
  %v3055 = vpop.f32.mrf.mxu0
  %3056 = vmatprep.mubr.bf16.mxu0 %v1507
  %3057 = vmatmul.mubr.bf16.gmra.mxu0 %v1506
  %v3058 = vpop.f32.mrf.mxu0
  %v3059 = vadd.f32 %v358, %v3058
  %v3060 = vpop.f32.mrf.mxu0
  %v3061 = vpop.f32.mrf.mxu0
  %v3062 = vadd.f32 %v358, %v3061
  %v3063 = vpop.f32.mrf.mxu0
  %3064 = vmatprep.mubr.bf16.mxu0 %v1509
  %3065 = vmatmul.mubr.bf16.gmra.mxu0 %v1508
  %v3066 = vpop.f32.mrf.mxu0
  %v3067 = vadd.f32 %v358, %v3066
  %v3068 = vpop.f32.mrf.mxu0
  %v3069 = vpop.f32.mrf.mxu0
  %v3070 = vadd.f32 %v358, %v3069
  %v3071 = vpop.f32.mrf.mxu0
  %3072 = vmatprep.mubr.bf16.mxu0 %v1511
  %3073 = vmatmul.mubr.bf16.gmra.mxu0 %v1510
  %v3074 = vpop.f32.mrf.mxu0
  %v3075 = vadd.f32 %v358, %v3074
  %v3076 = vpop.f32.mrf.mxu0
  %v3077 = vpop.f32.mrf.mxu0
  %v3078 = vadd.f32 %v358, %v3077
  %v3079 = vpop.f32.mrf.mxu0
  %3080 = vdwg.mxu0
  %v3081 = vmax.f32 %v1931, 0.0
  %v3082 = vmax.f32 %v1934, 0.0
  %v3083 = vmax.f32 %v1939, 0.0
  %v3084 = vmax.f32 %v1942, 0.0
  %v3085 = vmax.f32 %v1947, 0.0
  %v3086 = vmax.f32 %v1950, 0.0
  %v3087 = vmax.f32 %v1955, 0.0
  %v3088 = vmax.f32 %v1958, 0.0
  %v3089 = vmax.f32 %v1963, 0.0
  %v3090 = vmax.f32 %v1966, 0.0
  %v3091 = vmax.f32 %v1971, 0.0
  %v3092 = vmax.f32 %v1974, 0.0
  %v3093 = vmax.f32 %v1979, 0.0
  %v3094 = vmax.f32 %v1982, 0.0
  %v3095 = vmax.f32 %v1987, 0.0
  %v3096 = vmax.f32 %v1990, 0.0
  %v3097 = vmax.f32 %v1995, 0.0
  %v3098 = vmax.f32 %v1998, 0.0
  %v3099 = vmax.f32 %v2003, 0.0
  %v3100 = vmax.f32 %v2006, 0.0
  %v3101 = vmax.f32 %v2011, 0.0
  %v3102 = vmax.f32 %v2014, 0.0
  %v3103 = vmax.f32 %v2019, 0.0
  %v3104 = vmax.f32 %v2022, 0.0
  %v3105 = vmax.f32 %v2027, 0.0
  %v3106 = vmax.f32 %v2030, 0.0
  %v3107 = vmax.f32 %v2035, 0.0
  %v3108 = vmax.f32 %v2038, 0.0
  %v3109 = vmax.f32 %v2043, 0.0
  %v3110 = vmax.f32 %v2046, 0.0
  %v3111 = vmax.f32 %v2051, 0.0
  %v3112 = vmax.f32 %v2054, 0.0
  %v3113 = vmax.f32 %v2059, 0.0
  %v3114 = vmax.f32 %v2062, 0.0
  %v3115 = vmax.f32 %v2067, 0.0
  %v3116 = vmax.f32 %v2070, 0.0
  %v3117 = vmax.f32 %v2075, 0.0
  %v3118 = vmax.f32 %v2078, 0.0
  %v3119 = vmax.f32 %v2083, 0.0
  %v3120 = vmax.f32 %v2086, 0.0
  %v3121 = vmax.f32 %v2091, 0.0
  %v3122 = vmax.f32 %v2094, 0.0
  %v3123 = vmax.f32 %v2099, 0.0
  %v3124 = vmax.f32 %v2102, 0.0
  %v3125 = vmax.f32 %v2107, 0.0
  %v3126 = vmax.f32 %v2110, 0.0
  %v3127 = vmax.f32 %v2115, 0.0
  %v3128 = vmax.f32 %v2118, 0.0
  %v3129 = vmax.f32 %v2123, 0.0
  %v3130 = vmax.f32 %v2126, 0.0
  %v3131 = vmax.f32 %v2131, 0.0
  %v3132 = vmax.f32 %v2134, 0.0
  %v3133 = vmax.f32 %v2139, 0.0
  %v3134 = vmax.f32 %v2142, 0.0
  %v3135 = vmax.f32 %v2147, 0.0
  %v3136 = vmax.f32 %v2150, 0.0
  %v3137 = vmax.f32 %v2155, 0.0
  %v3138 = vmax.f32 %v2158, 0.0
  %v3139 = vmax.f32 %v2163, 0.0
  %v3140 = vmax.f32 %v2166, 0.0
  %v3141 = vmax.f32 %v2171, 0.0
  %v3142 = vmax.f32 %v2174, 0.0
  %v3143 = vmax.f32 %v2179, 0.0
  %v3144 = vmax.f32 %v2182, 0.0
  %v3145 = vmax.f32 %v2187, 0.0
  %v3146 = vmax.f32 %v2190, 0.0
  %v3147 = vmax.f32 %v2195, 0.0
  %v3148 = vmax.f32 %v2198, 0.0
  %v3149 = vmax.f32 %v2203, 0.0
  %v3150 = vmax.f32 %v2206, 0.0
  %v3151 = vmax.f32 %v2211, 0.0
  %v3152 = vmax.f32 %v2214, 0.0
  %v3153 = vmax.f32 %v2219, 0.0
  %v3154 = vmax.f32 %v2222, 0.0
  %v3155 = vmax.f32 %v2227, 0.0
  %v3156 = vmax.f32 %v2230, 0.0
  %v3157 = vmax.f32 %v2235, 0.0
  %v3158 = vmax.f32 %v2238, 0.0
  %v3159 = vmax.f32 %v2243, 0.0
  %v3160 = vmax.f32 %v2246, 0.0
  %v3161 = vmax.f32 %v2251, 0.0
  %v3162 = vmax.f32 %v2254, 0.0
  %v3163 = vmax.f32 %v2259, 0.0
  %v3164 = vmax.f32 %v2262, 0.0
  %v3165 = vmax.f32 %v2267, 0.0
  %v3166 = vmax.f32 %v2270, 0.0
  %v3167 = vmax.f32 %v2275, 0.0
  %v3168 = vmax.f32 %v2278, 0.0
  %v3169 = vmax.f32 %v2283, 0.0
  %v3170 = vmax.f32 %v2286, 0.0
  %v3171 = vmax.f32 %v2291, 0.0
  %v3172 = vmax.f32 %v2294, 0.0
  %v3173 = vmax.f32 %v2299, 0.0
  %v3174 = vmax.f32 %v2302, 0.0
  %v3175 = vmax.f32 %v2307, 0.0
  %v3176 = vmax.f32 %v2310, 0.0
  %v3177 = vmax.f32 %v2315, 0.0
  %v3178 = vmax.f32 %v2318, 0.0
  %v3179 = vmax.f32 %v2323, 0.0
  %v3180 = vmax.f32 %v2326, 0.0
  %v3181 = vmax.f32 %v2331, 0.0
  %v3182 = vmax.f32 %v2334, 0.0
  %v3183 = vmax.f32 %v2339, 0.0
  %v3184 = vmax.f32 %v2342, 0.0
  %v3185 = vmax.f32 %v2347, 0.0
  %v3186 = vmax.f32 %v2350, 0.0
  %v3187 = vmax.f32 %v2355, 0.0
  %v3188 = vmax.f32 %v2358, 0.0
  %v3189 = vmax.f32 %v2363, 0.0
  %v3190 = vmax.f32 %v2366, 0.0
  %v3191 = vmax.f32 %v2371, 0.0
  %v3192 = vmax.f32 %v2374, 0.0
  %v3193 = vmax.f32 %v2379, 0.0
  %v3194 = vmax.f32 %v2382, 0.0
  %v3195 = vmax.f32 %v2387, 0.0
  %v3196 = vmax.f32 %v2390, 0.0
  %v3197 = vmax.f32 %v2395, 0.0
  %v3198 = vmax.f32 %v2398, 0.0
  %v3199 = vmax.f32 %v2403, 0.0
  %v3200 = vmax.f32 %v2406, 0.0
  %v3201 = vmax.f32 %v2411, 0.0
  %v3202 = vmax.f32 %v2414, 0.0
  %v3203 = vmax.f32 %v2419, 0.0
  %v3204 = vmax.f32 %v2422, 0.0
  %v3205 = vmax.f32 %v2427, 0.0
  %v3206 = vmax.f32 %v2430, 0.0
  %v3207 = vmax.f32 %v2435, 0.0
  %v3208 = vmax.f32 %v2438, 0.0
  %v3209 = vmax.f32 %v2443, 0.0
  %v3210 = vmax.f32 %v2446, 0.0
  %v3211 = vmax.f32 %v2451, 0.0
  %v3212 = vmax.f32 %v2454, 0.0
  %v3213 = vmax.f32 %v2459, 0.0
  %v3214 = vmax.f32 %v2462, 0.0
  %v3215 = vmax.f32 %v2467, 0.0
  %v3216 = vmax.f32 %v2470, 0.0
  %v3217 = vmax.f32 %v2475, 0.0
  %v3218 = vmax.f32 %v2478, 0.0
  %v3219 = vmax.f32 %v2483, 0.0
  %v3220 = vmax.f32 %v2486, 0.0
  %v3221 = vmax.f32 %v2491, 0.0
  %v3222 = vmax.f32 %v2494, 0.0
  %v3223 = vmax.f32 %v2499, 0.0
  %v3224 = vmax.f32 %v2502, 0.0
  %v3225 = vmax.f32 %v2507, 0.0
  %v3226 = vmax.f32 %v2510, 0.0
  %v3227 = vmax.f32 %v2515, 0.0
  %v3228 = vmax.f32 %v2518, 0.0
  %v3229 = vmax.f32 %v2523, 0.0
  %v3230 = vmax.f32 %v2526, 0.0
  %v3231 = vmax.f32 %v2531, 0.0
  %v3232 = vmax.f32 %v2534, 0.0
  %v3233 = vmax.f32 %v2539, 0.0
  %v3234 = vmax.f32 %v2542, 0.0
  %v3235 = vmax.f32 %v2547, 0.0
  %v3236 = vmax.f32 %v2550, 0.0
  %v3237 = vmax.f32 %v2555, 0.0
  %v3238 = vmax.f32 %v2558, 0.0
  %v3239 = vmax.f32 %v2563, 0.0
  %v3240 = vmax.f32 %v2566, 0.0
  %v3241 = vmax.f32 %v2571, 0.0
  %v3242 = vmax.f32 %v2574, 0.0
  %v3243 = vmax.f32 %v2579, 0.0
  %v3244 = vmax.f32 %v2582, 0.0
  %v3245 = vmax.f32 %v2587, 0.0
  %v3246 = vmax.f32 %v2590, 0.0
  %v3247 = vmax.f32 %v2595, 0.0
  %v3248 = vmax.f32 %v2598, 0.0
  %v3249 = vmax.f32 %v2603, 0.0
  %v3250 = vmax.f32 %v2606, 0.0
  %v3251 = vmax.f32 %v2611, 0.0
  %v3252 = vmax.f32 %v2614, 0.0
  %v3253 = vmax.f32 %v2619, 0.0
  %v3254 = vmax.f32 %v2622, 0.0
  %v3255 = vmax.f32 %v2627, 0.0
  %v3256 = vmax.f32 %v2630, 0.0
  %v3257 = vmax.f32 %v2635, 0.0
  %v3258 = vmax.f32 %v2638, 0.0
  %v3259 = vmax.f32 %v2643, 0.0
  %v3260 = vmax.f32 %v2646, 0.0
  %v3261 = vmax.f32 %v2651, 0.0
  %v3262 = vmax.f32 %v2654, 0.0
  %v3263 = vmax.f32 %v2659, 0.0
  %v3264 = vmax.f32 %v2662, 0.0
  %v3265 = vmax.f32 %v2667, 0.0
  %v3266 = vmax.f32 %v2670, 0.0
  %v3267 = vmax.f32 %v2675, 0.0
  %v3268 = vmax.f32 %v2678, 0.0
  %v3269 = vmax.f32 %v2683, 0.0
  %v3270 = vmax.f32 %v2686, 0.0
  %v3271 = vmax.f32 %v2691, 0.0
  %v3272 = vmax.f32 %v2694, 0.0
  %v3273 = vmax.f32 %v2699, 0.0
  %v3274 = vmax.f32 %v2702, 0.0
  %v3275 = vmax.f32 %v2707, 0.0
  %v3276 = vmax.f32 %v2710, 0.0
  %v3277 = vmax.f32 %v2715, 0.0
  %v3278 = vmax.f32 %v2718, 0.0
  %v3279 = vmax.f32 %v2723, 0.0
  %v3280 = vmax.f32 %v2726, 0.0
  %v3281 = vmax.f32 %v2731, 0.0
  %v3282 = vmax.f32 %v2734, 0.0
  %v3283 = vmax.f32 %v2739, 0.0
  %v3284 = vmax.f32 %v2742, 0.0
  %v3285 = vmax.f32 %v2747, 0.0
  %v3286 = vmax.f32 %v2750, 0.0
  %v3287 = vmax.f32 %v2755, 0.0
  %v3288 = vmax.f32 %v2758, 0.0
  %v3289 = vmax.f32 %v2763, 0.0
  %v3290 = vmax.f32 %v2766, 0.0
  %v3291 = vmax.f32 %v2771, 0.0
  %v3292 = vmax.f32 %v2774, 0.0
  %v3293 = vmax.f32 %v2779, 0.0
  %v3294 = vmax.f32 %v2782, 0.0
  %v3295 = vmax.f32 %v2787, 0.0
  %v3296 = vmax.f32 %v2790, 0.0
  %v3297 = vmax.f32 %v2795, 0.0
  %v3298 = vmax.f32 %v2798, 0.0
  %v3299 = vmax.f32 %v2803, 0.0
  %v3300 = vmax.f32 %v2806, 0.0
  %v3301 = vmax.f32 %v2811, 0.0
  %v3302 = vmax.f32 %v2814, 0.0
  %v3303 = vmax.f32 %v2819, 0.0
  %v3304 = vmax.f32 %v2822, 0.0
  %v3305 = vmax.f32 %v2827, 0.0
  %v3306 = vmax.f32 %v2830, 0.0
  %v3307 = vmax.f32 %v2835, 0.0
  %v3308 = vmax.f32 %v2838, 0.0
  %v3309 = vmax.f32 %v2843, 0.0
  %v3310 = vmax.f32 %v2846, 0.0
  %v3311 = vmax.f32 %v2851, 0.0
  %v3312 = vmax.f32 %v2854, 0.0
  %v3313 = vmax.f32 %v2859, 0.0
  %v3314 = vmax.f32 %v2862, 0.0
  %v3315 = vmax.f32 %v2867, 0.0
  %v3316 = vmax.f32 %v2870, 0.0
  %v3317 = vmax.f32 %v2875, 0.0
  %v3318 = vmax.f32 %v2878, 0.0
  %v3319 = vmax.f32 %v2883, 0.0
  %v3320 = vmax.f32 %v2886, 0.0
  %v3321 = vmax.f32 %v2891, 0.0
  %v3322 = vmax.f32 %v2894, 0.0
  %v3323 = vmax.f32 %v2899, 0.0
  %v3324 = vmax.f32 %v2902, 0.0
  %v3325 = vmax.f32 %v2907, 0.0
  %v3326 = vmax.f32 %v2910, 0.0
  %v3327 = vmax.f32 %v2915, 0.0
  %v3328 = vmax.f32 %v2918, 0.0
  %v3329 = vmax.f32 %v2923, 0.0
  %v3330 = vmax.f32 %v2926, 0.0
  %v3331 = vmax.f32 %v2931, 0.0
  %v3332 = vmax.f32 %v2934, 0.0
  %v3333 = vmax.f32 %v2939, 0.0
  %v3334 = vmax.f32 %v2942, 0.0
  %v3335 = vmax.f32 %v2947, 0.0
  %v3336 = vmax.f32 %v2950, 0.0
  %v3337 = vmax.f32 %v2955, 0.0
  %v3338 = vmax.f32 %v2958, 0.0
  %v3339 = vmax.f32 %v2963, 0.0
  %v3340 = vmax.f32 %v2966, 0.0
  %v3341 = vmax.f32 %v2971, 0.0
  %v3342 = vmax.f32 %v2974, 0.0
  %v3343 = vmax.f32 %v2979, 0.0
  %v3344 = vmax.f32 %v2982, 0.0
  %v3345 = vmax.f32 %v2987, 0.0
  %v3346 = vmax.f32 %v2990, 0.0
  %v3347 = vmax.f32 %v2995, 0.0
  %v3348 = vmax.f32 %v2998, 0.0
  %v3349 = vmax.f32 %v3003, 0.0
  %v3350 = vmax.f32 %v3006, 0.0
  %v3351 = vmax.f32 %v3011, 0.0
  %v3352 = vmax.f32 %v3014, 0.0
  %v3353 = vmax.f32 %v3019, 0.0
  %v3354 = vmax.f32 %v3022, 0.0
  %v3355 = vmax.f32 %v3027, 0.0
  %v3356 = vmax.f32 %v3030, 0.0
  %v3357 = vmax.f32 %v3035, 0.0
  %v3358 = vmax.f32 %v3038, 0.0
  %v3359 = vmax.f32 %v3043, 0.0
  %v3360 = vmax.f32 %v3046, 0.0
  %v3361 = vmax.f32 %v3051, 0.0
  %v3362 = vmax.f32 %v3054, 0.0
  %v3363 = vmax.f32 %v3059, 0.0
  %v3364 = vmax.f32 %v3062, 0.0
  %v3365 = vmax.f32 %v3067, 0.0
  %v3366 = vmax.f32 %v3070, 0.0
  %v3367 = vmax.f32 %v3075, 0.0
  %v3368 = vmax.f32 %v3078, 0.0
  %v3369 = vpack.c.bf16 %v3082, %v3081
  %v3370 = vpack.c.bf16 %v3084, %v3083
  %v3371 = vpack.c.bf16 %v3086, %v3085
  %v3372 = vpack.c.bf16 %v3088, %v3087
  %v3373 = vpack.c.bf16 %v3090, %v3089
  %v3374 = vpack.c.bf16 %v3092, %v3091
  %v3375 = vpack.c.bf16 %v3094, %v3093
  %v3376 = vpack.c.bf16 %v3096, %v3095
  %v3377 = vpack.c.bf16 %v3098, %v3097
  %v3378 = vpack.c.bf16 %v3100, %v3099
  %v3379 = vpack.c.bf16 %v3102, %v3101
  %v3380 = vpack.c.bf16 %v3104, %v3103
  %v3381 = vpack.c.bf16 %v3106, %v3105
  %v3382 = vpack.c.bf16 %v3108, %v3107
  %v3383 = vpack.c.bf16 %v3110, %v3109
  %v3384 = vpack.c.bf16 %v3112, %v3111
  %v3385 = vpack.c.bf16 %v3114, %v3113
  %v3386 = vpack.c.bf16 %v3116, %v3115
  %v3387 = vpack.c.bf16 %v3118, %v3117
  %v3388 = vpack.c.bf16 %v3120, %v3119
  %v3389 = vpack.c.bf16 %v3122, %v3121
  %v3390 = vpack.c.bf16 %v3124, %v3123
  %v3391 = vpack.c.bf16 %v3126, %v3125
  %v3392 = vpack.c.bf16 %v3128, %v3127
  %v3393 = vpack.c.bf16 %v3130, %v3129
  %v3394 = vpack.c.bf16 %v3132, %v3131
  %v3395 = vpack.c.bf16 %v3134, %v3133
  %v3396 = vpack.c.bf16 %v3136, %v3135
  %v3397 = vpack.c.bf16 %v3138, %v3137
  %v3398 = vpack.c.bf16 %v3140, %v3139
  %v3399 = vpack.c.bf16 %v3142, %v3141
  %v3400 = vpack.c.bf16 %v3144, %v3143
  %v3401 = vpack.c.bf16 %v3146, %v3145
  %v3402 = vpack.c.bf16 %v3148, %v3147
  %v3403 = vpack.c.bf16 %v3150, %v3149
  %v3404 = vpack.c.bf16 %v3152, %v3151
  %v3405 = vpack.c.bf16 %v3154, %v3153
  %v3406 = vpack.c.bf16 %v3156, %v3155
  %v3407 = vpack.c.bf16 %v3158, %v3157
  %v3408 = vpack.c.bf16 %v3160, %v3159
  %v3409 = vpack.c.bf16 %v3162, %v3161
  %v3410 = vpack.c.bf16 %v3164, %v3163
  %v3411 = vpack.c.bf16 %v3166, %v3165
  %v3412 = vpack.c.bf16 %v3168, %v3167
  %v3413 = vpack.c.bf16 %v3170, %v3169
  %v3414 = vpack.c.bf16 %v3172, %v3171
  %v3415 = vpack.c.bf16 %v3174, %v3173
  %v3416 = vpack.c.bf16 %v3176, %v3175
  %v3417 = vpack.c.bf16 %v3178, %v3177
  %v3418 = vpack.c.bf16 %v3180, %v3179
  %v3419 = vpack.c.bf16 %v3182, %v3181
  %v3420 = vpack.c.bf16 %v3184, %v3183
  %v3421 = vpack.c.bf16 %v3186, %v3185
  %v3422 = vpack.c.bf16 %v3188, %v3187
  %v3423 = vpack.c.bf16 %v3190, %v3189
  %v3424 = vpack.c.bf16 %v3192, %v3191
  %v3425 = vpack.c.bf16 %v3194, %v3193
  %v3426 = vpack.c.bf16 %v3196, %v3195
  %v3427 = vpack.c.bf16 %v3198, %v3197
  %v3428 = vpack.c.bf16 %v3200, %v3199
  %v3429 = vpack.c.bf16 %v3202, %v3201
  %v3430 = vpack.c.bf16 %v3204, %v3203
  %v3431 = vpack.c.bf16 %v3206, %v3205
  %v3432 = vpack.c.bf16 %v3208, %v3207
  %v3433 = vpack.c.bf16 %v3210, %v3209
  %v3434 = vpack.c.bf16 %v3212, %v3211
  %v3435 = vpack.c.bf16 %v3214, %v3213
  %v3436 = vpack.c.bf16 %v3216, %v3215
  %v3437 = vpack.c.bf16 %v3218, %v3217
  %v3438 = vpack.c.bf16 %v3220, %v3219
  %v3439 = vpack.c.bf16 %v3222, %v3221
  %v3440 = vpack.c.bf16 %v3224, %v3223
  %v3441 = vpack.c.bf16 %v3226, %v3225
  %v3442 = vpack.c.bf16 %v3228, %v3227
  %v3443 = vpack.c.bf16 %v3230, %v3229
  %v3444 = vpack.c.bf16 %v3232, %v3231
  %v3445 = vpack.c.bf16 %v3234, %v3233
  %v3446 = vpack.c.bf16 %v3236, %v3235
  %v3447 = vpack.c.bf16 %v3238, %v3237
  %v3448 = vpack.c.bf16 %v3240, %v3239
  %v3449 = vpack.c.bf16 %v3242, %v3241
  %v3450 = vpack.c.bf16 %v3244, %v3243
  %v3451 = vpack.c.bf16 %v3246, %v3245
  %v3452 = vpack.c.bf16 %v3248, %v3247
  %v3453 = vpack.c.bf16 %v3250, %v3249
  %v3454 = vpack.c.bf16 %v3252, %v3251
  %v3455 = vpack.c.bf16 %v3254, %v3253
  %v3456 = vpack.c.bf16 %v3256, %v3255
  %v3457 = vpack.c.bf16 %v3258, %v3257
  %v3458 = vpack.c.bf16 %v3260, %v3259
  %v3459 = vpack.c.bf16 %v3262, %v3261
  %v3460 = vpack.c.bf16 %v3264, %v3263
  %v3461 = vpack.c.bf16 %v3266, %v3265
  %v3462 = vpack.c.bf16 %v3268, %v3267
  %v3463 = vpack.c.bf16 %v3270, %v3269
  %v3464 = vpack.c.bf16 %v3272, %v3271
  %v3465 = vpack.c.bf16 %v3274, %v3273
  %v3466 = vpack.c.bf16 %v3276, %v3275
  %v3467 = vpack.c.bf16 %v3278, %v3277
  %v3468 = vpack.c.bf16 %v3280, %v3279
  %v3469 = vpack.c.bf16 %v3282, %v3281
  %v3470 = vpack.c.bf16 %v3284, %v3283
  %v3471 = vpack.c.bf16 %v3286, %v3285
  %v3472 = vpack.c.bf16 %v3288, %v3287
  %v3473 = vpack.c.bf16 %v3290, %v3289
  %v3474 = vpack.c.bf16 %v3292, %v3291
  %v3475 = vpack.c.bf16 %v3294, %v3293
  %v3476 = vpack.c.bf16 %v3296, %v3295
  %v3477 = vpack.c.bf16 %v3298, %v3297
  %v3478 = vpack.c.bf16 %v3300, %v3299
  %v3479 = vpack.c.bf16 %v3302, %v3301
  %v3480 = vpack.c.bf16 %v3304, %v3303
  %v3481 = vpack.c.bf16 %v3306, %v3305
  %v3482 = vpack.c.bf16 %v3308, %v3307
  %v3483 = vpack.c.bf16 %v3310, %v3309
  %v3484 = vpack.c.bf16 %v3312, %v3311
  %v3485 = vpack.c.bf16 %v3314, %v3313
  %v3486 = vpack.c.bf16 %v3316, %v3315
  %v3487 = vpack.c.bf16 %v3318, %v3317
  %v3488 = vpack.c.bf16 %v3320, %v3319
  %v3489 = vpack.c.bf16 %v3322, %v3321
  %v3490 = vpack.c.bf16 %v3324, %v3323
  %v3491 = vpack.c.bf16 %v3326, %v3325
  %v3492 = vpack.c.bf16 %v3328, %v3327
  %v3493 = vpack.c.bf16 %v3330, %v3329
  %v3494 = vpack.c.bf16 %v3332, %v3331
  %v3495 = vpack.c.bf16 %v3334, %v3333
  %v3496 = vpack.c.bf16 %v3336, %v3335
  %v3497 = vpack.c.bf16 %v3338, %v3337
  %v3498 = vpack.c.bf16 %v3340, %v3339
  %v3499 = vpack.c.bf16 %v3342, %v3341
  %v3500 = vpack.c.bf16 %v3344, %v3343
  %v3501 = vpack.c.bf16 %v3346, %v3345
  %v3502 = vpack.c.bf16 %v3348, %v3347
  %v3503 = vpack.c.bf16 %v3350, %v3349
  %v3504 = vpack.c.bf16 %v3352, %v3351
  %v3505 = vpack.c.bf16 %v3354, %v3353
  %v3506 = vpack.c.bf16 %v3356, %v3355
  %v3507 = vpack.c.bf16 %v3358, %v3357
  %v3508 = vpack.c.bf16 %v3360, %v3359
  %v3509 = vpack.c.bf16 %v3362, %v3361
  %v3510 = vpack.c.bf16 %v3364, %v3363
  %v3511 = vpack.c.bf16 %v3366, %v3365
  %v3512 = vpack.c.bf16 %v3368, %v3367
  %v3513 = vld [vmem:[%s3] sm:$0xf]
  %v3514 = vld [vmem:[%s3 + $0x4] sm:$0xf]
  %v3515 = vld [vmem:[%s3 + $0x8] sm:$0xf]
  %v3516 = vld [vmem:[%s3 + $0xc] sm:$0xf]
  %s3517 = scalar_lea.vmem %s3, 16
  %v3518 = vld [vmem:[%s3517] sm:$0xf]
  %v3519 = vld [vmem:[%s3517 + $0x4] sm:$0xf]
  %v3520 = vld [vmem:[%s3517 + $0x8] sm:$0xf]
  %v3521 = vld [vmem:[%s3517 + $0xc] sm:$0xf]
  %v3526 = vunpack.c.l.b16 %v3518
  %v3527 = vunpack.c.l.b16 %v3519
  %v3528 = vunpack.c.l.b16 %v3520
  %v3529 = vunpack.c.l.b16 %v3521
  %v3530 = vpack.c.b16 %v3527, %v3526
  %v3531 = vpack.c.b16 %v3529, %v3528
  %vm3534 = vcmask 261120
  %v3536 = vsel %vm3534, %v3378, 0
  %v3539 = vsel %vm3534, %v3379, 0
  %v3542 = vsel %vm3534, %v3380, 0
  %v3545 = vsel %vm3534, %v3381, 0
  %v3548 = vsel %vm3534, %v3382, 0
  %v3551 = vsel %vm3534, %v3383, 0
  %v3554 = vsel %vm3534, %v3384, 0
  %v3557 = vsel %vm3534, %v3385, 0
  %v3560 = vsel %vm3534, %v3386, 0
  %3562 = vmatprep.subr.bf16.mxu0 0
  %3563 = vmatpush1.bf16.msra.mxu0 0
  %3564 = vmatprep.subr.bf16.mxu0 0
  %3565 = vmatpush1.bf16.msra.mxu0 0
  %3566 = vmatprep.subr.bf16.mxu0 0
  %3567 = vmatpush1.bf16.msra.mxu0 0
  %3568 = vmatprep.subr.bf16.mxu0 0
  %3569 = vmatpush1.bf16.msra.mxu0 0
  %3570 = vmatprep.subr.bf16.mxu0 0
  %3571 = vmatpush1.bf16.msra.mxu0 0
  %3572 = vmatprep.subr.bf16.mxu0 0
  %3573 = vmatpush1.bf16.msra.mxu0 0
  %3574 = vmatprep.subr.bf16.mxu0 0
  %3575 = vmatpush1.bf16.msra.mxu0 %v3531
  %3576 = vmatprep.subr.bf16.mxu0 0
  %3577 = vmatpush1.bf16.msra.mxu0 %v3530
  %3578 = vmatprep.subr.bf16.mxu0 0
  %3579 = vmatpush2.bf16.msra.mxu0 0
  %3580 = vmatprep.subr.bf16.mxu0 0
  %3581 = vmatpush2.bf16.msra.mxu0 0
  %3582 = vmatprep.subr.bf16.mxu0 0
  %3583 = vmatpush2.bf16.msra.mxu0 0
  %3584 = vmatprep.subr.bf16.mxu0 0
  %3585 = vmatpush2.bf16.msra.mxu0 0
  %3586 = vmatprep.subr.bf16.mxu0 0
  %3587 = vmatpush2.bf16.msra.mxu0 0
  %3588 = vmatprep.subr.bf16.mxu0 0
  %3589 = vmatpush2.bf16.msra.mxu0 0
  %3590 = vmatprep.subr.bf16.mxu0 0
  %3591 = vmatpush2.bf16.msra.mxu0 0
  %3592 = vmatprep.subr.bf16.mxu0 0
  %3593 = vmatpush2.bf16.msra.mxu0 0
  %3594 = vmatprep.mubr.bf16.mxu0 0
  %3595 = vmatmul.mubr.bf16.gmra.mxu0 %v3536
  %v3596 = vpop.f32.mrf.mxu0
  %v3597 = vadd.f32 0.0, %v3596
  %v3598 = vpop.f32.mrf.mxu0
  %v3599 = vpop.f32.mrf.mxu0
  %v3600 = vadd.f32 0.0, %v3599
  %v3601 = vpop.f32.mrf.mxu0
  %3602 = vmatprep.mubr.bf16.mxu0 0
  %3603 = vmatmul.mubr.bf16.gmra.mxu0 %v3539
  %v3604 = vpop.f32.mrf.mxu0
  %v3605 = vadd.f32 0.0, %v3604
  %v3606 = vpop.f32.mrf.mxu0
  %v3607 = vpop.f32.mrf.mxu0
  %v3608 = vadd.f32 0.0, %v3607
  %v3609 = vpop.f32.mrf.mxu0
  %3610 = vmatprep.mubr.bf16.mxu0 0
  %3611 = vmatmul.mubr.bf16.gmra.mxu0 %v3542
  %v3612 = vpop.f32.mrf.mxu0
  %v3613 = vadd.f32 0.0, %v3612
  %v3614 = vpop.f32.mrf.mxu0
  %v3615 = vpop.f32.mrf.mxu0
  %v3616 = vadd.f32 0.0, %v3615
  %v3617 = vpop.f32.mrf.mxu0
  %3618 = vmatprep.mubr.bf16.mxu0 0
  %3619 = vmatmul.mubr.bf16.gmra.mxu0 %v3545
  %v3620 = vpop.f32.mrf.mxu0
  %v3621 = vadd.f32 0.0, %v3620
  %v3622 = vpop.f32.mrf.mxu0
  %v3623 = vpop.f32.mrf.mxu0
  %v3624 = vadd.f32 0.0, %v3623
  %v3625 = vpop.f32.mrf.mxu0
  %3626 = vmatprep.mubr.bf16.mxu0 0
  %3627 = vmatmul.mubr.bf16.gmra.mxu0 %v3548
  %v3628 = vpop.f32.mrf.mxu0
  %v3629 = vadd.f32 0.0, %v3628
  %v3630 = vpop.f32.mrf.mxu0
  %v3631 = vpop.f32.mrf.mxu0
  %v3632 = vadd.f32 0.0, %v3631
  %v3633 = vpop.f32.mrf.mxu0
  %3634 = vmatprep.mubr.bf16.mxu0 0
  %3635 = vmatmul.mubr.bf16.gmra.mxu0 %v3551
  %v3636 = vpop.f32.mrf.mxu0
  %v3637 = vadd.f32 0.0, %v3636
  %v3638 = vpop.f32.mrf.mxu0
  %v3639 = vpop.f32.mrf.mxu0
  %v3640 = vadd.f32 0.0, %v3639
  %v3641 = vpop.f32.mrf.mxu0
  %3642 = vmatprep.mubr.bf16.mxu0 0
  %3643 = vmatmul.mubr.bf16.gmra.mxu0 %v3554
  %v3644 = vpop.f32.mrf.mxu0
  %v3645 = vadd.f32 0.0, %v3644
  %v3646 = vpop.f32.mrf.mxu0
  %v3647 = vpop.f32.mrf.mxu0
  %v3648 = vadd.f32 0.0, %v3647
  %v3649 = vpop.f32.mrf.mxu0
  %3650 = vmatprep.mubr.bf16.mxu0 0
  %3651 = vmatmul.mubr.bf16.gmra.mxu0 %v3557
  %v3652 = vpop.f32.mrf.mxu0
  %v3653 = vadd.f32 0.0, %v3652
  %v3654 = vpop.f32.mrf.mxu0
  %v3655 = vpop.f32.mrf.mxu0
  %v3656 = vadd.f32 0.0, %v3655
  %v3657 = vpop.f32.mrf.mxu0
  %3658 = vmatprep.mubr.bf16.mxu0 0
  %3659 = vmatmul.mubr.bf16.gmra.mxu0 %v3560
  %v3660 = vpop.f32.mrf.mxu0
  %v3661 = vadd.f32 0.0, %v3660
  %v3662 = vpop.f32.mrf.mxu0
  %v3663 = vpop.f32.mrf.mxu0
  %v3664 = vadd.f32 0.0, %v3663
  %v3665 = vpop.f32.mrf.mxu0
  %3666 = vdwg.mxu0
  %v3671 = vunpack.c.l.b16 %v3513
  %v3672 = vunpack.c.l.b16 %v3514
  %v3673 = vunpack.c.l.b16 %v3515
  %v3674 = vunpack.c.l.b16 %v3516
  %v3675 = vpack.c.b16 %v3672, %v3671
  %v3676 = vpack.c.b16 %v3674, %v3673
  %v3680 = vsel %vm3534, %v3369, 0
  %v3683 = vsel %vm3534, %v3370, 0
  %v3686 = vsel %vm3534, %v3371, 0
  %v3689 = vsel %vm3534, %v3372, 0
  %v3692 = vsel %vm3534, %v3373, 0
  %v3695 = vsel %vm3534, %v3374, 0
  %v3698 = vsel %vm3534, %v3375, 0
  %v3701 = vsel %vm3534, %v3376, 0
  %v3704 = vsel %vm3534, %v3377, 0
  %3706 = vmatprep.subr.bf16.mxu0 0
  %3707 = vmatpush1.bf16.msra.mxu0 0
  %3708 = vmatprep.subr.bf16.mxu0 0
  %3709 = vmatpush1.bf16.msra.mxu0 0
  %3710 = vmatprep.subr.bf16.mxu0 0
  %3711 = vmatpush1.bf16.msra.mxu0 0
  %3712 = vmatprep.subr.bf16.mxu0 0
  %3713 = vmatpush1.bf16.msra.mxu0 0
  %3714 = vmatprep.subr.bf16.mxu0 0
  %3715 = vmatpush1.bf16.msra.mxu0 0
  %3716 = vmatprep.subr.bf16.mxu0 0
  %3717 = vmatpush1.bf16.msra.mxu0 0
  %3718 = vmatprep.subr.bf16.mxu0 0
  %3719 = vmatpush1.bf16.msra.mxu0 %v3676
  %3720 = vmatprep.subr.bf16.mxu0 0
  %3721 = vmatpush1.bf16.msra.mxu0 %v3675
  %3722 = vmatprep.subr.bf16.mxu0 0
  %3723 = vmatpush2.bf16.msra.mxu0 0
  %3724 = vmatprep.subr.bf16.mxu0 0
  %3725 = vmatpush2.bf16.msra.mxu0 0
  %3726 = vmatprep.subr.bf16.mxu0 0
  %3727 = vmatpush2.bf16.msra.mxu0 0
  %3728 = vmatprep.subr.bf16.mxu0 0
  %3729 = vmatpush2.bf16.msra.mxu0 0
  %3730 = vmatprep.subr.bf16.mxu0 0
  %3731 = vmatpush2.bf16.msra.mxu0 0
  %3732 = vmatprep.subr.bf16.mxu0 0
  %3733 = vmatpush2.bf16.msra.mxu0 0
  %3734 = vmatprep.subr.bf16.mxu0 0
  %3735 = vmatpush2.bf16.msra.mxu0 0
  %3736 = vmatprep.subr.bf16.mxu0 0
  %3737 = vmatpush2.bf16.msra.mxu0 0
  %3738 = vmatprep.mubr.bf16.mxu0 0
  %3739 = vmatmul.mubr.bf16.gmra.mxu0 %v3680
  %v3740 = vpop.f32.mrf.mxu0
  %v3741 = vadd.f32 %v3597, %v3740
  %v3742 = vpop.f32.mrf.mxu0
  %v3743 = vpop.f32.mrf.mxu0
  %v3744 = vadd.f32 %v3600, %v3743
  %v3745 = vpop.f32.mrf.mxu0
  %3746 = vmatprep.mubr.bf16.mxu0 0
  %3747 = vmatmul.mubr.bf16.gmra.mxu0 %v3683
  %v3748 = vpop.f32.mrf.mxu0
  %v3749 = vadd.f32 %v3605, %v3748
  %v3750 = vpop.f32.mrf.mxu0
  %v3751 = vpop.f32.mrf.mxu0
  %v3752 = vadd.f32 %v3608, %v3751
  %v3753 = vpop.f32.mrf.mxu0
  %3754 = vmatprep.mubr.bf16.mxu0 0
  %3755 = vmatmul.mubr.bf16.gmra.mxu0 %v3686
  %v3756 = vpop.f32.mrf.mxu0
  %v3757 = vadd.f32 %v3613, %v3756
  %v3758 = vpop.f32.mrf.mxu0
  %v3759 = vpop.f32.mrf.mxu0
  %v3760 = vadd.f32 %v3616, %v3759
  %v3761 = vpop.f32.mrf.mxu0
  %3762 = vmatprep.mubr.bf16.mxu0 0
  %3763 = vmatmul.mubr.bf16.gmra.mxu0 %v3689
  %v3764 = vpop.f32.mrf.mxu0
  %v3765 = vadd.f32 %v3621, %v3764
  %v3766 = vpop.f32.mrf.mxu0
  %v3767 = vpop.f32.mrf.mxu0
  %v3768 = vadd.f32 %v3624, %v3767
  %v3769 = vpop.f32.mrf.mxu0
  %3770 = vmatprep.mubr.bf16.mxu0 0
  %3771 = vmatmul.mubr.bf16.gmra.mxu0 %v3692
  %v3772 = vpop.f32.mrf.mxu0
  %v3773 = vadd.f32 %v3629, %v3772
  %v3774 = vpop.f32.mrf.mxu0
  %v3775 = vpop.f32.mrf.mxu0
  %v3776 = vadd.f32 %v3632, %v3775
  %v3777 = vpop.f32.mrf.mxu0
  %3778 = vmatprep.mubr.bf16.mxu0 0
  %3779 = vmatmul.mubr.bf16.gmra.mxu0 %v3695
  %v3780 = vpop.f32.mrf.mxu0
  %v3781 = vadd.f32 %v3637, %v3780
  %v3782 = vpop.f32.mrf.mxu0
  %v3783 = vpop.f32.mrf.mxu0
  %v3784 = vadd.f32 %v3640, %v3783
  %v3785 = vpop.f32.mrf.mxu0
  %3786 = vmatprep.mubr.bf16.mxu0 0
  %3787 = vmatmul.mubr.bf16.gmra.mxu0 %v3698
  %v3788 = vpop.f32.mrf.mxu0
  %v3789 = vadd.f32 %v3645, %v3788
  %v3790 = vpop.f32.mrf.mxu0
  %v3791 = vpop.f32.mrf.mxu0
  %v3792 = vadd.f32 %v3648, %v3791
  %v3793 = vpop.f32.mrf.mxu0
  %3794 = vmatprep.mubr.bf16.mxu0 0
  %3795 = vmatmul.mubr.bf16.gmra.mxu0 %v3701
  %v3796 = vpop.f32.mrf.mxu0
  %v3797 = vadd.f32 %v3653, %v3796
  %v3798 = vpop.f32.mrf.mxu0
  %v3799 = vpop.f32.mrf.mxu0
  %v3800 = vadd.f32 %v3656, %v3799
  %v3801 = vpop.f32.mrf.mxu0
  %3802 = vmatprep.mubr.bf16.mxu0 0
  %3803 = vmatmul.mubr.bf16.gmra.mxu0 %v3704
  %v3804 = vpop.f32.mrf.mxu0
  %v3805 = vadd.f32 %v3661, %v3804
  %v3806 = vpop.f32.mrf.mxu0
  %v3807 = vpop.f32.mrf.mxu0
  %v3808 = vadd.f32 %v3664, %v3807
  %v3809 = vpop.f32.mrf.mxu0
  %3810 = vdwg.mxu0
  %s3811 = scalar_lea.vmem %s3, 32
  %v3812 = vld [vmem:[%s3811] sm:$0xf]
  %v3813 = vld [vmem:[%s3811 + $0x4] sm:$0xf]
  %v3814 = vld [vmem:[%s3811 + $0x8] sm:$0xf]
  %v3815 = vld [vmem:[%s3811 + $0xc] sm:$0xf]
  %v3820 = vunpack.c.l.b16 %v3812
  %v3821 = vunpack.c.l.b16 %v3813
  %v3822 = vunpack.c.l.b16 %v3814
  %v3823 = vunpack.c.l.b16 %v3815
  %v3824 = vpack.c.b16 %v3821, %v3820
  %v3825 = vpack.c.b16 %v3823, %v3822
  %v3829 = vsel %vm3534, %v3387, 0
  %v3832 = vsel %vm3534, %v3388, 0
  %v3835 = vsel %vm3534, %v3389, 0
  %v3838 = vsel %vm3534, %v3390, 0
  %v3841 = vsel %vm3534, %v3391, 0
  %v3844 = vsel %vm3534, %v3392, 0
  %v3847 = vsel %vm3534, %v3393, 0
  %v3850 = vsel %vm3534, %v3394, 0
  %v3853 = vsel %vm3534, %v3395, 0
  %3855 = vmatprep.subr.bf16.mxu0 0
  %3856 = vmatpush1.bf16.msra.mxu0 0
  %3857 = vmatprep.subr.bf16.mxu0 0
  %3858 = vmatpush1.bf16.msra.mxu0 0
  %3859 = vmatprep.subr.bf16.mxu0 0
  %3860 = vmatpush1.bf16.msra.mxu0 0
  %3861 = vmatprep.subr.bf16.mxu0 0
  %3862 = vmatpush1.bf16.msra.mxu0 0
  %3863 = vmatprep.subr.bf16.mxu0 0
  %3864 = vmatpush1.bf16.msra.mxu0 0
  %3865 = vmatprep.subr.bf16.mxu0 0
  %3866 = vmatpush1.bf16.msra.mxu0 0
  %3867 = vmatprep.subr.bf16.mxu0 0
  %3868 = vmatpush1.bf16.msra.mxu0 %v3825
  %3869 = vmatprep.subr.bf16.mxu0 0
  %3870 = vmatpush1.bf16.msra.mxu0 %v3824
  %3871 = vmatprep.subr.bf16.mxu0 0
  %3872 = vmatpush2.bf16.msra.mxu0 0
  %3873 = vmatprep.subr.bf16.mxu0 0
  %3874 = vmatpush2.bf16.msra.mxu0 0
  %3875 = vmatprep.subr.bf16.mxu0 0
  %3876 = vmatpush2.bf16.msra.mxu0 0
  %3877 = vmatprep.subr.bf16.mxu0 0
  %3878 = vmatpush2.bf16.msra.mxu0 0
  %3879 = vmatprep.subr.bf16.mxu0 0
  %3880 = vmatpush2.bf16.msra.mxu0 0
  %3881 = vmatprep.subr.bf16.mxu0 0
  %3882 = vmatpush2.bf16.msra.mxu0 0
  %3883 = vmatprep.subr.bf16.mxu0 0
  %3884 = vmatpush2.bf16.msra.mxu0 0
  %3885 = vmatprep.subr.bf16.mxu0 0
  %3886 = vmatpush2.bf16.msra.mxu0 0
  %3887 = vmatprep.mubr.bf16.mxu0 0
  %3888 = vmatmul.mubr.bf16.gmra.mxu0 %v3829
  %v3889 = vpop.f32.mrf.mxu0
  %v3890 = vadd.f32 0.0, %v3889
  %v3891 = vpop.f32.mrf.mxu0
  %v3892 = vpop.f32.mrf.mxu0
  %v3893 = vadd.f32 0.0, %v3892
  %v3894 = vpop.f32.mrf.mxu0
  %3895 = vmatprep.mubr.bf16.mxu0 0
  %3896 = vmatmul.mubr.bf16.gmra.mxu0 %v3832
  %v3897 = vpop.f32.mrf.mxu0
  %v3898 = vadd.f32 0.0, %v3897
  %v3899 = vpop.f32.mrf.mxu0
  %v3900 = vpop.f32.mrf.mxu0
  %v3901 = vadd.f32 0.0, %v3900
  %v3902 = vpop.f32.mrf.mxu0
  %3903 = vmatprep.mubr.bf16.mxu0 0
  %3904 = vmatmul.mubr.bf16.gmra.mxu0 %v3835
  %v3905 = vpop.f32.mrf.mxu0
  %v3906 = vadd.f32 0.0, %v3905
  %v3907 = vpop.f32.mrf.mxu0
  %v3908 = vpop.f32.mrf.mxu0
  %v3909 = vadd.f32 0.0, %v3908
  %v3910 = vpop.f32.mrf.mxu0
  %3911 = vmatprep.mubr.bf16.mxu0 0
  %3912 = vmatmul.mubr.bf16.gmra.mxu0 %v3838
  %v3913 = vpop.f32.mrf.mxu0
  %v3914 = vadd.f32 0.0, %v3913
  %v3915 = vpop.f32.mrf.mxu0
  %v3916 = vpop.f32.mrf.mxu0
  %v3917 = vadd.f32 0.0, %v3916
  %v3918 = vpop.f32.mrf.mxu0
  %3919 = vmatprep.mubr.bf16.mxu0 0
  %3920 = vmatmul.mubr.bf16.gmra.mxu0 %v3841
  %v3921 = vpop.f32.mrf.mxu0
  %v3922 = vadd.f32 0.0, %v3921
  %v3923 = vpop.f32.mrf.mxu0
  %v3924 = vpop.f32.mrf.mxu0
  %v3925 = vadd.f32 0.0, %v3924
  %v3926 = vpop.f32.mrf.mxu0
  %3927 = vmatprep.mubr.bf16.mxu0 0
  %3928 = vmatmul.mubr.bf16.gmra.mxu0 %v3844
  %v3929 = vpop.f32.mrf.mxu0
  %v3930 = vadd.f32 0.0, %v3929
  %v3931 = vpop.f32.mrf.mxu0
  %v3932 = vpop.f32.mrf.mxu0
  %v3933 = vadd.f32 0.0, %v3932
  %v3934 = vpop.f32.mrf.mxu0
  %3935 = vmatprep.mubr.bf16.mxu0 0
  %3936 = vmatmul.mubr.bf16.gmra.mxu0 %v3847
  %v3937 = vpop.f32.mrf.mxu0
  %v3938 = vadd.f32 0.0, %v3937
  %v3939 = vpop.f32.mrf.mxu0
  %v3940 = vpop.f32.mrf.mxu0
  %v3941 = vadd.f32 0.0, %v3940
  %v3942 = vpop.f32.mrf.mxu0
  %3943 = vmatprep.mubr.bf16.mxu0 0
  %3944 = vmatmul.mubr.bf16.gmra.mxu0 %v3850
  %v3945 = vpop.f32.mrf.mxu0
  %v3946 = vadd.f32 0.0, %v3945
  %v3947 = vpop.f32.mrf.mxu0
  %v3948 = vpop.f32.mrf.mxu0
  %v3949 = vadd.f32 0.0, %v3948
  %v3950 = vpop.f32.mrf.mxu0
  %3951 = vmatprep.mubr.bf16.mxu0 0
  %3952 = vmatmul.mubr.bf16.gmra.mxu0 %v3853
  %v3953 = vpop.f32.mrf.mxu0
  %v3954 = vadd.f32 0.0, %v3953
  %v3955 = vpop.f32.mrf.mxu0
  %v3956 = vpop.f32.mrf.mxu0
  %v3957 = vadd.f32 0.0, %v3956
  %v3958 = vpop.f32.mrf.mxu0
  %3959 = vdwg.mxu0
  %v3960 = vadd.f32 %v3741, %v3890
  %v3961 = vadd.f32 %v3744, %v3893
  %v3962 = vadd.f32 %v3749, %v3898
  %v3963 = vadd.f32 %v3752, %v3901
  %v3964 = vadd.f32 %v3757, %v3906
  %v3965 = vadd.f32 %v3760, %v3909
  %v3966 = vadd.f32 %v3765, %v3914
  %v3967 = vadd.f32 %v3768, %v3917
  %v3968 = vadd.f32 %v3773, %v3922
  %v3969 = vadd.f32 %v3776, %v3925
  %v3970 = vadd.f32 %v3781, %v3930
  %v3971 = vadd.f32 %v3784, %v3933
  %v3972 = vadd.f32 %v3789, %v3938
  %v3973 = vadd.f32 %v3792, %v3941
  %v3974 = vadd.f32 %v3797, %v3946
  %v3975 = vadd.f32 %v3800, %v3949
  %v3976 = vadd.f32 %v3805, %v3954
  %v3977 = vadd.f32 %v3808, %v3957
  %s3978 = scalar_lea.vmem %s3, 48
  %v3979 = vld [vmem:[%s3978] sm:$0xf]
  %v3980 = vld [vmem:[%s3978 + $0x4] sm:$0xf]
  %v3981 = vld [vmem:[%s3978 + $0x8] sm:$0xf]
  %v3982 = vld [vmem:[%s3978 + $0xc] sm:$0xf]
  %v3987 = vunpack.c.l.b16 %v3979
  %v3988 = vunpack.c.l.b16 %v3980
  %v3989 = vunpack.c.l.b16 %v3981
  %v3990 = vunpack.c.l.b16 %v3982
  %v3991 = vpack.c.b16 %v3988, %v3987
  %v3992 = vpack.c.b16 %v3990, %v3989
  %v3996 = vsel %vm3534, %v3396, 0
  %v3999 = vsel %vm3534, %v3397, 0
  %v4002 = vsel %vm3534, %v3398, 0
  %v4005 = vsel %vm3534, %v3399, 0
  %v4008 = vsel %vm3534, %v3400, 0
  %v4011 = vsel %vm3534, %v3401, 0
  %v4014 = vsel %vm3534, %v3402, 0
  %v4017 = vsel %vm3534, %v3403, 0
  %v4020 = vsel %vm3534, %v3404, 0
  %4022 = vmatprep.subr.bf16.mxu0 0
  %4023 = vmatpush1.bf16.msra.mxu0 0
  %4024 = vmatprep.subr.bf16.mxu0 0
  %4025 = vmatpush1.bf16.msra.mxu0 0
  %4026 = vmatprep.subr.bf16.mxu0 0
  %4027 = vmatpush1.bf16.msra.mxu0 0
  %4028 = vmatprep.subr.bf16.mxu0 0
  %4029 = vmatpush1.bf16.msra.mxu0 0
  %4030 = vmatprep.subr.bf16.mxu0 0
  %4031 = vmatpush1.bf16.msra.mxu0 0
  %4032 = vmatprep.subr.bf16.mxu0 0
  %4033 = vmatpush1.bf16.msra.mxu0 0
  %4034 = vmatprep.subr.bf16.mxu0 0
  %4035 = vmatpush1.bf16.msra.mxu0 %v3992
  %4036 = vmatprep.subr.bf16.mxu0 0
  %4037 = vmatpush1.bf16.msra.mxu0 %v3991
  %4038 = vmatprep.subr.bf16.mxu0 0
  %4039 = vmatpush2.bf16.msra.mxu0 0
  %4040 = vmatprep.subr.bf16.mxu0 0
  %4041 = vmatpush2.bf16.msra.mxu0 0
  %4042 = vmatprep.subr.bf16.mxu0 0
  %4043 = vmatpush2.bf16.msra.mxu0 0
  %4044 = vmatprep.subr.bf16.mxu0 0
  %4045 = vmatpush2.bf16.msra.mxu0 0
  %4046 = vmatprep.subr.bf16.mxu0 0
  %4047 = vmatpush2.bf16.msra.mxu0 0
  %4048 = vmatprep.subr.bf16.mxu0 0
  %4049 = vmatpush2.bf16.msra.mxu0 0
  %4050 = vmatprep.subr.bf16.mxu0 0
  %4051 = vmatpush2.bf16.msra.mxu0 0
  %4052 = vmatprep.subr.bf16.mxu0 0
  %4053 = vmatpush2.bf16.msra.mxu0 0
  %4054 = vmatprep.mubr.bf16.mxu0 0
  %4055 = vmatmul.mubr.bf16.gmra.mxu0 %v3996
  %v4056 = vpop.f32.mrf.mxu0
  %v4057 = vadd.f32 0.0, %v4056
  %v4058 = vpop.f32.mrf.mxu0
  %v4059 = vpop.f32.mrf.mxu0
  %v4060 = vadd.f32 0.0, %v4059
  %v4061 = vpop.f32.mrf.mxu0
  %4062 = vmatprep.mubr.bf16.mxu0 0
  %4063 = vmatmul.mubr.bf16.gmra.mxu0 %v3999
  %v4064 = vpop.f32.mrf.mxu0
  %v4065 = vadd.f32 0.0, %v4064
  %v4066 = vpop.f32.mrf.mxu0
  %v4067 = vpop.f32.mrf.mxu0
  %v4068 = vadd.f32 0.0, %v4067
  %v4069 = vpop.f32.mrf.mxu0
  %4070 = vmatprep.mubr.bf16.mxu0 0
  %4071 = vmatmul.mubr.bf16.gmra.mxu0 %v4002
  %v4072 = vpop.f32.mrf.mxu0
  %v4073 = vadd.f32 0.0, %v4072
  %v4074 = vpop.f32.mrf.mxu0
  %v4075 = vpop.f32.mrf.mxu0
  %v4076 = vadd.f32 0.0, %v4075
  %v4077 = vpop.f32.mrf.mxu0
  %4078 = vmatprep.mubr.bf16.mxu0 0
  %4079 = vmatmul.mubr.bf16.gmra.mxu0 %v4005
  %v4080 = vpop.f32.mrf.mxu0
  %v4081 = vadd.f32 0.0, %v4080
  %v4082 = vpop.f32.mrf.mxu0
  %v4083 = vpop.f32.mrf.mxu0
  %v4084 = vadd.f32 0.0, %v4083
  %v4085 = vpop.f32.mrf.mxu0
  %4086 = vmatprep.mubr.bf16.mxu0 0
  %4087 = vmatmul.mubr.bf16.gmra.mxu0 %v4008
  %v4088 = vpop.f32.mrf.mxu0
  %v4089 = vadd.f32 0.0, %v4088
  %v4090 = vpop.f32.mrf.mxu0
  %v4091 = vpop.f32.mrf.mxu0
  %v4092 = vadd.f32 0.0, %v4091
  %v4093 = vpop.f32.mrf.mxu0
  %4094 = vmatprep.mubr.bf16.mxu0 0
  %4095 = vmatmul.mubr.bf16.gmra.mxu0 %v4011
  %v4096 = vpop.f32.mrf.mxu0
  %v4097 = vadd.f32 0.0, %v4096
  %v4098 = vpop.f32.mrf.mxu0
  %v4099 = vpop.f32.mrf.mxu0
  %v4100 = vadd.f32 0.0, %v4099
  %v4101 = vpop.f32.mrf.mxu0
  %4102 = vmatprep.mubr.bf16.mxu0 0
  %4103 = vmatmul.mubr.bf16.gmra.mxu0 %v4014
  %v4104 = vpop.f32.mrf.mxu0
  %v4105 = vadd.f32 0.0, %v4104
  %v4106 = vpop.f32.mrf.mxu0
  %v4107 = vpop.f32.mrf.mxu0
  %v4108 = vadd.f32 0.0, %v4107
  %v4109 = vpop.f32.mrf.mxu0
  %4110 = vmatprep.mubr.bf16.mxu0 0
  %4111 = vmatmul.mubr.bf16.gmra.mxu0 %v4017
  %v4112 = vpop.f32.mrf.mxu0
  %v4113 = vadd.f32 0.0, %v4112
  %v4114 = vpop.f32.mrf.mxu0
  %v4115 = vpop.f32.mrf.mxu0
  %v4116 = vadd.f32 0.0, %v4115
  %v4117 = vpop.f32.mrf.mxu0
  %4118 = vmatprep.mubr.bf16.mxu0 0
  %4119 = vmatmul.mubr.bf16.gmra.mxu0 %v4020
  %v4120 = vpop.f32.mrf.mxu0
  %v4121 = vadd.f32 0.0, %v4120
  %v4122 = vpop.f32.mrf.mxu0
  %v4123 = vpop.f32.mrf.mxu0
  %v4124 = vadd.f32 0.0, %v4123
  %v4125 = vpop.f32.mrf.mxu0
  %4126 = vdwg.mxu0
  %v4127 = vadd.f32 %v3960, %v4057
  %v4128 = vadd.f32 %v3961, %v4060
  %v4129 = vadd.f32 %v3962, %v4065
  %v4130 = vadd.f32 %v3963, %v4068
  %v4131 = vadd.f32 %v3964, %v4073
  %v4132 = vadd.f32 %v3965, %v4076
  %v4133 = vadd.f32 %v3966, %v4081
  %v4134 = vadd.f32 %v3967, %v4084
  %v4135 = vadd.f32 %v3968, %v4089
  %v4136 = vadd.f32 %v3969, %v4092
  %v4137 = vadd.f32 %v3970, %v4097
  %v4138 = vadd.f32 %v3971, %v4100
  %v4139 = vadd.f32 %v3972, %v4105
  %v4140 = vadd.f32 %v3973, %v4108
  %v4141 = vadd.f32 %v3974, %v4113
  %v4142 = vadd.f32 %v3975, %v4116
  %v4143 = vadd.f32 %v3976, %v4121
  %v4144 = vadd.f32 %v3977, %v4124
  %s4145 = scalar_lea.vmem %s3, 64
  %v4146 = vld [vmem:[%s4145] sm:$0xf]
  %v4147 = vld [vmem:[%s4145 + $0x4] sm:$0xf]
  %v4148 = vld [vmem:[%s4145 + $0x8] sm:$0xf]
  %v4149 = vld [vmem:[%s4145 + $0xc] sm:$0xf]
  %v4154 = vunpack.c.l.b16 %v4146
  %v4155 = vunpack.c.l.b16 %v4147
  %v4156 = vunpack.c.l.b16 %v4148
  %v4157 = vunpack.c.l.b16 %v4149
  %v4158 = vpack.c.b16 %v4155, %v4154
  %v4159 = vpack.c.b16 %v4157, %v4156
  %v4163 = vsel %vm3534, %v3405, 0
  %v4166 = vsel %vm3534, %v3406, 0
  %v4169 = vsel %vm3534, %v3407, 0
  %v4172 = vsel %vm3534, %v3408, 0
  %v4175 = vsel %vm3534, %v3409, 0
  %v4178 = vsel %vm3534, %v3410, 0
  %v4181 = vsel %vm3534, %v3411, 0
  %v4184 = vsel %vm3534, %v3412, 0
  %v4187 = vsel %vm3534, %v3413, 0
  %4189 = vmatprep.subr.bf16.mxu0 0
  %4190 = vmatpush1.bf16.msra.mxu0 0
  %4191 = vmatprep.subr.bf16.mxu0 0
  %4192 = vmatpush1.bf16.msra.mxu0 0
  %4193 = vmatprep.subr.bf16.mxu0 0
  %4194 = vmatpush1.bf16.msra.mxu0 0
  %4195 = vmatprep.subr.bf16.mxu0 0
  %4196 = vmatpush1.bf16.msra.mxu0 0
  %4197 = vmatprep.subr.bf16.mxu0 0
  %4198 = vmatpush1.bf16.msra.mxu0 0
  %4199 = vmatprep.subr.bf16.mxu0 0
  %4200 = vmatpush1.bf16.msra.mxu0 0
  %4201 = vmatprep.subr.bf16.mxu0 0
  %4202 = vmatpush1.bf16.msra.mxu0 %v4159
  %4203 = vmatprep.subr.bf16.mxu0 0
  %4204 = vmatpush1.bf16.msra.mxu0 %v4158
  %4205 = vmatprep.subr.bf16.mxu0 0
  %4206 = vmatpush2.bf16.msra.mxu0 0
  %4207 = vmatprep.subr.bf16.mxu0 0
  %4208 = vmatpush2.bf16.msra.mxu0 0
  %4209 = vmatprep.subr.bf16.mxu0 0
  %4210 = vmatpush2.bf16.msra.mxu0 0
  %4211 = vmatprep.subr.bf16.mxu0 0
  %4212 = vmatpush2.bf16.msra.mxu0 0
  %4213 = vmatprep.subr.bf16.mxu0 0
  %4214 = vmatpush2.bf16.msra.mxu0 0
  %4215 = vmatprep.subr.bf16.mxu0 0
  %4216 = vmatpush2.bf16.msra.mxu0 0
  %4217 = vmatprep.subr.bf16.mxu0 0
  %4218 = vmatpush2.bf16.msra.mxu0 0
  %4219 = vmatprep.subr.bf16.mxu0 0
  %4220 = vmatpush2.bf16.msra.mxu0 0
  %4221 = vmatprep.mubr.bf16.mxu0 0
  %4222 = vmatmul.mubr.bf16.gmra.mxu0 %v4163
  %v4223 = vpop.f32.mrf.mxu0
  %v4224 = vadd.f32 0.0, %v4223
  %v4225 = vpop.f32.mrf.mxu0
  %v4226 = vpop.f32.mrf.mxu0
  %v4227 = vadd.f32 0.0, %v4226
  %v4228 = vpop.f32.mrf.mxu0
  %4229 = vmatprep.mubr.bf16.mxu0 0
  %4230 = vmatmul.mubr.bf16.gmra.mxu0 %v4166
  %v4231 = vpop.f32.mrf.mxu0
  %v4232 = vadd.f32 0.0, %v4231
  %v4233 = vpop.f32.mrf.mxu0
  %v4234 = vpop.f32.mrf.mxu0
  %v4235 = vadd.f32 0.0, %v4234
  %v4236 = vpop.f32.mrf.mxu0
  %4237 = vmatprep.mubr.bf16.mxu0 0
  %4238 = vmatmul.mubr.bf16.gmra.mxu0 %v4169
  %v4239 = vpop.f32.mrf.mxu0
  %v4240 = vadd.f32 0.0, %v4239
  %v4241 = vpop.f32.mrf.mxu0
  %v4242 = vpop.f32.mrf.mxu0
  %v4243 = vadd.f32 0.0, %v4242
  %v4244 = vpop.f32.mrf.mxu0
  %4245 = vmatprep.mubr.bf16.mxu0 0
  %4246 = vmatmul.mubr.bf16.gmra.mxu0 %v4172
  %v4247 = vpop.f32.mrf.mxu0
  %v4248 = vadd.f32 0.0, %v4247
  %v4249 = vpop.f32.mrf.mxu0
  %v4250 = vpop.f32.mrf.mxu0
  %v4251 = vadd.f32 0.0, %v4250
  %v4252 = vpop.f32.mrf.mxu0
  %4253 = vmatprep.mubr.bf16.mxu0 0
  %4254 = vmatmul.mubr.bf16.gmra.mxu0 %v4175
  %v4255 = vpop.f32.mrf.mxu0
  %v4256 = vadd.f32 0.0, %v4255
  %v4257 = vpop.f32.mrf.mxu0
  %v4258 = vpop.f32.mrf.mxu0
  %v4259 = vadd.f32 0.0, %v4258
  %v4260 = vpop.f32.mrf.mxu0
  %4261 = vmatprep.mubr.bf16.mxu0 0
  %4262 = vmatmul.mubr.bf16.gmra.mxu0 %v4178
  %v4263 = vpop.f32.mrf.mxu0
  %v4264 = vadd.f32 0.0, %v4263
  %v4265 = vpop.f32.mrf.mxu0
  %v4266 = vpop.f32.mrf.mxu0
  %v4267 = vadd.f32 0.0, %v4266
  %v4268 = vpop.f32.mrf.mxu0
  %4269 = vmatprep.mubr.bf16.mxu0 0
  %4270 = vmatmul.mubr.bf16.gmra.mxu0 %v4181
  %v4271 = vpop.f32.mrf.mxu0
  %v4272 = vadd.f32 0.0, %v4271
  %v4273 = vpop.f32.mrf.mxu0
  %v4274 = vpop.f32.mrf.mxu0
  %v4275 = vadd.f32 0.0, %v4274
  %v4276 = vpop.f32.mrf.mxu0
  %4277 = vmatprep.mubr.bf16.mxu0 0
  %4278 = vmatmul.mubr.bf16.gmra.mxu0 %v4184
  %v4279 = vpop.f32.mrf.mxu0
  %v4280 = vadd.f32 0.0, %v4279
  %v4281 = vpop.f32.mrf.mxu0
  %v4282 = vpop.f32.mrf.mxu0
  %v4283 = vadd.f32 0.0, %v4282
  %v4284 = vpop.f32.mrf.mxu0
  %4285 = vmatprep.mubr.bf16.mxu0 0
  %4286 = vmatmul.mubr.bf16.gmra.mxu0 %v4187
  %v4287 = vpop.f32.mrf.mxu0
  %v4288 = vadd.f32 0.0, %v4287
  %v4289 = vpop.f32.mrf.mxu0
  %v4290 = vpop.f32.mrf.mxu0
  %v4291 = vadd.f32 0.0, %v4290
  %v4292 = vpop.f32.mrf.mxu0
  %4293 = vdwg.mxu0
  %v4294 = vadd.f32 %v4127, %v4224
  %v4295 = vadd.f32 %v4128, %v4227
  %v4296 = vadd.f32 %v4129, %v4232
  %v4297 = vadd.f32 %v4130, %v4235
  %v4298 = vadd.f32 %v4131, %v4240
  %v4299 = vadd.f32 %v4132, %v4243
  %v4300 = vadd.f32 %v4133, %v4248
  %v4301 = vadd.f32 %v4134, %v4251
  %v4302 = vadd.f32 %v4135, %v4256
  %v4303 = vadd.f32 %v4136, %v4259
  %v4304 = vadd.f32 %v4137, %v4264
  %v4305 = vadd.f32 %v4138, %v4267
  %v4306 = vadd.f32 %v4139, %v4272
  %v4307 = vadd.f32 %v4140, %v4275
  %v4308 = vadd.f32 %v4141, %v4280
  %v4309 = vadd.f32 %v4142, %v4283
  %v4310 = vadd.f32 %v4143, %v4288
  %v4311 = vadd.f32 %v4144, %v4291
  %s4312 = scalar_lea.vmem %s3, 80
  %v4313 = vld [vmem:[%s4312] sm:$0xf]
  %v4314 = vld [vmem:[%s4312 + $0x4] sm:$0xf]
  %v4315 = vld [vmem:[%s4312 + $0x8] sm:$0xf]
  %v4316 = vld [vmem:[%s4312 + $0xc] sm:$0xf]
  %v4321 = vunpack.c.l.b16 %v4313
  %v4322 = vunpack.c.l.b16 %v4314
  %v4323 = vunpack.c.l.b16 %v4315
  %v4324 = vunpack.c.l.b16 %v4316
  %v4325 = vpack.c.b16 %v4322, %v4321
  %v4326 = vpack.c.b16 %v4324, %v4323
  %v4330 = vsel %vm3534, %v3414, 0
  %v4333 = vsel %vm3534, %v3415, 0
  %v4336 = vsel %vm3534, %v3416, 0
  %v4339 = vsel %vm3534, %v3417, 0
  %v4342 = vsel %vm3534, %v3418, 0
  %v4345 = vsel %vm3534, %v3419, 0
  %v4348 = vsel %vm3534, %v3420, 0
  %v4351 = vsel %vm3534, %v3421, 0
  %v4354 = vsel %vm3534, %v3422, 0
  %4356 = vmatprep.subr.bf16.mxu0 0
  %4357 = vmatpush1.bf16.msra.mxu0 0
  %4358 = vmatprep.subr.bf16.mxu0 0
  %4359 = vmatpush1.bf16.msra.mxu0 0
  %4360 = vmatprep.subr.bf16.mxu0 0
  %4361 = vmatpush1.bf16.msra.mxu0 0
  %4362 = vmatprep.subr.bf16.mxu0 0
  %4363 = vmatpush1.bf16.msra.mxu0 0
  %4364 = vmatprep.subr.bf16.mxu0 0
  %4365 = vmatpush1.bf16.msra.mxu0 0
  %4366 = vmatprep.subr.bf16.mxu0 0
  %4367 = vmatpush1.bf16.msra.mxu0 0
  %4368 = vmatprep.subr.bf16.mxu0 0
  %4369 = vmatpush1.bf16.msra.mxu0 %v4326
  %4370 = vmatprep.subr.bf16.mxu0 0
  %4371 = vmatpush1.bf16.msra.mxu0 %v4325
  %4372 = vmatprep.subr.bf16.mxu0 0
  %4373 = vmatpush2.bf16.msra.mxu0 0
  %4374 = vmatprep.subr.bf16.mxu0 0
  %4375 = vmatpush2.bf16.msra.mxu0 0
  %4376 = vmatprep.subr.bf16.mxu0 0
  %4377 = vmatpush2.bf16.msra.mxu0 0
  %4378 = vmatprep.subr.bf16.mxu0 0
  %4379 = vmatpush2.bf16.msra.mxu0 0
  %4380 = vmatprep.subr.bf16.mxu0 0
  %4381 = vmatpush2.bf16.msra.mxu0 0
  %4382 = vmatprep.subr.bf16.mxu0 0
  %4383 = vmatpush2.bf16.msra.mxu0 0
  %4384 = vmatprep.subr.bf16.mxu0 0
  %4385 = vmatpush2.bf16.msra.mxu0 0
  %4386 = vmatprep.subr.bf16.mxu0 0
  %4387 = vmatpush2.bf16.msra.mxu0 0
  %4388 = vmatprep.mubr.bf16.mxu0 0
  %4389 = vmatmul.mubr.bf16.gmra.mxu0 %v4330
  %v4390 = vpop.f32.mrf.mxu0
  %v4391 = vadd.f32 0.0, %v4390
  %v4392 = vpop.f32.mrf.mxu0
  %v4393 = vpop.f32.mrf.mxu0
  %v4394 = vadd.f32 0.0, %v4393
  %v4395 = vpop.f32.mrf.mxu0
  %4396 = vmatprep.mubr.bf16.mxu0 0
  %4397 = vmatmul.mubr.bf16.gmra.mxu0 %v4333
  %v4398 = vpop.f32.mrf.mxu0
  %v4399 = vadd.f32 0.0, %v4398
  %v4400 = vpop.f32.mrf.mxu0
  %v4401 = vpop.f32.mrf.mxu0
  %v4402 = vadd.f32 0.0, %v4401
  %v4403 = vpop.f32.mrf.mxu0
  %4404 = vmatprep.mubr.bf16.mxu0 0
  %4405 = vmatmul.mubr.bf16.gmra.mxu0 %v4336
  %v4406 = vpop.f32.mrf.mxu0
  %v4407 = vadd.f32 0.0, %v4406
  %v4408 = vpop.f32.mrf.mxu0
  %v4409 = vpop.f32.mrf.mxu0
  %v4410 = vadd.f32 0.0, %v4409
  %v4411 = vpop.f32.mrf.mxu0
  %4412 = vmatprep.mubr.bf16.mxu0 0
  %4413 = vmatmul.mubr.bf16.gmra.mxu0 %v4339
  %v4414 = vpop.f32.mrf.mxu0
  %v4415 = vadd.f32 0.0, %v4414
  %v4416 = vpop.f32.mrf.mxu0
  %v4417 = vpop.f32.mrf.mxu0
  %v4418 = vadd.f32 0.0, %v4417
  %v4419 = vpop.f32.mrf.mxu0
  %4420 = vmatprep.mubr.bf16.mxu0 0
  %4421 = vmatmul.mubr.bf16.gmra.mxu0 %v4342
  %v4422 = vpop.f32.mrf.mxu0
  %v4423 = vadd.f32 0.0, %v4422
  %v4424 = vpop.f32.mrf.mxu0
  %v4425 = vpop.f32.mrf.mxu0
  %v4426 = vadd.f32 0.0, %v4425
  %v4427 = vpop.f32.mrf.mxu0
  %4428 = vmatprep.mubr.bf16.mxu0 0
  %4429 = vmatmul.mubr.bf16.gmra.mxu0 %v4345
  %v4430 = vpop.f32.mrf.mxu0
  %v4431 = vadd.f32 0.0, %v4430
  %v4432 = vpop.f32.mrf.mxu0
  %v4433 = vpop.f32.mrf.mxu0
  %v4434 = vadd.f32 0.0, %v4433
  %v4435 = vpop.f32.mrf.mxu0
  %4436 = vmatprep.mubr.bf16.mxu0 0
  %4437 = vmatmul.mubr.bf16.gmra.mxu0 %v4348
  %v4438 = vpop.f32.mrf.mxu0
  %v4439 = vadd.f32 0.0, %v4438
  %v4440 = vpop.f32.mrf.mxu0
  %v4441 = vpop.f32.mrf.mxu0
  %v4442 = vadd.f32 0.0, %v4441
  %v4443 = vpop.f32.mrf.mxu0
  %4444 = vmatprep.mubr.bf16.mxu0 0
  %4445 = vmatmul.mubr.bf16.gmra.mxu0 %v4351
  %v4446 = vpop.f32.mrf.mxu0
  %v4447 = vadd.f32 0.0, %v4446
  %v4448 = vpop.f32.mrf.mxu0
  %v4449 = vpop.f32.mrf.mxu0
  %v4450 = vadd.f32 0.0, %v4449
  %v4451 = vpop.f32.mrf.mxu0
  %4452 = vmatprep.mubr.bf16.mxu0 0
  %4453 = vmatmul.mubr.bf16.gmra.mxu0 %v4354
  %v4454 = vpop.f32.mrf.mxu0
  %v4455 = vadd.f32 0.0, %v4454
  %v4456 = vpop.f32.mrf.mxu0
  %v4457 = vpop.f32.mrf.mxu0
  %v4458 = vadd.f32 0.0, %v4457
  %v4459 = vpop.f32.mrf.mxu0
  %4460 = vdwg.mxu0
  %v4461 = vadd.f32 %v4294, %v4391
  %v4462 = vadd.f32 %v4295, %v4394
  %v4463 = vadd.f32 %v4296, %v4399
  %v4464 = vadd.f32 %v4297, %v4402
  %v4465 = vadd.f32 %v4298, %v4407
  %v4466 = vadd.f32 %v4299, %v4410
  %v4467 = vadd.f32 %v4300, %v4415
  %v4468 = vadd.f32 %v4301, %v4418
  %v4469 = vadd.f32 %v4302, %v4423
  %v4470 = vadd.f32 %v4303, %v4426
  %v4471 = vadd.f32 %v4304, %v4431
  %v4472 = vadd.f32 %v4305, %v4434
  %v4473 = vadd.f32 %v4306, %v4439
  %v4474 = vadd.f32 %v4307, %v4442
  %v4475 = vadd.f32 %v4308, %v4447
  %v4476 = vadd.f32 %v4309, %v4450
  %v4477 = vadd.f32 %v4310, %v4455
  %v4478 = vadd.f32 %v4311, %v4458
  %s4479 = scalar_lea.vmem %s3, 96
  %v4480 = vld [vmem:[%s4479] sm:$0xf]
  %v4481 = vld [vmem:[%s4479 + $0x4] sm:$0xf]
  %v4482 = vld [vmem:[%s4479 + $0x8] sm:$0xf]
  %v4483 = vld [vmem:[%s4479 + $0xc] sm:$0xf]
  %v4488 = vunpack.c.l.b16 %v4480
  %v4489 = vunpack.c.l.b16 %v4481
  %v4490 = vunpack.c.l.b16 %v4482
  %v4491 = vunpack.c.l.b16 %v4483
  %v4492 = vpack.c.b16 %v4489, %v4488
  %v4493 = vpack.c.b16 %v4491, %v4490
  %v4497 = vsel %vm3534, %v3423, 0
  %v4500 = vsel %vm3534, %v3424, 0
  %v4503 = vsel %vm3534, %v3425, 0
  %v4506 = vsel %vm3534, %v3426, 0
  %v4509 = vsel %vm3534, %v3427, 0
  %v4512 = vsel %vm3534, %v3428, 0
  %v4515 = vsel %vm3534, %v3429, 0
  %v4518 = vsel %vm3534, %v3430, 0
  %v4521 = vsel %vm3534, %v3431, 0
  %4523 = vmatprep.subr.bf16.mxu0 0
  %4524 = vmatpush1.bf16.msra.mxu0 0
  %4525 = vmatprep.subr.bf16.mxu0 0
  %4526 = vmatpush1.bf16.msra.mxu0 0
  %4527 = vmatprep.subr.bf16.mxu0 0
  %4528 = vmatpush1.bf16.msra.mxu0 0
  %4529 = vmatprep.subr.bf16.mxu0 0
  %4530 = vmatpush1.bf16.msra.mxu0 0
  %4531 = vmatprep.subr.bf16.mxu0 0
  %4532 = vmatpush1.bf16.msra.mxu0 0
  %4533 = vmatprep.subr.bf16.mxu0 0
  %4534 = vmatpush1.bf16.msra.mxu0 0
  %4535 = vmatprep.subr.bf16.mxu0 0
  %4536 = vmatpush1.bf16.msra.mxu0 %v4493
  %4537 = vmatprep.subr.bf16.mxu0 0
  %4538 = vmatpush1.bf16.msra.mxu0 %v4492
  %4539 = vmatprep.subr.bf16.mxu0 0
  %4540 = vmatpush2.bf16.msra.mxu0 0
  %4541 = vmatprep.subr.bf16.mxu0 0
  %4542 = vmatpush2.bf16.msra.mxu0 0
  %4543 = vmatprep.subr.bf16.mxu0 0
  %4544 = vmatpush2.bf16.msra.mxu0 0
  %4545 = vmatprep.subr.bf16.mxu0 0
  %4546 = vmatpush2.bf16.msra.mxu0 0
  %4547 = vmatprep.subr.bf16.mxu0 0
  %4548 = vmatpush2.bf16.msra.mxu0 0
  %4549 = vmatprep.subr.bf16.mxu0 0
  %4550 = vmatpush2.bf16.msra.mxu0 0
  %4551 = vmatprep.subr.bf16.mxu0 0
  %4552 = vmatpush2.bf16.msra.mxu0 0
  %4553 = vmatprep.subr.bf16.mxu0 0
  %4554 = vmatpush2.bf16.msra.mxu0 0
  %4555 = vmatprep.mubr.bf16.mxu0 0
  %4556 = vmatmul.mubr.bf16.gmra.mxu0 %v4497
  %v4557 = vpop.f32.mrf.mxu0
  %v4558 = vadd.f32 0.0, %v4557
  %v4559 = vpop.f32.mrf.mxu0
  %v4560 = vpop.f32.mrf.mxu0
  %v4561 = vadd.f32 0.0, %v4560
  %v4562 = vpop.f32.mrf.mxu0
  %4563 = vmatprep.mubr.bf16.mxu0 0
  %4564 = vmatmul.mubr.bf16.gmra.mxu0 %v4500
  %v4565 = vpop.f32.mrf.mxu0
  %v4566 = vadd.f32 0.0, %v4565
  %v4567 = vpop.f32.mrf.mxu0
  %v4568 = vpop.f32.mrf.mxu0
  %v4569 = vadd.f32 0.0, %v4568
  %v4570 = vpop.f32.mrf.mxu0
  %4571 = vmatprep.mubr.bf16.mxu0 0
  %4572 = vmatmul.mubr.bf16.gmra.mxu0 %v4503
  %v4573 = vpop.f32.mrf.mxu0
  %v4574 = vadd.f32 0.0, %v4573
  %v4575 = vpop.f32.mrf.mxu0
  %v4576 = vpop.f32.mrf.mxu0
  %v4577 = vadd.f32 0.0, %v4576
  %v4578 = vpop.f32.mrf.mxu0
  %4579 = vmatprep.mubr.bf16.mxu0 0
  %4580 = vmatmul.mubr.bf16.gmra.mxu0 %v4506
  %v4581 = vpop.f32.mrf.mxu0
  %v4582 = vadd.f32 0.0, %v4581
  %v4583 = vpop.f32.mrf.mxu0
  %v4584 = vpop.f32.mrf.mxu0
  %v4585 = vadd.f32 0.0, %v4584
  %v4586 = vpop.f32.mrf.mxu0
  %4587 = vmatprep.mubr.bf16.mxu0 0
  %4588 = vmatmul.mubr.bf16.gmra.mxu0 %v4509
  %v4589 = vpop.f32.mrf.mxu0
  %v4590 = vadd.f32 0.0, %v4589
  %v4591 = vpop.f32.mrf.mxu0
  %v4592 = vpop.f32.mrf.mxu0
  %v4593 = vadd.f32 0.0, %v4592
  %v4594 = vpop.f32.mrf.mxu0
  %4595 = vmatprep.mubr.bf16.mxu0 0
  %4596 = vmatmul.mubr.bf16.gmra.mxu0 %v4512
  %v4597 = vpop.f32.mrf.mxu0
  %v4598 = vadd.f32 0.0, %v4597
  %v4599 = vpop.f32.mrf.mxu0
  %v4600 = vpop.f32.mrf.mxu0
  %v4601 = vadd.f32 0.0, %v4600
  %v4602 = vpop.f32.mrf.mxu0
  %4603 = vmatprep.mubr.bf16.mxu0 0
  %4604 = vmatmul.mubr.bf16.gmra.mxu0 %v4515
  %v4605 = vpop.f32.mrf.mxu0
  %v4606 = vadd.f32 0.0, %v4605
  %v4607 = vpop.f32.mrf.mxu0
  %v4608 = vpop.f32.mrf.mxu0
  %v4609 = vadd.f32 0.0, %v4608
  %v4610 = vpop.f32.mrf.mxu0
  %4611 = vmatprep.mubr.bf16.mxu0 0
  %4612 = vmatmul.mubr.bf16.gmra.mxu0 %v4518
  %v4613 = vpop.f32.mrf.mxu0
  %v4614 = vadd.f32 0.0, %v4613
  %v4615 = vpop.f32.mrf.mxu0
  %v4616 = vpop.f32.mrf.mxu0
  %v4617 = vadd.f32 0.0, %v4616
  %v4618 = vpop.f32.mrf.mxu0
  %4619 = vmatprep.mubr.bf16.mxu0 0
  %4620 = vmatmul.mubr.bf16.gmra.mxu0 %v4521
  %v4621 = vpop.f32.mrf.mxu0
  %v4622 = vadd.f32 0.0, %v4621
  %v4623 = vpop.f32.mrf.mxu0
  %v4624 = vpop.f32.mrf.mxu0
  %v4625 = vadd.f32 0.0, %v4624
  %v4626 = vpop.f32.mrf.mxu0
  %4627 = vdwg.mxu0
  %v4628 = vadd.f32 %v4461, %v4558
  %v4629 = vadd.f32 %v4462, %v4561
  %v4630 = vadd.f32 %v4463, %v4566
  %v4631 = vadd.f32 %v4464, %v4569
  %v4632 = vadd.f32 %v4465, %v4574
  %v4633 = vadd.f32 %v4466, %v4577
  %v4634 = vadd.f32 %v4467, %v4582
  %v4635 = vadd.f32 %v4468, %v4585
  %v4636 = vadd.f32 %v4469, %v4590
  %v4637 = vadd.f32 %v4470, %v4593
  %v4638 = vadd.f32 %v4471, %v4598
  %v4639 = vadd.f32 %v4472, %v4601
  %v4640 = vadd.f32 %v4473, %v4606
  %v4641 = vadd.f32 %v4474, %v4609
  %v4642 = vadd.f32 %v4475, %v4614
  %v4643 = vadd.f32 %v4476, %v4617
  %v4644 = vadd.f32 %v4477, %v4622
  %v4645 = vadd.f32 %v4478, %v4625
  %s4646 = scalar_lea.vmem %s3, 112
  %v4647 = vld [vmem:[%s4646] sm:$0xf]
  %v4648 = vld [vmem:[%s4646 + $0x4] sm:$0xf]
  %v4649 = vld [vmem:[%s4646 + $0x8] sm:$0xf]
  %v4650 = vld [vmem:[%s4646 + $0xc] sm:$0xf]
  %v4655 = vunpack.c.l.b16 %v4647
  %v4656 = vunpack.c.l.b16 %v4648
  %v4657 = vunpack.c.l.b16 %v4649
  %v4658 = vunpack.c.l.b16 %v4650
  %v4659 = vpack.c.b16 %v4656, %v4655
  %v4660 = vpack.c.b16 %v4658, %v4657
  %v4664 = vsel %vm3534, %v3432, 0
  %v4667 = vsel %vm3534, %v3433, 0
  %v4670 = vsel %vm3534, %v3434, 0
  %v4673 = vsel %vm3534, %v3435, 0
  %v4676 = vsel %vm3534, %v3436, 0
  %v4679 = vsel %vm3534, %v3437, 0
  %v4682 = vsel %vm3534, %v3438, 0
  %v4685 = vsel %vm3534, %v3439, 0
  %v4688 = vsel %vm3534, %v3440, 0
  %4690 = vmatprep.subr.bf16.mxu0 0
  %4691 = vmatpush1.bf16.msra.mxu0 0
  %4692 = vmatprep.subr.bf16.mxu0 0
  %4693 = vmatpush1.bf16.msra.mxu0 0
  %4694 = vmatprep.subr.bf16.mxu0 0
  %4695 = vmatpush1.bf16.msra.mxu0 0
  %4696 = vmatprep.subr.bf16.mxu0 0
  %4697 = vmatpush1.bf16.msra.mxu0 0
  %4698 = vmatprep.subr.bf16.mxu0 0
  %4699 = vmatpush1.bf16.msra.mxu0 0
  %4700 = vmatprep.subr.bf16.mxu0 0
  %4701 = vmatpush1.bf16.msra.mxu0 0
  %4702 = vmatprep.subr.bf16.mxu0 0
  %4703 = vmatpush1.bf16.msra.mxu0 %v4660
  %4704 = vmatprep.subr.bf16.mxu0 0
  %4705 = vmatpush1.bf16.msra.mxu0 %v4659
  %4706 = vmatprep.subr.bf16.mxu0 0
  %4707 = vmatpush2.bf16.msra.mxu0 0
  %4708 = vmatprep.subr.bf16.mxu0 0
  %4709 = vmatpush2.bf16.msra.mxu0 0
  %4710 = vmatprep.subr.bf16.mxu0 0
  %4711 = vmatpush2.bf16.msra.mxu0 0
  %4712 = vmatprep.subr.bf16.mxu0 0
  %4713 = vmatpush2.bf16.msra.mxu0 0
  %4714 = vmatprep.subr.bf16.mxu0 0
  %4715 = vmatpush2.bf16.msra.mxu0 0
  %4716 = vmatprep.subr.bf16.mxu0 0
  %4717 = vmatpush2.bf16.msra.mxu0 0
  %4718 = vmatprep.subr.bf16.mxu0 0
  %4719 = vmatpush2.bf16.msra.mxu0 0
  %4720 = vmatprep.subr.bf16.mxu0 0
  %4721 = vmatpush2.bf16.msra.mxu0 0
  %4722 = vmatprep.mubr.bf16.mxu0 0
  %4723 = vmatmul.mubr.bf16.gmra.mxu0 %v4664
  %v4724 = vpop.f32.mrf.mxu0
  %v4725 = vadd.f32 0.0, %v4724
  %v4726 = vpop.f32.mrf.mxu0
  %v4727 = vpop.f32.mrf.mxu0
  %v4728 = vadd.f32 0.0, %v4727
  %v4729 = vpop.f32.mrf.mxu0
  %4730 = vmatprep.mubr.bf16.mxu0 0
  %4731 = vmatmul.mubr.bf16.gmra.mxu0 %v4667
  %v4732 = vpop.f32.mrf.mxu0
  %v4733 = vadd.f32 0.0, %v4732
  %v4734 = vpop.f32.mrf.mxu0
  %v4735 = vpop.f32.mrf.mxu0
  %v4736 = vadd.f32 0.0, %v4735
  %v4737 = vpop.f32.mrf.mxu0
  %4738 = vmatprep.mubr.bf16.mxu0 0
  %4739 = vmatmul.mubr.bf16.gmra.mxu0 %v4670
  %v4740 = vpop.f32.mrf.mxu0
  %v4741 = vadd.f32 0.0, %v4740
  %v4742 = vpop.f32.mrf.mxu0
  %v4743 = vpop.f32.mrf.mxu0
  %v4744 = vadd.f32 0.0, %v4743
  %v4745 = vpop.f32.mrf.mxu0
  %4746 = vmatprep.mubr.bf16.mxu0 0
  %4747 = vmatmul.mubr.bf16.gmra.mxu0 %v4673
  %v4748 = vpop.f32.mrf.mxu0
  %v4749 = vadd.f32 0.0, %v4748
  %v4750 = vpop.f32.mrf.mxu0
  %v4751 = vpop.f32.mrf.mxu0
  %v4752 = vadd.f32 0.0, %v4751
  %v4753 = vpop.f32.mrf.mxu0
  %4754 = vmatprep.mubr.bf16.mxu0 0
  %4755 = vmatmul.mubr.bf16.gmra.mxu0 %v4676
  %v4756 = vpop.f32.mrf.mxu0
  %v4757 = vadd.f32 0.0, %v4756
  %v4758 = vpop.f32.mrf.mxu0
  %v4759 = vpop.f32.mrf.mxu0
  %v4760 = vadd.f32 0.0, %v4759
  %v4761 = vpop.f32.mrf.mxu0
  %4762 = vmatprep.mubr.bf16.mxu0 0
  %4763 = vmatmul.mubr.bf16.gmra.mxu0 %v4679
  %v4764 = vpop.f32.mrf.mxu0
  %v4765 = vadd.f32 0.0, %v4764
  %v4766 = vpop.f32.mrf.mxu0
  %v4767 = vpop.f32.mrf.mxu0
  %v4768 = vadd.f32 0.0, %v4767
  %v4769 = vpop.f32.mrf.mxu0
  %4770 = vmatprep.mubr.bf16.mxu0 0
  %4771 = vmatmul.mubr.bf16.gmra.mxu0 %v4682
  %v4772 = vpop.f32.mrf.mxu0
  %v4773 = vadd.f32 0.0, %v4772
  %v4774 = vpop.f32.mrf.mxu0
  %v4775 = vpop.f32.mrf.mxu0
  %v4776 = vadd.f32 0.0, %v4775
  %v4777 = vpop.f32.mrf.mxu0
  %4778 = vmatprep.mubr.bf16.mxu0 0
  %4779 = vmatmul.mubr.bf16.gmra.mxu0 %v4685
  %v4780 = vpop.f32.mrf.mxu0
  %v4781 = vadd.f32 0.0, %v4780
  %v4782 = vpop.f32.mrf.mxu0
  %v4783 = vpop.f32.mrf.mxu0
  %v4784 = vadd.f32 0.0, %v4783
  %v4785 = vpop.f32.mrf.mxu0
  %4786 = vmatprep.mubr.bf16.mxu0 0
  %4787 = vmatmul.mubr.bf16.gmra.mxu0 %v4688
  %v4788 = vpop.f32.mrf.mxu0
  %v4789 = vadd.f32 0.0, %v4788
  %v4790 = vpop.f32.mrf.mxu0
  %v4791 = vpop.f32.mrf.mxu0
  %v4792 = vadd.f32 0.0, %v4791
  %v4793 = vpop.f32.mrf.mxu0
  %4794 = vdwg.mxu0
  %v4795 = vadd.f32 %v4628, %v4725
  %v4796 = vadd.f32 %v4629, %v4728
  %v4797 = vadd.f32 %v4630, %v4733
  %v4798 = vadd.f32 %v4631, %v4736
  %v4799 = vadd.f32 %v4632, %v4741
  %v4800 = vadd.f32 %v4633, %v4744
  %v4801 = vadd.f32 %v4634, %v4749
  %v4802 = vadd.f32 %v4635, %v4752
  %v4803 = vadd.f32 %v4636, %v4757
  %v4804 = vadd.f32 %v4637, %v4760
  %v4805 = vadd.f32 %v4638, %v4765
  %v4806 = vadd.f32 %v4639, %v4768
  %v4807 = vadd.f32 %v4640, %v4773
  %v4808 = vadd.f32 %v4641, %v4776
  %v4809 = vadd.f32 %v4642, %v4781
  %v4810 = vadd.f32 %v4643, %v4784
  %v4811 = vadd.f32 %v4644, %v4789
  %v4812 = vadd.f32 %v4645, %v4792
  %s4813 = scalar_lea.vmem %s3, 128
  %v4814 = vld [vmem:[%s4813] sm:$0xf]
  %v4815 = vld [vmem:[%s4813 + $0x4] sm:$0xf]
  %v4816 = vld [vmem:[%s4813 + $0x8] sm:$0xf]
  %v4817 = vld [vmem:[%s4813 + $0xc] sm:$0xf]
  %v4822 = vunpack.c.l.b16 %v4814
  %v4823 = vunpack.c.l.b16 %v4815
  %v4824 = vunpack.c.l.b16 %v4816
  %v4825 = vunpack.c.l.b16 %v4817
  %v4826 = vpack.c.b16 %v4823, %v4822
  %v4827 = vpack.c.b16 %v4825, %v4824
  %v4831 = vsel %vm3534, %v3441, 0
  %v4834 = vsel %vm3534, %v3442, 0
  %v4837 = vsel %vm3534, %v3443, 0
  %v4840 = vsel %vm3534, %v3444, 0
  %v4843 = vsel %vm3534, %v3445, 0
  %v4846 = vsel %vm3534, %v3446, 0
  %v4849 = vsel %vm3534, %v3447, 0
  %v4852 = vsel %vm3534, %v3448, 0
  %v4855 = vsel %vm3534, %v3449, 0
  %4857 = vmatprep.subr.bf16.mxu0 0
  %4858 = vmatpush1.bf16.msra.mxu0 0
  %4859 = vmatprep.subr.bf16.mxu0 0
  %4860 = vmatpush1.bf16.msra.mxu0 0
  %4861 = vmatprep.subr.bf16.mxu0 0
  %4862 = vmatpush1.bf16.msra.mxu0 0
  %4863 = vmatprep.subr.bf16.mxu0 0
  %4864 = vmatpush1.bf16.msra.mxu0 0
  %4865 = vmatprep.subr.bf16.mxu0 0
  %4866 = vmatpush1.bf16.msra.mxu0 0
  %4867 = vmatprep.subr.bf16.mxu0 0
  %4868 = vmatpush1.bf16.msra.mxu0 0
  %4869 = vmatprep.subr.bf16.mxu0 0
  %4870 = vmatpush1.bf16.msra.mxu0 %v4827
  %4871 = vmatprep.subr.bf16.mxu0 0
  %4872 = vmatpush1.bf16.msra.mxu0 %v4826
  %4873 = vmatprep.subr.bf16.mxu0 0
  %4874 = vmatpush2.bf16.msra.mxu0 0
  %4875 = vmatprep.subr.bf16.mxu0 0
  %4876 = vmatpush2.bf16.msra.mxu0 0
  %4877 = vmatprep.subr.bf16.mxu0 0
  %4878 = vmatpush2.bf16.msra.mxu0 0
  %4879 = vmatprep.subr.bf16.mxu0 0
  %4880 = vmatpush2.bf16.msra.mxu0 0
  %4881 = vmatprep.subr.bf16.mxu0 0
  %4882 = vmatpush2.bf16.msra.mxu0 0
  %4883 = vmatprep.subr.bf16.mxu0 0
  %4884 = vmatpush2.bf16.msra.mxu0 0
  %4885 = vmatprep.subr.bf16.mxu0 0
  %4886 = vmatpush2.bf16.msra.mxu0 0
  %4887 = vmatprep.subr.bf16.mxu0 0
  %4888 = vmatpush2.bf16.msra.mxu0 0
  %4889 = vmatprep.mubr.bf16.mxu0 0
  %4890 = vmatmul.mubr.bf16.gmra.mxu0 %v4831
  %v4891 = vpop.f32.mrf.mxu0
  %v4892 = vadd.f32 0.0, %v4891
  %v4893 = vpop.f32.mrf.mxu0
  %v4894 = vpop.f32.mrf.mxu0
  %v4895 = vadd.f32 0.0, %v4894
  %v4896 = vpop.f32.mrf.mxu0
  %4897 = vmatprep.mubr.bf16.mxu0 0
  %4898 = vmatmul.mubr.bf16.gmra.mxu0 %v4834
  %v4899 = vpop.f32.mrf.mxu0
  %v4900 = vadd.f32 0.0, %v4899
  %v4901 = vpop.f32.mrf.mxu0
  %v4902 = vpop.f32.mrf.mxu0
  %v4903 = vadd.f32 0.0, %v4902
  %v4904 = vpop.f32.mrf.mxu0
  %4905 = vmatprep.mubr.bf16.mxu0 0
  %4906 = vmatmul.mubr.bf16.gmra.mxu0 %v4837
  %v4907 = vpop.f32.mrf.mxu0
  %v4908 = vadd.f32 0.0, %v4907
  %v4909 = vpop.f32.mrf.mxu0
  %v4910 = vpop.f32.mrf.mxu0
  %v4911 = vadd.f32 0.0, %v4910
  %v4912 = vpop.f32.mrf.mxu0
  %4913 = vmatprep.mubr.bf16.mxu0 0
  %4914 = vmatmul.mubr.bf16.gmra.mxu0 %v4840
  %v4915 = vpop.f32.mrf.mxu0
  %v4916 = vadd.f32 0.0, %v4915
  %v4917 = vpop.f32.mrf.mxu0
  %v4918 = vpop.f32.mrf.mxu0
  %v4919 = vadd.f32 0.0, %v4918
  %v4920 = vpop.f32.mrf.mxu0
  %4921 = vmatprep.mubr.bf16.mxu0 0
  %4922 = vmatmul.mubr.bf16.gmra.mxu0 %v4843
  %v4923 = vpop.f32.mrf.mxu0
  %v4924 = vadd.f32 0.0, %v4923
  %v4925 = vpop.f32.mrf.mxu0
  %v4926 = vpop.f32.mrf.mxu0
  %v4927 = vadd.f32 0.0, %v4926
  %v4928 = vpop.f32.mrf.mxu0
  %4929 = vmatprep.mubr.bf16.mxu0 0
  %4930 = vmatmul.mubr.bf16.gmra.mxu0 %v4846
  %v4931 = vpop.f32.mrf.mxu0
  %v4932 = vadd.f32 0.0, %v4931
  %v4933 = vpop.f32.mrf.mxu0
  %v4934 = vpop.f32.mrf.mxu0
  %v4935 = vadd.f32 0.0, %v4934
  %v4936 = vpop.f32.mrf.mxu0
  %4937 = vmatprep.mubr.bf16.mxu0 0
  %4938 = vmatmul.mubr.bf16.gmra.mxu0 %v4849
  %v4939 = vpop.f32.mrf.mxu0
  %v4940 = vadd.f32 0.0, %v4939
  %v4941 = vpop.f32.mrf.mxu0
  %v4942 = vpop.f32.mrf.mxu0
  %v4943 = vadd.f32 0.0, %v4942
  %v4944 = vpop.f32.mrf.mxu0
  %4945 = vmatprep.mubr.bf16.mxu0 0
  %4946 = vmatmul.mubr.bf16.gmra.mxu0 %v4852
  %v4947 = vpop.f32.mrf.mxu0
  %v4948 = vadd.f32 0.0, %v4947
  %v4949 = vpop.f32.mrf.mxu0
  %v4950 = vpop.f32.mrf.mxu0
  %v4951 = vadd.f32 0.0, %v4950
  %v4952 = vpop.f32.mrf.mxu0
  %4953 = vmatprep.mubr.bf16.mxu0 0
  %4954 = vmatmul.mubr.bf16.gmra.mxu0 %v4855
  %v4955 = vpop.f32.mrf.mxu0
  %v4956 = vadd.f32 0.0, %v4955
  %v4957 = vpop.f32.mrf.mxu0
  %v4958 = vpop.f32.mrf.mxu0
  %v4959 = vadd.f32 0.0, %v4958
  %v4960 = vpop.f32.mrf.mxu0
  %4961 = vdwg.mxu0
  %v4962 = vadd.f32 %v4795, %v4892
  %v4963 = vadd.f32 %v4796, %v4895
  %v4964 = vadd.f32 %v4797, %v4900
  %v4965 = vadd.f32 %v4798, %v4903
  %v4966 = vadd.f32 %v4799, %v4908
  %v4967 = vadd.f32 %v4800, %v4911
  %v4968 = vadd.f32 %v4801, %v4916
  %v4969 = vadd.f32 %v4802, %v4919
  %v4970 = vadd.f32 %v4803, %v4924
  %v4971 = vadd.f32 %v4804, %v4927
  %v4972 = vadd.f32 %v4805, %v4932
  %v4973 = vadd.f32 %v4806, %v4935
  %v4974 = vadd.f32 %v4807, %v4940
  %v4975 = vadd.f32 %v4808, %v4943
  %v4976 = vadd.f32 %v4809, %v4948
  %v4977 = vadd.f32 %v4810, %v4951
  %v4978 = vadd.f32 %v4811, %v4956
  %v4979 = vadd.f32 %v4812, %v4959
  %s4980 = scalar_lea.vmem %s3, 144
  %v4981 = vld [vmem:[%s4980] sm:$0xf]
  %v4982 = vld [vmem:[%s4980 + $0x4] sm:$0xf]
  %v4983 = vld [vmem:[%s4980 + $0x8] sm:$0xf]
  %v4984 = vld [vmem:[%s4980 + $0xc] sm:$0xf]
  %v4989 = vunpack.c.l.b16 %v4981
  %v4990 = vunpack.c.l.b16 %v4982
  %v4991 = vunpack.c.l.b16 %v4983
  %v4992 = vunpack.c.l.b16 %v4984
  %v4993 = vpack.c.b16 %v4990, %v4989
  %v4994 = vpack.c.b16 %v4992, %v4991
  %v4998 = vsel %vm3534, %v3450, 0
  %v5001 = vsel %vm3534, %v3451, 0
  %v5004 = vsel %vm3534, %v3452, 0
  %v5007 = vsel %vm3534, %v3453, 0
  %v5010 = vsel %vm3534, %v3454, 0
  %v5013 = vsel %vm3534, %v3455, 0
  %v5016 = vsel %vm3534, %v3456, 0
  %v5019 = vsel %vm3534, %v3457, 0
  %v5022 = vsel %vm3534, %v3458, 0
  %5024 = vmatprep.subr.bf16.mxu0 0
  %5025 = vmatpush1.bf16.msra.mxu0 0
  %5026 = vmatprep.subr.bf16.mxu0 0
  %5027 = vmatpush1.bf16.msra.mxu0 0
  %5028 = vmatprep.subr.bf16.mxu0 0
  %5029 = vmatpush1.bf16.msra.mxu0 0
  %5030 = vmatprep.subr.bf16.mxu0 0
  %5031 = vmatpush1.bf16.msra.mxu0 0
  %5032 = vmatprep.subr.bf16.mxu0 0
  %5033 = vmatpush1.bf16.msra.mxu0 0
  %5034 = vmatprep.subr.bf16.mxu0 0
  %5035 = vmatpush1.bf16.msra.mxu0 0
  %5036 = vmatprep.subr.bf16.mxu0 0
  %5037 = vmatpush1.bf16.msra.mxu0 %v4994
  %5038 = vmatprep.subr.bf16.mxu0 0
  %5039 = vmatpush1.bf16.msra.mxu0 %v4993
  %5040 = vmatprep.subr.bf16.mxu0 0
  %5041 = vmatpush2.bf16.msra.mxu0 0
  %5042 = vmatprep.subr.bf16.mxu0 0
  %5043 = vmatpush2.bf16.msra.mxu0 0
  %5044 = vmatprep.subr.bf16.mxu0 0
  %5045 = vmatpush2.bf16.msra.mxu0 0
  %5046 = vmatprep.subr.bf16.mxu0 0
  %5047 = vmatpush2.bf16.msra.mxu0 0
  %5048 = vmatprep.subr.bf16.mxu0 0
  %5049 = vmatpush2.bf16.msra.mxu0 0
  %5050 = vmatprep.subr.bf16.mxu0 0
  %5051 = vmatpush2.bf16.msra.mxu0 0
  %5052 = vmatprep.subr.bf16.mxu0 0
  %5053 = vmatpush2.bf16.msra.mxu0 0
  %5054 = vmatprep.subr.bf16.mxu0 0
  %5055 = vmatpush2.bf16.msra.mxu0 0
  %5056 = vmatprep.mubr.bf16.mxu0 0
  %5057 = vmatmul.mubr.bf16.gmra.mxu0 %v4998
  %v5058 = vpop.f32.mrf.mxu0
  %v5059 = vadd.f32 0.0, %v5058
  %v5060 = vpop.f32.mrf.mxu0
  %v5061 = vpop.f32.mrf.mxu0
  %v5062 = vadd.f32 0.0, %v5061
  %v5063 = vpop.f32.mrf.mxu0
  %5064 = vmatprep.mubr.bf16.mxu0 0
  %5065 = vmatmul.mubr.bf16.gmra.mxu0 %v5001
  %v5066 = vpop.f32.mrf.mxu0
  %v5067 = vadd.f32 0.0, %v5066
  %v5068 = vpop.f32.mrf.mxu0
  %v5069 = vpop.f32.mrf.mxu0
  %v5070 = vadd.f32 0.0, %v5069
  %v5071 = vpop.f32.mrf.mxu0
  %5072 = vmatprep.mubr.bf16.mxu0 0
  %5073 = vmatmul.mubr.bf16.gmra.mxu0 %v5004
  %v5074 = vpop.f32.mrf.mxu0
  %v5075 = vadd.f32 0.0, %v5074
  %v5076 = vpop.f32.mrf.mxu0
  %v5077 = vpop.f32.mrf.mxu0
  %v5078 = vadd.f32 0.0, %v5077
  %v5079 = vpop.f32.mrf.mxu0
  %5080 = vmatprep.mubr.bf16.mxu0 0
  %5081 = vmatmul.mubr.bf16.gmra.mxu0 %v5007
  %v5082 = vpop.f32.mrf.mxu0
  %v5083 = vadd.f32 0.0, %v5082
  %v5084 = vpop.f32.mrf.mxu0
  %v5085 = vpop.f32.mrf.mxu0
  %v5086 = vadd.f32 0.0, %v5085
  %v5087 = vpop.f32.mrf.mxu0
  %5088 = vmatprep.mubr.bf16.mxu0 0
  %5089 = vmatmul.mubr.bf16.gmra.mxu0 %v5010
  %v5090 = vpop.f32.mrf.mxu0
  %v5091 = vadd.f32 0.0, %v5090
  %v5092 = vpop.f32.mrf.mxu0
  %v5093 = vpop.f32.mrf.mxu0
  %v5094 = vadd.f32 0.0, %v5093
  %v5095 = vpop.f32.mrf.mxu0
  %5096 = vmatprep.mubr.bf16.mxu0 0
  %5097 = vmatmul.mubr.bf16.gmra.mxu0 %v5013
  %v5098 = vpop.f32.mrf.mxu0
  %v5099 = vadd.f32 0.0, %v5098
  %v5100 = vpop.f32.mrf.mxu0
  %v5101 = vpop.f32.mrf.mxu0
  %v5102 = vadd.f32 0.0, %v5101
  %v5103 = vpop.f32.mrf.mxu0
  %5104 = vmatprep.mubr.bf16.mxu0 0
  %5105 = vmatmul.mubr.bf16.gmra.mxu0 %v5016
  %v5106 = vpop.f32.mrf.mxu0
  %v5107 = vadd.f32 0.0, %v5106
  %v5108 = vpop.f32.mrf.mxu0
  %v5109 = vpop.f32.mrf.mxu0
  %v5110 = vadd.f32 0.0, %v5109
  %v5111 = vpop.f32.mrf.mxu0
  %5112 = vmatprep.mubr.bf16.mxu0 0
  %5113 = vmatmul.mubr.bf16.gmra.mxu0 %v5019
  %v5114 = vpop.f32.mrf.mxu0
  %v5115 = vadd.f32 0.0, %v5114
  %v5116 = vpop.f32.mrf.mxu0
  %v5117 = vpop.f32.mrf.mxu0
  %v5118 = vadd.f32 0.0, %v5117
  %v5119 = vpop.f32.mrf.mxu0
  %5120 = vmatprep.mubr.bf16.mxu0 0
  %5121 = vmatmul.mubr.bf16.gmra.mxu0 %v5022
  %v5122 = vpop.f32.mrf.mxu0
  %v5123 = vadd.f32 0.0, %v5122
  %v5124 = vpop.f32.mrf.mxu0
  %v5125 = vpop.f32.mrf.mxu0
  %v5126 = vadd.f32 0.0, %v5125
  %v5127 = vpop.f32.mrf.mxu0
  %5128 = vdwg.mxu0
  %v5129 = vadd.f32 %v4962, %v5059
  %v5130 = vadd.f32 %v4963, %v5062
  %v5131 = vadd.f32 %v4964, %v5067
  %v5132 = vadd.f32 %v4965, %v5070
  %v5133 = vadd.f32 %v4966, %v5075
  %v5134 = vadd.f32 %v4967, %v5078
  %v5135 = vadd.f32 %v4968, %v5083
  %v5136 = vadd.f32 %v4969, %v5086
  %v5137 = vadd.f32 %v4970, %v5091
  %v5138 = vadd.f32 %v4971, %v5094
  %v5139 = vadd.f32 %v4972, %v5099
  %v5140 = vadd.f32 %v4973, %v5102
  %v5141 = vadd.f32 %v4974, %v5107
  %v5142 = vadd.f32 %v4975, %v5110
  %v5143 = vadd.f32 %v4976, %v5115
  %v5144 = vadd.f32 %v4977, %v5118
  %v5145 = vadd.f32 %v4978, %v5123
  %v5146 = vadd.f32 %v4979, %v5126
  %s5147 = scalar_lea.vmem %s3, 160
  %v5148 = vld [vmem:[%s5147] sm:$0xf]
  %v5149 = vld [vmem:[%s5147 + $0x4] sm:$0xf]
  %v5150 = vld [vmem:[%s5147 + $0x8] sm:$0xf]
  %v5151 = vld [vmem:[%s5147 + $0xc] sm:$0xf]
  %v5156 = vunpack.c.l.b16 %v5148
  %v5157 = vunpack.c.l.b16 %v5149
  %v5158 = vunpack.c.l.b16 %v5150
  %v5159 = vunpack.c.l.b16 %v5151
  %v5160 = vpack.c.b16 %v5157, %v5156
  %v5161 = vpack.c.b16 %v5159, %v5158
  %v5165 = vsel %vm3534, %v3459, 0
  %v5168 = vsel %vm3534, %v3460, 0
  %v5171 = vsel %vm3534, %v3461, 0
  %v5174 = vsel %vm3534, %v3462, 0
  %v5177 = vsel %vm3534, %v3463, 0
  %v5180 = vsel %vm3534, %v3464, 0
  %v5183 = vsel %vm3534, %v3465, 0
  %v5186 = vsel %vm3534, %v3466, 0
  %v5189 = vsel %vm3534, %v3467, 0
  %5191 = vmatprep.subr.bf16.mxu0 0
  %5192 = vmatpush1.bf16.msra.mxu0 0
  %5193 = vmatprep.subr.bf16.mxu0 0
  %5194 = vmatpush1.bf16.msra.mxu0 0
  %5195 = vmatprep.subr.bf16.mxu0 0
  %5196 = vmatpush1.bf16.msra.mxu0 0
  %5197 = vmatprep.subr.bf16.mxu0 0
  %5198 = vmatpush1.bf16.msra.mxu0 0
  %5199 = vmatprep.subr.bf16.mxu0 0
  %5200 = vmatpush1.bf16.msra.mxu0 0
  %5201 = vmatprep.subr.bf16.mxu0 0
  %5202 = vmatpush1.bf16.msra.mxu0 0
  %5203 = vmatprep.subr.bf16.mxu0 0
  %5204 = vmatpush1.bf16.msra.mxu0 %v5161
  %5205 = vmatprep.subr.bf16.mxu0 0
  %5206 = vmatpush1.bf16.msra.mxu0 %v5160
  %5207 = vmatprep.subr.bf16.mxu0 0
  %5208 = vmatpush2.bf16.msra.mxu0 0
  %5209 = vmatprep.subr.bf16.mxu0 0
  %5210 = vmatpush2.bf16.msra.mxu0 0
  %5211 = vmatprep.subr.bf16.mxu0 0
  %5212 = vmatpush2.bf16.msra.mxu0 0
  %5213 = vmatprep.subr.bf16.mxu0 0
  %5214 = vmatpush2.bf16.msra.mxu0 0
  %5215 = vmatprep.subr.bf16.mxu0 0
  %5216 = vmatpush2.bf16.msra.mxu0 0
  %5217 = vmatprep.subr.bf16.mxu0 0
  %5218 = vmatpush2.bf16.msra.mxu0 0
  %5219 = vmatprep.subr.bf16.mxu0 0
  %5220 = vmatpush2.bf16.msra.mxu0 0
  %5221 = vmatprep.subr.bf16.mxu0 0
  %5222 = vmatpush2.bf16.msra.mxu0 0
  %5223 = vmatprep.mubr.bf16.mxu0 0
  %5224 = vmatmul.mubr.bf16.gmra.mxu0 %v5165
  %v5225 = vpop.f32.mrf.mxu0
  %v5226 = vadd.f32 0.0, %v5225
  %v5227 = vpop.f32.mrf.mxu0
  %v5228 = vpop.f32.mrf.mxu0
  %v5229 = vadd.f32 0.0, %v5228
  %v5230 = vpop.f32.mrf.mxu0
  %5231 = vmatprep.mubr.bf16.mxu0 0
  %5232 = vmatmul.mubr.bf16.gmra.mxu0 %v5168
  %v5233 = vpop.f32.mrf.mxu0
  %v5234 = vadd.f32 0.0, %v5233
  %v5235 = vpop.f32.mrf.mxu0
  %v5236 = vpop.f32.mrf.mxu0
  %v5237 = vadd.f32 0.0, %v5236
  %v5238 = vpop.f32.mrf.mxu0
  %5239 = vmatprep.mubr.bf16.mxu0 0
  %5240 = vmatmul.mubr.bf16.gmra.mxu0 %v5171
  %v5241 = vpop.f32.mrf.mxu0
  %v5242 = vadd.f32 0.0, %v5241
  %v5243 = vpop.f32.mrf.mxu0
  %v5244 = vpop.f32.mrf.mxu0
  %v5245 = vadd.f32 0.0, %v5244
  %v5246 = vpop.f32.mrf.mxu0
  %5247 = vmatprep.mubr.bf16.mxu0 0
  %5248 = vmatmul.mubr.bf16.gmra.mxu0 %v5174
  %v5249 = vpop.f32.mrf.mxu0
  %v5250 = vadd.f32 0.0, %v5249
  %v5251 = vpop.f32.mrf.mxu0
  %v5252 = vpop.f32.mrf.mxu0
  %v5253 = vadd.f32 0.0, %v5252
  %v5254 = vpop.f32.mrf.mxu0
  %5255 = vmatprep.mubr.bf16.mxu0 0
  %5256 = vmatmul.mubr.bf16.gmra.mxu0 %v5177
  %v5257 = vpop.f32.mrf.mxu0
  %v5258 = vadd.f32 0.0, %v5257
  %v5259 = vpop.f32.mrf.mxu0
  %v5260 = vpop.f32.mrf.mxu0
  %v5261 = vadd.f32 0.0, %v5260
  %v5262 = vpop.f32.mrf.mxu0
  %5263 = vmatprep.mubr.bf16.mxu0 0
  %5264 = vmatmul.mubr.bf16.gmra.mxu0 %v5180
  %v5265 = vpop.f32.mrf.mxu0
  %v5266 = vadd.f32 0.0, %v5265
  %v5267 = vpop.f32.mrf.mxu0
  %v5268 = vpop.f32.mrf.mxu0
  %v5269 = vadd.f32 0.0, %v5268
  %v5270 = vpop.f32.mrf.mxu0
  %5271 = vmatprep.mubr.bf16.mxu0 0
  %5272 = vmatmul.mubr.bf16.gmra.mxu0 %v5183
  %v5273 = vpop.f32.mrf.mxu0
  %v5274 = vadd.f32 0.0, %v5273
  %v5275 = vpop.f32.mrf.mxu0
  %v5276 = vpop.f32.mrf.mxu0
  %v5277 = vadd.f32 0.0, %v5276
  %v5278 = vpop.f32.mrf.mxu0
  %5279 = vmatprep.mubr.bf16.mxu0 0
  %5280 = vmatmul.mubr.bf16.gmra.mxu0 %v5186
  %v5281 = vpop.f32.mrf.mxu0
  %v5282 = vadd.f32 0.0, %v5281
  %v5283 = vpop.f32.mrf.mxu0
  %v5284 = vpop.f32.mrf.mxu0
  %v5285 = vadd.f32 0.0, %v5284
  %v5286 = vpop.f32.mrf.mxu0
  %5287 = vmatprep.mubr.bf16.mxu0 0
  %5288 = vmatmul.mubr.bf16.gmra.mxu0 %v5189
  %v5289 = vpop.f32.mrf.mxu0
  %v5290 = vadd.f32 0.0, %v5289
  %v5291 = vpop.f32.mrf.mxu0
  %v5292 = vpop.f32.mrf.mxu0
  %v5293 = vadd.f32 0.0, %v5292
  %v5294 = vpop.f32.mrf.mxu0
  %5295 = vdwg.mxu0
  %v5296 = vadd.f32 %v5129, %v5226
  %v5297 = vadd.f32 %v5130, %v5229
  %v5298 = vadd.f32 %v5131, %v5234
  %v5299 = vadd.f32 %v5132, %v5237
  %v5300 = vadd.f32 %v5133, %v5242
  %v5301 = vadd.f32 %v5134, %v5245
  %v5302 = vadd.f32 %v5135, %v5250
  %v5303 = vadd.f32 %v5136, %v5253
  %v5304 = vadd.f32 %v5137, %v5258
  %v5305 = vadd.f32 %v5138, %v5261
  %v5306 = vadd.f32 %v5139, %v5266
  %v5307 = vadd.f32 %v5140, %v5269
  %v5308 = vadd.f32 %v5141, %v5274
  %v5309 = vadd.f32 %v5142, %v5277
  %v5310 = vadd.f32 %v5143, %v5282
  %v5311 = vadd.f32 %v5144, %v5285
  %v5312 = vadd.f32 %v5145, %v5290
  %v5313 = vadd.f32 %v5146, %v5293
  %s5314 = scalar_lea.vmem %s3, 176
  %v5315 = vld [vmem:[%s5314] sm:$0xf]
  %v5316 = vld [vmem:[%s5314 + $0x4] sm:$0xf]
  %v5317 = vld [vmem:[%s5314 + $0x8] sm:$0xf]
  %v5318 = vld [vmem:[%s5314 + $0xc] sm:$0xf]
  %v5323 = vunpack.c.l.b16 %v5315
  %v5324 = vunpack.c.l.b16 %v5316
  %v5325 = vunpack.c.l.b16 %v5317
  %v5326 = vunpack.c.l.b16 %v5318
  %v5327 = vpack.c.b16 %v5324, %v5323
  %v5328 = vpack.c.b16 %v5326, %v5325
  %v5332 = vsel %vm3534, %v3468, 0
  %v5335 = vsel %vm3534, %v3469, 0
  %v5338 = vsel %vm3534, %v3470, 0
  %v5341 = vsel %vm3534, %v3471, 0
  %v5344 = vsel %vm3534, %v3472, 0
  %v5347 = vsel %vm3534, %v3473, 0
  %v5350 = vsel %vm3534, %v3474, 0
  %v5353 = vsel %vm3534, %v3475, 0
  %v5356 = vsel %vm3534, %v3476, 0
  %5358 = vmatprep.subr.bf16.mxu0 0
  %5359 = vmatpush1.bf16.msra.mxu0 0
  %5360 = vmatprep.subr.bf16.mxu0 0
  %5361 = vmatpush1.bf16.msra.mxu0 0
  %5362 = vmatprep.subr.bf16.mxu0 0
  %5363 = vmatpush1.bf16.msra.mxu0 0
  %5364 = vmatprep.subr.bf16.mxu0 0
  %5365 = vmatpush1.bf16.msra.mxu0 0
  %5366 = vmatprep.subr.bf16.mxu0 0
  %5367 = vmatpush1.bf16.msra.mxu0 0
  %5368 = vmatprep.subr.bf16.mxu0 0
  %5369 = vmatpush1.bf16.msra.mxu0 0
  %5370 = vmatprep.subr.bf16.mxu0 0
  %5371 = vmatpush1.bf16.msra.mxu0 %v5328
  %5372 = vmatprep.subr.bf16.mxu0 0
  %5373 = vmatpush1.bf16.msra.mxu0 %v5327
  %5374 = vmatprep.subr.bf16.mxu0 0
  %5375 = vmatpush2.bf16.msra.mxu0 0
  %5376 = vmatprep.subr.bf16.mxu0 0
  %5377 = vmatpush2.bf16.msra.mxu0 0
  %5378 = vmatprep.subr.bf16.mxu0 0
  %5379 = vmatpush2.bf16.msra.mxu0 0
  %5380 = vmatprep.subr.bf16.mxu0 0
  %5381 = vmatpush2.bf16.msra.mxu0 0
  %5382 = vmatprep.subr.bf16.mxu0 0
  %5383 = vmatpush2.bf16.msra.mxu0 0
  %5384 = vmatprep.subr.bf16.mxu0 0
  %5385 = vmatpush2.bf16.msra.mxu0 0
  %5386 = vmatprep.subr.bf16.mxu0 0
  %5387 = vmatpush2.bf16.msra.mxu0 0
  %5388 = vmatprep.subr.bf16.mxu0 0
  %5389 = vmatpush2.bf16.msra.mxu0 0
  %5390 = vmatprep.mubr.bf16.mxu0 0
  %5391 = vmatmul.mubr.bf16.gmra.mxu0 %v5332
  %v5392 = vpop.f32.mrf.mxu0
  %v5393 = vadd.f32 0.0, %v5392
  %v5394 = vpop.f32.mrf.mxu0
  %v5395 = vpop.f32.mrf.mxu0
  %v5396 = vadd.f32 0.0, %v5395
  %v5397 = vpop.f32.mrf.mxu0
  %5398 = vmatprep.mubr.bf16.mxu0 0
  %5399 = vmatmul.mubr.bf16.gmra.mxu0 %v5335
  %v5400 = vpop.f32.mrf.mxu0
  %v5401 = vadd.f32 0.0, %v5400
  %v5402 = vpop.f32.mrf.mxu0
  %v5403 = vpop.f32.mrf.mxu0
  %v5404 = vadd.f32 0.0, %v5403
  %v5405 = vpop.f32.mrf.mxu0
  %5406 = vmatprep.mubr.bf16.mxu0 0
  %5407 = vmatmul.mubr.bf16.gmra.mxu0 %v5338
  %v5408 = vpop.f32.mrf.mxu0
  %v5409 = vadd.f32 0.0, %v5408
  %v5410 = vpop.f32.mrf.mxu0
  %v5411 = vpop.f32.mrf.mxu0
  %v5412 = vadd.f32 0.0, %v5411
  %v5413 = vpop.f32.mrf.mxu0
  %5414 = vmatprep.mubr.bf16.mxu0 0
  %5415 = vmatmul.mubr.bf16.gmra.mxu0 %v5341
  %v5416 = vpop.f32.mrf.mxu0
  %v5417 = vadd.f32 0.0, %v5416
  %v5418 = vpop.f32.mrf.mxu0
  %v5419 = vpop.f32.mrf.mxu0
  %v5420 = vadd.f32 0.0, %v5419
  %v5421 = vpop.f32.mrf.mxu0
  %5422 = vmatprep.mubr.bf16.mxu0 0
  %5423 = vmatmul.mubr.bf16.gmra.mxu0 %v5344
  %v5424 = vpop.f32.mrf.mxu0
  %v5425 = vadd.f32 0.0, %v5424
  %v5426 = vpop.f32.mrf.mxu0
  %v5427 = vpop.f32.mrf.mxu0
  %v5428 = vadd.f32 0.0, %v5427
  %v5429 = vpop.f32.mrf.mxu0
  %5430 = vmatprep.mubr.bf16.mxu0 0
  %5431 = vmatmul.mubr.bf16.gmra.mxu0 %v5347
  %v5432 = vpop.f32.mrf.mxu0
  %v5433 = vadd.f32 0.0, %v5432
  %v5434 = vpop.f32.mrf.mxu0
  %v5435 = vpop.f32.mrf.mxu0
  %v5436 = vadd.f32 0.0, %v5435
  %v5437 = vpop.f32.mrf.mxu0
  %5438 = vmatprep.mubr.bf16.mxu0 0
  %5439 = vmatmul.mubr.bf16.gmra.mxu0 %v5350
  %v5440 = vpop.f32.mrf.mxu0
  %v5441 = vadd.f32 0.0, %v5440
  %v5442 = vpop.f32.mrf.mxu0
  %v5443 = vpop.f32.mrf.mxu0
  %v5444 = vadd.f32 0.0, %v5443
  %v5445 = vpop.f32.mrf.mxu0
  %5446 = vmatprep.mubr.bf16.mxu0 0
  %5447 = vmatmul.mubr.bf16.gmra.mxu0 %v5353
  %v5448 = vpop.f32.mrf.mxu0
  %v5449 = vadd.f32 0.0, %v5448
  %v5450 = vpop.f32.mrf.mxu0
  %v5451 = vpop.f32.mrf.mxu0
  %v5452 = vadd.f32 0.0, %v5451
  %v5453 = vpop.f32.mrf.mxu0
  %5454 = vmatprep.mubr.bf16.mxu0 0
  %5455 = vmatmul.mubr.bf16.gmra.mxu0 %v5356
  %v5456 = vpop.f32.mrf.mxu0
  %v5457 = vadd.f32 0.0, %v5456
  %v5458 = vpop.f32.mrf.mxu0
  %v5459 = vpop.f32.mrf.mxu0
  %v5460 = vadd.f32 0.0, %v5459
  %v5461 = vpop.f32.mrf.mxu0
  %5462 = vdwg.mxu0
  %v5463 = vadd.f32 %v5296, %v5393
  %v5464 = vadd.f32 %v5297, %v5396
  %v5465 = vadd.f32 %v5298, %v5401
  %v5466 = vadd.f32 %v5299, %v5404
  %v5467 = vadd.f32 %v5300, %v5409
  %v5468 = vadd.f32 %v5301, %v5412
  %v5469 = vadd.f32 %v5302, %v5417
  %v5470 = vadd.f32 %v5303, %v5420
  %v5471 = vadd.f32 %v5304, %v5425
  %v5472 = vadd.f32 %v5305, %v5428
  %v5473 = vadd.f32 %v5306, %v5433
  %v5474 = vadd.f32 %v5307, %v5436
  %v5475 = vadd.f32 %v5308, %v5441
  %v5476 = vadd.f32 %v5309, %v5444
  %v5477 = vadd.f32 %v5310, %v5449
  %v5478 = vadd.f32 %v5311, %v5452
  %v5479 = vadd.f32 %v5312, %v5457
  %v5480 = vadd.f32 %v5313, %v5460
  %s5481 = scalar_lea.vmem %s3, 192
  %v5482 = vld [vmem:[%s5481] sm:$0xf]
  %v5483 = vld [vmem:[%s5481 + $0x4] sm:$0xf]
  %v5484 = vld [vmem:[%s5481 + $0x8] sm:$0xf]
  %v5485 = vld [vmem:[%s5481 + $0xc] sm:$0xf]
  %v5490 = vunpack.c.l.b16 %v5482
  %v5491 = vunpack.c.l.b16 %v5483
  %v5492 = vunpack.c.l.b16 %v5484
  %v5493 = vunpack.c.l.b16 %v5485
  %v5494 = vpack.c.b16 %v5491, %v5490
  %v5495 = vpack.c.b16 %v5493, %v5492
  %v5499 = vsel %vm3534, %v3477, 0
  %v5502 = vsel %vm3534, %v3478, 0
  %v5505 = vsel %vm3534, %v3479, 0
  %v5508 = vsel %vm3534, %v3480, 0
  %v5511 = vsel %vm3534, %v3481, 0
  %v5514 = vsel %vm3534, %v3482, 0
  %v5517 = vsel %vm3534, %v3483, 0
  %v5520 = vsel %vm3534, %v3484, 0
  %v5523 = vsel %vm3534, %v3485, 0
  %5525 = vmatprep.subr.bf16.mxu0 0
  %5526 = vmatpush1.bf16.msra.mxu0 0
  %5527 = vmatprep.subr.bf16.mxu0 0
  %5528 = vmatpush1.bf16.msra.mxu0 0
  %5529 = vmatprep.subr.bf16.mxu0 0
  %5530 = vmatpush1.bf16.msra.mxu0 0
  %5531 = vmatprep.subr.bf16.mxu0 0
  %5532 = vmatpush1.bf16.msra.mxu0 0
  %5533 = vmatprep.subr.bf16.mxu0 0
  %5534 = vmatpush1.bf16.msra.mxu0 0
  %5535 = vmatprep.subr.bf16.mxu0 0
  %5536 = vmatpush1.bf16.msra.mxu0 0
  %5537 = vmatprep.subr.bf16.mxu0 0
  %5538 = vmatpush1.bf16.msra.mxu0 %v5495
  %5539 = vmatprep.subr.bf16.mxu0 0
  %5540 = vmatpush1.bf16.msra.mxu0 %v5494
  %5541 = vmatprep.subr.bf16.mxu0 0
  %5542 = vmatpush2.bf16.msra.mxu0 0
  %5543 = vmatprep.subr.bf16.mxu0 0
  %5544 = vmatpush2.bf16.msra.mxu0 0
  %5545 = vmatprep.subr.bf16.mxu0 0
  %5546 = vmatpush2.bf16.msra.mxu0 0
  %5547 = vmatprep.subr.bf16.mxu0 0
  %5548 = vmatpush2.bf16.msra.mxu0 0
  %5549 = vmatprep.subr.bf16.mxu0 0
  %5550 = vmatpush2.bf16.msra.mxu0 0
  %5551 = vmatprep.subr.bf16.mxu0 0
  %5552 = vmatpush2.bf16.msra.mxu0 0
  %5553 = vmatprep.subr.bf16.mxu0 0
  %5554 = vmatpush2.bf16.msra.mxu0 0
  %5555 = vmatprep.subr.bf16.mxu0 0
  %5556 = vmatpush2.bf16.msra.mxu0 0
  %5557 = vmatprep.mubr.bf16.mxu0 0
  %5558 = vmatmul.mubr.bf16.gmra.mxu0 %v5499
  %v5559 = vpop.f32.mrf.mxu0
  %v5560 = vadd.f32 0.0, %v5559
  %v5561 = vpop.f32.mrf.mxu0
  %v5562 = vpop.f32.mrf.mxu0
  %v5563 = vadd.f32 0.0, %v5562
  %v5564 = vpop.f32.mrf.mxu0
  %5565 = vmatprep.mubr.bf16.mxu0 0
  %5566 = vmatmul.mubr.bf16.gmra.mxu0 %v5502
  %v5567 = vpop.f32.mrf.mxu0
  %v5568 = vadd.f32 0.0, %v5567
  %v5569 = vpop.f32.mrf.mxu0
  %v5570 = vpop.f32.mrf.mxu0
  %v5571 = vadd.f32 0.0, %v5570
  %v5572 = vpop.f32.mrf.mxu0
  %5573 = vmatprep.mubr.bf16.mxu0 0
  %5574 = vmatmul.mubr.bf16.gmra.mxu0 %v5505
  %v5575 = vpop.f32.mrf.mxu0
  %v5576 = vadd.f32 0.0, %v5575
  %v5577 = vpop.f32.mrf.mxu0
  %v5578 = vpop.f32.mrf.mxu0
  %v5579 = vadd.f32 0.0, %v5578
  %v5580 = vpop.f32.mrf.mxu0
  %5581 = vmatprep.mubr.bf16.mxu0 0
  %5582 = vmatmul.mubr.bf16.gmra.mxu0 %v5508
  %v5583 = vpop.f32.mrf.mxu0
  %v5584 = vadd.f32 0.0, %v5583
  %v5585 = vpop.f32.mrf.mxu0
  %v5586 = vpop.f32.mrf.mxu0
  %v5587 = vadd.f32 0.0, %v5586
  %v5588 = vpop.f32.mrf.mxu0
  %5589 = vmatprep.mubr.bf16.mxu0 0
  %5590 = vmatmul.mubr.bf16.gmra.mxu0 %v5511
  %v5591 = vpop.f32.mrf.mxu0
  %v5592 = vadd.f32 0.0, %v5591
  %v5593 = vpop.f32.mrf.mxu0
  %v5594 = vpop.f32.mrf.mxu0
  %v5595 = vadd.f32 0.0, %v5594
  %v5596 = vpop.f32.mrf.mxu0
  %5597 = vmatprep.mubr.bf16.mxu0 0
  %5598 = vmatmul.mubr.bf16.gmra.mxu0 %v5514
  %v5599 = vpop.f32.mrf.mxu0
  %v5600 = vadd.f32 0.0, %v5599
  %v5601 = vpop.f32.mrf.mxu0
  %v5602 = vpop.f32.mrf.mxu0
  %v5603 = vadd.f32 0.0, %v5602
  %v5604 = vpop.f32.mrf.mxu0
  %5605 = vmatprep.mubr.bf16.mxu0 0
  %5606 = vmatmul.mubr.bf16.gmra.mxu0 %v5517
  %v5607 = vpop.f32.mrf.mxu0
  %v5608 = vadd.f32 0.0, %v5607
  %v5609 = vpop.f32.mrf.mxu0
  %v5610 = vpop.f32.mrf.mxu0
  %v5611 = vadd.f32 0.0, %v5610
  %v5612 = vpop.f32.mrf.mxu0
  %5613 = vmatprep.mubr.bf16.mxu0 0
  %5614 = vmatmul.mubr.bf16.gmra.mxu0 %v5520
  %v5615 = vpop.f32.mrf.mxu0
  %v5616 = vadd.f32 0.0, %v5615
  %v5617 = vpop.f32.mrf.mxu0
  %v5618 = vpop.f32.mrf.mxu0
  %v5619 = vadd.f32 0.0, %v5618
  %v5620 = vpop.f32.mrf.mxu0
  %5621 = vmatprep.mubr.bf16.mxu0 0
  %5622 = vmatmul.mubr.bf16.gmra.mxu0 %v5523
  %v5623 = vpop.f32.mrf.mxu0
  %v5624 = vadd.f32 0.0, %v5623
  %v5625 = vpop.f32.mrf.mxu0
  %v5626 = vpop.f32.mrf.mxu0
  %v5627 = vadd.f32 0.0, %v5626
  %v5628 = vpop.f32.mrf.mxu0
  %5629 = vdwg.mxu0
  %v5630 = vadd.f32 %v5463, %v5560
  %v5631 = vadd.f32 %v5464, %v5563
  %v5632 = vadd.f32 %v5465, %v5568
  %v5633 = vadd.f32 %v5466, %v5571
  %v5634 = vadd.f32 %v5467, %v5576
  %v5635 = vadd.f32 %v5468, %v5579
  %v5636 = vadd.f32 %v5469, %v5584
  %v5637 = vadd.f32 %v5470, %v5587
  %v5638 = vadd.f32 %v5471, %v5592
  %v5639 = vadd.f32 %v5472, %v5595
  %v5640 = vadd.f32 %v5473, %v5600
  %v5641 = vadd.f32 %v5474, %v5603
  %v5642 = vadd.f32 %v5475, %v5608
  %v5643 = vadd.f32 %v5476, %v5611
  %v5644 = vadd.f32 %v5477, %v5616
  %v5645 = vadd.f32 %v5478, %v5619
  %v5646 = vadd.f32 %v5479, %v5624
  %v5647 = vadd.f32 %v5480, %v5627
  %s5648 = scalar_lea.vmem %s3, 208
  %v5649 = vld [vmem:[%s5648] sm:$0xf]
  %v5650 = vld [vmem:[%s5648 + $0x4] sm:$0xf]
  %v5651 = vld [vmem:[%s5648 + $0x8] sm:$0xf]
  %v5652 = vld [vmem:[%s5648 + $0xc] sm:$0xf]
  %v5657 = vunpack.c.l.b16 %v5649
  %v5658 = vunpack.c.l.b16 %v5650
  %v5659 = vunpack.c.l.b16 %v5651
  %v5660 = vunpack.c.l.b16 %v5652
  %v5661 = vpack.c.b16 %v5658, %v5657
  %v5662 = vpack.c.b16 %v5660, %v5659
  %v5666 = vsel %vm3534, %v3486, 0
  %v5669 = vsel %vm3534, %v3487, 0
  %v5672 = vsel %vm3534, %v3488, 0
  %v5675 = vsel %vm3534, %v3489, 0
  %v5678 = vsel %vm3534, %v3490, 0
  %v5681 = vsel %vm3534, %v3491, 0
  %v5684 = vsel %vm3534, %v3492, 0
  %v5687 = vsel %vm3534, %v3493, 0
  %v5690 = vsel %vm3534, %v3494, 0
  %5692 = vmatprep.subr.bf16.mxu0 0
  %5693 = vmatpush1.bf16.msra.mxu0 0
  %5694 = vmatprep.subr.bf16.mxu0 0
  %5695 = vmatpush1.bf16.msra.mxu0 0
  %5696 = vmatprep.subr.bf16.mxu0 0
  %5697 = vmatpush1.bf16.msra.mxu0 0
  %5698 = vmatprep.subr.bf16.mxu0 0
  %5699 = vmatpush1.bf16.msra.mxu0 0
  %5700 = vmatprep.subr.bf16.mxu0 0
  %5701 = vmatpush1.bf16.msra.mxu0 0
  %5702 = vmatprep.subr.bf16.mxu0 0
  %5703 = vmatpush1.bf16.msra.mxu0 0
  %5704 = vmatprep.subr.bf16.mxu0 0
  %5705 = vmatpush1.bf16.msra.mxu0 %v5662
  %5706 = vmatprep.subr.bf16.mxu0 0
  %5707 = vmatpush1.bf16.msra.mxu0 %v5661
  %5708 = vmatprep.subr.bf16.mxu0 0
  %5709 = vmatpush2.bf16.msra.mxu0 0
  %5710 = vmatprep.subr.bf16.mxu0 0
  %5711 = vmatpush2.bf16.msra.mxu0 0
  %5712 = vmatprep.subr.bf16.mxu0 0
  %5713 = vmatpush2.bf16.msra.mxu0 0
  %5714 = vmatprep.subr.bf16.mxu0 0
  %5715 = vmatpush2.bf16.msra.mxu0 0
  %5716 = vmatprep.subr.bf16.mxu0 0
  %5717 = vmatpush2.bf16.msra.mxu0 0
  %5718 = vmatprep.subr.bf16.mxu0 0
  %5719 = vmatpush2.bf16.msra.mxu0 0
  %5720 = vmatprep.subr.bf16.mxu0 0
  %5721 = vmatpush2.bf16.msra.mxu0 0
  %5722 = vmatprep.subr.bf16.mxu0 0
  %5723 = vmatpush2.bf16.msra.mxu0 0
  %5724 = vmatprep.mubr.bf16.mxu0 0
  %5725 = vmatmul.mubr.bf16.gmra.mxu0 %v5666
  %v5726 = vpop.f32.mrf.mxu0
  %v5727 = vadd.f32 0.0, %v5726
  %v5728 = vpop.f32.mrf.mxu0
  %v5729 = vpop.f32.mrf.mxu0
  %v5730 = vadd.f32 0.0, %v5729
  %v5731 = vpop.f32.mrf.mxu0
  %5732 = vmatprep.mubr.bf16.mxu0 0
  %5733 = vmatmul.mubr.bf16.gmra.mxu0 %v5669
  %v5734 = vpop.f32.mrf.mxu0
  %v5735 = vadd.f32 0.0, %v5734
  %v5736 = vpop.f32.mrf.mxu0
  %v5737 = vpop.f32.mrf.mxu0
  %v5738 = vadd.f32 0.0, %v5737
  %v5739 = vpop.f32.mrf.mxu0
  %5740 = vmatprep.mubr.bf16.mxu0 0
  %5741 = vmatmul.mubr.bf16.gmra.mxu0 %v5672
  %v5742 = vpop.f32.mrf.mxu0
  %v5743 = vadd.f32 0.0, %v5742
  %v5744 = vpop.f32.mrf.mxu0
  %v5745 = vpop.f32.mrf.mxu0
  %v5746 = vadd.f32 0.0, %v5745
  %v5747 = vpop.f32.mrf.mxu0
  %5748 = vmatprep.mubr.bf16.mxu0 0
  %5749 = vmatmul.mubr.bf16.gmra.mxu0 %v5675
  %v5750 = vpop.f32.mrf.mxu0
  %v5751 = vadd.f32 0.0, %v5750
  %v5752 = vpop.f32.mrf.mxu0
  %v5753 = vpop.f32.mrf.mxu0
  %v5754 = vadd.f32 0.0, %v5753
  %v5755 = vpop.f32.mrf.mxu0
  %5756 = vmatprep.mubr.bf16.mxu0 0
  %5757 = vmatmul.mubr.bf16.gmra.mxu0 %v5678
  %v5758 = vpop.f32.mrf.mxu0
  %v5759 = vadd.f32 0.0, %v5758
  %v5760 = vpop.f32.mrf.mxu0
  %v5761 = vpop.f32.mrf.mxu0
  %v5762 = vadd.f32 0.0, %v5761
  %v5763 = vpop.f32.mrf.mxu0
  %5764 = vmatprep.mubr.bf16.mxu0 0
  %5765 = vmatmul.mubr.bf16.gmra.mxu0 %v5681
  %v5766 = vpop.f32.mrf.mxu0
  %v5767 = vadd.f32 0.0, %v5766
  %v5768 = vpop.f32.mrf.mxu0
  %v5769 = vpop.f32.mrf.mxu0
  %v5770 = vadd.f32 0.0, %v5769
  %v5771 = vpop.f32.mrf.mxu0
  %5772 = vmatprep.mubr.bf16.mxu0 0
  %5773 = vmatmul.mubr.bf16.gmra.mxu0 %v5684
  %v5774 = vpop.f32.mrf.mxu0
  %v5775 = vadd.f32 0.0, %v5774
  %v5776 = vpop.f32.mrf.mxu0
  %v5777 = vpop.f32.mrf.mxu0
  %v5778 = vadd.f32 0.0, %v5777
  %v5779 = vpop.f32.mrf.mxu0
  %5780 = vmatprep.mubr.bf16.mxu0 0
  %5781 = vmatmul.mubr.bf16.gmra.mxu0 %v5687
  %v5782 = vpop.f32.mrf.mxu0
  %v5783 = vadd.f32 0.0, %v5782
  %v5784 = vpop.f32.mrf.mxu0
  %v5785 = vpop.f32.mrf.mxu0
  %v5786 = vadd.f32 0.0, %v5785
  %v5787 = vpop.f32.mrf.mxu0
  %5788 = vmatprep.mubr.bf16.mxu0 0
  %5789 = vmatmul.mubr.bf16.gmra.mxu0 %v5690
  %v5790 = vpop.f32.mrf.mxu0
  %v5791 = vadd.f32 0.0, %v5790
  %v5792 = vpop.f32.mrf.mxu0
  %v5793 = vpop.f32.mrf.mxu0
  %v5794 = vadd.f32 0.0, %v5793
  %v5795 = vpop.f32.mrf.mxu0
  %5796 = vdwg.mxu0
  %v5797 = vadd.f32 %v5630, %v5727
  %v5798 = vadd.f32 %v5631, %v5730
  %v5799 = vadd.f32 %v5632, %v5735
  %v5800 = vadd.f32 %v5633, %v5738
  %v5801 = vadd.f32 %v5634, %v5743
  %v5802 = vadd.f32 %v5635, %v5746
  %v5803 = vadd.f32 %v5636, %v5751
  %v5804 = vadd.f32 %v5637, %v5754
  %v5805 = vadd.f32 %v5638, %v5759
  %v5806 = vadd.f32 %v5639, %v5762
  %v5807 = vadd.f32 %v5640, %v5767
  %v5808 = vadd.f32 %v5641, %v5770
  %v5809 = vadd.f32 %v5642, %v5775
  %v5810 = vadd.f32 %v5643, %v5778
  %v5811 = vadd.f32 %v5644, %v5783
  %v5812 = vadd.f32 %v5645, %v5786
  %v5813 = vadd.f32 %v5646, %v5791
  %v5814 = vadd.f32 %v5647, %v5794
  %s5815 = scalar_lea.vmem %s3, 224
  %v5816 = vld [vmem:[%s5815] sm:$0xf]
  %v5817 = vld [vmem:[%s5815 + $0x4] sm:$0xf]
  %v5818 = vld [vmem:[%s5815 + $0x8] sm:$0xf]
  %v5819 = vld [vmem:[%s5815 + $0xc] sm:$0xf]
  %v5824 = vunpack.c.l.b16 %v5816
  %v5825 = vunpack.c.l.b16 %v5817
  %v5826 = vunpack.c.l.b16 %v5818
  %v5827 = vunpack.c.l.b16 %v5819
  %v5828 = vpack.c.b16 %v5825, %v5824
  %v5829 = vpack.c.b16 %v5827, %v5826
  %v5833 = vsel %vm3534, %v3495, 0
  %v5836 = vsel %vm3534, %v3496, 0
  %v5839 = vsel %vm3534, %v3497, 0
  %v5842 = vsel %vm3534, %v3498, 0
  %v5845 = vsel %vm3534, %v3499, 0
  %v5848 = vsel %vm3534, %v3500, 0
  %v5851 = vsel %vm3534, %v3501, 0
  %v5854 = vsel %vm3534, %v3502, 0
  %v5857 = vsel %vm3534, %v3503, 0
  %5859 = vmatprep.subr.bf16.mxu0 0
  %5860 = vmatpush1.bf16.msra.mxu0 0
  %5861 = vmatprep.subr.bf16.mxu0 0
  %5862 = vmatpush1.bf16.msra.mxu0 0
  %5863 = vmatprep.subr.bf16.mxu0 0
  %5864 = vmatpush1.bf16.msra.mxu0 0
  %5865 = vmatprep.subr.bf16.mxu0 0
  %5866 = vmatpush1.bf16.msra.mxu0 0
  %5867 = vmatprep.subr.bf16.mxu0 0
  %5868 = vmatpush1.bf16.msra.mxu0 0
  %5869 = vmatprep.subr.bf16.mxu0 0
  %5870 = vmatpush1.bf16.msra.mxu0 0
  %5871 = vmatprep.subr.bf16.mxu0 0
  %5872 = vmatpush1.bf16.msra.mxu0 %v5829
  %5873 = vmatprep.subr.bf16.mxu0 0
  %5874 = vmatpush1.bf16.msra.mxu0 %v5828
  %5875 = vmatprep.subr.bf16.mxu0 0
  %5876 = vmatpush2.bf16.msra.mxu0 0
  %5877 = vmatprep.subr.bf16.mxu0 0
  %5878 = vmatpush2.bf16.msra.mxu0 0
  %5879 = vmatprep.subr.bf16.mxu0 0
  %5880 = vmatpush2.bf16.msra.mxu0 0
  %5881 = vmatprep.subr.bf16.mxu0 0
  %5882 = vmatpush2.bf16.msra.mxu0 0
  %5883 = vmatprep.subr.bf16.mxu0 0
  %5884 = vmatpush2.bf16.msra.mxu0 0
  %5885 = vmatprep.subr.bf16.mxu0 0
  %5886 = vmatpush2.bf16.msra.mxu0 0
  %5887 = vmatprep.subr.bf16.mxu0 0
  %5888 = vmatpush2.bf16.msra.mxu0 0
  %5889 = vmatprep.subr.bf16.mxu0 0
  %5890 = vmatpush2.bf16.msra.mxu0 0
  %5891 = vmatprep.mubr.bf16.mxu0 0
  %5892 = vmatmul.mubr.bf16.gmra.mxu0 %v5833
  %v5893 = vpop.f32.mrf.mxu0
  %v5894 = vadd.f32 0.0, %v5893
  %v5895 = vpop.f32.mrf.mxu0
  %v5896 = vpop.f32.mrf.mxu0
  %v5897 = vadd.f32 0.0, %v5896
  %v5898 = vpop.f32.mrf.mxu0
  %5899 = vmatprep.mubr.bf16.mxu0 0
  %5900 = vmatmul.mubr.bf16.gmra.mxu0 %v5836
  %v5901 = vpop.f32.mrf.mxu0
  %v5902 = vadd.f32 0.0, %v5901
  %v5903 = vpop.f32.mrf.mxu0
  %v5904 = vpop.f32.mrf.mxu0
  %v5905 = vadd.f32 0.0, %v5904
  %v5906 = vpop.f32.mrf.mxu0
  %5907 = vmatprep.mubr.bf16.mxu0 0
  %5908 = vmatmul.mubr.bf16.gmra.mxu0 %v5839
  %v5909 = vpop.f32.mrf.mxu0
  %v5910 = vadd.f32 0.0, %v5909
  %v5911 = vpop.f32.mrf.mxu0
  %v5912 = vpop.f32.mrf.mxu0
  %v5913 = vadd.f32 0.0, %v5912
  %v5914 = vpop.f32.mrf.mxu0
  %5915 = vmatprep.mubr.bf16.mxu0 0
  %5916 = vmatmul.mubr.bf16.gmra.mxu0 %v5842
  %v5917 = vpop.f32.mrf.mxu0
  %v5918 = vadd.f32 0.0, %v5917
  %v5919 = vpop.f32.mrf.mxu0
  %v5920 = vpop.f32.mrf.mxu0
  %v5921 = vadd.f32 0.0, %v5920
  %v5922 = vpop.f32.mrf.mxu0
  %5923 = vmatprep.mubr.bf16.mxu0 0
  %5924 = vmatmul.mubr.bf16.gmra.mxu0 %v5845
  %v5925 = vpop.f32.mrf.mxu0
  %v5926 = vadd.f32 0.0, %v5925
  %v5927 = vpop.f32.mrf.mxu0
  %v5928 = vpop.f32.mrf.mxu0
  %v5929 = vadd.f32 0.0, %v5928
  %v5930 = vpop.f32.mrf.mxu0
  %5931 = vmatprep.mubr.bf16.mxu0 0
  %5932 = vmatmul.mubr.bf16.gmra.mxu0 %v5848
  %v5933 = vpop.f32.mrf.mxu0
  %v5934 = vadd.f32 0.0, %v5933
  %v5935 = vpop.f32.mrf.mxu0
  %v5936 = vpop.f32.mrf.mxu0
  %v5937 = vadd.f32 0.0, %v5936
  %v5938 = vpop.f32.mrf.mxu0
  %5939 = vmatprep.mubr.bf16.mxu0 0
  %5940 = vmatmul.mubr.bf16.gmra.mxu0 %v5851
  %v5941 = vpop.f32.mrf.mxu0
  %v5942 = vadd.f32 0.0, %v5941
  %v5943 = vpop.f32.mrf.mxu0
  %v5944 = vpop.f32.mrf.mxu0
  %v5945 = vadd.f32 0.0, %v5944
  %v5946 = vpop.f32.mrf.mxu0
  %5947 = vmatprep.mubr.bf16.mxu0 0
  %5948 = vmatmul.mubr.bf16.gmra.mxu0 %v5854
  %v5949 = vpop.f32.mrf.mxu0
  %v5950 = vadd.f32 0.0, %v5949
  %v5951 = vpop.f32.mrf.mxu0
  %v5952 = vpop.f32.mrf.mxu0
  %v5953 = vadd.f32 0.0, %v5952
  %v5954 = vpop.f32.mrf.mxu0
  %5955 = vmatprep.mubr.bf16.mxu0 0
  %5956 = vmatmul.mubr.bf16.gmra.mxu0 %v5857
  %v5957 = vpop.f32.mrf.mxu0
  %v5958 = vadd.f32 0.0, %v5957
  %v5959 = vpop.f32.mrf.mxu0
  %v5960 = vpop.f32.mrf.mxu0
  %v5961 = vadd.f32 0.0, %v5960
  %v5962 = vpop.f32.mrf.mxu0
  %5963 = vdwg.mxu0
  %v5964 = vadd.f32 %v5797, %v5894
  %v5965 = vadd.f32 %v5798, %v5897
  %v5966 = vadd.f32 %v5799, %v5902
  %v5967 = vadd.f32 %v5800, %v5905
  %v5968 = vadd.f32 %v5801, %v5910
  %v5969 = vadd.f32 %v5802, %v5913
  %v5970 = vadd.f32 %v5803, %v5918
  %v5971 = vadd.f32 %v5804, %v5921
  %v5972 = vadd.f32 %v5805, %v5926
  %v5973 = vadd.f32 %v5806, %v5929
  %v5974 = vadd.f32 %v5807, %v5934
  %v5975 = vadd.f32 %v5808, %v5937
  %v5976 = vadd.f32 %v5809, %v5942
  %v5977 = vadd.f32 %v5810, %v5945
  %v5978 = vadd.f32 %v5811, %v5950
  %v5979 = vadd.f32 %v5812, %v5953
  %v5980 = vadd.f32 %v5813, %v5958
  %v5981 = vadd.f32 %v5814, %v5961
  %s5982 = scalar_lea.vmem %s3, 240
  %v5983 = vld [vmem:[%s5982] sm:$0xf]
  %v5984 = vld [vmem:[%s5982 + $0x4] sm:$0xf]
  %v5985 = vld [vmem:[%s5982 + $0x8] sm:$0xf]
  %v5986 = vld [vmem:[%s5982 + $0xc] sm:$0xf]
  %v5991 = vunpack.c.l.b16 %v5983
  %v5992 = vunpack.c.l.b16 %v5984
  %v5993 = vunpack.c.l.b16 %v5985
  %v5994 = vunpack.c.l.b16 %v5986
  %v5995 = vpack.c.b16 %v5992, %v5991
  %v5996 = vpack.c.b16 %v5994, %v5993
  %v6000 = vsel %vm3534, %v3504, 0
  %v6003 = vsel %vm3534, %v3505, 0
  %v6006 = vsel %vm3534, %v3506, 0
  %v6009 = vsel %vm3534, %v3507, 0
  %v6012 = vsel %vm3534, %v3508, 0
  %v6015 = vsel %vm3534, %v3509, 0
  %v6018 = vsel %vm3534, %v3510, 0
  %v6021 = vsel %vm3534, %v3511, 0
  %v6024 = vsel %vm3534, %v3512, 0
  %6026 = vmatprep.subr.bf16.mxu0 0
  %6027 = vmatpush1.bf16.msra.mxu0 0
  %6028 = vmatprep.subr.bf16.mxu0 0
  %6029 = vmatpush1.bf16.msra.mxu0 0
  %6030 = vmatprep.subr.bf16.mxu0 0
  %6031 = vmatpush1.bf16.msra.mxu0 0
  %6032 = vmatprep.subr.bf16.mxu0 0
  %6033 = vmatpush1.bf16.msra.mxu0 0
  %6034 = vmatprep.subr.bf16.mxu0 0
  %6035 = vmatpush1.bf16.msra.mxu0 0
  %6036 = vmatprep.subr.bf16.mxu0 0
  %6037 = vmatpush1.bf16.msra.mxu0 0
  %6038 = vmatprep.subr.bf16.mxu0 0
  %6039 = vmatpush1.bf16.msra.mxu0 %v5996
  %6040 = vmatprep.subr.bf16.mxu0 0
  %6041 = vmatpush1.bf16.msra.mxu0 %v5995
  %6042 = vmatprep.subr.bf16.mxu0 0
  %6043 = vmatpush2.bf16.msra.mxu0 0
  %6044 = vmatprep.subr.bf16.mxu0 0
  %6045 = vmatpush2.bf16.msra.mxu0 0
  %6046 = vmatprep.subr.bf16.mxu0 0
  %6047 = vmatpush2.bf16.msra.mxu0 0
  %6048 = vmatprep.subr.bf16.mxu0 0
  %6049 = vmatpush2.bf16.msra.mxu0 0
  %6050 = vmatprep.subr.bf16.mxu0 0
  %6051 = vmatpush2.bf16.msra.mxu0 0
  %6052 = vmatprep.subr.bf16.mxu0 0
  %6053 = vmatpush2.bf16.msra.mxu0 0
  %6054 = vmatprep.subr.bf16.mxu0 0
  %6055 = vmatpush2.bf16.msra.mxu0 0
  %6056 = vmatprep.subr.bf16.mxu0 0
  %6057 = vmatpush2.bf16.msra.mxu0 0
  %6058 = vmatprep.mubr.bf16.mxu0 0
  %6059 = vmatmul.mubr.bf16.gmra.mxu0 %v6000
  %v6060 = vpop.f32.mrf.mxu0
  %v6061 = vadd.f32 0.0, %v6060
  %v6062 = vpop.f32.mrf.mxu0
  %v6063 = vpop.f32.mrf.mxu0
  %v6064 = vadd.f32 0.0, %v6063
  %v6065 = vpop.f32.mrf.mxu0
  %6066 = vmatprep.mubr.bf16.mxu0 0
  %6067 = vmatmul.mubr.bf16.gmra.mxu0 %v6003
  %v6068 = vpop.f32.mrf.mxu0
  %v6069 = vadd.f32 0.0, %v6068
  %v6070 = vpop.f32.mrf.mxu0
  %v6071 = vpop.f32.mrf.mxu0
  %v6072 = vadd.f32 0.0, %v6071
  %v6073 = vpop.f32.mrf.mxu0
  %6074 = vmatprep.mubr.bf16.mxu0 0
  %6075 = vmatmul.mubr.bf16.gmra.mxu0 %v6006
  %v6076 = vpop.f32.mrf.mxu0
  %v6077 = vadd.f32 0.0, %v6076
  %v6078 = vpop.f32.mrf.mxu0
  %v6079 = vpop.f32.mrf.mxu0
  %v6080 = vadd.f32 0.0, %v6079
  %v6081 = vpop.f32.mrf.mxu0
  %6082 = vmatprep.mubr.bf16.mxu0 0
  %6083 = vmatmul.mubr.bf16.gmra.mxu0 %v6009
  %v6084 = vpop.f32.mrf.mxu0
  %v6085 = vadd.f32 0.0, %v6084
  %v6086 = vpop.f32.mrf.mxu0
  %v6087 = vpop.f32.mrf.mxu0
  %v6088 = vadd.f32 0.0, %v6087
  %v6089 = vpop.f32.mrf.mxu0
  %6090 = vmatprep.mubr.bf16.mxu0 0
  %6091 = vmatmul.mubr.bf16.gmra.mxu0 %v6012
  %v6092 = vpop.f32.mrf.mxu0
  %v6093 = vadd.f32 0.0, %v6092
  %v6094 = vpop.f32.mrf.mxu0
  %v6095 = vpop.f32.mrf.mxu0
  %v6096 = vadd.f32 0.0, %v6095
  %v6097 = vpop.f32.mrf.mxu0
  %6098 = vmatprep.mubr.bf16.mxu0 0
  %6099 = vmatmul.mubr.bf16.gmra.mxu0 %v6015
  %v6100 = vpop.f32.mrf.mxu0
  %v6101 = vadd.f32 0.0, %v6100
  %v6102 = vpop.f32.mrf.mxu0
  %v6103 = vpop.f32.mrf.mxu0
  %v6104 = vadd.f32 0.0, %v6103
  %v6105 = vpop.f32.mrf.mxu0
  %6106 = vmatprep.mubr.bf16.mxu0 0
  %6107 = vmatmul.mubr.bf16.gmra.mxu0 %v6018
  %v6108 = vpop.f32.mrf.mxu0
  %v6109 = vadd.f32 0.0, %v6108
  %v6110 = vpop.f32.mrf.mxu0
  %v6111 = vpop.f32.mrf.mxu0
  %v6112 = vadd.f32 0.0, %v6111
  %v6113 = vpop.f32.mrf.mxu0
  %6114 = vmatprep.mubr.bf16.mxu0 0
  %6115 = vmatmul.mubr.bf16.gmra.mxu0 %v6021
  %v6116 = vpop.f32.mrf.mxu0
  %v6117 = vadd.f32 0.0, %v6116
  %v6118 = vpop.f32.mrf.mxu0
  %v6119 = vpop.f32.mrf.mxu0
  %v6120 = vadd.f32 0.0, %v6119
  %v6121 = vpop.f32.mrf.mxu0
  %6122 = vmatprep.mubr.bf16.mxu0 0
  %6123 = vmatmul.mubr.bf16.gmra.mxu0 %v6024
  %v6124 = vpop.f32.mrf.mxu0
  %v6125 = vadd.f32 0.0, %v6124
  %v6126 = vpop.f32.mrf.mxu0
  %v6127 = vpop.f32.mrf.mxu0
  %v6128 = vadd.f32 0.0, %v6127
  %v6129 = vpop.f32.mrf.mxu0
  %6130 = vdwg.mxu0
  %v6131 = vadd.f32 %v5964, %v6061
  %v6132 = vadd.f32 %v5965, %v6064
  %v6133 = vadd.f32 %v5966, %v6069
  %v6134 = vadd.f32 %v5967, %v6072
  %v6135 = vadd.f32 %v5968, %v6077
  %v6136 = vadd.f32 %v5969, %v6080
  %v6137 = vadd.f32 %v5970, %v6085
  %v6138 = vadd.f32 %v5971, %v6088
  %v6139 = vadd.f32 %v5972, %v6093
  %v6140 = vadd.f32 %v5973, %v6096
  %v6141 = vadd.f32 %v5974, %v6101
  %v6142 = vadd.f32 %v5975, %v6104
  %v6143 = vadd.f32 %v5976, %v6109
  %v6144 = vadd.f32 %v5977, %v6112
  %v6145 = vadd.f32 %v5978, %v6117
  %v6146 = vadd.f32 %v5979, %v6120
  %v6147 = vadd.f32 %v5980, %v6125
  %v6148 = vadd.f32 %v5981, %v6128
  %v6149 = vld [vmem:[%s4] sm:$0x1]
  %v6151 = vlaneseq
  %v6152 = vshrl.u32 %v6151, 7
  %v6153 = vsub.s32 0, %v6152
  %v6154 = vrot.slane %v6149, %v6153
  %v6156 = vadd.f32 %v6131, %v6154
  %v6157 = vadd.f32 %v6132, %v6154
  %v6158 = vadd.f32 %v6133, %v6154
  %v6159 = vadd.f32 %v6134, %v6154
  %v6160 = vadd.f32 %v6135, %v6154
  %v6161 = vadd.f32 %v6136, %v6154
  %v6162 = vadd.f32 %v6137, %v6154
  %v6163 = vadd.f32 %v6138, %v6154
  %v6164 = vadd.f32 %v6139, %v6154
  %v6165 = vadd.f32 %v6140, %v6154
  %v6166 = vadd.f32 %v6141, %v6154
  %v6167 = vadd.f32 %v6142, %v6154
  %v6168 = vadd.f32 %v6143, %v6154
  %v6169 = vadd.f32 %v6144, %v6154
  %v6170 = vadd.f32 %v6145, %v6154
  %v6171 = vadd.f32 %v6146, %v6154
  %v6172 = vadd.f32 %v6147, %v6154
  %v6173 = vadd.f32 %v6148, %v6154
  %v6174 = vmax.f32 %v6156, 0.0
  %v6175 = vmax.f32 %v6157, 0.0
  %v6176 = vmax.f32 %v6158, 0.0
  %v6177 = vmax.f32 %v6159, 0.0
  %v6178 = vmax.f32 %v6160, 0.0
  %v6179 = vmax.f32 %v6161, 0.0
  %v6180 = vmax.f32 %v6162, 0.0
  %v6181 = vmax.f32 %v6163, 0.0
  %v6182 = vmax.f32 %v6164, 0.0
  %v6183 = vmax.f32 %v6165, 0.0
  %v6184 = vmax.f32 %v6166, 0.0
  %v6185 = vmax.f32 %v6167, 0.0
  %v6186 = vmax.f32 %v6168, 0.0
  %v6187 = vmax.f32 %v6169, 0.0
  %v6188 = vmax.f32 %v6170, 0.0
  %v6189 = vmax.f32 %v6171, 0.0
  %v6190 = vmax.f32 %v6172, 0.0
  %v6191 = vmax.f32 %v6173, 0.0
  %v6192 = vpack.c.bf16 %v6175, %v6174
  %v6193 = vpack.c.bf16 %v6177, %v6176
  %v6194 = vpack.c.bf16 %v6179, %v6178
  %v6195 = vpack.c.bf16 %v6181, %v6180
  %v6196 = vpack.c.bf16 %v6183, %v6182
  %v6197 = vpack.c.bf16 %v6185, %v6184
  %v6198 = vpack.c.bf16 %v6187, %v6186
  %v6199 = vpack.c.bf16 %v6189, %v6188
  %v6200 = vpack.c.bf16 %v6191, %v6190
  %v6201 = vld [vmem:[%s5] sm:$0xff]
  %v6202 = vld [vmem:[%s5 + $0x8] sm:$0xff]
  %v6203 = vld [vmem:[%s5 + $0x10] sm:$0xff]
  %v6204 = vld [vmem:[%s5 + $0x18] sm:$0xff]
  %v6205 = vld [vmem:[%s5 + $0x20] sm:$0xff]
  %v6206 = vld [vmem:[%s5 + $0x28] sm:$0xff]
  %v6207 = vld [vmem:[%s5 + $0x30] sm:$0xff]
  %v6208 = vld [vmem:[%s5 + $0x38] sm:$0xff]
  %v6209 = vld [vmem:[%s5 + $0x40] sm:$0xff]
  %v6210 = vld [vmem:[%s5 + $0x48] sm:$0xff]
  %v6211 = vld [vmem:[%s5 + $0x50] sm:$0xff]
  %v6212 = vld [vmem:[%s5 + $0x58] sm:$0xff]
  %v6213 = vld [vmem:[%s5 + $0x60] sm:$0xff]
  %v6214 = vld [vmem:[%s5 + $0x68] sm:$0xff]
  %v6215 = vld [vmem:[%s5 + $0x70] sm:$0xff]
  %v6216 = vld [vmem:[%s5 + $0x78] sm:$0xff]
  %s6217 = scalar_lea.vmem %s5, 128
  %v6218 = vld [vmem:[%s6217] sm:$0xff]
  %v6219 = vld [vmem:[%s6217 + $0x8] sm:$0xff]
  %v6220 = vld [vmem:[%s6217 + $0x10] sm:$0xff]
  %v6221 = vld [vmem:[%s6217 + $0x18] sm:$0xff]
  %v6222 = vld [vmem:[%s6217 + $0x20] sm:$0xff]
  %v6223 = vld [vmem:[%s6217 + $0x28] sm:$0xff]
  %v6224 = vld [vmem:[%s6217 + $0x30] sm:$0xff]
  %v6225 = vld [vmem:[%s6217 + $0x38] sm:$0xff]
  %v6226 = vld [vmem:[%s6217 + $0x40] sm:$0xff]
  %v6227 = vld [vmem:[%s6217 + $0x48] sm:$0xff]
  %v6228 = vld [vmem:[%s6217 + $0x50] sm:$0xff]
  %v6229 = vld [vmem:[%s6217 + $0x58] sm:$0xff]
  %v6230 = vld [vmem:[%s6217 + $0x60] sm:$0xff]
  %v6231 = vld [vmem:[%s6217 + $0x68] sm:$0xff]
  %v6232 = vld [vmem:[%s6217 + $0x70] sm:$0xff]
  %v6233 = vld [vmem:[%s6217 + $0x78] sm:$0xff]
  %v6250 = vunpack.c.l.b16 %v6218
  %v6251 = vunpack.c.h.b16 %v6218
  %v6252 = vunpack.c.l.b16 %v6219
  %v6253 = vunpack.c.h.b16 %v6219
  %v6254 = vunpack.c.l.b16 %v6220
  %v6255 = vunpack.c.h.b16 %v6220
  %v6256 = vunpack.c.l.b16 %v6221
  %v6257 = vunpack.c.h.b16 %v6221
  %v6258 = vunpack.c.l.b16 %v6222
  %v6259 = vunpack.c.h.b16 %v6222
  %v6260 = vunpack.c.l.b16 %v6223
  %v6261 = vunpack.c.h.b16 %v6223
  %v6262 = vunpack.c.l.b16 %v6224
  %v6263 = vunpack.c.h.b16 %v6224
  %v6264 = vunpack.c.l.b16 %v6225
  %v6265 = vunpack.c.h.b16 %v6225
  %v6266 = vunpack.c.l.b16 %v6226
  %v6267 = vunpack.c.h.b16 %v6226
  %v6268 = vunpack.c.l.b16 %v6227
  %v6269 = vunpack.c.h.b16 %v6227
  %v6270 = vunpack.c.l.b16 %v6228
  %v6271 = vunpack.c.h.b16 %v6228
  %v6272 = vunpack.c.l.b16 %v6229
  %v6273 = vunpack.c.h.b16 %v6229
  %v6274 = vunpack.c.l.b16 %v6230
  %v6275 = vunpack.c.h.b16 %v6230
  %v6276 = vunpack.c.l.b16 %v6231
  %v6277 = vunpack.c.h.b16 %v6231
  %v6278 = vunpack.c.l.b16 %v6232
  %v6279 = vunpack.c.h.b16 %v6232
  %v6280 = vunpack.c.l.b16 %v6233
  %v6281 = vunpack.c.h.b16 %v6233
  %v6282 = vpack.c.b16 %v6254, %v6250
  %v6283 = vpack.c.b16 %v6255, %v6251
  %v6284 = vpack.c.b16 %v6256, %v6252
  %v6285 = vpack.c.b16 %v6257, %v6253
  %v6286 = vpack.c.b16 %v6262, %v6258
  %v6287 = vpack.c.b16 %v6263, %v6259
  %v6288 = vpack.c.b16 %v6264, %v6260
  %v6289 = vpack.c.b16 %v6265, %v6261
  %v6290 = vpack.c.b16 %v6270, %v6266
  %v6291 = vpack.c.b16 %v6271, %v6267
  %v6292 = vpack.c.b16 %v6272, %v6268
  %v6293 = vpack.c.b16 %v6273, %v6269
  %v6294 = vpack.c.b16 %v6278, %v6274
  %v6295 = vpack.c.b16 %v6279, %v6275
  %v6296 = vpack.c.b16 %v6280, %v6276
  %v6297 = vpack.c.b16 %v6281, %v6277
  %vm6314 = vcmask 523264
  %v6316 = vsel %vm6314, %v6193, 0
  %6318 = vmatprep.subr.bf16.mxu0 0
  %6319 = vmatpush1.bf16.msra.mxu0 0
  %6320 = vmatprep.subr.bf16.mxu0 0
  %6321 = vmatpush1.bf16.msra.mxu0 0
  %6322 = vmatprep.subr.bf16.mxu0 0
  %6323 = vmatpush1.bf16.msra.mxu0 0
  %6324 = vmatprep.subr.bf16.mxu0 0
  %6325 = vmatpush1.bf16.msra.mxu0 0
  %6326 = vmatprep.subr.bf16.mxu0 %v6295
  %6327 = vmatpush1.bf16.msra.mxu0 %v6294
  %6328 = vmatprep.subr.bf16.mxu0 %v6291
  %6329 = vmatpush1.bf16.msra.mxu0 %v6290
  %6330 = vmatprep.subr.bf16.mxu0 %v6287
  %6331 = vmatpush1.bf16.msra.mxu0 %v6286
  %6332 = vmatprep.subr.bf16.mxu0 %v6283
  %6333 = vmatpush1.bf16.msra.mxu0 %v6282
  %6334 = vmatprep.subr.bf16.mxu0 0
  %6335 = vmatpush2.bf16.msra.mxu0 0
  %6336 = vmatprep.subr.bf16.mxu0 0
  %6337 = vmatpush2.bf16.msra.mxu0 0
  %6338 = vmatprep.subr.bf16.mxu0 0
  %6339 = vmatpush2.bf16.msra.mxu0 0
  %6340 = vmatprep.subr.bf16.mxu0 0
  %6341 = vmatpush2.bf16.msra.mxu0 0
  %6342 = vmatprep.subr.bf16.mxu0 0
  %6343 = vmatpush2.bf16.msra.mxu0 0
  %6344 = vmatprep.subr.bf16.mxu0 0
  %6345 = vmatpush2.bf16.msra.mxu0 0
  %6346 = vmatprep.subr.bf16.mxu0 0
  %6347 = vmatpush2.bf16.msra.mxu0 0
  %6348 = vmatprep.subr.bf16.mxu0 0
  %6349 = vmatpush2.bf16.msra.mxu0 0
  %6350 = vmatprep.mubr.bf16.mxu0 0
  %6351 = vmatmul.mubr.bf16.gmra.mxu0 %v6316
  %v6352 = vpop.f32.mrf.mxu0
  %v6353 = vadd.f32 0.0, %v6352
  %v6354 = vpop.f32.mrf.mxu0
  %v6355 = vadd.f32 0.0, %v6354
  %v6356 = vpop.f32.mrf.mxu0
  %v6357 = vadd.f32 0.0, %v6356
  %v6358 = vpop.f32.mrf.mxu0
  %v6359 = vadd.f32 0.0, %v6358
  %6360 = vdwg.mxu0
  %6361 = vmatprep.subr.bf16.mxu0 0
  %6362 = vmatpush1.bf16.msra.mxu0 0
  %6363 = vmatprep.subr.bf16.mxu0 0
  %6364 = vmatpush1.bf16.msra.mxu0 0
  %6365 = vmatprep.subr.bf16.mxu0 0
  %6366 = vmatpush1.bf16.msra.mxu0 0
  %6367 = vmatprep.subr.bf16.mxu0 0
  %6368 = vmatpush1.bf16.msra.mxu0 0
  %6369 = vmatprep.subr.bf16.mxu0 %v6297
  %6370 = vmatpush1.bf16.msra.mxu0 %v6296
  %6371 = vmatprep.subr.bf16.mxu0 %v6293
  %6372 = vmatpush1.bf16.msra.mxu0 %v6292
  %6373 = vmatprep.subr.bf16.mxu0 %v6289
  %6374 = vmatpush1.bf16.msra.mxu0 %v6288
  %6375 = vmatprep.subr.bf16.mxu0 %v6285
  %6376 = vmatpush1.bf16.msra.mxu0 %v6284
  %6377 = vmatprep.subr.bf16.mxu0 0
  %6378 = vmatpush2.bf16.msra.mxu0 0
  %6379 = vmatprep.subr.bf16.mxu0 0
  %6380 = vmatpush2.bf16.msra.mxu0 0
  %6381 = vmatprep.subr.bf16.mxu0 0
  %6382 = vmatpush2.bf16.msra.mxu0 0
  %6383 = vmatprep.subr.bf16.mxu0 0
  %6384 = vmatpush2.bf16.msra.mxu0 0
  %6385 = vmatprep.subr.bf16.mxu0 0
  %6386 = vmatpush2.bf16.msra.mxu0 0
  %6387 = vmatprep.subr.bf16.mxu0 0
  %6388 = vmatpush2.bf16.msra.mxu0 0
  %6389 = vmatprep.subr.bf16.mxu0 0
  %6390 = vmatpush2.bf16.msra.mxu0 0
  %6391 = vmatprep.subr.bf16.mxu0 0
  %6392 = vmatpush2.bf16.msra.mxu0 0
  %6393 = vmatprep.mubr.bf16.mxu0 0
  %6394 = vmatmul.mubr.bf16.gmra.mxu0 %v6316
  %v6395 = vpop.f32.mrf.mxu0
  %v6396 = vadd.f32 0.0, %v6395
  %v6397 = vpop.f32.mrf.mxu0
  %v6398 = vadd.f32 0.0, %v6397
  %v6399 = vpop.f32.mrf.mxu0
  %v6400 = vadd.f32 0.0, %v6399
  %v6401 = vpop.f32.mrf.mxu0
  %v6402 = vadd.f32 0.0, %v6401
  %6403 = vdwg.mxu0
  %v6420 = vunpack.c.l.b16 %v6201
  %v6421 = vunpack.c.h.b16 %v6201
  %v6422 = vunpack.c.l.b16 %v6202
  %v6423 = vunpack.c.h.b16 %v6202
  %v6424 = vunpack.c.l.b16 %v6203
  %v6425 = vunpack.c.h.b16 %v6203
  %v6426 = vunpack.c.l.b16 %v6204
  %v6427 = vunpack.c.h.b16 %v6204
  %v6428 = vunpack.c.l.b16 %v6205
  %v6429 = vunpack.c.h.b16 %v6205
  %v6430 = vunpack.c.l.b16 %v6206
  %v6431 = vunpack.c.h.b16 %v6206
  %v6432 = vunpack.c.l.b16 %v6207
  %v6433 = vunpack.c.h.b16 %v6207
  %v6434 = vunpack.c.l.b16 %v6208
  %v6435 = vunpack.c.h.b16 %v6208
  %v6436 = vunpack.c.l.b16 %v6209
  %v6437 = vunpack.c.h.b16 %v6209
  %v6438 = vunpack.c.l.b16 %v6210
  %v6439 = vunpack.c.h.b16 %v6210
  %v6440 = vunpack.c.l.b16 %v6211
  %v6441 = vunpack.c.h.b16 %v6211
  %v6442 = vunpack.c.l.b16 %v6212
  %v6443 = vunpack.c.h.b16 %v6212
  %v6444 = vunpack.c.l.b16 %v6213
  %v6445 = vunpack.c.h.b16 %v6213
  %v6446 = vunpack.c.l.b16 %v6214
  %v6447 = vunpack.c.h.b16 %v6214
  %v6448 = vunpack.c.l.b16 %v6215
  %v6449 = vunpack.c.h.b16 %v6215
  %v6450 = vunpack.c.l.b16 %v6216
  %v6451 = vunpack.c.h.b16 %v6216
  %v6452 = vpack.c.b16 %v6424, %v6420
  %v6453 = vpack.c.b16 %v6425, %v6421
  %v6454 = vpack.c.b16 %v6426, %v6422
  %v6455 = vpack.c.b16 %v6427, %v6423
  %v6456 = vpack.c.b16 %v6432, %v6428
  %v6457 = vpack.c.b16 %v6433, %v6429
  %v6458 = vpack.c.b16 %v6434, %v6430
  %v6459 = vpack.c.b16 %v6435, %v6431
  %v6460 = vpack.c.b16 %v6440, %v6436
  %v6461 = vpack.c.b16 %v6441, %v6437
  %v6462 = vpack.c.b16 %v6442, %v6438
  %v6463 = vpack.c.b16 %v6443, %v6439
  %v6464 = vpack.c.b16 %v6448, %v6444
  %v6465 = vpack.c.b16 %v6449, %v6445
  %v6466 = vpack.c.b16 %v6450, %v6446
  %v6467 = vpack.c.b16 %v6451, %v6447
  %v6485 = vsel %vm6314, %v6192, 0
  %6487 = vmatprep.subr.bf16.mxu0 0
  %6488 = vmatpush1.bf16.msra.mxu0 0
  %6489 = vmatprep.subr.bf16.mxu0 0
  %6490 = vmatpush1.bf16.msra.mxu0 0
  %6491 = vmatprep.subr.bf16.mxu0 0
  %6492 = vmatpush1.bf16.msra.mxu0 0
  %6493 = vmatprep.subr.bf16.mxu0 0
  %6494 = vmatpush1.bf16.msra.mxu0 0
  %6495 = vmatprep.subr.bf16.mxu0 %v6465
  %6496 = vmatpush1.bf16.msra.mxu0 %v6464
  %6497 = vmatprep.subr.bf16.mxu0 %v6461
  %6498 = vmatpush1.bf16.msra.mxu0 %v6460
  %6499 = vmatprep.subr.bf16.mxu0 %v6457
  %6500 = vmatpush1.bf16.msra.mxu0 %v6456
  %6501 = vmatprep.subr.bf16.mxu0 %v6453
  %6502 = vmatpush1.bf16.msra.mxu0 %v6452
  %6503 = vmatprep.subr.bf16.mxu0 0
  %6504 = vmatpush2.bf16.msra.mxu0 0
  %6505 = vmatprep.subr.bf16.mxu0 0
  %6506 = vmatpush2.bf16.msra.mxu0 0
  %6507 = vmatprep.subr.bf16.mxu0 0
  %6508 = vmatpush2.bf16.msra.mxu0 0
  %6509 = vmatprep.subr.bf16.mxu0 0
  %6510 = vmatpush2.bf16.msra.mxu0 0
  %6511 = vmatprep.subr.bf16.mxu0 0
  %6512 = vmatpush2.bf16.msra.mxu0 0
  %6513 = vmatprep.subr.bf16.mxu0 0
  %6514 = vmatpush2.bf16.msra.mxu0 0
  %6515 = vmatprep.subr.bf16.mxu0 0
  %6516 = vmatpush2.bf16.msra.mxu0 0
  %6517 = vmatprep.subr.bf16.mxu0 0
  %6518 = vmatpush2.bf16.msra.mxu0 0
  %6519 = vmatprep.mubr.bf16.mxu0 0
  %6520 = vmatmul.mubr.bf16.gmra.mxu0 %v6485
  %v6521 = vpop.f32.mrf.mxu0
  %v6522 = vadd.f32 %v6353, %v6521
  %v6523 = vpop.f32.mrf.mxu0
  %v6524 = vadd.f32 %v6355, %v6523
  %v6525 = vpop.f32.mrf.mxu0
  %v6526 = vadd.f32 %v6357, %v6525
  %v6527 = vpop.f32.mrf.mxu0
  %v6528 = vadd.f32 %v6359, %v6527
  %6529 = vdwg.mxu0
  %6530 = vmatprep.subr.bf16.mxu0 0
  %6531 = vmatpush1.bf16.msra.mxu0 0
  %6532 = vmatprep.subr.bf16.mxu0 0
  %6533 = vmatpush1.bf16.msra.mxu0 0
  %6534 = vmatprep.subr.bf16.mxu0 0
  %6535 = vmatpush1.bf16.msra.mxu0 0
  %6536 = vmatprep.subr.bf16.mxu0 0
  %6537 = vmatpush1.bf16.msra.mxu0 0
  %6538 = vmatprep.subr.bf16.mxu0 %v6467
  %6539 = vmatpush1.bf16.msra.mxu0 %v6466
  %6540 = vmatprep.subr.bf16.mxu0 %v6463
  %6541 = vmatpush1.bf16.msra.mxu0 %v6462
  %6542 = vmatprep.subr.bf16.mxu0 %v6459
  %6543 = vmatpush1.bf16.msra.mxu0 %v6458
  %6544 = vmatprep.subr.bf16.mxu0 %v6455
  %6545 = vmatpush1.bf16.msra.mxu0 %v6454
  %6546 = vmatprep.subr.bf16.mxu0 0
  %6547 = vmatpush2.bf16.msra.mxu0 0
  %6548 = vmatprep.subr.bf16.mxu0 0
  %6549 = vmatpush2.bf16.msra.mxu0 0
  %6550 = vmatprep.subr.bf16.mxu0 0
  %6551 = vmatpush2.bf16.msra.mxu0 0
  %6552 = vmatprep.subr.bf16.mxu0 0
  %6553 = vmatpush2.bf16.msra.mxu0 0
  %6554 = vmatprep.subr.bf16.mxu0 0
  %6555 = vmatpush2.bf16.msra.mxu0 0
  %6556 = vmatprep.subr.bf16.mxu0 0
  %6557 = vmatpush2.bf16.msra.mxu0 0
  %6558 = vmatprep.subr.bf16.mxu0 0
  %6559 = vmatpush2.bf16.msra.mxu0 0
  %6560 = vmatprep.subr.bf16.mxu0 0
  %6561 = vmatpush2.bf16.msra.mxu0 0
  %6562 = vmatprep.mubr.bf16.mxu0 0
  %6563 = vmatmul.mubr.bf16.gmra.mxu0 %v6485
  %v6564 = vpop.f32.mrf.mxu0
  %v6565 = vadd.f32 %v6396, %v6564
  %v6566 = vpop.f32.mrf.mxu0
  %v6567 = vadd.f32 %v6398, %v6566
  %v6568 = vpop.f32.mrf.mxu0
  %v6569 = vadd.f32 %v6400, %v6568
  %v6570 = vpop.f32.mrf.mxu0
  %v6571 = vadd.f32 %v6402, %v6570
  %6572 = vdwg.mxu0
  %s6573 = scalar_lea.vmem %s5, 256
  %v6574 = vld [vmem:[%s6573] sm:$0xff]
  %v6575 = vld [vmem:[%s6573 + $0x8] sm:$0xff]
  %v6576 = vld [vmem:[%s6573 + $0x10] sm:$0xff]
  %v6577 = vld [vmem:[%s6573 + $0x18] sm:$0xff]
  %v6578 = vld [vmem:[%s6573 + $0x20] sm:$0xff]
  %v6579 = vld [vmem:[%s6573 + $0x28] sm:$0xff]
  %v6580 = vld [vmem:[%s6573 + $0x30] sm:$0xff]
  %v6581 = vld [vmem:[%s6573 + $0x38] sm:$0xff]
  %v6582 = vld [vmem:[%s6573 + $0x40] sm:$0xff]
  %v6583 = vld [vmem:[%s6573 + $0x48] sm:$0xff]
  %v6584 = vld [vmem:[%s6573 + $0x50] sm:$0xff]
  %v6585 = vld [vmem:[%s6573 + $0x58] sm:$0xff]
  %v6586 = vld [vmem:[%s6573 + $0x60] sm:$0xff]
  %v6587 = vld [vmem:[%s6573 + $0x68] sm:$0xff]
  %v6588 = vld [vmem:[%s6573 + $0x70] sm:$0xff]
  %v6589 = vld [vmem:[%s6573 + $0x78] sm:$0xff]
  %v6606 = vunpack.c.l.b16 %v6574
  %v6607 = vunpack.c.h.b16 %v6574
  %v6608 = vunpack.c.l.b16 %v6575
  %v6609 = vunpack.c.h.b16 %v6575
  %v6610 = vunpack.c.l.b16 %v6576
  %v6611 = vunpack.c.h.b16 %v6576
  %v6612 = vunpack.c.l.b16 %v6577
  %v6613 = vunpack.c.h.b16 %v6577
  %v6614 = vunpack.c.l.b16 %v6578
  %v6615 = vunpack.c.h.b16 %v6578
  %v6616 = vunpack.c.l.b16 %v6579
  %v6617 = vunpack.c.h.b16 %v6579
  %v6618 = vunpack.c.l.b16 %v6580
  %v6619 = vunpack.c.h.b16 %v6580
  %v6620 = vunpack.c.l.b16 %v6581
  %v6621 = vunpack.c.h.b16 %v6581
  %v6622 = vunpack.c.l.b16 %v6582
  %v6623 = vunpack.c.h.b16 %v6582
  %v6624 = vunpack.c.l.b16 %v6583
  %v6625 = vunpack.c.h.b16 %v6583
  %v6626 = vunpack.c.l.b16 %v6584
  %v6627 = vunpack.c.h.b16 %v6584
  %v6628 = vunpack.c.l.b16 %v6585
  %v6629 = vunpack.c.h.b16 %v6585
  %v6630 = vunpack.c.l.b16 %v6586
  %v6631 = vunpack.c.h.b16 %v6586
  %v6632 = vunpack.c.l.b16 %v6587
  %v6633 = vunpack.c.h.b16 %v6587
  %v6634 = vunpack.c.l.b16 %v6588
  %v6635 = vunpack.c.h.b16 %v6588
  %v6636 = vunpack.c.l.b16 %v6589
  %v6637 = vunpack.c.h.b16 %v6589
  %v6638 = vpack.c.b16 %v6610, %v6606
  %v6639 = vpack.c.b16 %v6611, %v6607
  %v6640 = vpack.c.b16 %v6612, %v6608
  %v6641 = vpack.c.b16 %v6613, %v6609
  %v6642 = vpack.c.b16 %v6618, %v6614
  %v6643 = vpack.c.b16 %v6619, %v6615
  %v6644 = vpack.c.b16 %v6620, %v6616
  %v6645 = vpack.c.b16 %v6621, %v6617
  %v6646 = vpack.c.b16 %v6626, %v6622
  %v6647 = vpack.c.b16 %v6627, %v6623
  %v6648 = vpack.c.b16 %v6628, %v6624
  %v6649 = vpack.c.b16 %v6629, %v6625
  %v6650 = vpack.c.b16 %v6634, %v6630
  %v6651 = vpack.c.b16 %v6635, %v6631
  %v6652 = vpack.c.b16 %v6636, %v6632
  %v6653 = vpack.c.b16 %v6637, %v6633
  %v6671 = vsel %vm6314, %v6194, 0
  %6673 = vmatprep.subr.bf16.mxu0 0
  %6674 = vmatpush1.bf16.msra.mxu0 0
  %6675 = vmatprep.subr.bf16.mxu0 0
  %6676 = vmatpush1.bf16.msra.mxu0 0
  %6677 = vmatprep.subr.bf16.mxu0 0
  %6678 = vmatpush1.bf16.msra.mxu0 0
  %6679 = vmatprep.subr.bf16.mxu0 0
  %6680 = vmatpush1.bf16.msra.mxu0 0
  %6681 = vmatprep.subr.bf16.mxu0 %v6651
  %6682 = vmatpush1.bf16.msra.mxu0 %v6650
  %6683 = vmatprep.subr.bf16.mxu0 %v6647
  %6684 = vmatpush1.bf16.msra.mxu0 %v6646
  %6685 = vmatprep.subr.bf16.mxu0 %v6643
  %6686 = vmatpush1.bf16.msra.mxu0 %v6642
  %6687 = vmatprep.subr.bf16.mxu0 %v6639
  %6688 = vmatpush1.bf16.msra.mxu0 %v6638
  %6689 = vmatprep.subr.bf16.mxu0 0
  %6690 = vmatpush2.bf16.msra.mxu0 0
  %6691 = vmatprep.subr.bf16.mxu0 0
  %6692 = vmatpush2.bf16.msra.mxu0 0
  %6693 = vmatprep.subr.bf16.mxu0 0
  %6694 = vmatpush2.bf16.msra.mxu0 0
  %6695 = vmatprep.subr.bf16.mxu0 0
  %6696 = vmatpush2.bf16.msra.mxu0 0
  %6697 = vmatprep.subr.bf16.mxu0 0
  %6698 = vmatpush2.bf16.msra.mxu0 0
  %6699 = vmatprep.subr.bf16.mxu0 0
  %6700 = vmatpush2.bf16.msra.mxu0 0
  %6701 = vmatprep.subr.bf16.mxu0 0
  %6702 = vmatpush2.bf16.msra.mxu0 0
  %6703 = vmatprep.subr.bf16.mxu0 0
  %6704 = vmatpush2.bf16.msra.mxu0 0
  %6705 = vmatprep.mubr.bf16.mxu0 0
  %6706 = vmatmul.mubr.bf16.gmra.mxu0 %v6671
  %v6707 = vpop.f32.mrf.mxu0
  %v6708 = vadd.f32 0.0, %v6707
  %v6709 = vpop.f32.mrf.mxu0
  %v6710 = vadd.f32 0.0, %v6709
  %v6711 = vpop.f32.mrf.mxu0
  %v6712 = vadd.f32 0.0, %v6711
  %v6713 = vpop.f32.mrf.mxu0
  %v6714 = vadd.f32 0.0, %v6713
  %6715 = vdwg.mxu0
  %6716 = vmatprep.subr.bf16.mxu0 0
  %6717 = vmatpush1.bf16.msra.mxu0 0
  %6718 = vmatprep.subr.bf16.mxu0 0
  %6719 = vmatpush1.bf16.msra.mxu0 0
  %6720 = vmatprep.subr.bf16.mxu0 0
  %6721 = vmatpush1.bf16.msra.mxu0 0
  %6722 = vmatprep.subr.bf16.mxu0 0
  %6723 = vmatpush1.bf16.msra.mxu0 0
  %6724 = vmatprep.subr.bf16.mxu0 %v6653
  %6725 = vmatpush1.bf16.msra.mxu0 %v6652
  %6726 = vmatprep.subr.bf16.mxu0 %v6649
  %6727 = vmatpush1.bf16.msra.mxu0 %v6648
  %6728 = vmatprep.subr.bf16.mxu0 %v6645
  %6729 = vmatpush1.bf16.msra.mxu0 %v6644
  %6730 = vmatprep.subr.bf16.mxu0 %v6641
  %6731 = vmatpush1.bf16.msra.mxu0 %v6640
  %6732 = vmatprep.subr.bf16.mxu0 0
  %6733 = vmatpush2.bf16.msra.mxu0 0
  %6734 = vmatprep.subr.bf16.mxu0 0
  %6735 = vmatpush2.bf16.msra.mxu0 0
  %6736 = vmatprep.subr.bf16.mxu0 0
  %6737 = vmatpush2.bf16.msra.mxu0 0
  %6738 = vmatprep.subr.bf16.mxu0 0
  %6739 = vmatpush2.bf16.msra.mxu0 0
  %6740 = vmatprep.subr.bf16.mxu0 0
  %6741 = vmatpush2.bf16.msra.mxu0 0
  %6742 = vmatprep.subr.bf16.mxu0 0
  %6743 = vmatpush2.bf16.msra.mxu0 0
  %6744 = vmatprep.subr.bf16.mxu0 0
  %6745 = vmatpush2.bf16.msra.mxu0 0
  %6746 = vmatprep.subr.bf16.mxu0 0
  %6747 = vmatpush2.bf16.msra.mxu0 0
  %6748 = vmatprep.mubr.bf16.mxu0 0
  %6749 = vmatmul.mubr.bf16.gmra.mxu0 %v6671
  %v6750 = vpop.f32.mrf.mxu0
  %v6751 = vadd.f32 0.0, %v6750
  %v6752 = vpop.f32.mrf.mxu0
  %v6753 = vadd.f32 0.0, %v6752
  %v6754 = vpop.f32.mrf.mxu0
  %v6755 = vadd.f32 0.0, %v6754
  %v6756 = vpop.f32.mrf.mxu0
  %v6757 = vadd.f32 0.0, %v6756
  %6758 = vdwg.mxu0
  %v6759 = vadd.f32 %v6522, %v6708
  %v6760 = vadd.f32 %v6524, %v6710
  %v6761 = vadd.f32 %v6565, %v6751
  %v6762 = vadd.f32 %v6567, %v6753
  %v6763 = vadd.f32 %v6526, %v6712
  %v6764 = vadd.f32 %v6528, %v6714
  %v6765 = vadd.f32 %v6569, %v6755
  %v6766 = vadd.f32 %v6571, %v6757
  %s6767 = scalar_lea.vmem %s5, 384
  %v6768 = vld [vmem:[%s6767] sm:$0xff]
  %v6769 = vld [vmem:[%s6767 + $0x8] sm:$0xff]
  %v6770 = vld [vmem:[%s6767 + $0x10] sm:$0xff]
  %v6771 = vld [vmem:[%s6767 + $0x18] sm:$0xff]
  %v6772 = vld [vmem:[%s6767 + $0x20] sm:$0xff]
  %v6773 = vld [vmem:[%s6767 + $0x28] sm:$0xff]
  %v6774 = vld [vmem:[%s6767 + $0x30] sm:$0xff]
  %v6775 = vld [vmem:[%s6767 + $0x38] sm:$0xff]
  %v6776 = vld [vmem:[%s6767 + $0x40] sm:$0xff]
  %v6777 = vld [vmem:[%s6767 + $0x48] sm:$0xff]
  %v6778 = vld [vmem:[%s6767 + $0x50] sm:$0xff]
  %v6779 = vld [vmem:[%s6767 + $0x58] sm:$0xff]
  %v6780 = vld [vmem:[%s6767 + $0x60] sm:$0xff]
  %v6781 = vld [vmem:[%s6767 + $0x68] sm:$0xff]
  %v6782 = vld [vmem:[%s6767 + $0x70] sm:$0xff]
  %v6783 = vld [vmem:[%s6767 + $0x78] sm:$0xff]
  %v6800 = vunpack.c.l.b16 %v6768
  %v6801 = vunpack.c.h.b16 %v6768
  %v6802 = vunpack.c.l.b16 %v6769
  %v6803 = vunpack.c.h.b16 %v6769
  %v6804 = vunpack.c.l.b16 %v6770
  %v6805 = vunpack.c.h.b16 %v6770
  %v6806 = vunpack.c.l.b16 %v6771
  %v6807 = vunpack.c.h.b16 %v6771
  %v6808 = vunpack.c.l.b16 %v6772
  %v6809 = vunpack.c.h.b16 %v6772
  %v6810 = vunpack.c.l.b16 %v6773
  %v6811 = vunpack.c.h.b16 %v6773
  %v6812 = vunpack.c.l.b16 %v6774
  %v6813 = vunpack.c.h.b16 %v6774
  %v6814 = vunpack.c.l.b16 %v6775
  %v6815 = vunpack.c.h.b16 %v6775
  %v6816 = vunpack.c.l.b16 %v6776
  %v6817 = vunpack.c.h.b16 %v6776
  %v6818 = vunpack.c.l.b16 %v6777
  %v6819 = vunpack.c.h.b16 %v6777
  %v6820 = vunpack.c.l.b16 %v6778
  %v6821 = vunpack.c.h.b16 %v6778
  %v6822 = vunpack.c.l.b16 %v6779
  %v6823 = vunpack.c.h.b16 %v6779
  %v6824 = vunpack.c.l.b16 %v6780
  %v6825 = vunpack.c.h.b16 %v6780
  %v6826 = vunpack.c.l.b16 %v6781
  %v6827 = vunpack.c.h.b16 %v6781
  %v6828 = vunpack.c.l.b16 %v6782
  %v6829 = vunpack.c.h.b16 %v6782
  %v6830 = vunpack.c.l.b16 %v6783
  %v6831 = vunpack.c.h.b16 %v6783
  %v6832 = vpack.c.b16 %v6804, %v6800
  %v6833 = vpack.c.b16 %v6805, %v6801
  %v6834 = vpack.c.b16 %v6806, %v6802
  %v6835 = vpack.c.b16 %v6807, %v6803
  %v6836 = vpack.c.b16 %v6812, %v6808
  %v6837 = vpack.c.b16 %v6813, %v6809
  %v6838 = vpack.c.b16 %v6814, %v6810
  %v6839 = vpack.c.b16 %v6815, %v6811
  %v6840 = vpack.c.b16 %v6820, %v6816
  %v6841 = vpack.c.b16 %v6821, %v6817
  %v6842 = vpack.c.b16 %v6822, %v6818
  %v6843 = vpack.c.b16 %v6823, %v6819
  %v6844 = vpack.c.b16 %v6828, %v6824
  %v6845 = vpack.c.b16 %v6829, %v6825
  %v6846 = vpack.c.b16 %v6830, %v6826
  %v6847 = vpack.c.b16 %v6831, %v6827
  %v6865 = vsel %vm6314, %v6195, 0
  %6867 = vmatprep.subr.bf16.mxu0 0
  %6868 = vmatpush1.bf16.msra.mxu0 0
  %6869 = vmatprep.subr.bf16.mxu0 0
  %6870 = vmatpush1.bf16.msra.mxu0 0
  %6871 = vmatprep.subr.bf16.mxu0 0
  %6872 = vmatpush1.bf16.msra.mxu0 0
  %6873 = vmatprep.subr.bf16.mxu0 0
  %6874 = vmatpush1.bf16.msra.mxu0 0
  %6875 = vmatprep.subr.bf16.mxu0 %v6845
  %6876 = vmatpush1.bf16.msra.mxu0 %v6844
  %6877 = vmatprep.subr.bf16.mxu0 %v6841
  %6878 = vmatpush1.bf16.msra.mxu0 %v6840
  %6879 = vmatprep.subr.bf16.mxu0 %v6837
  %6880 = vmatpush1.bf16.msra.mxu0 %v6836
  %6881 = vmatprep.subr.bf16.mxu0 %v6833
  %6882 = vmatpush1.bf16.msra.mxu0 %v6832
  %6883 = vmatprep.subr.bf16.mxu0 0
  %6884 = vmatpush2.bf16.msra.mxu0 0
  %6885 = vmatprep.subr.bf16.mxu0 0
  %6886 = vmatpush2.bf16.msra.mxu0 0
  %6887 = vmatprep.subr.bf16.mxu0 0
  %6888 = vmatpush2.bf16.msra.mxu0 0
  %6889 = vmatprep.subr.bf16.mxu0 0
  %6890 = vmatpush2.bf16.msra.mxu0 0
  %6891 = vmatprep.subr.bf16.mxu0 0
  %6892 = vmatpush2.bf16.msra.mxu0 0
  %6893 = vmatprep.subr.bf16.mxu0 0
  %6894 = vmatpush2.bf16.msra.mxu0 0
  %6895 = vmatprep.subr.bf16.mxu0 0
  %6896 = vmatpush2.bf16.msra.mxu0 0
  %6897 = vmatprep.subr.bf16.mxu0 0
  %6898 = vmatpush2.bf16.msra.mxu0 0
  %6899 = vmatprep.mubr.bf16.mxu0 0
  %6900 = vmatmul.mubr.bf16.gmra.mxu0 %v6865
  %v6901 = vpop.f32.mrf.mxu0
  %v6902 = vadd.f32 0.0, %v6901
  %v6903 = vpop.f32.mrf.mxu0
  %v6904 = vadd.f32 0.0, %v6903
  %v6905 = vpop.f32.mrf.mxu0
  %v6906 = vadd.f32 0.0, %v6905
  %v6907 = vpop.f32.mrf.mxu0
  %v6908 = vadd.f32 0.0, %v6907
  %6909 = vdwg.mxu0
  %6910 = vmatprep.subr.bf16.mxu0 0
  %6911 = vmatpush1.bf16.msra.mxu0 0
  %6912 = vmatprep.subr.bf16.mxu0 0
  %6913 = vmatpush1.bf16.msra.mxu0 0
  %6914 = vmatprep.subr.bf16.mxu0 0
  %6915 = vmatpush1.bf16.msra.mxu0 0
  %6916 = vmatprep.subr.bf16.mxu0 0
  %6917 = vmatpush1.bf16.msra.mxu0 0
  %6918 = vmatprep.subr.bf16.mxu0 %v6847
  %6919 = vmatpush1.bf16.msra.mxu0 %v6846
  %6920 = vmatprep.subr.bf16.mxu0 %v6843
  %6921 = vmatpush1.bf16.msra.mxu0 %v6842
  %6922 = vmatprep.subr.bf16.mxu0 %v6839
  %6923 = vmatpush1.bf16.msra.mxu0 %v6838
  %6924 = vmatprep.subr.bf16.mxu0 %v6835
  %6925 = vmatpush1.bf16.msra.mxu0 %v6834
  %6926 = vmatprep.subr.bf16.mxu0 0
  %6927 = vmatpush2.bf16.msra.mxu0 0
  %6928 = vmatprep.subr.bf16.mxu0 0
  %6929 = vmatpush2.bf16.msra.mxu0 0
  %6930 = vmatprep.subr.bf16.mxu0 0
  %6931 = vmatpush2.bf16.msra.mxu0 0
  %6932 = vmatprep.subr.bf16.mxu0 0
  %6933 = vmatpush2.bf16.msra.mxu0 0
  %6934 = vmatprep.subr.bf16.mxu0 0
  %6935 = vmatpush2.bf16.msra.mxu0 0
  %6936 = vmatprep.subr.bf16.mxu0 0
  %6937 = vmatpush2.bf16.msra.mxu0 0
  %6938 = vmatprep.subr.bf16.mxu0 0
  %6939 = vmatpush2.bf16.msra.mxu0 0
  %6940 = vmatprep.subr.bf16.mxu0 0
  %6941 = vmatpush2.bf16.msra.mxu0 0
  %6942 = vmatprep.mubr.bf16.mxu0 0
  %6943 = vmatmul.mubr.bf16.gmra.mxu0 %v6865
  %v6944 = vpop.f32.mrf.mxu0
  %v6945 = vadd.f32 0.0, %v6944
  %v6946 = vpop.f32.mrf.mxu0
  %v6947 = vadd.f32 0.0, %v6946
  %v6948 = vpop.f32.mrf.mxu0
  %v6949 = vadd.f32 0.0, %v6948
  %v6950 = vpop.f32.mrf.mxu0
  %v6951 = vadd.f32 0.0, %v6950
  %6952 = vdwg.mxu0
  %v6953 = vadd.f32 %v6759, %v6902
  %v6954 = vadd.f32 %v6760, %v6904
  %v6955 = vadd.f32 %v6761, %v6945
  %v6956 = vadd.f32 %v6762, %v6947
  %v6957 = vadd.f32 %v6763, %v6906
  %v6958 = vadd.f32 %v6764, %v6908
  %v6959 = vadd.f32 %v6765, %v6949
  %v6960 = vadd.f32 %v6766, %v6951
  %s6961 = scalar_lea.vmem %s5, 512
  %v6962 = vld [vmem:[%s6961] sm:$0xff]
  %v6963 = vld [vmem:[%s6961 + $0x8] sm:$0xff]
  %v6964 = vld [vmem:[%s6961 + $0x10] sm:$0xff]
  %v6965 = vld [vmem:[%s6961 + $0x18] sm:$0xff]
  %v6966 = vld [vmem:[%s6961 + $0x20] sm:$0xff]
  %v6967 = vld [vmem:[%s6961 + $0x28] sm:$0xff]
  %v6968 = vld [vmem:[%s6961 + $0x30] sm:$0xff]
  %v6969 = vld [vmem:[%s6961 + $0x38] sm:$0xff]
  %v6970 = vld [vmem:[%s6961 + $0x40] sm:$0xff]
  %v6971 = vld [vmem:[%s6961 + $0x48] sm:$0xff]
  %v6972 = vld [vmem:[%s6961 + $0x50] sm:$0xff]
  %v6973 = vld [vmem:[%s6961 + $0x58] sm:$0xff]
  %v6974 = vld [vmem:[%s6961 + $0x60] sm:$0xff]
  %v6975 = vld [vmem:[%s6961 + $0x68] sm:$0xff]
  %v6976 = vld [vmem:[%s6961 + $0x70] sm:$0xff]
  %v6977 = vld [vmem:[%s6961 + $0x78] sm:$0xff]
  %v6994 = vunpack.c.l.b16 %v6962
  %v6995 = vunpack.c.h.b16 %v6962
  %v6996 = vunpack.c.l.b16 %v6963
  %v6997 = vunpack.c.h.b16 %v6963
  %v6998 = vunpack.c.l.b16 %v6964
  %v6999 = vunpack.c.h.b16 %v6964
  %v7000 = vunpack.c.l.b16 %v6965
  %v7001 = vunpack.c.h.b16 %v6965
  %v7002 = vunpack.c.l.b16 %v6966
  %v7003 = vunpack.c.h.b16 %v6966
  %v7004 = vunpack.c.l.b16 %v6967
  %v7005 = vunpack.c.h.b16 %v6967
  %v7006 = vunpack.c.l.b16 %v6968
  %v7007 = vunpack.c.h.b16 %v6968
  %v7008 = vunpack.c.l.b16 %v6969
  %v7009 = vunpack.c.h.b16 %v6969
  %v7010 = vunpack.c.l.b16 %v6970
  %v7011 = vunpack.c.h.b16 %v6970
  %v7012 = vunpack.c.l.b16 %v6971
  %v7013 = vunpack.c.h.b16 %v6971
  %v7014 = vunpack.c.l.b16 %v6972
  %v7015 = vunpack.c.h.b16 %v6972
  %v7016 = vunpack.c.l.b16 %v6973
  %v7017 = vunpack.c.h.b16 %v6973
  %v7018 = vunpack.c.l.b16 %v6974
  %v7019 = vunpack.c.h.b16 %v6974
  %v7020 = vunpack.c.l.b16 %v6975
  %v7021 = vunpack.c.h.b16 %v6975
  %v7022 = vunpack.c.l.b16 %v6976
  %v7023 = vunpack.c.h.b16 %v6976
  %v7024 = vunpack.c.l.b16 %v6977
  %v7025 = vunpack.c.h.b16 %v6977
  %v7026 = vpack.c.b16 %v6998, %v6994
  %v7027 = vpack.c.b16 %v6999, %v6995
  %v7028 = vpack.c.b16 %v7000, %v6996
  %v7029 = vpack.c.b16 %v7001, %v6997
  %v7030 = vpack.c.b16 %v7006, %v7002
  %v7031 = vpack.c.b16 %v7007, %v7003
  %v7032 = vpack.c.b16 %v7008, %v7004
  %v7033 = vpack.c.b16 %v7009, %v7005
  %v7034 = vpack.c.b16 %v7014, %v7010
  %v7035 = vpack.c.b16 %v7015, %v7011
  %v7036 = vpack.c.b16 %v7016, %v7012
  %v7037 = vpack.c.b16 %v7017, %v7013
  %v7038 = vpack.c.b16 %v7022, %v7018
  %v7039 = vpack.c.b16 %v7023, %v7019
  %v7040 = vpack.c.b16 %v7024, %v7020
  %v7041 = vpack.c.b16 %v7025, %v7021
  %v7059 = vsel %vm6314, %v6196, 0
  %7061 = vmatprep.subr.bf16.mxu0 0
  %7062 = vmatpush1.bf16.msra.mxu0 0
  %7063 = vmatprep.subr.bf16.mxu0 0
  %7064 = vmatpush1.bf16.msra.mxu0 0
  %7065 = vmatprep.subr.bf16.mxu0 0
  %7066 = vmatpush1.bf16.msra.mxu0 0
  %7067 = vmatprep.subr.bf16.mxu0 0
  %7068 = vmatpush1.bf16.msra.mxu0 0
  %7069 = vmatprep.subr.bf16.mxu0 %v7039
  %7070 = vmatpush1.bf16.msra.mxu0 %v7038
  %7071 = vmatprep.subr.bf16.mxu0 %v7035
  %7072 = vmatpush1.bf16.msra.mxu0 %v7034
  %7073 = vmatprep.subr.bf16.mxu0 %v7031
  %7074 = vmatpush1.bf16.msra.mxu0 %v7030
  %7075 = vmatprep.subr.bf16.mxu0 %v7027
  %7076 = vmatpush1.bf16.msra.mxu0 %v7026
  %7077 = vmatprep.subr.bf16.mxu0 0
  %7078 = vmatpush2.bf16.msra.mxu0 0
  %7079 = vmatprep.subr.bf16.mxu0 0
  %7080 = vmatpush2.bf16.msra.mxu0 0
  %7081 = vmatprep.subr.bf16.mxu0 0
  %7082 = vmatpush2.bf16.msra.mxu0 0
  %7083 = vmatprep.subr.bf16.mxu0 0
  %7084 = vmatpush2.bf16.msra.mxu0 0
  %7085 = vmatprep.subr.bf16.mxu0 0
  %7086 = vmatpush2.bf16.msra.mxu0 0
  %7087 = vmatprep.subr.bf16.mxu0 0
  %7088 = vmatpush2.bf16.msra.mxu0 0
  %7089 = vmatprep.subr.bf16.mxu0 0
  %7090 = vmatpush2.bf16.msra.mxu0 0
  %7091 = vmatprep.subr.bf16.mxu0 0
  %7092 = vmatpush2.bf16.msra.mxu0 0
  %7093 = vmatprep.mubr.bf16.mxu0 0
  %7094 = vmatmul.mubr.bf16.gmra.mxu0 %v7059
  %v7095 = vpop.f32.mrf.mxu0
  %v7096 = vadd.f32 0.0, %v7095
  %v7097 = vpop.f32.mrf.mxu0
  %v7098 = vadd.f32 0.0, %v7097
  %v7099 = vpop.f32.mrf.mxu0
  %v7100 = vadd.f32 0.0, %v7099
  %v7101 = vpop.f32.mrf.mxu0
  %v7102 = vadd.f32 0.0, %v7101
  %7103 = vdwg.mxu0
  %7104 = vmatprep.subr.bf16.mxu0 0
  %7105 = vmatpush1.bf16.msra.mxu0 0
  %7106 = vmatprep.subr.bf16.mxu0 0
  %7107 = vmatpush1.bf16.msra.mxu0 0
  %7108 = vmatprep.subr.bf16.mxu0 0
  %7109 = vmatpush1.bf16.msra.mxu0 0
  %7110 = vmatprep.subr.bf16.mxu0 0
  %7111 = vmatpush1.bf16.msra.mxu0 0
  %7112 = vmatprep.subr.bf16.mxu0 %v7041
  %7113 = vmatpush1.bf16.msra.mxu0 %v7040
  %7114 = vmatprep.subr.bf16.mxu0 %v7037
  %7115 = vmatpush1.bf16.msra.mxu0 %v7036
  %7116 = vmatprep.subr.bf16.mxu0 %v7033
  %7117 = vmatpush1.bf16.msra.mxu0 %v7032
  %7118 = vmatprep.subr.bf16.mxu0 %v7029
  %7119 = vmatpush1.bf16.msra.mxu0 %v7028
  %7120 = vmatprep.subr.bf16.mxu0 0
  %7121 = vmatpush2.bf16.msra.mxu0 0
  %7122 = vmatprep.subr.bf16.mxu0 0
  %7123 = vmatpush2.bf16.msra.mxu0 0
  %7124 = vmatprep.subr.bf16.mxu0 0
  %7125 = vmatpush2.bf16.msra.mxu0 0
  %7126 = vmatprep.subr.bf16.mxu0 0
  %7127 = vmatpush2.bf16.msra.mxu0 0
  %7128 = vmatprep.subr.bf16.mxu0 0
  %7129 = vmatpush2.bf16.msra.mxu0 0
  %7130 = vmatprep.subr.bf16.mxu0 0
  %7131 = vmatpush2.bf16.msra.mxu0 0
  %7132 = vmatprep.subr.bf16.mxu0 0
  %7133 = vmatpush2.bf16.msra.mxu0 0
  %7134 = vmatprep.subr.bf16.mxu0 0
  %7135 = vmatpush2.bf16.msra.mxu0 0
  %7136 = vmatprep.mubr.bf16.mxu0 0
  %7137 = vmatmul.mubr.bf16.gmra.mxu0 %v7059
  %v7138 = vpop.f32.mrf.mxu0
  %v7139 = vadd.f32 0.0, %v7138
  %v7140 = vpop.f32.mrf.mxu0
  %v7141 = vadd.f32 0.0, %v7140
  %v7142 = vpop.f32.mrf.mxu0
  %v7143 = vadd.f32 0.0, %v7142
  %v7144 = vpop.f32.mrf.mxu0
  %v7145 = vadd.f32 0.0, %v7144
  %7146 = vdwg.mxu0
  %v7147 = vadd.f32 %v6953, %v7096
  %v7148 = vadd.f32 %v6954, %v7098
  %v7149 = vadd.f32 %v6955, %v7139
  %v7150 = vadd.f32 %v6956, %v7141
  %v7151 = vadd.f32 %v6957, %v7100
  %v7152 = vadd.f32 %v6958, %v7102
  %v7153 = vadd.f32 %v6959, %v7143
  %v7154 = vadd.f32 %v6960, %v7145
  %s7155 = scalar_lea.vmem %s5, 640
  %v7156 = vld [vmem:[%s7155] sm:$0xff]
  %v7157 = vld [vmem:[%s7155 + $0x8] sm:$0xff]
  %v7158 = vld [vmem:[%s7155 + $0x10] sm:$0xff]
  %v7159 = vld [vmem:[%s7155 + $0x18] sm:$0xff]
  %v7160 = vld [vmem:[%s7155 + $0x20] sm:$0xff]
  %v7161 = vld [vmem:[%s7155 + $0x28] sm:$0xff]
  %v7162 = vld [vmem:[%s7155 + $0x30] sm:$0xff]
  %v7163 = vld [vmem:[%s7155 + $0x38] sm:$0xff]
  %v7164 = vld [vmem:[%s7155 + $0x40] sm:$0xff]
  %v7165 = vld [vmem:[%s7155 + $0x48] sm:$0xff]
  %v7166 = vld [vmem:[%s7155 + $0x50] sm:$0xff]
  %v7167 = vld [vmem:[%s7155 + $0x58] sm:$0xff]
  %v7168 = vld [vmem:[%s7155 + $0x60] sm:$0xff]
  %v7169 = vld [vmem:[%s7155 + $0x68] sm:$0xff]
  %v7170 = vld [vmem:[%s7155 + $0x70] sm:$0xff]
  %v7171 = vld [vmem:[%s7155 + $0x78] sm:$0xff]
  %v7188 = vunpack.c.l.b16 %v7156
  %v7189 = vunpack.c.h.b16 %v7156
  %v7190 = vunpack.c.l.b16 %v7157
  %v7191 = vunpack.c.h.b16 %v7157
  %v7192 = vunpack.c.l.b16 %v7158
  %v7193 = vunpack.c.h.b16 %v7158
  %v7194 = vunpack.c.l.b16 %v7159
  %v7195 = vunpack.c.h.b16 %v7159
  %v7196 = vunpack.c.l.b16 %v7160
  %v7197 = vunpack.c.h.b16 %v7160
  %v7198 = vunpack.c.l.b16 %v7161
  %v7199 = vunpack.c.h.b16 %v7161
  %v7200 = vunpack.c.l.b16 %v7162
  %v7201 = vunpack.c.h.b16 %v7162
  %v7202 = vunpack.c.l.b16 %v7163
  %v7203 = vunpack.c.h.b16 %v7163
  %v7204 = vunpack.c.l.b16 %v7164
  %v7205 = vunpack.c.h.b16 %v7164
  %v7206 = vunpack.c.l.b16 %v7165
  %v7207 = vunpack.c.h.b16 %v7165
  %v7208 = vunpack.c.l.b16 %v7166
  %v7209 = vunpack.c.h.b16 %v7166
  %v7210 = vunpack.c.l.b16 %v7167
  %v7211 = vunpack.c.h.b16 %v7167
  %v7212 = vunpack.c.l.b16 %v7168
  %v7213 = vunpack.c.h.b16 %v7168
  %v7214 = vunpack.c.l.b16 %v7169
  %v7215 = vunpack.c.h.b16 %v7169
  %v7216 = vunpack.c.l.b16 %v7170
  %v7217 = vunpack.c.h.b16 %v7170
  %v7218 = vunpack.c.l.b16 %v7171
  %v7219 = vunpack.c.h.b16 %v7171
  %v7220 = vpack.c.b16 %v7192, %v7188
  %v7221 = vpack.c.b16 %v7193, %v7189
  %v7222 = vpack.c.b16 %v7194, %v7190
  %v7223 = vpack.c.b16 %v7195, %v7191
  %v7224 = vpack.c.b16 %v7200, %v7196
  %v7225 = vpack.c.b16 %v7201, %v7197
  %v7226 = vpack.c.b16 %v7202, %v7198
  %v7227 = vpack.c.b16 %v7203, %v7199
  %v7228 = vpack.c.b16 %v7208, %v7204
  %v7229 = vpack.c.b16 %v7209, %v7205
  %v7230 = vpack.c.b16 %v7210, %v7206
  %v7231 = vpack.c.b16 %v7211, %v7207
  %v7232 = vpack.c.b16 %v7216, %v7212
  %v7233 = vpack.c.b16 %v7217, %v7213
  %v7234 = vpack.c.b16 %v7218, %v7214
  %v7235 = vpack.c.b16 %v7219, %v7215
  %v7253 = vsel %vm6314, %v6197, 0
  %7255 = vmatprep.subr.bf16.mxu0 0
  %7256 = vmatpush1.bf16.msra.mxu0 0
  %7257 = vmatprep.subr.bf16.mxu0 0
  %7258 = vmatpush1.bf16.msra.mxu0 0
  %7259 = vmatprep.subr.bf16.mxu0 0
  %7260 = vmatpush1.bf16.msra.mxu0 0
  %7261 = vmatprep.subr.bf16.mxu0 0
  %7262 = vmatpush1.bf16.msra.mxu0 0
  %7263 = vmatprep.subr.bf16.mxu0 %v7233
  %7264 = vmatpush1.bf16.msra.mxu0 %v7232
  %7265 = vmatprep.subr.bf16.mxu0 %v7229
  %7266 = vmatpush1.bf16.msra.mxu0 %v7228
  %7267 = vmatprep.subr.bf16.mxu0 %v7225
  %7268 = vmatpush1.bf16.msra.mxu0 %v7224
  %7269 = vmatprep.subr.bf16.mxu0 %v7221
  %7270 = vmatpush1.bf16.msra.mxu0 %v7220
  %7271 = vmatprep.subr.bf16.mxu0 0
  %7272 = vmatpush2.bf16.msra.mxu0 0
  %7273 = vmatprep.subr.bf16.mxu0 0
  %7274 = vmatpush2.bf16.msra.mxu0 0
  %7275 = vmatprep.subr.bf16.mxu0 0
  %7276 = vmatpush2.bf16.msra.mxu0 0
  %7277 = vmatprep.subr.bf16.mxu0 0
  %7278 = vmatpush2.bf16.msra.mxu0 0
  %7279 = vmatprep.subr.bf16.mxu0 0
  %7280 = vmatpush2.bf16.msra.mxu0 0
  %7281 = vmatprep.subr.bf16.mxu0 0
  %7282 = vmatpush2.bf16.msra.mxu0 0
  %7283 = vmatprep.subr.bf16.mxu0 0
  %7284 = vmatpush2.bf16.msra.mxu0 0
  %7285 = vmatprep.subr.bf16.mxu0 0
  %7286 = vmatpush2.bf16.msra.mxu0 0
  %7287 = vmatprep.mubr.bf16.mxu0 0
  %7288 = vmatmul.mubr.bf16.gmra.mxu0 %v7253
  %v7289 = vpop.f32.mrf.mxu0
  %v7290 = vadd.f32 0.0, %v7289
  %v7291 = vpop.f32.mrf.mxu0
  %v7292 = vadd.f32 0.0, %v7291
  %v7293 = vpop.f32.mrf.mxu0
  %v7294 = vadd.f32 0.0, %v7293
  %v7295 = vpop.f32.mrf.mxu0
  %v7296 = vadd.f32 0.0, %v7295
  %7297 = vdwg.mxu0
  %7298 = vmatprep.subr.bf16.mxu0 0
  %7299 = vmatpush1.bf16.msra.mxu0 0
  %7300 = vmatprep.subr.bf16.mxu0 0
  %7301 = vmatpush1.bf16.msra.mxu0 0
  %7302 = vmatprep.subr.bf16.mxu0 0
  %7303 = vmatpush1.bf16.msra.mxu0 0
  %7304 = vmatprep.subr.bf16.mxu0 0
  %7305 = vmatpush1.bf16.msra.mxu0 0
  %7306 = vmatprep.subr.bf16.mxu0 %v7235
  %7307 = vmatpush1.bf16.msra.mxu0 %v7234
  %7308 = vmatprep.subr.bf16.mxu0 %v7231
  %7309 = vmatpush1.bf16.msra.mxu0 %v7230
  %7310 = vmatprep.subr.bf16.mxu0 %v7227
  %7311 = vmatpush1.bf16.msra.mxu0 %v7226
  %7312 = vmatprep.subr.bf16.mxu0 %v7223
  %7313 = vmatpush1.bf16.msra.mxu0 %v7222
  %7314 = vmatprep.subr.bf16.mxu0 0
  %7315 = vmatpush2.bf16.msra.mxu0 0
  %7316 = vmatprep.subr.bf16.mxu0 0
  %7317 = vmatpush2.bf16.msra.mxu0 0
  %7318 = vmatprep.subr.bf16.mxu0 0
  %7319 = vmatpush2.bf16.msra.mxu0 0
  %7320 = vmatprep.subr.bf16.mxu0 0
  %7321 = vmatpush2.bf16.msra.mxu0 0
  %7322 = vmatprep.subr.bf16.mxu0 0
  %7323 = vmatpush2.bf16.msra.mxu0 0
  %7324 = vmatprep.subr.bf16.mxu0 0
  %7325 = vmatpush2.bf16.msra.mxu0 0
  %7326 = vmatprep.subr.bf16.mxu0 0
  %7327 = vmatpush2.bf16.msra.mxu0 0
  %7328 = vmatprep.subr.bf16.mxu0 0
  %7329 = vmatpush2.bf16.msra.mxu0 0
  %7330 = vmatprep.mubr.bf16.mxu0 0
  %7331 = vmatmul.mubr.bf16.gmra.mxu0 %v7253
  %v7332 = vpop.f32.mrf.mxu0
  %v7333 = vadd.f32 0.0, %v7332
  %v7334 = vpop.f32.mrf.mxu0
  %v7335 = vadd.f32 0.0, %v7334
  %v7336 = vpop.f32.mrf.mxu0
  %v7337 = vadd.f32 0.0, %v7336
  %v7338 = vpop.f32.mrf.mxu0
  %v7339 = vadd.f32 0.0, %v7338
  %7340 = vdwg.mxu0
  %v7341 = vadd.f32 %v7147, %v7290
  %v7342 = vadd.f32 %v7148, %v7292
  %v7343 = vadd.f32 %v7149, %v7333
  %v7344 = vadd.f32 %v7150, %v7335
  %v7345 = vadd.f32 %v7151, %v7294
  %v7346 = vadd.f32 %v7152, %v7296
  %v7347 = vadd.f32 %v7153, %v7337
  %v7348 = vadd.f32 %v7154, %v7339
  %s7349 = scalar_lea.vmem %s5, 768
  %v7350 = vld [vmem:[%s7349] sm:$0xff]
  %v7351 = vld [vmem:[%s7349 + $0x8] sm:$0xff]
  %v7352 = vld [vmem:[%s7349 + $0x10] sm:$0xff]
  %v7353 = vld [vmem:[%s7349 + $0x18] sm:$0xff]
  %v7354 = vld [vmem:[%s7349 + $0x20] sm:$0xff]
  %v7355 = vld [vmem:[%s7349 + $0x28] sm:$0xff]
  %v7356 = vld [vmem:[%s7349 + $0x30] sm:$0xff]
  %v7357 = vld [vmem:[%s7349 + $0x38] sm:$0xff]
  %v7358 = vld [vmem:[%s7349 + $0x40] sm:$0xff]
  %v7359 = vld [vmem:[%s7349 + $0x48] sm:$0xff]
  %v7360 = vld [vmem:[%s7349 + $0x50] sm:$0xff]
  %v7361 = vld [vmem:[%s7349 + $0x58] sm:$0xff]
  %v7362 = vld [vmem:[%s7349 + $0x60] sm:$0xff]
  %v7363 = vld [vmem:[%s7349 + $0x68] sm:$0xff]
  %v7364 = vld [vmem:[%s7349 + $0x70] sm:$0xff]
  %v7365 = vld [vmem:[%s7349 + $0x78] sm:$0xff]
  %v7382 = vunpack.c.l.b16 %v7350
  %v7383 = vunpack.c.h.b16 %v7350
  %v7384 = vunpack.c.l.b16 %v7351
  %v7385 = vunpack.c.h.b16 %v7351
  %v7386 = vunpack.c.l.b16 %v7352
  %v7387 = vunpack.c.h.b16 %v7352
  %v7388 = vunpack.c.l.b16 %v7353
  %v7389 = vunpack.c.h.b16 %v7353
  %v7390 = vunpack.c.l.b16 %v7354
  %v7391 = vunpack.c.h.b16 %v7354
  %v7392 = vunpack.c.l.b16 %v7355
  %v7393 = vunpack.c.h.b16 %v7355
  %v7394 = vunpack.c.l.b16 %v7356
  %v7395 = vunpack.c.h.b16 %v7356
  %v7396 = vunpack.c.l.b16 %v7357
  %v7397 = vunpack.c.h.b16 %v7357
  %v7398 = vunpack.c.l.b16 %v7358
  %v7399 = vunpack.c.h.b16 %v7358
  %v7400 = vunpack.c.l.b16 %v7359
  %v7401 = vunpack.c.h.b16 %v7359
  %v7402 = vunpack.c.l.b16 %v7360
  %v7403 = vunpack.c.h.b16 %v7360
  %v7404 = vunpack.c.l.b16 %v7361
  %v7405 = vunpack.c.h.b16 %v7361
  %v7406 = vunpack.c.l.b16 %v7362
  %v7407 = vunpack.c.h.b16 %v7362
  %v7408 = vunpack.c.l.b16 %v7363
  %v7409 = vunpack.c.h.b16 %v7363
  %v7410 = vunpack.c.l.b16 %v7364
  %v7411 = vunpack.c.h.b16 %v7364
  %v7412 = vunpack.c.l.b16 %v7365
  %v7413 = vunpack.c.h.b16 %v7365
  %v7414 = vpack.c.b16 %v7386, %v7382
  %v7415 = vpack.c.b16 %v7387, %v7383
  %v7416 = vpack.c.b16 %v7388, %v7384
  %v7417 = vpack.c.b16 %v7389, %v7385
  %v7418 = vpack.c.b16 %v7394, %v7390
  %v7419 = vpack.c.b16 %v7395, %v7391
  %v7420 = vpack.c.b16 %v7396, %v7392
  %v7421 = vpack.c.b16 %v7397, %v7393
  %v7422 = vpack.c.b16 %v7402, %v7398
  %v7423 = vpack.c.b16 %v7403, %v7399
  %v7424 = vpack.c.b16 %v7404, %v7400
  %v7425 = vpack.c.b16 %v7405, %v7401
  %v7426 = vpack.c.b16 %v7410, %v7406
  %v7427 = vpack.c.b16 %v7411, %v7407
  %v7428 = vpack.c.b16 %v7412, %v7408
  %v7429 = vpack.c.b16 %v7413, %v7409
  %v7447 = vsel %vm6314, %v6198, 0
  %7449 = vmatprep.subr.bf16.mxu0 0
  %7450 = vmatpush1.bf16.msra.mxu0 0
  %7451 = vmatprep.subr.bf16.mxu0 0
  %7452 = vmatpush1.bf16.msra.mxu0 0
  %7453 = vmatprep.subr.bf16.mxu0 0
  %7454 = vmatpush1.bf16.msra.mxu0 0
  %7455 = vmatprep.subr.bf16.mxu0 0
  %7456 = vmatpush1.bf16.msra.mxu0 0
  %7457 = vmatprep.subr.bf16.mxu0 %v7427
  %7458 = vmatpush1.bf16.msra.mxu0 %v7426
  %7459 = vmatprep.subr.bf16.mxu0 %v7423
  %7460 = vmatpush1.bf16.msra.mxu0 %v7422
  %7461 = vmatprep.subr.bf16.mxu0 %v7419
  %7462 = vmatpush1.bf16.msra.mxu0 %v7418
  %7463 = vmatprep.subr.bf16.mxu0 %v7415
  %7464 = vmatpush1.bf16.msra.mxu0 %v7414
  %7465 = vmatprep.subr.bf16.mxu0 0
  %7466 = vmatpush2.bf16.msra.mxu0 0
  %7467 = vmatprep.subr.bf16.mxu0 0
  %7468 = vmatpush2.bf16.msra.mxu0 0
  %7469 = vmatprep.subr.bf16.mxu0 0
  %7470 = vmatpush2.bf16.msra.mxu0 0
  %7471 = vmatprep.subr.bf16.mxu0 0
  %7472 = vmatpush2.bf16.msra.mxu0 0
  %7473 = vmatprep.subr.bf16.mxu0 0
  %7474 = vmatpush2.bf16.msra.mxu0 0
  %7475 = vmatprep.subr.bf16.mxu0 0
  %7476 = vmatpush2.bf16.msra.mxu0 0
  %7477 = vmatprep.subr.bf16.mxu0 0
  %7478 = vmatpush2.bf16.msra.mxu0 0
  %7479 = vmatprep.subr.bf16.mxu0 0
  %7480 = vmatpush2.bf16.msra.mxu0 0
  %7481 = vmatprep.mubr.bf16.mxu0 0
  %7482 = vmatmul.mubr.bf16.gmra.mxu0 %v7447
  %v7483 = vpop.f32.mrf.mxu0
  %v7484 = vadd.f32 0.0, %v7483
  %v7485 = vpop.f32.mrf.mxu0
  %v7486 = vadd.f32 0.0, %v7485
  %v7487 = vpop.f32.mrf.mxu0
  %v7488 = vadd.f32 0.0, %v7487
  %v7489 = vpop.f32.mrf.mxu0
  %v7490 = vadd.f32 0.0, %v7489
  %7491 = vdwg.mxu0
  %7492 = vmatprep.subr.bf16.mxu0 0
  %7493 = vmatpush1.bf16.msra.mxu0 0
  %7494 = vmatprep.subr.bf16.mxu0 0
  %7495 = vmatpush1.bf16.msra.mxu0 0
  %7496 = vmatprep.subr.bf16.mxu0 0
  %7497 = vmatpush1.bf16.msra.mxu0 0
  %7498 = vmatprep.subr.bf16.mxu0 0
  %7499 = vmatpush1.bf16.msra.mxu0 0
  %7500 = vmatprep.subr.bf16.mxu0 %v7429
  %7501 = vmatpush1.bf16.msra.mxu0 %v7428
  %7502 = vmatprep.subr.bf16.mxu0 %v7425
  %7503 = vmatpush1.bf16.msra.mxu0 %v7424
  %7504 = vmatprep.subr.bf16.mxu0 %v7421
  %7505 = vmatpush1.bf16.msra.mxu0 %v7420
  %7506 = vmatprep.subr.bf16.mxu0 %v7417
  %7507 = vmatpush1.bf16.msra.mxu0 %v7416
  %7508 = vmatprep.subr.bf16.mxu0 0
  %7509 = vmatpush2.bf16.msra.mxu0 0
  %7510 = vmatprep.subr.bf16.mxu0 0
  %7511 = vmatpush2.bf16.msra.mxu0 0
  %7512 = vmatprep.subr.bf16.mxu0 0
  %7513 = vmatpush2.bf16.msra.mxu0 0
  %7514 = vmatprep.subr.bf16.mxu0 0
  %7515 = vmatpush2.bf16.msra.mxu0 0
  %7516 = vmatprep.subr.bf16.mxu0 0
  %7517 = vmatpush2.bf16.msra.mxu0 0
  %7518 = vmatprep.subr.bf16.mxu0 0
  %7519 = vmatpush2.bf16.msra.mxu0 0
  %7520 = vmatprep.subr.bf16.mxu0 0
  %7521 = vmatpush2.bf16.msra.mxu0 0
  %7522 = vmatprep.subr.bf16.mxu0 0
  %7523 = vmatpush2.bf16.msra.mxu0 0
  %7524 = vmatprep.mubr.bf16.mxu0 0
  %7525 = vmatmul.mubr.bf16.gmra.mxu0 %v7447
  %v7526 = vpop.f32.mrf.mxu0
  %v7527 = vadd.f32 0.0, %v7526
  %v7528 = vpop.f32.mrf.mxu0
  %v7529 = vadd.f32 0.0, %v7528
  %v7530 = vpop.f32.mrf.mxu0
  %v7531 = vadd.f32 0.0, %v7530
  %v7532 = vpop.f32.mrf.mxu0
  %v7533 = vadd.f32 0.0, %v7532
  %7534 = vdwg.mxu0
  %v7535 = vadd.f32 %v7341, %v7484
  %v7536 = vadd.f32 %v7342, %v7486
  %v7537 = vadd.f32 %v7343, %v7527
  %v7538 = vadd.f32 %v7344, %v7529
  %v7539 = vadd.f32 %v7345, %v7488
  %v7540 = vadd.f32 %v7346, %v7490
  %v7541 = vadd.f32 %v7347, %v7531
  %v7542 = vadd.f32 %v7348, %v7533
  %s7543 = scalar_lea.vmem %s5, 896
  %v7544 = vld [vmem:[%s7543] sm:$0xff]
  %v7545 = vld [vmem:[%s7543 + $0x8] sm:$0xff]
  %v7546 = vld [vmem:[%s7543 + $0x10] sm:$0xff]
  %v7547 = vld [vmem:[%s7543 + $0x18] sm:$0xff]
  %v7548 = vld [vmem:[%s7543 + $0x20] sm:$0xff]
  %v7549 = vld [vmem:[%s7543 + $0x28] sm:$0xff]
  %v7550 = vld [vmem:[%s7543 + $0x30] sm:$0xff]
  %v7551 = vld [vmem:[%s7543 + $0x38] sm:$0xff]
  %v7552 = vld [vmem:[%s7543 + $0x40] sm:$0xff]
  %v7553 = vld [vmem:[%s7543 + $0x48] sm:$0xff]
  %v7554 = vld [vmem:[%s7543 + $0x50] sm:$0xff]
  %v7555 = vld [vmem:[%s7543 + $0x58] sm:$0xff]
  %v7556 = vld [vmem:[%s7543 + $0x60] sm:$0xff]
  %v7557 = vld [vmem:[%s7543 + $0x68] sm:$0xff]
  %v7558 = vld [vmem:[%s7543 + $0x70] sm:$0xff]
  %v7559 = vld [vmem:[%s7543 + $0x78] sm:$0xff]
  %v7576 = vunpack.c.l.b16 %v7544
  %v7577 = vunpack.c.h.b16 %v7544
  %v7578 = vunpack.c.l.b16 %v7545
  %v7579 = vunpack.c.h.b16 %v7545
  %v7580 = vunpack.c.l.b16 %v7546
  %v7581 = vunpack.c.h.b16 %v7546
  %v7582 = vunpack.c.l.b16 %v7547
  %v7583 = vunpack.c.h.b16 %v7547
  %v7584 = vunpack.c.l.b16 %v7548
  %v7585 = vunpack.c.h.b16 %v7548
  %v7586 = vunpack.c.l.b16 %v7549
  %v7587 = vunpack.c.h.b16 %v7549
  %v7588 = vunpack.c.l.b16 %v7550
  %v7589 = vunpack.c.h.b16 %v7550
  %v7590 = vunpack.c.l.b16 %v7551
  %v7591 = vunpack.c.h.b16 %v7551
  %v7592 = vunpack.c.l.b16 %v7552
  %v7593 = vunpack.c.h.b16 %v7552
  %v7594 = vunpack.c.l.b16 %v7553
  %v7595 = vunpack.c.h.b16 %v7553
  %v7596 = vunpack.c.l.b16 %v7554
  %v7597 = vunpack.c.h.b16 %v7554
  %v7598 = vunpack.c.l.b16 %v7555
  %v7599 = vunpack.c.h.b16 %v7555
  %v7600 = vunpack.c.l.b16 %v7556
  %v7601 = vunpack.c.h.b16 %v7556
  %v7602 = vunpack.c.l.b16 %v7557
  %v7603 = vunpack.c.h.b16 %v7557
  %v7604 = vunpack.c.l.b16 %v7558
  %v7605 = vunpack.c.h.b16 %v7558
  %v7606 = vunpack.c.l.b16 %v7559
  %v7607 = vunpack.c.h.b16 %v7559
  %v7608 = vpack.c.b16 %v7580, %v7576
  %v7609 = vpack.c.b16 %v7581, %v7577
  %v7610 = vpack.c.b16 %v7582, %v7578
  %v7611 = vpack.c.b16 %v7583, %v7579
  %v7612 = vpack.c.b16 %v7588, %v7584
  %v7613 = vpack.c.b16 %v7589, %v7585
  %v7614 = vpack.c.b16 %v7590, %v7586
  %v7615 = vpack.c.b16 %v7591, %v7587
  %v7616 = vpack.c.b16 %v7596, %v7592
  %v7617 = vpack.c.b16 %v7597, %v7593
  %v7618 = vpack.c.b16 %v7598, %v7594
  %v7619 = vpack.c.b16 %v7599, %v7595
  %v7620 = vpack.c.b16 %v7604, %v7600
  %v7621 = vpack.c.b16 %v7605, %v7601
  %v7622 = vpack.c.b16 %v7606, %v7602
  %v7623 = vpack.c.b16 %v7607, %v7603
  %v7641 = vsel %vm6314, %v6199, 0
  %7643 = vmatprep.subr.bf16.mxu0 0
  %7644 = vmatpush1.bf16.msra.mxu0 0
  %7645 = vmatprep.subr.bf16.mxu0 0
  %7646 = vmatpush1.bf16.msra.mxu0 0
  %7647 = vmatprep.subr.bf16.mxu0 0
  %7648 = vmatpush1.bf16.msra.mxu0 0
  %7649 = vmatprep.subr.bf16.mxu0 0
  %7650 = vmatpush1.bf16.msra.mxu0 0
  %7651 = vmatprep.subr.bf16.mxu0 %v7621
  %7652 = vmatpush1.bf16.msra.mxu0 %v7620
  %7653 = vmatprep.subr.bf16.mxu0 %v7617
  %7654 = vmatpush1.bf16.msra.mxu0 %v7616
  %7655 = vmatprep.subr.bf16.mxu0 %v7613
  %7656 = vmatpush1.bf16.msra.mxu0 %v7612
  %7657 = vmatprep.subr.bf16.mxu0 %v7609
  %7658 = vmatpush1.bf16.msra.mxu0 %v7608
  %7659 = vmatprep.subr.bf16.mxu0 0
  %7660 = vmatpush2.bf16.msra.mxu0 0
  %7661 = vmatprep.subr.bf16.mxu0 0
  %7662 = vmatpush2.bf16.msra.mxu0 0
  %7663 = vmatprep.subr.bf16.mxu0 0
  %7664 = vmatpush2.bf16.msra.mxu0 0
  %7665 = vmatprep.subr.bf16.mxu0 0
  %7666 = vmatpush2.bf16.msra.mxu0 0
  %7667 = vmatprep.subr.bf16.mxu0 0
  %7668 = vmatpush2.bf16.msra.mxu0 0
  %7669 = vmatprep.subr.bf16.mxu0 0
  %7670 = vmatpush2.bf16.msra.mxu0 0
  %7671 = vmatprep.subr.bf16.mxu0 0
  %7672 = vmatpush2.bf16.msra.mxu0 0
  %7673 = vmatprep.subr.bf16.mxu0 0
  %7674 = vmatpush2.bf16.msra.mxu0 0
  %7675 = vmatprep.mubr.bf16.mxu0 0
  %7676 = vmatmul.mubr.bf16.gmra.mxu0 %v7641
  %v7677 = vpop.f32.mrf.mxu0
  %v7678 = vadd.f32 0.0, %v7677
  %v7679 = vpop.f32.mrf.mxu0
  %v7680 = vadd.f32 0.0, %v7679
  %v7681 = vpop.f32.mrf.mxu0
  %v7682 = vadd.f32 0.0, %v7681
  %v7683 = vpop.f32.mrf.mxu0
  %v7684 = vadd.f32 0.0, %v7683
  %7685 = vdwg.mxu0
  %7686 = vmatprep.subr.bf16.mxu0 0
  %7687 = vmatpush1.bf16.msra.mxu0 0
  %7688 = vmatprep.subr.bf16.mxu0 0
  %7689 = vmatpush1.bf16.msra.mxu0 0
  %7690 = vmatprep.subr.bf16.mxu0 0
  %7691 = vmatpush1.bf16.msra.mxu0 0
  %7692 = vmatprep.subr.bf16.mxu0 0
  %7693 = vmatpush1.bf16.msra.mxu0 0
  %7694 = vmatprep.subr.bf16.mxu0 %v7623
  %7695 = vmatpush1.bf16.msra.mxu0 %v7622
  %7696 = vmatprep.subr.bf16.mxu0 %v7619
  %7697 = vmatpush1.bf16.msra.mxu0 %v7618
  %7698 = vmatprep.subr.bf16.mxu0 %v7615
  %7699 = vmatpush1.bf16.msra.mxu0 %v7614
  %7700 = vmatprep.subr.bf16.mxu0 %v7611
  %7701 = vmatpush1.bf16.msra.mxu0 %v7610
  %7702 = vmatprep.subr.bf16.mxu0 0
  %7703 = vmatpush2.bf16.msra.mxu0 0
  %7704 = vmatprep.subr.bf16.mxu0 0
  %7705 = vmatpush2.bf16.msra.mxu0 0
  %7706 = vmatprep.subr.bf16.mxu0 0
  %7707 = vmatpush2.bf16.msra.mxu0 0
  %7708 = vmatprep.subr.bf16.mxu0 0
  %7709 = vmatpush2.bf16.msra.mxu0 0
  %7710 = vmatprep.subr.bf16.mxu0 0
  %7711 = vmatpush2.bf16.msra.mxu0 0
  %7712 = vmatprep.subr.bf16.mxu0 0
  %7713 = vmatpush2.bf16.msra.mxu0 0
  %7714 = vmatprep.subr.bf16.mxu0 0
  %7715 = vmatpush2.bf16.msra.mxu0 0
  %7716 = vmatprep.subr.bf16.mxu0 0
  %7717 = vmatpush2.bf16.msra.mxu0 0
  %7718 = vmatprep.mubr.bf16.mxu0 0
  %7719 = vmatmul.mubr.bf16.gmra.mxu0 %v7641
  %v7720 = vpop.f32.mrf.mxu0
  %v7721 = vadd.f32 0.0, %v7720
  %v7722 = vpop.f32.mrf.mxu0
  %v7723 = vadd.f32 0.0, %v7722
  %v7724 = vpop.f32.mrf.mxu0
  %v7725 = vadd.f32 0.0, %v7724
  %v7726 = vpop.f32.mrf.mxu0
  %v7727 = vadd.f32 0.0, %v7726
  %7728 = vdwg.mxu0
  %v7729 = vadd.f32 %v7535, %v7678
  %v7730 = vadd.f32 %v7536, %v7680
  %v7731 = vadd.f32 %v7537, %v7721
  %v7732 = vadd.f32 %v7538, %v7723
  %v7733 = vadd.f32 %v7539, %v7682
  %v7734 = vadd.f32 %v7540, %v7684
  %v7735 = vadd.f32 %v7541, %v7725
  %v7736 = vadd.f32 %v7542, %v7727
  %s7737 = scalar_lea.vmem %s5, 1024
  %v7738 = vld [vmem:[%s7737] sm:$0xff]
  %v7739 = vld [vmem:[%s7737 + $0x8] sm:$0xff]
  %v7740 = vld [vmem:[%s7737 + $0x10] sm:$0xff]
  %v7741 = vld [vmem:[%s7737 + $0x18] sm:$0xff]
  %v7742 = vld [vmem:[%s7737 + $0x20] sm:$0xff]
  %v7743 = vld [vmem:[%s7737 + $0x28] sm:$0xff]
  %v7744 = vld [vmem:[%s7737 + $0x30] sm:$0xff]
  %v7745 = vld [vmem:[%s7737 + $0x38] sm:$0xff]
  %v7746 = vld [vmem:[%s7737 + $0x40] sm:$0xff]
  %v7747 = vld [vmem:[%s7737 + $0x48] sm:$0xff]
  %v7748 = vld [vmem:[%s7737 + $0x50] sm:$0xff]
  %v7749 = vld [vmem:[%s7737 + $0x58] sm:$0xff]
  %v7750 = vld [vmem:[%s7737 + $0x60] sm:$0xff]
  %v7751 = vld [vmem:[%s7737 + $0x68] sm:$0xff]
  %v7752 = vld [vmem:[%s7737 + $0x70] sm:$0xff]
  %v7753 = vld [vmem:[%s7737 + $0x78] sm:$0xff]
  %v7770 = vunpack.c.l.b16 %v7738
  %v7771 = vunpack.c.h.b16 %v7738
  %v7772 = vunpack.c.l.b16 %v7739
  %v7773 = vunpack.c.h.b16 %v7739
  %v7774 = vunpack.c.l.b16 %v7740
  %v7775 = vunpack.c.h.b16 %v7740
  %v7776 = vunpack.c.l.b16 %v7741
  %v7777 = vunpack.c.h.b16 %v7741
  %v7778 = vunpack.c.l.b16 %v7742
  %v7779 = vunpack.c.h.b16 %v7742
  %v7780 = vunpack.c.l.b16 %v7743
  %v7781 = vunpack.c.h.b16 %v7743
  %v7782 = vunpack.c.l.b16 %v7744
  %v7783 = vunpack.c.h.b16 %v7744
  %v7784 = vunpack.c.l.b16 %v7745
  %v7785 = vunpack.c.h.b16 %v7745
  %v7786 = vunpack.c.l.b16 %v7746
  %v7787 = vunpack.c.h.b16 %v7746
  %v7788 = vunpack.c.l.b16 %v7747
  %v7789 = vunpack.c.h.b16 %v7747
  %v7790 = vunpack.c.l.b16 %v7748
  %v7791 = vunpack.c.h.b16 %v7748
  %v7792 = vunpack.c.l.b16 %v7749
  %v7793 = vunpack.c.h.b16 %v7749
  %v7794 = vunpack.c.l.b16 %v7750
  %v7795 = vunpack.c.h.b16 %v7750
  %v7796 = vunpack.c.l.b16 %v7751
  %v7797 = vunpack.c.h.b16 %v7751
  %v7798 = vunpack.c.l.b16 %v7752
  %v7799 = vunpack.c.h.b16 %v7752
  %v7800 = vunpack.c.l.b16 %v7753
  %v7801 = vunpack.c.h.b16 %v7753
  %v7802 = vpack.c.b16 %v7774, %v7770
  %v7803 = vpack.c.b16 %v7775, %v7771
  %v7804 = vpack.c.b16 %v7776, %v7772
  %v7805 = vpack.c.b16 %v7777, %v7773
  %v7806 = vpack.c.b16 %v7782, %v7778
  %v7807 = vpack.c.b16 %v7783, %v7779
  %v7808 = vpack.c.b16 %v7784, %v7780
  %v7809 = vpack.c.b16 %v7785, %v7781
  %v7810 = vpack.c.b16 %v7790, %v7786
  %v7811 = vpack.c.b16 %v7791, %v7787
  %v7812 = vpack.c.b16 %v7792, %v7788
  %v7813 = vpack.c.b16 %v7793, %v7789
  %v7814 = vpack.c.b16 %v7798, %v7794
  %v7815 = vpack.c.b16 %v7799, %v7795
  %v7816 = vpack.c.b16 %v7800, %v7796
  %v7817 = vpack.c.b16 %v7801, %v7797
  %v7835 = vsel %vm6314, %v6200, 0
  %7837 = vmatprep.subr.bf16.mxu0 0
  %7838 = vmatpush1.bf16.msra.mxu0 0
  %7839 = vmatprep.subr.bf16.mxu0 0
  %7840 = vmatpush1.bf16.msra.mxu0 0
  %7841 = vmatprep.subr.bf16.mxu0 0
  %7842 = vmatpush1.bf16.msra.mxu0 0
  %7843 = vmatprep.subr.bf16.mxu0 0
  %7844 = vmatpush1.bf16.msra.mxu0 0
  %7845 = vmatprep.subr.bf16.mxu0 %v7815
  %7846 = vmatpush1.bf16.msra.mxu0 %v7814
  %7847 = vmatprep.subr.bf16.mxu0 %v7811
  %7848 = vmatpush1.bf16.msra.mxu0 %v7810
  %7849 = vmatprep.subr.bf16.mxu0 %v7807
  %7850 = vmatpush1.bf16.msra.mxu0 %v7806
  %7851 = vmatprep.subr.bf16.mxu0 %v7803
  %7852 = vmatpush1.bf16.msra.mxu0 %v7802
  %7853 = vmatprep.subr.bf16.mxu0 0
  %7854 = vmatpush2.bf16.msra.mxu0 0
  %7855 = vmatprep.subr.bf16.mxu0 0
  %7856 = vmatpush2.bf16.msra.mxu0 0
  %7857 = vmatprep.subr.bf16.mxu0 0
  %7858 = vmatpush2.bf16.msra.mxu0 0
  %7859 = vmatprep.subr.bf16.mxu0 0
  %7860 = vmatpush2.bf16.msra.mxu0 0
  %7861 = vmatprep.subr.bf16.mxu0 0
  %7862 = vmatpush2.bf16.msra.mxu0 0
  %7863 = vmatprep.subr.bf16.mxu0 0
  %7864 = vmatpush2.bf16.msra.mxu0 0
  %7865 = vmatprep.subr.bf16.mxu0 0
  %7866 = vmatpush2.bf16.msra.mxu0 0
  %7867 = vmatprep.subr.bf16.mxu0 0
  %7868 = vmatpush2.bf16.msra.mxu0 0
  %7869 = vmatprep.mubr.bf16.mxu0 0
  %7870 = vmatmul.mubr.bf16.gmra.mxu0 %v7835
  %v7871 = vpop.f32.mrf.mxu0
  %v7872 = vadd.f32 0.0, %v7871
  %v7873 = vpop.f32.mrf.mxu0
  %v7874 = vadd.f32 0.0, %v7873
  %v7875 = vpop.f32.mrf.mxu0
  %v7876 = vadd.f32 0.0, %v7875
  %v7877 = vpop.f32.mrf.mxu0
  %v7878 = vadd.f32 0.0, %v7877
  %7879 = vdwg.mxu0
  %7880 = vmatprep.subr.bf16.mxu0 0
  %7881 = vmatpush1.bf16.msra.mxu0 0
  %7882 = vmatprep.subr.bf16.mxu0 0
  %7883 = vmatpush1.bf16.msra.mxu0 0
  %7884 = vmatprep.subr.bf16.mxu0 0
  %7885 = vmatpush1.bf16.msra.mxu0 0
  %7886 = vmatprep.subr.bf16.mxu0 0
  %7887 = vmatpush1.bf16.msra.mxu0 0
  %7888 = vmatprep.subr.bf16.mxu0 %v7817
  %7889 = vmatpush1.bf16.msra.mxu0 %v7816
  %7890 = vmatprep.subr.bf16.mxu0 %v7813
  %7891 = vmatpush1.bf16.msra.mxu0 %v7812
  %7892 = vmatprep.subr.bf16.mxu0 %v7809
  %7893 = vmatpush1.bf16.msra.mxu0 %v7808
  %7894 = vmatprep.subr.bf16.mxu0 %v7805
  %7895 = vmatpush1.bf16.msra.mxu0 %v7804
  %7896 = vmatprep.subr.bf16.mxu0 0
  %7897 = vmatpush2.bf16.msra.mxu0 0
  %7898 = vmatprep.subr.bf16.mxu0 0
  %7899 = vmatpush2.bf16.msra.mxu0 0
  %7900 = vmatprep.subr.bf16.mxu0 0
  %7901 = vmatpush2.bf16.msra.mxu0 0
  %7902 = vmatprep.subr.bf16.mxu0 0
  %7903 = vmatpush2.bf16.msra.mxu0 0
  %7904 = vmatprep.subr.bf16.mxu0 0
  %7905 = vmatpush2.bf16.msra.mxu0 0
  %7906 = vmatprep.subr.bf16.mxu0 0
  %7907 = vmatpush2.bf16.msra.mxu0 0
  %7908 = vmatprep.subr.bf16.mxu0 0
  %7909 = vmatpush2.bf16.msra.mxu0 0
  %7910 = vmatprep.subr.bf16.mxu0 0
  %7911 = vmatpush2.bf16.msra.mxu0 0
  %7912 = vmatprep.mubr.bf16.mxu0 0
  %7913 = vmatmul.mubr.bf16.gmra.mxu0 %v7835
  %v7914 = vpop.f32.mrf.mxu0
  %v7915 = vadd.f32 0.0, %v7914
  %v7916 = vpop.f32.mrf.mxu0
  %v7917 = vadd.f32 0.0, %v7916
  %v7918 = vpop.f32.mrf.mxu0
  %v7919 = vadd.f32 0.0, %v7918
  %v7920 = vpop.f32.mrf.mxu0
  %v7921 = vadd.f32 0.0, %v7920
  %7922 = vdwg.mxu0
  %v7923 = vadd.f32 %v7729, %v7872
  %v7924 = vadd.f32 %v7730, %v7874
  %v7925 = vadd.f32 %v7731, %v7915
  %v7926 = vadd.f32 %v7732, %v7917
  %v7927 = vadd.f32 %v7733, %v7876
  %v7928 = vadd.f32 %v7734, %v7878
  %v7929 = vadd.f32 %v7735, %v7919
  %v7930 = vadd.f32 %v7736, %v7921
  %v7931 = vld [vmem:[%s6] sm:$0xf]
  %v7933 = vlaneseq
  %v7934 = vshrl.u32 %v7933, 7
  %v7935 = vsub.s32 0, %v7934
  %v7936 = vrot.slane %v7931, %v7935
  %v7937 = vlaneseq
  %v7938 = vshrl.u32 %v7937, 7
  %v7939 = vsub.s32 1, %v7938
  %v7940 = vrot.slane %v7931, %v7939
  %v7941 = vlaneseq
  %v7942 = vshrl.u32 %v7941, 7
  %v7943 = vsub.s32 2, %v7942
  %v7944 = vrot.slane %v7931, %v7943
  %v7945 = vlaneseq
  %v7946 = vshrl.u32 %v7945, 7
  %v7947 = vsub.s32 3, %v7946
  %v7948 = vrot.slane %v7931, %v7947
  %v7953 = vadd.f32 %v7923, %v7936
  %v7954 = vadd.f32 %v7924, %v7940
  %v7955 = vadd.f32 %v7925, %v7944
  %v7956 = vadd.f32 %v7926, %v7948
  %v7957 = vadd.f32 %v7927, %v7936
  %v7958 = vadd.f32 %v7928, %v7940
  %v7959 = vadd.f32 %v7929, %v7944
  %v7960 = vadd.f32 %v7930, %v7948
  %v7961 = vmax.f32 %v7953, 0.0
  %v7962 = vmax.f32 %v7954, 0.0
  %v7963 = vmax.f32 %v7955, 0.0
  %v7964 = vmax.f32 %v7956, 0.0
  %v7965 = vmax.f32 %v7957, 0.0
  %v7966 = vmax.f32 %v7958, 0.0
  %v7967 = vmax.f32 %v7959, 0.0
  %v7968 = vmax.f32 %v7960, 0.0
  %v7969 = vpack.c.bf16 %v7965, %v7961
  %v7970 = vpack.c.bf16 %v7966, %v7962
  %v7971 = vpack.c.bf16 %v7967, %v7963
  %v7972 = vpack.c.bf16 %v7968, %v7964
  %v7973 = vld [vmem:[%s7] sm:$0xf]
  %v7974 = vld [vmem:[%s7 + $0x4] sm:$0xf]
  %v7975 = vld [vmem:[%s7 + $0x8] sm:$0xf]
  %v7976 = vld [vmem:[%s7 + $0xc] sm:$0xf]
  %v7977 = vld [vmem:[%s7 + $0x10] sm:$0xf]
  %v7978 = vld [vmem:[%s7 + $0x14] sm:$0xf]
  %v7979 = vld [vmem:[%s7 + $0x18] sm:$0xf]
  %v7980 = vld [vmem:[%s7 + $0x1c] sm:$0xf]
  %v7981 = vld [vmem:[%s7 + $0x20] sm:$0xf]
  %v7982 = vld [vmem:[%s7 + $0x24] sm:$0xf]
  %v7983 = vld [vmem:[%s7 + $0x28] sm:$0xf]
  %v7984 = vld [vmem:[%s7 + $0x2c] sm:$0xf]
  %v7985 = vld [vmem:[%s7 + $0x30] sm:$0xf]
  %v7986 = vld [vmem:[%s7 + $0x34] sm:$0xf]
  %v7987 = vld [vmem:[%s7 + $0x38] sm:$0xf]
  %v7988 = vld [vmem:[%s7 + $0x3c] sm:$0xf]
  %v7989 = vld [vmem:[%s7 + $0x40] sm:$0xf]
  %v7990 = vld [vmem:[%s7 + $0x44] sm:$0xf]
  %v7991 = vld [vmem:[%s7 + $0x48] sm:$0xf]
  %v7992 = vld [vmem:[%s7 + $0x4c] sm:$0xf]
  %v7993 = vld [vmem:[%s7 + $0x50] sm:$0xf]
  %v7994 = vld [vmem:[%s7 + $0x54] sm:$0xf]
  %v7995 = vld [vmem:[%s7 + $0x58] sm:$0xf]
  %v7996 = vld [vmem:[%s7 + $0x5c] sm:$0xf]
  %v7997 = vld [vmem:[%s7 + $0x60] sm:$0xf]
  %v7998 = vld [vmem:[%s7 + $0x64] sm:$0xf]
  %v7999 = vld [vmem:[%s7 + $0x68] sm:$0xf]
  %v8000 = vld [vmem:[%s7 + $0x6c] sm:$0xf]
  %v8001 = vld [vmem:[%s7 + $0x70] sm:$0xf]
  %v8002 = vld [vmem:[%s7 + $0x74] sm:$0xf]
  %v8003 = vld [vmem:[%s7 + $0x78] sm:$0xf]
  %v8004 = vld [vmem:[%s7 + $0x7c] sm:$0xf]
  %v8005 = vld [vmem:[%s7 + $0x80] sm:$0xf]
  %v8006 = vld [vmem:[%s7 + $0x84] sm:$0xf]
  %v8007 = vld [vmem:[%s7 + $0x88] sm:$0xf]
  %v8008 = vld [vmem:[%s7 + $0x8c] sm:$0xf]
  %v8009 = vld [vmem:[%s7 + $0x90] sm:$0xf]
  %v8010 = vld [vmem:[%s7 + $0x94] sm:$0xf]
  %v8011 = vld [vmem:[%s7 + $0x98] sm:$0xf]
  %v8012 = vld [vmem:[%s7 + $0x9c] sm:$0xf]
  %v8013 = vld [vmem:[%s7 + $0xa0] sm:$0xf]
  %v8014 = vld [vmem:[%s7 + $0xa4] sm:$0xf]
  %v8015 = vld [vmem:[%s7 + $0xa8] sm:$0xf]
  %v8016 = vld [vmem:[%s7 + $0xac] sm:$0xf]
  %v8017 = vld [vmem:[%s7 + $0xb0] sm:$0xf]
  %v8018 = vld [vmem:[%s7 + $0xb4] sm:$0xf]
  %v8019 = vld [vmem:[%s7 + $0xb8] sm:$0xf]
  %v8020 = vld [vmem:[%s7 + $0xbc] sm:$0xf]
  %v8021 = vld [vmem:[%s7 + $0xc0] sm:$0xf]
  %v8022 = vld [vmem:[%s7 + $0xc4] sm:$0xf]
  %v8023 = vld [vmem:[%s7 + $0xc8] sm:$0xf]
  %v8024 = vld [vmem:[%s7 + $0xcc] sm:$0xf]
  %v8025 = vld [vmem:[%s7 + $0xd0] sm:$0xf]
  %v8026 = vld [vmem:[%s7 + $0xd4] sm:$0xf]
  %v8027 = vld [vmem:[%s7 + $0xd8] sm:$0xf]
  %v8028 = vld [vmem:[%s7 + $0xdc] sm:$0xf]
  %v8029 = vld [vmem:[%s7 + $0xe0] sm:$0xf]
  %v8030 = vld [vmem:[%s7 + $0xe4] sm:$0xf]
  %v8031 = vld [vmem:[%s7 + $0xe8] sm:$0xf]
  %v8032 = vld [vmem:[%s7 + $0xec] sm:$0xf]
  %v8033 = vld [vmem:[%s7 + $0xf0] sm:$0xf]
  %v8034 = vld [vmem:[%s7 + $0xf4] sm:$0xf]
  %v8035 = vld [vmem:[%s7 + $0xf8] sm:$0xf]
  %v8036 = vld [vmem:[%s7 + $0xfc] sm:$0xf]
  %v8037 = vld [vmem:[%s8] sm:$0x1]
  %v8039 = vlaneseq
  %v8040 = vshrl.u32 %v8039, 7
  %v8041 = vsub.s32 0, %v8040
  %v8042 = vrot.slane %v8037, %v8041
  %v8108 = vunpack.c.l.b16 %v7973
  %v8109 = vunpack.c.l.b16 %v7974
  %v8110 = vunpack.c.l.b16 %v7975
  %v8111 = vunpack.c.l.b16 %v7976
  %v8112 = vunpack.c.l.b16 %v7977
  %v8113 = vunpack.c.l.b16 %v7978
  %v8114 = vunpack.c.l.b16 %v7979
  %v8115 = vunpack.c.l.b16 %v7980
  %v8116 = vunpack.c.l.b16 %v7981
  %v8117 = vunpack.c.l.b16 %v7982
  %v8118 = vunpack.c.l.b16 %v7983
  %v8119 = vunpack.c.l.b16 %v7984
  %v8120 = vunpack.c.l.b16 %v7985
  %v8121 = vunpack.c.l.b16 %v7986
  %v8122 = vunpack.c.l.b16 %v7987
  %v8123 = vunpack.c.l.b16 %v7988
  %v8124 = vunpack.c.l.b16 %v7989
  %v8125 = vunpack.c.l.b16 %v7990
  %v8126 = vunpack.c.l.b16 %v7991
  %v8127 = vunpack.c.l.b16 %v7992
  %v8128 = vunpack.c.l.b16 %v7993
  %v8129 = vunpack.c.l.b16 %v7994
  %v8130 = vunpack.c.l.b16 %v7995
  %v8131 = vunpack.c.l.b16 %v7996
  %v8132 = vunpack.c.l.b16 %v7997
  %v8133 = vunpack.c.l.b16 %v7998
  %v8134 = vunpack.c.l.b16 %v7999
  %v8135 = vunpack.c.l.b16 %v8000
  %v8136 = vunpack.c.l.b16 %v8001
  %v8137 = vunpack.c.l.b16 %v8002
  %v8138 = vunpack.c.l.b16 %v8003
  %v8139 = vunpack.c.l.b16 %v8004
  %v8140 = vunpack.c.l.b16 %v8005
  %v8141 = vunpack.c.l.b16 %v8006
  %v8142 = vunpack.c.l.b16 %v8007
  %v8143 = vunpack.c.l.b16 %v8008
  %v8144 = vunpack.c.l.b16 %v8009
  %v8145 = vunpack.c.l.b16 %v8010
  %v8146 = vunpack.c.l.b16 %v8011
  %v8147 = vunpack.c.l.b16 %v8012
  %v8148 = vunpack.c.l.b16 %v8013
  %v8149 = vunpack.c.l.b16 %v8014
  %v8150 = vunpack.c.l.b16 %v8015
  %v8151 = vunpack.c.l.b16 %v8016
  %v8152 = vunpack.c.l.b16 %v8017
  %v8153 = vunpack.c.l.b16 %v8018
  %v8154 = vunpack.c.l.b16 %v8019
  %v8155 = vunpack.c.l.b16 %v8020
  %v8156 = vunpack.c.l.b16 %v8021
  %v8157 = vunpack.c.l.b16 %v8022
  %v8158 = vunpack.c.l.b16 %v8023
  %v8159 = vunpack.c.l.b16 %v8024
  %v8160 = vunpack.c.l.b16 %v8025
  %v8161 = vunpack.c.l.b16 %v8026
  %v8162 = vunpack.c.l.b16 %v8027
  %v8163 = vunpack.c.l.b16 %v8028
  %v8164 = vunpack.c.l.b16 %v8029
  %v8165 = vunpack.c.l.b16 %v8030
  %v8166 = vunpack.c.l.b16 %v8031
  %v8167 = vunpack.c.l.b16 %v8032
  %v8168 = vunpack.c.l.b16 %v8033
  %v8169 = vunpack.c.l.b16 %v8034
  %v8170 = vunpack.c.l.b16 %v8035
  %v8171 = vunpack.c.l.b16 %v8036
  %v8172 = vpack.c.b16 %v8109, %v8108
  %v8173 = vpack.c.b16 %v8111, %v8110
  %v8174 = vpack.c.b16 %v8113, %v8112
  %v8175 = vpack.c.b16 %v8115, %v8114
  %v8176 = vpack.c.b16 %v8117, %v8116
  %v8177 = vpack.c.b16 %v8119, %v8118
  %v8178 = vpack.c.b16 %v8121, %v8120
  %v8179 = vpack.c.b16 %v8123, %v8122
  %v8180 = vpack.c.b16 %v8125, %v8124
  %v8181 = vpack.c.b16 %v8127, %v8126
  %v8182 = vpack.c.b16 %v8129, %v8128
  %v8183 = vpack.c.b16 %v8131, %v8130
  %v8184 = vpack.c.b16 %v8133, %v8132
  %v8185 = vpack.c.b16 %v8135, %v8134
  %v8186 = vpack.c.b16 %v8137, %v8136
  %v8187 = vpack.c.b16 %v8139, %v8138
  %v8188 = vpack.c.b16 %v8141, %v8140
  %v8189 = vpack.c.b16 %v8143, %v8142
  %v8190 = vpack.c.b16 %v8145, %v8144
  %v8191 = vpack.c.b16 %v8147, %v8146
  %v8192 = vpack.c.b16 %v8149, %v8148
  %v8193 = vpack.c.b16 %v8151, %v8150
  %v8194 = vpack.c.b16 %v8153, %v8152
  %v8195 = vpack.c.b16 %v8155, %v8154
  %v8196 = vpack.c.b16 %v8157, %v8156
  %v8197 = vpack.c.b16 %v8159, %v8158
  %v8198 = vpack.c.b16 %v8161, %v8160
  %v8199 = vpack.c.b16 %v8163, %v8162
  %v8200 = vpack.c.b16 %v8165, %v8164
  %v8201 = vpack.c.b16 %v8167, %v8166
  %v8202 = vpack.c.b16 %v8169, %v8168
  %v8203 = vpack.c.b16 %v8171, %v8170
  %8236 = vmatprep.subr.bf16.mxu0 0
  %8237 = vmatpush1.bf16.msra.mxu0 %v8179
  %8238 = vmatprep.subr.bf16.mxu0 0
  %8239 = vmatpush1.bf16.msra.mxu0 %v8178
  %8240 = vmatprep.subr.bf16.mxu0 0
  %8241 = vmatpush1.bf16.msra.mxu0 %v8177
  %8242 = vmatprep.subr.bf16.mxu0 0
  %8243 = vmatpush1.bf16.msra.mxu0 %v8176
  %8244 = vmatprep.subr.bf16.mxu0 0
  %8245 = vmatpush1.bf16.msra.mxu0 %v8175
  %8246 = vmatprep.subr.bf16.mxu0 0
  %8247 = vmatpush1.bf16.msra.mxu0 %v8174
  %8248 = vmatprep.subr.bf16.mxu0 0
  %8249 = vmatpush1.bf16.msra.mxu0 %v8173
  %8250 = vmatprep.subr.bf16.mxu0 0
  %8251 = vmatpush1.bf16.msra.mxu0 %v8172
  %8252 = vmatprep.subr.bf16.mxu0 0
  %8253 = vmatpush2.bf16.msra.mxu0 %v8187
  %8254 = vmatprep.subr.bf16.mxu0 0
  %8255 = vmatpush2.bf16.msra.mxu0 %v8186
  %8256 = vmatprep.subr.bf16.mxu0 0
  %8257 = vmatpush2.bf16.msra.mxu0 %v8185
  %8258 = vmatprep.subr.bf16.mxu0 0
  %8259 = vmatpush2.bf16.msra.mxu0 %v8184
  %8260 = vmatprep.subr.bf16.mxu0 0
  %8261 = vmatpush2.bf16.msra.mxu0 %v8183
  %8262 = vmatprep.subr.bf16.mxu0 0
  %8263 = vmatpush2.bf16.msra.mxu0 %v8182
  %8264 = vmatprep.subr.bf16.mxu0 0
  %8265 = vmatpush2.bf16.msra.mxu0 %v8181
  %8266 = vmatprep.subr.bf16.mxu0 0
  %8267 = vmatpush2.bf16.msra.mxu0 %v8180
  %8268 = vmatprep.mubr.bf16.mxu0 %v7970
  %8269 = vmatmul.mubr.bf16.gmra.mxu0 %v7969
  %v8270 = vpop.f32.mrf.mxu0
  %v8271 = vadd.f32 %v8042, %v8270
  %v8272 = vpop.f32.mrf.mxu0
  %v8273 = vpop.f32.mrf.mxu0
  %v8274 = vadd.f32 %v8042, %v8273
  %v8275 = vpop.f32.mrf.mxu0
  %8276 = vdwg.mxu0
  %8277 = vmatprep.subr.bf16.mxu0 0
  %8278 = vmatpush1.bf16.msra.mxu0 %v8195
  %8279 = vmatprep.subr.bf16.mxu0 0
  %8280 = vmatpush1.bf16.msra.mxu0 %v8194
  %8281 = vmatprep.subr.bf16.mxu0 0
  %8282 = vmatpush1.bf16.msra.mxu0 %v8193
  %8283 = vmatprep.subr.bf16.mxu0 0
  %8284 = vmatpush1.bf16.msra.mxu0 %v8192
  %8285 = vmatprep.subr.bf16.mxu0 0
  %8286 = vmatpush1.bf16.msra.mxu0 %v8191
  %8287 = vmatprep.subr.bf16.mxu0 0
  %8288 = vmatpush1.bf16.msra.mxu0 %v8190
  %8289 = vmatprep.subr.bf16.mxu0 0
  %8290 = vmatpush1.bf16.msra.mxu0 %v8189
  %8291 = vmatprep.subr.bf16.mxu0 0
  %8292 = vmatpush1.bf16.msra.mxu0 %v8188
  %8293 = vmatprep.subr.bf16.mxu0 0
  %8294 = vmatpush2.bf16.msra.mxu0 %v8203
  %8295 = vmatprep.subr.bf16.mxu0 0
  %8296 = vmatpush2.bf16.msra.mxu0 %v8202
  %8297 = vmatprep.subr.bf16.mxu0 0
  %8298 = vmatpush2.bf16.msra.mxu0 %v8201
  %8299 = vmatprep.subr.bf16.mxu0 0
  %8300 = vmatpush2.bf16.msra.mxu0 %v8200
  %8301 = vmatprep.subr.bf16.mxu0 0
  %8302 = vmatpush2.bf16.msra.mxu0 %v8199
  %8303 = vmatprep.subr.bf16.mxu0 0
  %8304 = vmatpush2.bf16.msra.mxu0 %v8198
  %8305 = vmatprep.subr.bf16.mxu0 0
  %8306 = vmatpush2.bf16.msra.mxu0 %v8197
  %8307 = vmatprep.subr.bf16.mxu0 0
  %8308 = vmatpush2.bf16.msra.mxu0 %v8196
  %8309 = vmatprep.mubr.bf16.mxu0 %v7972
  %8310 = vmatmul.mubr.bf16.gmra.mxu0 %v7971
  %v8311 = vpop.f32.mrf.mxu0
  %v8312 = vadd.f32 %v8271, %v8311
  %v8313 = vpop.f32.mrf.mxu0
  %v8314 = vpop.f32.mrf.mxu0
  %v8315 = vadd.f32 %v8274, %v8314
  %v8316 = vpop.f32.mrf.mxu0
  %8317 = vdwg.mxu0
  %8318 = vst [vmem:[%s9] sm:$0xff] %v8312
  %8319 = vst [vmem:[%s9 + $0x8] sm:$0xff] %v8315
  // Predicated region
  $region38: #{dqn_forward.1} parent=0 // pred_check
    _
  $region39: #{dqn_forward.1} parent=0 // pred_check_branch
    %8321 = sbr.rel (0) target = $region41
  $region40: #{dqn_forward.1} parent=0 // pred_region
    _
  $region41: #{dqn_forward.1} parent=0 // pred_fallthru
    _
  // Predicated region
  $region42: #{dqn_forward.1} parent=0 // pred_check
    _
  $region43: #{dqn_forward.1} parent=0 // pred_check_branch
    %8323 = sbr.rel (0) target = $region45
  $region44: #{dqn_forward.1} parent=0 // pred_region
    _
  $region45: #{dqn_forward.1} parent=0 // pred_fallthru
    _

</llo_original>
